<compile_context>
chip_gen: v6e
topology: v6e:2x2x1
jax: 0.10.0
libtpu: 0.0.40
codegen_flags: <defaults>
</compile_context>

<pallas_src>
import functools

import jax
import jax.numpy as jnp
from jax.experimental import pallas as pl
from jax.experimental.pallas import tpu as pltpu

D_MODEL = 768
D_FF = 2048


def _round_up(x, m):
    return (x + m - 1) // m * m


def _ffn_kernel(x_ref, w1_ref, w2_ref, o_ref):
    # h = relu(x @ W1^T)   -- (tm, d_ff), bf16 MXU matmul with f32 accumulation.
    h = jnp.dot(x_ref[...], w1_ref[...], preferred_element_type=jnp.float32)
    h = jnp.maximum(h, 0.0)
    # y = h @ W2^T         -- (tm, d_model); write the result directly (no scratch).
    o_ref[...] = jnp.dot(
        h.astype(w2_ref.dtype), w2_ref[...], preferred_element_type=jnp.float32
    ).astype(o_ref.dtype)


def prepare_weights(w1, w2, dtype=jnp.bfloat16):
    """One-time relayout + cast of PyTorch-layout weights (outside the hot path).

    w1 : (d_ff, d_model)  -- linear1.weight
    w2 : (d_model, d_ff)  -- linear2.weight
    returns (w1_t, w2_t) with shapes (d_model, d_ff) and (d_ff, d_model) in `dtype`.
    """
    return jnp.transpose(w1).astype(dtype), jnp.transpose(w2).astype(dtype)


@functools.partial(jax.jit, static_argnames=("tm_max",))
def position_forward_prepared(x, w1_t, w2_t, *, tm_max=512):
    """FFN forward with pre-transposed, pre-cast weights (the hot path)."""
    d_model, d_ff = w1_t.shape
    leading = x.shape[:-1]
    x2 = x.reshape(-1, d_model).astype(w1_t.dtype)
    m = x2.shape[0]

    # Row tile: big, sublane-aligned; ensure >=2 row tiles for v7x megacore when possible.
    tm = min(tm_max, _round_up(m, 8))
    if _round_up(m, tm) // tm < 2 and tm >= 16:
        tm = _round_up(tm // 2, 8)
    m_pad = _round_up(m, tm)
    if m_pad != m:
        x2 = jnp.pad(x2, ((0, m_pad - m), (0, 0)))

    grid = (m_pad // tm,)

    out = pl.pallas_call(
        _ffn_kernel,
        out_shape=jax.ShapeDtypeStruct((m_pad, d_model), x.dtype),
        grid_spec=pltpu.PrefetchScalarGridSpec(
            num_scalar_prefetch=0,
            grid=grid,
            in_specs=[
                pl.BlockSpec((tm, d_model), lambda i: (i, 0)),      # x rows (streamed)
                pl.BlockSpec((d_model, d_ff), lambda i: (0, 0)),    # W1^T resident
                pl.BlockSpec((d_ff, d_model), lambda i: (0, 0)),    # W2^T resident
            ],
            out_specs=pl.BlockSpec((tm, d_model), lambda i: (i, 0)),
        ),
        compiler_params=pltpu.CompilerParams(
            dimension_semantics=("parallel",),
            vmem_limit_bytes=48 * 1024 * 1024,
        ),
    )(x2, w1_t, w2_t)

    if m_pad != m:
        out = out[:m]
    return out.reshape(*leading, d_model)


def position_forward(x, w1, w2):
    """Convenience wrapper taking PyTorch-layout f32 weights directly."""
    w1_t, w2_t = prepare_weights(w1, w2)
    return position_forward_prepared(x, w1_t, w2_t)


if __name__ == "__main__":
    key = jax.random.PRNGKey(0)
    kx, k1, k2 = jax.random.split(key, 3)

    batch, seq = 2, 8
    x = jax.random.normal(kx, (batch, seq, D_MODEL), dtype=jnp.float32)
    # PyTorch-layout weights, scaled roughly like nn.Linear init.
    w1 = jax.random.normal(k1, (D_FF, D_MODEL), dtype=jnp.float32) * (D_MODEL ** -0.5)
    w2 = jax.random.normal(k2, (D_MODEL, D_FF), dtype=jnp.float32) * (D_FF ** -0.5)

    # One-time weight relayout + bf16 cast (kept out of the per-call hot path).
    w1_t, w2_t = prepare_weights(w1, w2)

    y = position_forward_prepared(x, w1_t, w2_t)
    jax.block_until_ready(y)

    # Reference mirroring the kernel math (bf16 inputs, f32 accumulation).
    xb = x.reshape(-1, D_MODEL).astype(jnp.bfloat16)
    h_ref = jnp.maximum(jnp.dot(xb, w1_t, preferred_element_type=jnp.float32), 0.0)
    y_ref = jnp.dot(
        h_ref.astype(jnp.bfloat16), w2_t, preferred_element_type=jnp.float32
    ).reshape(batch, seq, D_MODEL)

    # Full-f32 reference (loose check of module semantics).
    h_f32 = jnp.maximum(jnp.einsum("...d,fd->...f", x, w1), 0.0)
    y_f32 = jnp.einsum("...f,df->...d", h_f32, w2)

    assert y.shape == y_ref.shape, "shape mismatch"
    assert jnp.allclose(y, y_ref, atol=2e-2, rtol=2e-2), "output mismatch (bf16 ref)"
    assert jnp.allclose(y, y_f32, atol=1e-1, rtol=1e-1), "output mismatch (f32 ref)"

    print("KERNEL_OK")
</pallas_src>

<mosaic_0001>
module attributes {stable_mosaic.version = 11 : i64} {
  func.func @_ffn_kernel(%arg0: i32, %arg1: memref<8x768xbf16, #tpu.memory_space<vmem>>, %arg2: memref<768x2048xbf16, #tpu.memory_space<vmem>>, %arg3: memref<2048x768xbf16, #tpu.memory_space<vmem>>, %arg4: memref<8x768xf32, #tpu.memory_space<vmem>>) attributes {dimension_semantics = [#tpu.dimension_semantics<parallel>], iteration_bounds = array<i64: 2>, scalar_prefetch = 0 : i64, scratch_operands = 0 : i64, tpu.core_type = #tpu.core_type<tc>, window_params = [{transform_indices = @transform_0, window_bounds = array<i64: 8, 768>}, {pipeline_mode = #tpu.pipeline_mode<synchronous>, transform_indices = @transform_1, window_bounds = array<i64: 768, 2048>}, {pipeline_mode = #tpu.pipeline_mode<synchronous>, transform_indices = @transform_2, window_bounds = array<i64: 2048, 768>}, {transform_indices = @transform_3, window_bounds = array<i64: 8, 768>}]} {
    %c0 = arith.constant 0 : index
    %c0_0 = arith.constant 0 : index
    %0 = vector.load %arg1[%c0, %c0_0] : memref<8x768xbf16, #tpu.memory_space<vmem>>, vector<8x768xbf16>
    %c0_1 = arith.constant 0 : index
    %c0_2 = arith.constant 0 : index
    %1 = vector.load %arg2[%c0_1, %c0_2] : memref<768x2048xbf16, #tpu.memory_space<vmem>>, vector<768x2048xbf16>
    %cst = arith.constant dense<0.000000e+00> : vector<8x2048xf32>
    %2 = tpu.matmul %0, %1, %cst {dimension_numbers = #tpu.dot_dimension_numbers<[1], [0], [0], [1], [0, 0, 1, 1], [], []>} : vector<8x768xbf16>, vector<768x2048xbf16>, vector<8x2048xf32> -> vector<8x2048xf32>
    %cst_3 = arith.constant 0.000000e+00 : f32
    %3 = vector.broadcast %cst_3 : f32 to vector<8x2048xf32>
    %4 = arith.maximumf %2, %3 : vector<8x2048xf32>
    %5 = arith.truncf %4 : vector<8x2048xf32> to vector<8x2048xbf16>
    %c0_4 = arith.constant 0 : index
    %c0_5 = arith.constant 0 : index
    %6 = vector.load %arg3[%c0_4, %c0_5] : memref<2048x768xbf16, #tpu.memory_space<vmem>>, vector<2048x768xbf16>
    %cst_6 = arith.constant dense<0.000000e+00> : vector<8x768xf32>
    %7 = tpu.matmul %5, %6, %cst_6 {dimension_numbers = #tpu.dot_dimension_numbers<[1], [0], [0], [1], [0, 0, 1, 1], [], []>} : vector<8x2048xbf16>, vector<2048x768xbf16>, vector<8x768xf32> -> vector<8x768xf32>
    %c0_7 = arith.constant 0 : index
    %c0_8 = arith.constant 0 : index
    %8 = vector.load %arg4[%c0_7, %c0_8] : memref<8x768xf32, #tpu.memory_space<vmem>>, vector<8x768xf32>
    tpu.vector_store %arg4[%c0_7, %c0_8], %7 {strides = array<i32>} : memref<8x768xf32, #tpu.memory_space<vmem>>, vector<8x768xf32>,
    return
  }
  func.func @transform_0(%arg0: i32) -> (i32, i32) {
    %c0_i32 = arith.constant 0 : i32
    %c0_i32_0 = arith.constant 0 : i32
    return %arg0, %c0_i32 : i32, i32
  }
  func.func @transform_1(%arg0: i32) -> (i32, i32) {
    %c0_i32 = arith.constant 0 : i32
    %c0_i32_0 = arith.constant 0 : i32
    %c0_i32_1 = arith.constant 0 : i32
    return %c0_i32, %c0_i32_0 : i32, i32
  }
  func.func @transform_2(%arg0: i32) -> (i32, i32) {
    %c0_i32 = arith.constant 0 : i32
    %c0_i32_0 = arith.constant 0 : i32
    %c0_i32_1 = arith.constant 0 : i32
    return %c0_i32, %c0_i32_0 : i32, i32
  }
  func.func @transform_3(%arg0: i32) -> (i32, i32) {
    %c0_i32 = arith.constant 0 : i32
    %c0_i32_0 = arith.constant 0 : i32
    return %arg0, %c0_i32 : i32, i32
  }
}

</mosaic_0001>

<llo_original>
// kernel: position_forward_prepared.1
$region0: #{position_forward_prepared.1}
  #allocation0 [shape = 'u32[]', space=smem, size = 0x4, offset = 0x4, fixed_abs, tag = 'smem constant byte address 0x4 - core index']
  #allocation1 [shape = 'u32[144,128]{1,0:T(1,128)}', space=vmem, size = 0x12000, scoped, tag = 'internal scratch']
  %s0 = inlined_call_operand.vmem [shape: bf16[16,768], index: 0, kind: input, shape index: {}]
  %s1 = inlined_call_operand.hbm [shape: bf16[768,2048], index: 1, kind: input, shape index: {}]
  %s2 = inlined_call_operand.hbm [shape: bf16[2048,768], index: 2, kind: input, shape index: {}]
  %s3 = inlined_call_operand.hbm [shape: f32[16,768], index: 3, kind: output, shape index: {}]
  %s4 = sld [smem:[#allocation0]]
  $region53: #{position_forward_prepared.1} parent=0
    _
  %s6 = ssub.s32 1, %s4
  %s7 = scalar_select 0, %s6, %s4
  $region1: #{position_forward_prepared.1} parent=0
    #allocation2 [shape = 'u8[3145728]{0}', space=vmem, size = 0x300000, scoped, tag = 'input window, operand 1, single buffered']
    #allocation3 [shape = 's32[2]{0}', space=sflag, size = 0x8, scoped, tag = 'scoped memory for position_forward_prepared.1']
    #allocation4 [shape = 's32[2]{0}', space=sflag, size = 0x8, scoped, tag = 'scoped memory for position_forward_prepared.1']
    #allocation5 [shape = 'u8[3145728]{0}', space=vmem, size = 0x300000, scoped, tag = 'input window, operand 2, single buffered']
    #allocation6 [shape = 's32[1]{0}', space=sflag, size = 0x4, scoped, tag = 'scoped memory for position_forward_prepared.1']
    #allocation7 [shape = 'u8[49152]{0}', space=vmem, size = 0xc000, scoped, tag = 'output window, operand 0']
    %8 = vsyncpa [#allocation3], 0
    %9 = vsyncpa [#allocation6], 0
    %10 = vsyncpa [#allocation4], 0
    %s11 = scalar_lea.sflag [#allocation4], 1
    %12 = vsyncpa %s11, 0
    loop: start=0, step=1, limit=4
    $region2: #{position_forward_prepared.1} parent=1 // loop_pre_header
      _
    $region3: #{position_forward_prepared.1} parent=1 // loop_header
      %s14 = sphi 0, %s18
      %p15 = scmp.ge.s32.totalorder %s14, 4
      %s24 = sphi 0, %s26
      %s27 = sphi 0, %s24
      %s28 = sphi 0, %s27
      %s44 = sphi 0, %s28
      %s48 = sphi 0, %s48
      %s50 = sphi 0, %s48
      %s51 = sphi 0, %s50
      %s65 = sphi 0, %s51
      %s69 = sphi 0, %s69
      %s71 = sphi 0, %s69
      %s72 = sphi 0, %s71
      %s86 = sphi 0, %s72
      %s92 = sphi 0, %s94
      %s95 = sphi 0, %s92
      %s96 = sphi 0, %s95
      %s112 = sphi 0, %s96
    $region4: #{position_forward_prepared.1} parent=1 // loop_header_branch
      %17 = sbr.rel (%p15) target = $region8
    $region5: #{position_forward_prepared.1} parent=1 // loop_body
      %s19 = ssub.s32 %s14, 1
      %s20 = ssub.s32 %s14, 2
      %s21 = sadd.s32 %s14, 1
      %s22 = ssub.s32 %s14, %s21
      %p23 = scmp.eq.s32.totalorder %s22, 0
      %s25 = sadd.s32 %s24, 1
      %s26 = scalar_select %p23, %s24, %s25
      %p29 = pneg %p23
      %p30 = scmp.eq.s32.totalorder %s14, 1
      %p31 = por %p29, %p30
      %p32 = scmp.ne.s32.totalorder %s24, %s27
      %p33 = scmp.eq.s32.totalorder %s14, 0
      %p34 = por %p32, %p33
      %p35 = scmp.ne.s32.totalorder %s24, %s27
      %p36 = scmp.eq.s32.totalorder %s19, 1
      %p37 = por %p35, %p36
      %p38 = scmp.ne.s32.totalorder %s27, %s28
      %p39 = scmp.eq.s32.totalorder %s19, 0
      %p40 = por %p38, %p39
      %p41 = scmp.ne.s32.totalorder %s27, %s28
      %p42 = scmp.eq.s32.totalorder %s20, 1
      %p43 = por %p41, %p42
      %p45 = scmp.ne.s32.totalorder %s28, %s44
      %p46 = scmp.eq.s32.totalorder %s20, 0
      %p47 = por %p45, %p46
      %s49 = sadd.s32 %s48, 1
      %p52 = scmp.eq.s32.totalorder %s14, 1
      %p53 = scmp.ne.s32.totalorder %s48, %s50
      %p54 = scmp.eq.s32.totalorder %s14, 0
      %p55 = por %p53, %p54
      %p56 = scmp.ne.s32.totalorder %s48, %s50
      %p57 = scmp.eq.s32.totalorder %s19, 1
      %p58 = por %p56, %p57
      %p59 = scmp.ne.s32.totalorder %s50, %s51
      %p60 = scmp.eq.s32.totalorder %s19, 0
      %p61 = por %p59, %p60
      %p62 = scmp.ne.s32.totalorder %s50, %s51
      %p63 = scmp.eq.s32.totalorder %s20, 1
      %p64 = por %p62, %p63
      %p66 = scmp.ne.s32.totalorder %s51, %s65
      %p67 = scmp.eq.s32.totalorder %s20, 0
      %p68 = por %p66, %p67
      %s70 = sadd.s32 %s69, 1
      %p73 = scmp.eq.s32.totalorder %s14, 1
      %p74 = scmp.ne.s32.totalorder %s69, %s71
      %p75 = scmp.eq.s32.totalorder %s14, 0
      %p76 = por %p74, %p75
      %p77 = scmp.ne.s32.totalorder %s69, %s71
      %p78 = scmp.eq.s32.totalorder %s19, 1
      %p79 = por %p77, %p78
      %p80 = scmp.ne.s32.totalorder %s71, %s72
      %p81 = scmp.eq.s32.totalorder %s19, 0
      %p82 = por %p80, %p81
      %p83 = scmp.ne.s32.totalorder %s71, %s72
      %p84 = scmp.eq.s32.totalorder %s20, 1
      %p85 = por %p83, %p84
      %p87 = scmp.ne.s32.totalorder %s72, %s86
      %p88 = scmp.eq.s32.totalorder %s20, 0
      %p89 = por %p87, %p88
      %s90 = ssub.s32 %s14, %s21
      %p91 = scmp.eq.s32.totalorder %s90, 0
      %s93 = sadd.s32 %s92, 1
      %s94 = scalar_select %p91, %s92, %s93
      %p97 = pneg %p91
      %p98 = scmp.eq.s32.totalorder %s14, 1
      %p99 = por %p97, %p98
      %p100 = scmp.ne.s32.totalorder %s92, %s95
      %p101 = scmp.eq.s32.totalorder %s14, 0
      %p102 = por %p100, %p101
      %p103 = scmp.ne.s32.totalorder %s92, %s95
      %p104 = scmp.eq.s32.totalorder %s19, 1
      %p105 = por %p103, %p104
      %p106 = scmp.ne.s32.totalorder %s95, %s96
      %p107 = scmp.eq.s32.totalorder %s19, 0
      %p108 = por %p106, %p107
      %p109 = scmp.ne.s32.totalorder %s95, %s96
      %p110 = scmp.eq.s32.totalorder %s20, 1
      %p111 = por %p109, %p110
      %p113 = scmp.ne.s32.totalorder %s96, %s112
      %p114 = scmp.eq.s32.totalorder %s20, 0
      %p115 = por %p113, %p114
      %p116 = scmp.le.s32.totalorder 1, %s14
      %p117 = scmp.lt.s32.totalorder %s14, 3
      %p118 = pnand %p116, %p117
      %p119 = pneg %p118
      // Predicated region
      $region9: #{position_forward_prepared.1} parent=5 // pred_check
        _
      $region10: #{position_forward_prepared.1} parent=5 // pred_check_branch
        %121 = sbr.rel (%p118) target = $region12
      $region11: #{position_forward_prepared.1} parent=5 // pred_region
        %s122 = ssub.s32 %s14, 1
        // Predicated region
        $region13: #{position_forward_prepared.1} parent=11 // pred_check
          %p123 = pneg %p61
        $region14: #{position_forward_prepared.1} parent=11 // pred_check_branch
          %125 = sbr.rel (%p123) target = $region16
        $region15: #{position_forward_prepared.1} parent=11 // pred_region
          %s127 = ssub.s32 98304, 98304
          %128 = vsyncadd [#allocation3], %s127
          %s129 = sshll.u32 [#allocation2], 4
          %s130 = int_to_ptr.vmem [resolvable:$true] %s129
          %135 = dma.hbm_to_vmem [thread:$0]  %s1, 98304, %s130, [#allocation3], 1024, 1024, 64
        $region16: #{position_forward_prepared.1} parent=11 // pred_fallthru
          _
        // Predicated region
        $region17: #{position_forward_prepared.1} parent=11 // pred_check
          %p136 = pneg %p82
        $region18: #{position_forward_prepared.1} parent=11 // pred_check_branch
          %138 = sbr.rel (%p136) target = $region20
        $region19: #{position_forward_prepared.1} parent=11 // pred_region
          %s140 = ssub.s32 98304, 98304
          %141 = vsyncadd [#allocation6], %s140
          %s142 = sshll.u32 [#allocation5], 4
          %s143 = int_to_ptr.vmem [resolvable:$true] %s142
          %148 = dma.hbm_to_vmem [thread:$0]  %s2, 98304, %s143, [#allocation6], 384, 384, 24
        $region20: #{position_forward_prepared.1} parent=11 // pred_fallthru
          _
      $region12: #{position_forward_prepared.1} parent=5 // pred_fallthru
        _
      %p149 = scmp.lt.s32.totalorder %s14, 2
      // Predicated region
      $region21: #{position_forward_prepared.1} parent=5 // pred_check
        %p150 = pneg %p149
      $region22: #{position_forward_prepared.1} parent=5 // pred_check_branch
        %152 = sbr.rel (%p150) target = $region24
      $region23: #{position_forward_prepared.1} parent=5 // pred_region
        // Predicated region
        $region25: #{position_forward_prepared.1} parent=23 // pred_check
          %p153 = pneg %p34
        $region26: #{position_forward_prepared.1} parent=23 // pred_check_branch
          %155 = sbr.rel (%p153) target = $region28
        $region27: #{position_forward_prepared.1} parent=23 // pred_region
          %p156 = scmp.lt.s32.totalorder %s14, 1
          %s157 = scalar_select %p156, %s14, 1
          %s158 = smul.addr %s157, 6
          %s159 = smul.addr %s158, 4
          %s160 = scalar_lea.vmem %s0, %s159
        $region28: #{position_forward_prepared.1} parent=23 // pred_fallthru
          _
      $region24: #{position_forward_prepared.1} parent=5 // pred_fallthru
        _
      %p161 = scmp.le.s32.totalorder 1, %s14
      %p162 = scmp.lt.s32.totalorder %s14, 3
      %p163 = pnand %p161, %p162
      %p164 = pneg %p163
      // Predicated region
      $region29: #{position_forward_prepared.1} parent=5 // pred_check
        _
      $region30: #{position_forward_prepared.1} parent=5 // pred_check_branch
        %166 = sbr.rel (%p163) target = $region32
      $region31: #{position_forward_prepared.1} parent=5 // pred_region
        %s167 = ssub.s32 %s14, 1
        // Predicated region
        $region33: #{position_forward_prepared.1} parent=31 // pred_check
          %p168 = pneg %p61
        $region34: #{position_forward_prepared.1} parent=31 // pred_check_branch
          %170 = sbr.rel (%p168) target = $region36
        $region35: #{position_forward_prepared.1} parent=31 // pred_region
          %171 = dma.done [#allocation3], 98304
        $region36: #{position_forward_prepared.1} parent=31 // pred_fallthru
          _
        // Predicated region
        $region37: #{position_forward_prepared.1} parent=31 // pred_check
          %p172 = pneg %p82
        $region38: #{position_forward_prepared.1} parent=31 // pred_check_branch
          %174 = sbr.rel (%p172) target = $region40
        $region39: #{position_forward_prepared.1} parent=31 // pred_region
          %175 = dma.done [#allocation6], 98304
        $region40: #{position_forward_prepared.1} parent=31 // pred_fallthru
          _
        %p176 = scmp.lt.s32.totalorder %s19, 1
        %s177 = scalar_select %p176, %s19, 1
        %s178 = smul.addr %s177, 6
        %s179 = smul.addr %s178, 4
        %s180 = scalar_lea.vmem %s0, %s179
        %p181 = pneg %p40
        %p182 = pneg %p37
        %p183 = pneg %p61
        %p184 = pneg %p58
        %p185 = pneg %p82
        %p186 = pneg %p79
        %p187 = pneg %p108
        %p188 = pneg %p105
        %s189 = sand.u32 %s95, 1
        %s190 = scalar_lea.sflag [#allocation4], %s189
        %s191 = sand.u32 %s95, 1
        %s192 = smul.addr %s191, 48
        %s193 = scalar_lea.vmem [#allocation7], %s192
        %p194 = scmp.lt.s32.totalorder %s19, 1
        %s195 = scalar_select %p194, %s19, 1
        %s196 = smul.addr %s195, 6
        %s197 = smul.addr %s196, 4
        %s198 = scalar_lea.vmem %s0, %s197
        %v199 = vld [vmem:[%s198] sm:$0xff]
        %v200 = vld [vmem:[%s198 + $0x8] sm:$0xff]
        %v201 = vld [vmem:[%s198 + $0x10] sm:$0xff]
        %v202 = vld [vmem:[#allocation2] sm:$0xff]
        %v203 = vld [vmem:[#allocation2 + $0x8] sm:$0xff]
        %v204 = vld [vmem:[#allocation2 + $0x10] sm:$0xff]
        %v205 = vld [vmem:[#allocation2 + $0x18] sm:$0xff]
        %v206 = vld [vmem:[#allocation2 + $0x20] sm:$0xff]
        %v207 = vld [vmem:[#allocation2 + $0x28] sm:$0xff]
        %v208 = vld [vmem:[#allocation2 + $0x30] sm:$0xff]
        %v209 = vld [vmem:[#allocation2 + $0x38] sm:$0xff]
        %v210 = vld [vmem:[#allocation2 + $0x40] sm:$0xff]
        %v211 = vld [vmem:[#allocation2 + $0x48] sm:$0xff]
        %v212 = vld [vmem:[#allocation2 + $0x50] sm:$0xff]
        %v213 = vld [vmem:[#allocation2 + $0x58] sm:$0xff]
        %v214 = vld [vmem:[#allocation2 + $0x60] sm:$0xff]
        %v215 = vld [vmem:[#allocation2 + $0x68] sm:$0xff]
        %v216 = vld [vmem:[#allocation2 + $0x70] sm:$0xff]
        %v217 = vld [vmem:[#allocation2 + $0x78] sm:$0xff]
        %v218 = vld [vmem:[#allocation2 + $0x80] sm:$0xff]
        %v219 = vld [vmem:[#allocation2 + $0x88] sm:$0xff]
        %v220 = vld [vmem:[#allocation2 + $0x90] sm:$0xff]
        %v221 = vld [vmem:[#allocation2 + $0x98] sm:$0xff]
        %v222 = vld [vmem:[#allocation2 + $0xa0] sm:$0xff]
        %v223 = vld [vmem:[#allocation2 + $0xa8] sm:$0xff]
        %v224 = vld [vmem:[#allocation2 + $0xb0] sm:$0xff]
        %v225 = vld [vmem:[#allocation2 + $0xb8] sm:$0xff]
        %v226 = vld [vmem:[#allocation2 + $0xc0] sm:$0xff]
        %v227 = vld [vmem:[#allocation2 + $0xc8] sm:$0xff]
        %v228 = vld [vmem:[#allocation2 + $0xd0] sm:$0xff]
        %v229 = vld [vmem:[#allocation2 + $0xd8] sm:$0xff]
        %v230 = vld [vmem:[#allocation2 + $0xe0] sm:$0xff]
        %v231 = vld [vmem:[#allocation2 + $0xe8] sm:$0xff]
        %v232 = vld [vmem:[#allocation2 + $0xf0] sm:$0xff]
        %v233 = vld [vmem:[#allocation2 + $0xf8] sm:$0xff]
        %v234 = vld [vmem:[#allocation2 + $0x100] sm:$0xff]
        %v235 = vld [vmem:[#allocation2 + $0x108] sm:$0xff]
        %v236 = vld [vmem:[#allocation2 + $0x110] sm:$0xff]
        %v237 = vld [vmem:[#allocation2 + $0x118] sm:$0xff]
        %v238 = vld [vmem:[#allocation2 + $0x120] sm:$0xff]
        %v239 = vld [vmem:[#allocation2 + $0x128] sm:$0xff]
        %v240 = vld [vmem:[#allocation2 + $0x130] sm:$0xff]
        %v241 = vld [vmem:[#allocation2 + $0x138] sm:$0xff]
        %v242 = vld [vmem:[#allocation2 + $0x140] sm:$0xff]
        %v243 = vld [vmem:[#allocation2 + $0x148] sm:$0xff]
        %v244 = vld [vmem:[#allocation2 + $0x150] sm:$0xff]
        %v245 = vld [vmem:[#allocation2 + $0x158] sm:$0xff]
        %v246 = vld [vmem:[#allocation2 + $0x160] sm:$0xff]
        %v247 = vld [vmem:[#allocation2 + $0x168] sm:$0xff]
        %v248 = vld [vmem:[#allocation2 + $0x170] sm:$0xff]
        %v249 = vld [vmem:[#allocation2 + $0x178] sm:$0xff]
        %v250 = vld [vmem:[#allocation2 + $0x180] sm:$0xff]
        %v251 = vld [vmem:[#allocation2 + $0x188] sm:$0xff]
        %v252 = vld [vmem:[#allocation2 + $0x190] sm:$0xff]
        %v253 = vld [vmem:[#allocation2 + $0x198] sm:$0xff]
        %v254 = vld [vmem:[#allocation2 + $0x1a0] sm:$0xff]
        %v255 = vld [vmem:[#allocation2 + $0x1a8] sm:$0xff]
        %v256 = vld [vmem:[#allocation2 + $0x1b0] sm:$0xff]
        %v257 = vld [vmem:[#allocation2 + $0x1b8] sm:$0xff]
        %v258 = vld [vmem:[#allocation2 + $0x1c0] sm:$0xff]
        %v259 = vld [vmem:[#allocation2 + $0x1c8] sm:$0xff]
        %v260 = vld [vmem:[#allocation2 + $0x1d0] sm:$0xff]
        %v261 = vld [vmem:[#allocation2 + $0x1d8] sm:$0xff]
        %v262 = vld [vmem:[#allocation2 + $0x1e0] sm:$0xff]
        %v263 = vld [vmem:[#allocation2 + $0x1e8] sm:$0xff]
        %v264 = vld [vmem:[#allocation2 + $0x1f0] sm:$0xff]
        %v265 = vld [vmem:[#allocation2 + $0x1f8] sm:$0xff]
        %v266 = vld [vmem:[#allocation2 + $0x200] sm:$0xff]
        %v267 = vld [vmem:[#allocation2 + $0x208] sm:$0xff]
        %v268 = vld [vmem:[#allocation2 + $0x210] sm:$0xff]
        %v269 = vld [vmem:[#allocation2 + $0x218] sm:$0xff]
        %v270 = vld [vmem:[#allocation2 + $0x220] sm:$0xff]
        %v271 = vld [vmem:[#allocation2 + $0x228] sm:$0xff]
        %v272 = vld [vmem:[#allocation2 + $0x230] sm:$0xff]
        %v273 = vld [vmem:[#allocation2 + $0x238] sm:$0xff]
        %v274 = vld [vmem:[#allocation2 + $0x240] sm:$0xff]
        %v275 = vld [vmem:[#allocation2 + $0x248] sm:$0xff]
        %v276 = vld [vmem:[#allocation2 + $0x250] sm:$0xff]
        %v277 = vld [vmem:[#allocation2 + $0x258] sm:$0xff]
        %v278 = vld [vmem:[#allocation2 + $0x260] sm:$0xff]
        %v279 = vld [vmem:[#allocation2 + $0x268] sm:$0xff]
        %v280 = vld [vmem:[#allocation2 + $0x270] sm:$0xff]
        %v281 = vld [vmem:[#allocation2 + $0x278] sm:$0xff]
        %v282 = vld [vmem:[#allocation2 + $0x280] sm:$0xff]
        %v283 = vld [vmem:[#allocation2 + $0x288] sm:$0xff]
        %v284 = vld [vmem:[#allocation2 + $0x290] sm:$0xff]
        %v285 = vld [vmem:[#allocation2 + $0x298] sm:$0xff]
        %v286 = vld [vmem:[#allocation2 + $0x2a0] sm:$0xff]
        %v287 = vld [vmem:[#allocation2 + $0x2a8] sm:$0xff]
        %v288 = vld [vmem:[#allocation2 + $0x2b0] sm:$0xff]
        %v289 = vld [vmem:[#allocation2 + $0x2b8] sm:$0xff]
        %v290 = vld [vmem:[#allocation2 + $0x2c0] sm:$0xff]
        %v291 = vld [vmem:[#allocation2 + $0x2c8] sm:$0xff]
        %v292 = vld [vmem:[#allocation2 + $0x2d0] sm:$0xff]
        %v293 = vld [vmem:[#allocation2 + $0x2d8] sm:$0xff]
        %v294 = vld [vmem:[#allocation2 + $0x2e0] sm:$0xff]
        %v295 = vld [vmem:[#allocation2 + $0x2e8] sm:$0xff]
        %v296 = vld [vmem:[#allocation2 + $0x2f0] sm:$0xff]
        %v297 = vld [vmem:[#allocation2 + $0x2f8] sm:$0xff]
        %v298 = vld [vmem:[#allocation2 + $0x300] sm:$0xff]
        %v299 = vld [vmem:[#allocation2 + $0x308] sm:$0xff]
        %v300 = vld [vmem:[#allocation2 + $0x310] sm:$0xff]
        %v301 = vld [vmem:[#allocation2 + $0x318] sm:$0xff]
        %v302 = vld [vmem:[#allocation2 + $0x320] sm:$0xff]
        %v303 = vld [vmem:[#allocation2 + $0x328] sm:$0xff]
        %v304 = vld [vmem:[#allocation2 + $0x330] sm:$0xff]
        %v305 = vld [vmem:[#allocation2 + $0x338] sm:$0xff]
        %v306 = vld [vmem:[#allocation2 + $0x340] sm:$0xff]
        %v307 = vld [vmem:[#allocation2 + $0x348] sm:$0xff]
        %v308 = vld [vmem:[#allocation2 + $0x350] sm:$0xff]
        %v309 = vld [vmem:[#allocation2 + $0x358] sm:$0xff]
        %v310 = vld [vmem:[#allocation2 + $0x360] sm:$0xff]
        %v311 = vld [vmem:[#allocation2 + $0x368] sm:$0xff]
        %v312 = vld [vmem:[#allocation2 + $0x370] sm:$0xff]
        %v313 = vld [vmem:[#allocation2 + $0x378] sm:$0xff]
        %v314 = vld [vmem:[#allocation2 + $0x380] sm:$0xff]
        %v315 = vld [vmem:[#allocation2 + $0x388] sm:$0xff]
        %v316 = vld [vmem:[#allocation2 + $0x390] sm:$0xff]
        %v317 = vld [vmem:[#allocation2 + $0x398] sm:$0xff]
        %v318 = vld [vmem:[#allocation2 + $0x3a0] sm:$0xff]
        %v319 = vld [vmem:[#allocation2 + $0x3a8] sm:$0xff]
        %v320 = vld [vmem:[#allocation2 + $0x3b0] sm:$0xff]
        %v321 = vld [vmem:[#allocation2 + $0x3b8] sm:$0xff]
        %v322 = vld [vmem:[#allocation2 + $0x3c0] sm:$0xff]
        %v323 = vld [vmem:[#allocation2 + $0x3c8] sm:$0xff]
        %v324 = vld [vmem:[#allocation2 + $0x3d0] sm:$0xff]
        %v325 = vld [vmem:[#allocation2 + $0x3d8] sm:$0xff]
        %v326 = vld [vmem:[#allocation2 + $0x3e0] sm:$0xff]
        %v327 = vld [vmem:[#allocation2 + $0x3e8] sm:$0xff]
        %v328 = vld [vmem:[#allocation2 + $0x3f0] sm:$0xff]
        %v329 = vld [vmem:[#allocation2 + $0x3f8] sm:$0xff]
        %v330 = vld [vmem:[#allocation2 + $0x400] sm:$0xff]
        %v331 = vld [vmem:[#allocation2 + $0x408] sm:$0xff]
        %v332 = vld [vmem:[#allocation2 + $0x410] sm:$0xff]
        %v333 = vld [vmem:[#allocation2 + $0x418] sm:$0xff]
        %v334 = vld [vmem:[#allocation2 + $0x420] sm:$0xff]
        %v335 = vld [vmem:[#allocation2 + $0x428] sm:$0xff]
        %v336 = vld [vmem:[#allocation2 + $0x430] sm:$0xff]
        %v337 = vld [vmem:[#allocation2 + $0x438] sm:$0xff]
        %v338 = vld [vmem:[#allocation2 + $0x440] sm:$0xff]
        %v339 = vld [vmem:[#allocation2 + $0x448] sm:$0xff]
        %v340 = vld [vmem:[#allocation2 + $0x450] sm:$0xff]
        %v341 = vld [vmem:[#allocation2 + $0x458] sm:$0xff]
        %v342 = vld [vmem:[#allocation2 + $0x460] sm:$0xff]
        %v343 = vld [vmem:[#allocation2 + $0x468] sm:$0xff]
        %v344 = vld [vmem:[#allocation2 + $0x470] sm:$0xff]
        %v345 = vld [vmem:[#allocation2 + $0x478] sm:$0xff]
        %v346 = vld [vmem:[#allocation2 + $0x480] sm:$0xff]
        %v347 = vld [vmem:[#allocation2 + $0x488] sm:$0xff]
        %v348 = vld [vmem:[#allocation2 + $0x490] sm:$0xff]
        %v349 = vld [vmem:[#allocation2 + $0x498] sm:$0xff]
        %v350 = vld [vmem:[#allocation2 + $0x4a0] sm:$0xff]
        %v351 = vld [vmem:[#allocation2 + $0x4a8] sm:$0xff]
        %v352 = vld [vmem:[#allocation2 + $0x4b0] sm:$0xff]
        %v353 = vld [vmem:[#allocation2 + $0x4b8] sm:$0xff]
        %v354 = vld [vmem:[#allocation2 + $0x4c0] sm:$0xff]
        %v355 = vld [vmem:[#allocation2 + $0x4c8] sm:$0xff]
        %v356 = vld [vmem:[#allocation2 + $0x4d0] sm:$0xff]
        %v357 = vld [vmem:[#allocation2 + $0x4d8] sm:$0xff]
        %v358 = vld [vmem:[#allocation2 + $0x4e0] sm:$0xff]
        %v359 = vld [vmem:[#allocation2 + $0x4e8] sm:$0xff]
        %v360 = vld [vmem:[#allocation2 + $0x4f0] sm:$0xff]
        %v361 = vld [vmem:[#allocation2 + $0x4f8] sm:$0xff]
        %v362 = vld [vmem:[#allocation2 + $0x500] sm:$0xff]
        %v363 = vld [vmem:[#allocation2 + $0x508] sm:$0xff]
        %v364 = vld [vmem:[#allocation2 + $0x510] sm:$0xff]
        %v365 = vld [vmem:[#allocation2 + $0x518] sm:$0xff]
        %v366 = vld [vmem:[#allocation2 + $0x520] sm:$0xff]
        %v367 = vld [vmem:[#allocation2 + $0x528] sm:$0xff]
        %v368 = vld [vmem:[#allocation2 + $0x530] sm:$0xff]
        %v369 = vld [vmem:[#allocation2 + $0x538] sm:$0xff]
        %v370 = vld [vmem:[#allocation2 + $0x540] sm:$0xff]
        %v371 = vld [vmem:[#allocation2 + $0x548] sm:$0xff]
        %v372 = vld [vmem:[#allocation2 + $0x550] sm:$0xff]
        %v373 = vld [vmem:[#allocation2 + $0x558] sm:$0xff]
        %v374 = vld [vmem:[#allocation2 + $0x560] sm:$0xff]
        %v375 = vld [vmem:[#allocation2 + $0x568] sm:$0xff]
        %v376 = vld [vmem:[#allocation2 + $0x570] sm:$0xff]
        %v377 = vld [vmem:[#allocation2 + $0x578] sm:$0xff]
        %v378 = vld [vmem:[#allocation2 + $0x580] sm:$0xff]
        %v379 = vld [vmem:[#allocation2 + $0x588] sm:$0xff]
        %v380 = vld [vmem:[#allocation2 + $0x590] sm:$0xff]
        %v381 = vld [vmem:[#allocation2 + $0x598] sm:$0xff]
        %v382 = vld [vmem:[#allocation2 + $0x5a0] sm:$0xff]
        %v383 = vld [vmem:[#allocation2 + $0x5a8] sm:$0xff]
        %v384 = vld [vmem:[#allocation2 + $0x5b0] sm:$0xff]
        %v385 = vld [vmem:[#allocation2 + $0x5b8] sm:$0xff]
        %v386 = vld [vmem:[#allocation2 + $0x5c0] sm:$0xff]
        %v387 = vld [vmem:[#allocation2 + $0x5c8] sm:$0xff]
        %v388 = vld [vmem:[#allocation2 + $0x5d0] sm:$0xff]
        %v389 = vld [vmem:[#allocation2 + $0x5d8] sm:$0xff]
        %v390 = vld [vmem:[#allocation2 + $0x5e0] sm:$0xff]
        %v391 = vld [vmem:[#allocation2 + $0x5e8] sm:$0xff]
        %v392 = vld [vmem:[#allocation2 + $0x5f0] sm:$0xff]
        %v393 = vld [vmem:[#allocation2 + $0x5f8] sm:$0xff]
        %v394 = vld [vmem:[#allocation2 + $0x600] sm:$0xff]
        %v395 = vld [vmem:[#allocation2 + $0x608] sm:$0xff]
        %v396 = vld [vmem:[#allocation2 + $0x610] sm:$0xff]
        %v397 = vld [vmem:[#allocation2 + $0x618] sm:$0xff]
        %v398 = vld [vmem:[#allocation2 + $0x620] sm:$0xff]
        %v399 = vld [vmem:[#allocation2 + $0x628] sm:$0xff]
        %v400 = vld [vmem:[#allocation2 + $0x630] sm:$0xff]
        %v401 = vld [vmem:[#allocation2 + $0x638] sm:$0xff]
        %v402 = vld [vmem:[#allocation2 + $0x640] sm:$0xff]
        %v403 = vld [vmem:[#allocation2 + $0x648] sm:$0xff]
        %v404 = vld [vmem:[#allocation2 + $0x650] sm:$0xff]
        %v405 = vld [vmem:[#allocation2 + $0x658] sm:$0xff]
        %v406 = vld [vmem:[#allocation2 + $0x660] sm:$0xff]
        %v407 = vld [vmem:[#allocation2 + $0x668] sm:$0xff]
        %v408 = vld [vmem:[#allocation2 + $0x670] sm:$0xff]
        %v409 = vld [vmem:[#allocation2 + $0x678] sm:$0xff]
        %v410 = vld [vmem:[#allocation2 + $0x680] sm:$0xff]
        %v411 = vld [vmem:[#allocation2 + $0x688] sm:$0xff]
        %v412 = vld [vmem:[#allocation2 + $0x690] sm:$0xff]
        %v413 = vld [vmem:[#allocation2 + $0x698] sm:$0xff]
        %v414 = vld [vmem:[#allocation2 + $0x6a0] sm:$0xff]
        %v415 = vld [vmem:[#allocation2 + $0x6a8] sm:$0xff]
        %v416 = vld [vmem:[#allocation2 + $0x6b0] sm:$0xff]
        %v417 = vld [vmem:[#allocation2 + $0x6b8] sm:$0xff]
        %v418 = vld [vmem:[#allocation2 + $0x6c0] sm:$0xff]
        %v419 = vld [vmem:[#allocation2 + $0x6c8] sm:$0xff]
        %v420 = vld [vmem:[#allocation2 + $0x6d0] sm:$0xff]
        %v421 = vld [vmem:[#allocation2 + $0x6d8] sm:$0xff]
        %v422 = vld [vmem:[#allocation2 + $0x6e0] sm:$0xff]
        %v423 = vld [vmem:[#allocation2 + $0x6e8] sm:$0xff]
        %v424 = vld [vmem:[#allocation2 + $0x6f0] sm:$0xff]
        %v425 = vld [vmem:[#allocation2 + $0x6f8] sm:$0xff]
        %v426 = vld [vmem:[#allocation2 + $0x700] sm:$0xff]
        %v427 = vld [vmem:[#allocation2 + $0x708] sm:$0xff]
        %v428 = vld [vmem:[#allocation2 + $0x710] sm:$0xff]
        %v429 = vld [vmem:[#allocation2 + $0x718] sm:$0xff]
        %v430 = vld [vmem:[#allocation2 + $0x720] sm:$0xff]
        %v431 = vld [vmem:[#allocation2 + $0x728] sm:$0xff]
        %v432 = vld [vmem:[#allocation2 + $0x730] sm:$0xff]
        %v433 = vld [vmem:[#allocation2 + $0x738] sm:$0xff]
        %v434 = vld [vmem:[#allocation2 + $0x740] sm:$0xff]
        %v435 = vld [vmem:[#allocation2 + $0x748] sm:$0xff]
        %v436 = vld [vmem:[#allocation2 + $0x750] sm:$0xff]
        %v437 = vld [vmem:[#allocation2 + $0x758] sm:$0xff]
        %v438 = vld [vmem:[#allocation2 + $0x760] sm:$0xff]
        %v439 = vld [vmem:[#allocation2 + $0x768] sm:$0xff]
        %v440 = vld [vmem:[#allocation2 + $0x770] sm:$0xff]
        %v441 = vld [vmem:[#allocation2 + $0x778] sm:$0xff]
        %v442 = vld [vmem:[#allocation2 + $0x780] sm:$0xff]
        %v443 = vld [vmem:[#allocation2 + $0x788] sm:$0xff]
        %v444 = vld [vmem:[#allocation2 + $0x790] sm:$0xff]
        %v445 = vld [vmem:[#allocation2 + $0x798] sm:$0xff]
        %v446 = vld [vmem:[#allocation2 + $0x7a0] sm:$0xff]
        %v447 = vld [vmem:[#allocation2 + $0x7a8] sm:$0xff]
        %v448 = vld [vmem:[#allocation2 + $0x7b0] sm:$0xff]
        %v449 = vld [vmem:[#allocation2 + $0x7b8] sm:$0xff]
        %v450 = vld [vmem:[#allocation2 + $0x7c0] sm:$0xff]
        %v451 = vld [vmem:[#allocation2 + $0x7c8] sm:$0xff]
        %v452 = vld [vmem:[#allocation2 + $0x7d0] sm:$0xff]
        %v453 = vld [vmem:[#allocation2 + $0x7d8] sm:$0xff]
        %v454 = vld [vmem:[#allocation2 + $0x7e0] sm:$0xff]
        %v455 = vld [vmem:[#allocation2 + $0x7e8] sm:$0xff]
        %v456 = vld [vmem:[#allocation2 + $0x7f0] sm:$0xff]
        %v457 = vld [vmem:[#allocation2 + $0x7f8] sm:$0xff]
        %v458 = vld [vmem:[#allocation2 + $0x800] sm:$0xff]
        %v459 = vld [vmem:[#allocation2 + $0x808] sm:$0xff]
        %v460 = vld [vmem:[#allocation2 + $0x810] sm:$0xff]
        %v461 = vld [vmem:[#allocation2 + $0x818] sm:$0xff]
        %v462 = vld [vmem:[#allocation2 + $0x820] sm:$0xff]
        %v463 = vld [vmem:[#allocation2 + $0x828] sm:$0xff]
        %v464 = vld [vmem:[#allocation2 + $0x830] sm:$0xff]
        %v465 = vld [vmem:[#allocation2 + $0x838] sm:$0xff]
        %v466 = vld [vmem:[#allocation2 + $0x840] sm:$0xff]
        %v467 = vld [vmem:[#allocation2 + $0x848] sm:$0xff]
        %v468 = vld [vmem:[#allocation2 + $0x850] sm:$0xff]
        %v469 = vld [vmem:[#allocation2 + $0x858] sm:$0xff]
        %v470 = vld [vmem:[#allocation2 + $0x860] sm:$0xff]
        %v471 = vld [vmem:[#allocation2 + $0x868] sm:$0xff]
        %v472 = vld [vmem:[#allocation2 + $0x870] sm:$0xff]
        %v473 = vld [vmem:[#allocation2 + $0x878] sm:$0xff]
        %v474 = vld [vmem:[#allocation2 + $0x880] sm:$0xff]
        %v475 = vld [vmem:[#allocation2 + $0x888] sm:$0xff]
        %v476 = vld [vmem:[#allocation2 + $0x890] sm:$0xff]
        %v477 = vld [vmem:[#allocation2 + $0x898] sm:$0xff]
        %v478 = vld [vmem:[#allocation2 + $0x8a0] sm:$0xff]
        %v479 = vld [vmem:[#allocation2 + $0x8a8] sm:$0xff]
        %v480 = vld [vmem:[#allocation2 + $0x8b0] sm:$0xff]
        %v481 = vld [vmem:[#allocation2 + $0x8b8] sm:$0xff]
        %v482 = vld [vmem:[#allocation2 + $0x8c0] sm:$0xff]
        %v483 = vld [vmem:[#allocation2 + $0x8c8] sm:$0xff]
        %v484 = vld [vmem:[#allocation2 + $0x8d0] sm:$0xff]
        %v485 = vld [vmem:[#allocation2 + $0x8d8] sm:$0xff]
        %v486 = vld [vmem:[#allocation2 + $0x8e0] sm:$0xff]
        %v487 = vld [vmem:[#allocation2 + $0x8e8] sm:$0xff]
        %v488 = vld [vmem:[#allocation2 + $0x8f0] sm:$0xff]
        %v489 = vld [vmem:[#allocation2 + $0x8f8] sm:$0xff]
        %v490 = vld [vmem:[#allocation2 + $0x900] sm:$0xff]
        %v491 = vld [vmem:[#allocation2 + $0x908] sm:$0xff]
        %v492 = vld [vmem:[#allocation2 + $0x910] sm:$0xff]
        %v493 = vld [vmem:[#allocation2 + $0x918] sm:$0xff]
        %v494 = vld [vmem:[#allocation2 + $0x920] sm:$0xff]
        %v495 = vld [vmem:[#allocation2 + $0x928] sm:$0xff]
        %v496 = vld [vmem:[#allocation2 + $0x930] sm:$0xff]
        %v497 = vld [vmem:[#allocation2 + $0x938] sm:$0xff]
        %v498 = vld [vmem:[#allocation2 + $0x940] sm:$0xff]
        %v499 = vld [vmem:[#allocation2 + $0x948] sm:$0xff]
        %v500 = vld [vmem:[#allocation2 + $0x950] sm:$0xff]
        %v501 = vld [vmem:[#allocation2 + $0x958] sm:$0xff]
        %v502 = vld [vmem:[#allocation2 + $0x960] sm:$0xff]
        %v503 = vld [vmem:[#allocation2 + $0x968] sm:$0xff]
        %v504 = vld [vmem:[#allocation2 + $0x970] sm:$0xff]
        %v505 = vld [vmem:[#allocation2 + $0x978] sm:$0xff]
        %v506 = vld [vmem:[#allocation2 + $0x980] sm:$0xff]
        %v507 = vld [vmem:[#allocation2 + $0x988] sm:$0xff]
        %v508 = vld [vmem:[#allocation2 + $0x990] sm:$0xff]
        %v509 = vld [vmem:[#allocation2 + $0x998] sm:$0xff]
        %v510 = vld [vmem:[#allocation2 + $0x9a0] sm:$0xff]
        %v511 = vld [vmem:[#allocation2 + $0x9a8] sm:$0xff]
        %v512 = vld [vmem:[#allocation2 + $0x9b0] sm:$0xff]
        %v513 = vld [vmem:[#allocation2 + $0x9b8] sm:$0xff]
        %v514 = vld [vmem:[#allocation2 + $0x9c0] sm:$0xff]
        %v515 = vld [vmem:[#allocation2 + $0x9c8] sm:$0xff]
        %v516 = vld [vmem:[#allocation2 + $0x9d0] sm:$0xff]
        %v517 = vld [vmem:[#allocation2 + $0x9d8] sm:$0xff]
        %v518 = vld [vmem:[#allocation2 + $0x9e0] sm:$0xff]
        %v519 = vld [vmem:[#allocation2 + $0x9e8] sm:$0xff]
        %v520 = vld [vmem:[#allocation2 + $0x9f0] sm:$0xff]
        %v521 = vld [vmem:[#allocation2 + $0x9f8] sm:$0xff]
        %v522 = vld [vmem:[#allocation2 + $0xa00] sm:$0xff]
        %v523 = vld [vmem:[#allocation2 + $0xa08] sm:$0xff]
        %v524 = vld [vmem:[#allocation2 + $0xa10] sm:$0xff]
        %v525 = vld [vmem:[#allocation2 + $0xa18] sm:$0xff]
        %v526 = vld [vmem:[#allocation2 + $0xa20] sm:$0xff]
        %v527 = vld [vmem:[#allocation2 + $0xa28] sm:$0xff]
        %v528 = vld [vmem:[#allocation2 + $0xa30] sm:$0xff]
        %v529 = vld [vmem:[#allocation2 + $0xa38] sm:$0xff]
        %v530 = vld [vmem:[#allocation2 + $0xa40] sm:$0xff]
        %v531 = vld [vmem:[#allocation2 + $0xa48] sm:$0xff]
        %v532 = vld [vmem:[#allocation2 + $0xa50] sm:$0xff]
        %v533 = vld [vmem:[#allocation2 + $0xa58] sm:$0xff]
        %v534 = vld [vmem:[#allocation2 + $0xa60] sm:$0xff]
        %v535 = vld [vmem:[#allocation2 + $0xa68] sm:$0xff]
        %v536 = vld [vmem:[#allocation2 + $0xa70] sm:$0xff]
        %v537 = vld [vmem:[#allocation2 + $0xa78] sm:$0xff]
        %v538 = vld [vmem:[#allocation2 + $0xa80] sm:$0xff]
        %v539 = vld [vmem:[#allocation2 + $0xa88] sm:$0xff]
        %v540 = vld [vmem:[#allocation2 + $0xa90] sm:$0xff]
        %v541 = vld [vmem:[#allocation2 + $0xa98] sm:$0xff]
        %v542 = vld [vmem:[#allocation2 + $0xaa0] sm:$0xff]
        %v543 = vld [vmem:[#allocation2 + $0xaa8] sm:$0xff]
        %v544 = vld [vmem:[#allocation2 + $0xab0] sm:$0xff]
        %v545 = vld [vmem:[#allocation2 + $0xab8] sm:$0xff]
        %v546 = vld [vmem:[#allocation2 + $0xac0] sm:$0xff]
        %v547 = vld [vmem:[#allocation2 + $0xac8] sm:$0xff]
        %v548 = vld [vmem:[#allocation2 + $0xad0] sm:$0xff]
        %v549 = vld [vmem:[#allocation2 + $0xad8] sm:$0xff]
        %v550 = vld [vmem:[#allocation2 + $0xae0] sm:$0xff]
        %v551 = vld [vmem:[#allocation2 + $0xae8] sm:$0xff]
        %v552 = vld [vmem:[#allocation2 + $0xaf0] sm:$0xff]
        %v553 = vld [vmem:[#allocation2 + $0xaf8] sm:$0xff]
        %v554 = vld [vmem:[#allocation2 + $0xb00] sm:$0xff]
        %v555 = vld [vmem:[#allocation2 + $0xb08] sm:$0xff]
        %v556 = vld [vmem:[#allocation2 + $0xb10] sm:$0xff]
        %v557 = vld [vmem:[#allocation2 + $0xb18] sm:$0xff]
        %v558 = vld [vmem:[#allocation2 + $0xb20] sm:$0xff]
        %v559 = vld [vmem:[#allocation2 + $0xb28] sm:$0xff]
        %v560 = vld [vmem:[#allocation2 + $0xb30] sm:$0xff]
        %v561 = vld [vmem:[#allocation2 + $0xb38] sm:$0xff]
        %v562 = vld [vmem:[#allocation2 + $0xb40] sm:$0xff]
        %v563 = vld [vmem:[#allocation2 + $0xb48] sm:$0xff]
        %v564 = vld [vmem:[#allocation2 + $0xb50] sm:$0xff]
        %v565 = vld [vmem:[#allocation2 + $0xb58] sm:$0xff]
        %v566 = vld [vmem:[#allocation2 + $0xb60] sm:$0xff]
        %v567 = vld [vmem:[#allocation2 + $0xb68] sm:$0xff]
        %v568 = vld [vmem:[#allocation2 + $0xb70] sm:$0xff]
        %v569 = vld [vmem:[#allocation2 + $0xb78] sm:$0xff]
        %v570 = vld [vmem:[#allocation2 + $0xb80] sm:$0xff]
        %v571 = vld [vmem:[#allocation2 + $0xb88] sm:$0xff]
        %v572 = vld [vmem:[#allocation2 + $0xb90] sm:$0xff]
        %v573 = vld [vmem:[#allocation2 + $0xb98] sm:$0xff]
        %v574 = vld [vmem:[#allocation2 + $0xba0] sm:$0xff]
        %v575 = vld [vmem:[#allocation2 + $0xba8] sm:$0xff]
        %v576 = vld [vmem:[#allocation2 + $0xbb0] sm:$0xff]
        %v577 = vld [vmem:[#allocation2 + $0xbb8] sm:$0xff]
        %v578 = vld [vmem:[#allocation2 + $0xbc0] sm:$0xff]
        %v579 = vld [vmem:[#allocation2 + $0xbc8] sm:$0xff]
        %v580 = vld [vmem:[#allocation2 + $0xbd0] sm:$0xff]
        %v581 = vld [vmem:[#allocation2 + $0xbd8] sm:$0xff]
        %v582 = vld [vmem:[#allocation2 + $0xbe0] sm:$0xff]
        %v583 = vld [vmem:[#allocation2 + $0xbe8] sm:$0xff]
        %v584 = vld [vmem:[#allocation2 + $0xbf0] sm:$0xff]
        %v585 = vld [vmem:[#allocation2 + $0xbf8] sm:$0xff]
        %v586 = vld [vmem:[#allocation2 + $0xc00] sm:$0xff]
        %v587 = vld [vmem:[#allocation2 + $0xc08] sm:$0xff]
        %v588 = vld [vmem:[#allocation2 + $0xc10] sm:$0xff]
        %v589 = vld [vmem:[#allocation2 + $0xc18] sm:$0xff]
        %v590 = vld [vmem:[#allocation2 + $0xc20] sm:$0xff]
        %v591 = vld [vmem:[#allocation2 + $0xc28] sm:$0xff]
        %v592 = vld [vmem:[#allocation2 + $0xc30] sm:$0xff]
        %v593 = vld [vmem:[#allocation2 + $0xc38] sm:$0xff]
        %v594 = vld [vmem:[#allocation2 + $0xc40] sm:$0xff]
        %v595 = vld [vmem:[#allocation2 + $0xc48] sm:$0xff]
        %v596 = vld [vmem:[#allocation2 + $0xc50] sm:$0xff]
        %v597 = vld [vmem:[#allocation2 + $0xc58] sm:$0xff]
        %v598 = vld [vmem:[#allocation2 + $0xc60] sm:$0xff]
        %v599 = vld [vmem:[#allocation2 + $0xc68] sm:$0xff]
        %v600 = vld [vmem:[#allocation2 + $0xc70] sm:$0xff]
        %v601 = vld [vmem:[#allocation2 + $0xc78] sm:$0xff]
        %v602 = vld [vmem:[#allocation2 + $0xc80] sm:$0xff]
        %v603 = vld [vmem:[#allocation2 + $0xc88] sm:$0xff]
        %v604 = vld [vmem:[#allocation2 + $0xc90] sm:$0xff]
        %v605 = vld [vmem:[#allocation2 + $0xc98] sm:$0xff]
        %v606 = vld [vmem:[#allocation2 + $0xca0] sm:$0xff]
        %v607 = vld [vmem:[#allocation2 + $0xca8] sm:$0xff]
        %v608 = vld [vmem:[#allocation2 + $0xcb0] sm:$0xff]
        %v609 = vld [vmem:[#allocation2 + $0xcb8] sm:$0xff]
        %v610 = vld [vmem:[#allocation2 + $0xcc0] sm:$0xff]
        %v611 = vld [vmem:[#allocation2 + $0xcc8] sm:$0xff]
        %v612 = vld [vmem:[#allocation2 + $0xcd0] sm:$0xff]
        %v613 = vld [vmem:[#allocation2 + $0xcd8] sm:$0xff]
        %v614 = vld [vmem:[#allocation2 + $0xce0] sm:$0xff]
        %v615 = vld [vmem:[#allocation2 + $0xce8] sm:$0xff]
        %v616 = vld [vmem:[#allocation2 + $0xcf0] sm:$0xff]
        %v617 = vld [vmem:[#allocation2 + $0xcf8] sm:$0xff]
        %v618 = vld [vmem:[#allocation2 + $0xd00] sm:$0xff]
        %v619 = vld [vmem:[#allocation2 + $0xd08] sm:$0xff]
        %v620 = vld [vmem:[#allocation2 + $0xd10] sm:$0xff]
        %v621 = vld [vmem:[#allocation2 + $0xd18] sm:$0xff]
        %v622 = vld [vmem:[#allocation2 + $0xd20] sm:$0xff]
        %v623 = vld [vmem:[#allocation2 + $0xd28] sm:$0xff]
        %v624 = vld [vmem:[#allocation2 + $0xd30] sm:$0xff]
        %v625 = vld [vmem:[#allocation2 + $0xd38] sm:$0xff]
        %v626 = vld [vmem:[#allocation2 + $0xd40] sm:$0xff]
        %v627 = vld [vmem:[#allocation2 + $0xd48] sm:$0xff]
        %v628 = vld [vmem:[#allocation2 + $0xd50] sm:$0xff]
        %v629 = vld [vmem:[#allocation2 + $0xd58] sm:$0xff]
        %v630 = vld [vmem:[#allocation2 + $0xd60] sm:$0xff]
        %v631 = vld [vmem:[#allocation2 + $0xd68] sm:$0xff]
        %v632 = vld [vmem:[#allocation2 + $0xd70] sm:$0xff]
        %v633 = vld [vmem:[#allocation2 + $0xd78] sm:$0xff]
        %v634 = vld [vmem:[#allocation2 + $0xd80] sm:$0xff]
        %v635 = vld [vmem:[#allocation2 + $0xd88] sm:$0xff]
        %v636 = vld [vmem:[#allocation2 + $0xd90] sm:$0xff]
        %v637 = vld [vmem:[#allocation2 + $0xd98] sm:$0xff]
        %v638 = vld [vmem:[#allocation2 + $0xda0] sm:$0xff]
        %v639 = vld [vmem:[#allocation2 + $0xda8] sm:$0xff]
        %v640 = vld [vmem:[#allocation2 + $0xdb0] sm:$0xff]
        %v641 = vld [vmem:[#allocation2 + $0xdb8] sm:$0xff]
        %v642 = vld [vmem:[#allocation2 + $0xdc0] sm:$0xff]
        %v643 = vld [vmem:[#allocation2 + $0xdc8] sm:$0xff]
        %v644 = vld [vmem:[#allocation2 + $0xdd0] sm:$0xff]
        %v645 = vld [vmem:[#allocation2 + $0xdd8] sm:$0xff]
        %v646 = vld [vmem:[#allocation2 + $0xde0] sm:$0xff]
        %v647 = vld [vmem:[#allocation2 + $0xde8] sm:$0xff]
        %v648 = vld [vmem:[#allocation2 + $0xdf0] sm:$0xff]
        %v649 = vld [vmem:[#allocation2 + $0xdf8] sm:$0xff]
        %v650 = vld [vmem:[#allocation2 + $0xe00] sm:$0xff]
        %v651 = vld [vmem:[#allocation2 + $0xe08] sm:$0xff]
        %v652 = vld [vmem:[#allocation2 + $0xe10] sm:$0xff]
        %v653 = vld [vmem:[#allocation2 + $0xe18] sm:$0xff]
        %v654 = vld [vmem:[#allocation2 + $0xe20] sm:$0xff]
        %v655 = vld [vmem:[#allocation2 + $0xe28] sm:$0xff]
        %v656 = vld [vmem:[#allocation2 + $0xe30] sm:$0xff]
        %v657 = vld [vmem:[#allocation2 + $0xe38] sm:$0xff]
        %v658 = vld [vmem:[#allocation2 + $0xe40] sm:$0xff]
        %v659 = vld [vmem:[#allocation2 + $0xe48] sm:$0xff]
        %v660 = vld [vmem:[#allocation2 + $0xe50] sm:$0xff]
        %v661 = vld [vmem:[#allocation2 + $0xe58] sm:$0xff]
        %v662 = vld [vmem:[#allocation2 + $0xe60] sm:$0xff]
        %v663 = vld [vmem:[#allocation2 + $0xe68] sm:$0xff]
        %v664 = vld [vmem:[#allocation2 + $0xe70] sm:$0xff]
        %v665 = vld [vmem:[#allocation2 + $0xe78] sm:$0xff]
        %v666 = vld [vmem:[#allocation2 + $0xe80] sm:$0xff]
        %v667 = vld [vmem:[#allocation2 + $0xe88] sm:$0xff]
        %v668 = vld [vmem:[#allocation2 + $0xe90] sm:$0xff]
        %v669 = vld [vmem:[#allocation2 + $0xe98] sm:$0xff]
        %v670 = vld [vmem:[#allocation2 + $0xea0] sm:$0xff]
        %v671 = vld [vmem:[#allocation2 + $0xea8] sm:$0xff]
        %v672 = vld [vmem:[#allocation2 + $0xeb0] sm:$0xff]
        %v673 = vld [vmem:[#allocation2 + $0xeb8] sm:$0xff]
        %v674 = vld [vmem:[#allocation2 + $0xec0] sm:$0xff]
        %v675 = vld [vmem:[#allocation2 + $0xec8] sm:$0xff]
        %v676 = vld [vmem:[#allocation2 + $0xed0] sm:$0xff]
        %v677 = vld [vmem:[#allocation2 + $0xed8] sm:$0xff]
        %v678 = vld [vmem:[#allocation2 + $0xee0] sm:$0xff]
        %v679 = vld [vmem:[#allocation2 + $0xee8] sm:$0xff]
        %v680 = vld [vmem:[#allocation2 + $0xef0] sm:$0xff]
        %v681 = vld [vmem:[#allocation2 + $0xef8] sm:$0xff]
        %v682 = vld [vmem:[#allocation2 + $0xf00] sm:$0xff]
        %v683 = vld [vmem:[#allocation2 + $0xf08] sm:$0xff]
        %v684 = vld [vmem:[#allocation2 + $0xf10] sm:$0xff]
        %v685 = vld [vmem:[#allocation2 + $0xf18] sm:$0xff]
        %v686 = vld [vmem:[#allocation2 + $0xf20] sm:$0xff]
        %v687 = vld [vmem:[#allocation2 + $0xf28] sm:$0xff]
        %v688 = vld [vmem:[#allocation2 + $0xf30] sm:$0xff]
        %v689 = vld [vmem:[#allocation2 + $0xf38] sm:$0xff]
        %v690 = vld [vmem:[#allocation2 + $0xf40] sm:$0xff]
        %v691 = vld [vmem:[#allocation2 + $0xf48] sm:$0xff]
        %v692 = vld [vmem:[#allocation2 + $0xf50] sm:$0xff]
        %v693 = vld [vmem:[#allocation2 + $0xf58] sm:$0xff]
        %v694 = vld [vmem:[#allocation2 + $0xf60] sm:$0xff]
        %v695 = vld [vmem:[#allocation2 + $0xf68] sm:$0xff]
        %v696 = vld [vmem:[#allocation2 + $0xf70] sm:$0xff]
        %v697 = vld [vmem:[#allocation2 + $0xf78] sm:$0xff]
        %v698 = vld [vmem:[#allocation2 + $0xf80] sm:$0xff]
        %v699 = vld [vmem:[#allocation2 + $0xf88] sm:$0xff]
        %v700 = vld [vmem:[#allocation2 + $0xf90] sm:$0xff]
        %v701 = vld [vmem:[#allocation2 + $0xf98] sm:$0xff]
        %v702 = vld [vmem:[#allocation2 + $0xfa0] sm:$0xff]
        %v703 = vld [vmem:[#allocation2 + $0xfa8] sm:$0xff]
        %v704 = vld [vmem:[#allocation2 + $0xfb0] sm:$0xff]
        %v705 = vld [vmem:[#allocation2 + $0xfb8] sm:$0xff]
        %v706 = vld [vmem:[#allocation2 + $0xfc0] sm:$0xff]
        %v707 = vld [vmem:[#allocation2 + $0xfc8] sm:$0xff]
        %v708 = vld [vmem:[#allocation2 + $0xfd0] sm:$0xff]
        %v709 = vld [vmem:[#allocation2 + $0xfd8] sm:$0xff]
        %v710 = vld [vmem:[#allocation2 + $0xfe0] sm:$0xff]
        %v711 = vld [vmem:[#allocation2 + $0xfe8] sm:$0xff]
        %v712 = vld [vmem:[#allocation2 + $0xff0] sm:$0xff]
        %v713 = vld [vmem:[#allocation2 + $0xff8] sm:$0xff]
        %v714 = vld [vmem:[#allocation2 + $0x1000] sm:$0xff]
        %v715 = vld [vmem:[#allocation2 + $0x1008] sm:$0xff]
        %v716 = vld [vmem:[#allocation2 + $0x1010] sm:$0xff]
        %v717 = vld [vmem:[#allocation2 + $0x1018] sm:$0xff]
        %v718 = vld [vmem:[#allocation2 + $0x1020] sm:$0xff]
        %v719 = vld [vmem:[#allocation2 + $0x1028] sm:$0xff]
        %v720 = vld [vmem:[#allocation2 + $0x1030] sm:$0xff]
        %v721 = vld [vmem:[#allocation2 + $0x1038] sm:$0xff]
        %v722 = vld [vmem:[#allocation2 + $0x1040] sm:$0xff]
        %v723 = vld [vmem:[#allocation2 + $0x1048] sm:$0xff]
        %v724 = vld [vmem:[#allocation2 + $0x1050] sm:$0xff]
        %v725 = vld [vmem:[#allocation2 + $0x1058] sm:$0xff]
        %v726 = vld [vmem:[#allocation2 + $0x1060] sm:$0xff]
        %v727 = vld [vmem:[#allocation2 + $0x1068] sm:$0xff]
        %v728 = vld [vmem:[#allocation2 + $0x1070] sm:$0xff]
        %v729 = vld [vmem:[#allocation2 + $0x1078] sm:$0xff]
        %v730 = vld [vmem:[#allocation2 + $0x1080] sm:$0xff]
        %v731 = vld [vmem:[#allocation2 + $0x1088] sm:$0xff]
        %v732 = vld [vmem:[#allocation2 + $0x1090] sm:$0xff]
        %v733 = vld [vmem:[#allocation2 + $0x1098] sm:$0xff]
        %v734 = vld [vmem:[#allocation2 + $0x10a0] sm:$0xff]
        %v735 = vld [vmem:[#allocation2 + $0x10a8] sm:$0xff]
        %v736 = vld [vmem:[#allocation2 + $0x10b0] sm:$0xff]
        %v737 = vld [vmem:[#allocation2 + $0x10b8] sm:$0xff]
        %v738 = vld [vmem:[#allocation2 + $0x10c0] sm:$0xff]
        %v739 = vld [vmem:[#allocation2 + $0x10c8] sm:$0xff]
        %v740 = vld [vmem:[#allocation2 + $0x10d0] sm:$0xff]
        %v741 = vld [vmem:[#allocation2 + $0x10d8] sm:$0xff]
        %v742 = vld [vmem:[#allocation2 + $0x10e0] sm:$0xff]
        %v743 = vld [vmem:[#allocation2 + $0x10e8] sm:$0xff]
        %v744 = vld [vmem:[#allocation2 + $0x10f0] sm:$0xff]
        %v745 = vld [vmem:[#allocation2 + $0x10f8] sm:$0xff]
        %v746 = vld [vmem:[#allocation2 + $0x1100] sm:$0xff]
        %v747 = vld [vmem:[#allocation2 + $0x1108] sm:$0xff]
        %v748 = vld [vmem:[#allocation2 + $0x1110] sm:$0xff]
        %v749 = vld [vmem:[#allocation2 + $0x1118] sm:$0xff]
        %v750 = vld [vmem:[#allocation2 + $0x1120] sm:$0xff]
        %v751 = vld [vmem:[#allocation2 + $0x1128] sm:$0xff]
        %v752 = vld [vmem:[#allocation2 + $0x1130] sm:$0xff]
        %v753 = vld [vmem:[#allocation2 + $0x1138] sm:$0xff]
        %v754 = vld [vmem:[#allocation2 + $0x1140] sm:$0xff]
        %v755 = vld [vmem:[#allocation2 + $0x1148] sm:$0xff]
        %v756 = vld [vmem:[#allocation2 + $0x1150] sm:$0xff]
        %v757 = vld [vmem:[#allocation2 + $0x1158] sm:$0xff]
        %v758 = vld [vmem:[#allocation2 + $0x1160] sm:$0xff]
        %v759 = vld [vmem:[#allocation2 + $0x1168] sm:$0xff]
        %v760 = vld [vmem:[#allocation2 + $0x1170] sm:$0xff]
        %v761 = vld [vmem:[#allocation2 + $0x1178] sm:$0xff]
        %v762 = vld [vmem:[#allocation2 + $0x1180] sm:$0xff]
        %v763 = vld [vmem:[#allocation2 + $0x1188] sm:$0xff]
        %v764 = vld [vmem:[#allocation2 + $0x1190] sm:$0xff]
        %v765 = vld [vmem:[#allocation2 + $0x1198] sm:$0xff]
        %v766 = vld [vmem:[#allocation2 + $0x11a0] sm:$0xff]
        %v767 = vld [vmem:[#allocation2 + $0x11a8] sm:$0xff]
        %v768 = vld [vmem:[#allocation2 + $0x11b0] sm:$0xff]
        %v769 = vld [vmem:[#allocation2 + $0x11b8] sm:$0xff]
        %v770 = vld [vmem:[#allocation2 + $0x11c0] sm:$0xff]
        %v771 = vld [vmem:[#allocation2 + $0x11c8] sm:$0xff]
        %v772 = vld [vmem:[#allocation2 + $0x11d0] sm:$0xff]
        %v773 = vld [vmem:[#allocation2 + $0x11d8] sm:$0xff]
        %v774 = vld [vmem:[#allocation2 + $0x11e0] sm:$0xff]
        %v775 = vld [vmem:[#allocation2 + $0x11e8] sm:$0xff]
        %v776 = vld [vmem:[#allocation2 + $0x11f0] sm:$0xff]
        %v777 = vld [vmem:[#allocation2 + $0x11f8] sm:$0xff]
        %v778 = vld [vmem:[#allocation2 + $0x1200] sm:$0xff]
        %v779 = vld [vmem:[#allocation2 + $0x1208] sm:$0xff]
        %v780 = vld [vmem:[#allocation2 + $0x1210] sm:$0xff]
        %v781 = vld [vmem:[#allocation2 + $0x1218] sm:$0xff]
        %v782 = vld [vmem:[#allocation2 + $0x1220] sm:$0xff]
        %v783 = vld [vmem:[#allocation2 + $0x1228] sm:$0xff]
        %v784 = vld [vmem:[#allocation2 + $0x1230] sm:$0xff]
        %v785 = vld [vmem:[#allocation2 + $0x1238] sm:$0xff]
        %v786 = vld [vmem:[#allocation2 + $0x1240] sm:$0xff]
        %v787 = vld [vmem:[#allocation2 + $0x1248] sm:$0xff]
        %v788 = vld [vmem:[#allocation2 + $0x1250] sm:$0xff]
        %v789 = vld [vmem:[#allocation2 + $0x1258] sm:$0xff]
        %v790 = vld [vmem:[#allocation2 + $0x1260] sm:$0xff]
        %v791 = vld [vmem:[#allocation2 + $0x1268] sm:$0xff]
        %v792 = vld [vmem:[#allocation2 + $0x1270] sm:$0xff]
        %v793 = vld [vmem:[#allocation2 + $0x1278] sm:$0xff]
        %v794 = vld [vmem:[#allocation2 + $0x1280] sm:$0xff]
        %v795 = vld [vmem:[#allocation2 + $0x1288] sm:$0xff]
        %v796 = vld [vmem:[#allocation2 + $0x1290] sm:$0xff]
        %v797 = vld [vmem:[#allocation2 + $0x1298] sm:$0xff]
        %v798 = vld [vmem:[#allocation2 + $0x12a0] sm:$0xff]
        %v799 = vld [vmem:[#allocation2 + $0x12a8] sm:$0xff]
        %v800 = vld [vmem:[#allocation2 + $0x12b0] sm:$0xff]
        %v801 = vld [vmem:[#allocation2 + $0x12b8] sm:$0xff]
        %v802 = vld [vmem:[#allocation2 + $0x12c0] sm:$0xff]
        %v803 = vld [vmem:[#allocation2 + $0x12c8] sm:$0xff]
        %v804 = vld [vmem:[#allocation2 + $0x12d0] sm:$0xff]
        %v805 = vld [vmem:[#allocation2 + $0x12d8] sm:$0xff]
        %v806 = vld [vmem:[#allocation2 + $0x12e0] sm:$0xff]
        %v807 = vld [vmem:[#allocation2 + $0x12e8] sm:$0xff]
        %v808 = vld [vmem:[#allocation2 + $0x12f0] sm:$0xff]
        %v809 = vld [vmem:[#allocation2 + $0x12f8] sm:$0xff]
        %v810 = vld [vmem:[#allocation2 + $0x1300] sm:$0xff]
        %v811 = vld [vmem:[#allocation2 + $0x1308] sm:$0xff]
        %v812 = vld [vmem:[#allocation2 + $0x1310] sm:$0xff]
        %v813 = vld [vmem:[#allocation2 + $0x1318] sm:$0xff]
        %v814 = vld [vmem:[#allocation2 + $0x1320] sm:$0xff]
        %v815 = vld [vmem:[#allocation2 + $0x1328] sm:$0xff]
        %v816 = vld [vmem:[#allocation2 + $0x1330] sm:$0xff]
        %v817 = vld [vmem:[#allocation2 + $0x1338] sm:$0xff]
        %v818 = vld [vmem:[#allocation2 + $0x1340] sm:$0xff]
        %v819 = vld [vmem:[#allocation2 + $0x1348] sm:$0xff]
        %v820 = vld [vmem:[#allocation2 + $0x1350] sm:$0xff]
        %v821 = vld [vmem:[#allocation2 + $0x1358] sm:$0xff]
        %v822 = vld [vmem:[#allocation2 + $0x1360] sm:$0xff]
        %v823 = vld [vmem:[#allocation2 + $0x1368] sm:$0xff]
        %v824 = vld [vmem:[#allocation2 + $0x1370] sm:$0xff]
        %v825 = vld [vmem:[#allocation2 + $0x1378] sm:$0xff]
        %v826 = vld [vmem:[#allocation2 + $0x1380] sm:$0xff]
        %v827 = vld [vmem:[#allocation2 + $0x1388] sm:$0xff]
        %v828 = vld [vmem:[#allocation2 + $0x1390] sm:$0xff]
        %v829 = vld [vmem:[#allocation2 + $0x1398] sm:$0xff]
        %v830 = vld [vmem:[#allocation2 + $0x13a0] sm:$0xff]
        %v831 = vld [vmem:[#allocation2 + $0x13a8] sm:$0xff]
        %v832 = vld [vmem:[#allocation2 + $0x13b0] sm:$0xff]
        %v833 = vld [vmem:[#allocation2 + $0x13b8] sm:$0xff]
        %v834 = vld [vmem:[#allocation2 + $0x13c0] sm:$0xff]
        %v835 = vld [vmem:[#allocation2 + $0x13c8] sm:$0xff]
        %v836 = vld [vmem:[#allocation2 + $0x13d0] sm:$0xff]
        %v837 = vld [vmem:[#allocation2 + $0x13d8] sm:$0xff]
        %v838 = vld [vmem:[#allocation2 + $0x13e0] sm:$0xff]
        %v839 = vld [vmem:[#allocation2 + $0x13e8] sm:$0xff]
        %v840 = vld [vmem:[#allocation2 + $0x13f0] sm:$0xff]
        %v841 = vld [vmem:[#allocation2 + $0x13f8] sm:$0xff]
        %v842 = vld [vmem:[#allocation2 + $0x1400] sm:$0xff]
        %v843 = vld [vmem:[#allocation2 + $0x1408] sm:$0xff]
        %v844 = vld [vmem:[#allocation2 + $0x1410] sm:$0xff]
        %v845 = vld [vmem:[#allocation2 + $0x1418] sm:$0xff]
        %v846 = vld [vmem:[#allocation2 + $0x1420] sm:$0xff]
        %v847 = vld [vmem:[#allocation2 + $0x1428] sm:$0xff]
        %v848 = vld [vmem:[#allocation2 + $0x1430] sm:$0xff]
        %v849 = vld [vmem:[#allocation2 + $0x1438] sm:$0xff]
        %v850 = vld [vmem:[#allocation2 + $0x1440] sm:$0xff]
        %v851 = vld [vmem:[#allocation2 + $0x1448] sm:$0xff]
        %v852 = vld [vmem:[#allocation2 + $0x1450] sm:$0xff]
        %v853 = vld [vmem:[#allocation2 + $0x1458] sm:$0xff]
        %v854 = vld [vmem:[#allocation2 + $0x1460] sm:$0xff]
        %v855 = vld [vmem:[#allocation2 + $0x1468] sm:$0xff]
        %v856 = vld [vmem:[#allocation2 + $0x1470] sm:$0xff]
        %v857 = vld [vmem:[#allocation2 + $0x1478] sm:$0xff]
        %v858 = vld [vmem:[#allocation2 + $0x1480] sm:$0xff]
        %v859 = vld [vmem:[#allocation2 + $0x1488] sm:$0xff]
        %v860 = vld [vmem:[#allocation2 + $0x1490] sm:$0xff]
        %v861 = vld [vmem:[#allocation2 + $0x1498] sm:$0xff]
        %v862 = vld [vmem:[#allocation2 + $0x14a0] sm:$0xff]
        %v863 = vld [vmem:[#allocation2 + $0x14a8] sm:$0xff]
        %v864 = vld [vmem:[#allocation2 + $0x14b0] sm:$0xff]
        %v865 = vld [vmem:[#allocation2 + $0x14b8] sm:$0xff]
        %v866 = vld [vmem:[#allocation2 + $0x14c0] sm:$0xff]
        %v867 = vld [vmem:[#allocation2 + $0x14c8] sm:$0xff]
        %v868 = vld [vmem:[#allocation2 + $0x14d0] sm:$0xff]
        %v869 = vld [vmem:[#allocation2 + $0x14d8] sm:$0xff]
        %v870 = vld [vmem:[#allocation2 + $0x14e0] sm:$0xff]
        %v871 = vld [vmem:[#allocation2 + $0x14e8] sm:$0xff]
        %v872 = vld [vmem:[#allocation2 + $0x14f0] sm:$0xff]
        %v873 = vld [vmem:[#allocation2 + $0x14f8] sm:$0xff]
        %v874 = vld [vmem:[#allocation2 + $0x1500] sm:$0xff]
        %v875 = vld [vmem:[#allocation2 + $0x1508] sm:$0xff]
        %v876 = vld [vmem:[#allocation2 + $0x1510] sm:$0xff]
        %v877 = vld [vmem:[#allocation2 + $0x1518] sm:$0xff]
        %v878 = vld [vmem:[#allocation2 + $0x1520] sm:$0xff]
        %v879 = vld [vmem:[#allocation2 + $0x1528] sm:$0xff]
        %v880 = vld [vmem:[#allocation2 + $0x1530] sm:$0xff]
        %v881 = vld [vmem:[#allocation2 + $0x1538] sm:$0xff]
        %v882 = vld [vmem:[#allocation2 + $0x1540] sm:$0xff]
        %v883 = vld [vmem:[#allocation2 + $0x1548] sm:$0xff]
        %v884 = vld [vmem:[#allocation2 + $0x1550] sm:$0xff]
        %v885 = vld [vmem:[#allocation2 + $0x1558] sm:$0xff]
        %v886 = vld [vmem:[#allocation2 + $0x1560] sm:$0xff]
        %v887 = vld [vmem:[#allocation2 + $0x1568] sm:$0xff]
        %v888 = vld [vmem:[#allocation2 + $0x1570] sm:$0xff]
        %v889 = vld [vmem:[#allocation2 + $0x1578] sm:$0xff]
        %v890 = vld [vmem:[#allocation2 + $0x1580] sm:$0xff]
        %v891 = vld [vmem:[#allocation2 + $0x1588] sm:$0xff]
        %v892 = vld [vmem:[#allocation2 + $0x1590] sm:$0xff]
        %v893 = vld [vmem:[#allocation2 + $0x1598] sm:$0xff]
        %v894 = vld [vmem:[#allocation2 + $0x15a0] sm:$0xff]
        %v895 = vld [vmem:[#allocation2 + $0x15a8] sm:$0xff]
        %v896 = vld [vmem:[#allocation2 + $0x15b0] sm:$0xff]
        %v897 = vld [vmem:[#allocation2 + $0x15b8] sm:$0xff]
        %v898 = vld [vmem:[#allocation2 + $0x15c0] sm:$0xff]
        %v899 = vld [vmem:[#allocation2 + $0x15c8] sm:$0xff]
        %v900 = vld [vmem:[#allocation2 + $0x15d0] sm:$0xff]
        %v901 = vld [vmem:[#allocation2 + $0x15d8] sm:$0xff]
        %v902 = vld [vmem:[#allocation2 + $0x15e0] sm:$0xff]
        %v903 = vld [vmem:[#allocation2 + $0x15e8] sm:$0xff]
        %v904 = vld [vmem:[#allocation2 + $0x15f0] sm:$0xff]
        %v905 = vld [vmem:[#allocation2 + $0x15f8] sm:$0xff]
        %v906 = vld [vmem:[#allocation2 + $0x1600] sm:$0xff]
        %v907 = vld [vmem:[#allocation2 + $0x1608] sm:$0xff]
        %v908 = vld [vmem:[#allocation2 + $0x1610] sm:$0xff]
        %v909 = vld [vmem:[#allocation2 + $0x1618] sm:$0xff]
        %v910 = vld [vmem:[#allocation2 + $0x1620] sm:$0xff]
        %v911 = vld [vmem:[#allocation2 + $0x1628] sm:$0xff]
        %v912 = vld [vmem:[#allocation2 + $0x1630] sm:$0xff]
        %v913 = vld [vmem:[#allocation2 + $0x1638] sm:$0xff]
        %v914 = vld [vmem:[#allocation2 + $0x1640] sm:$0xff]
        %v915 = vld [vmem:[#allocation2 + $0x1648] sm:$0xff]
        %v916 = vld [vmem:[#allocation2 + $0x1650] sm:$0xff]
        %v917 = vld [vmem:[#allocation2 + $0x1658] sm:$0xff]
        %v918 = vld [vmem:[#allocation2 + $0x1660] sm:$0xff]
        %v919 = vld [vmem:[#allocation2 + $0x1668] sm:$0xff]
        %v920 = vld [vmem:[#allocation2 + $0x1670] sm:$0xff]
        %v921 = vld [vmem:[#allocation2 + $0x1678] sm:$0xff]
        %v922 = vld [vmem:[#allocation2 + $0x1680] sm:$0xff]
        %v923 = vld [vmem:[#allocation2 + $0x1688] sm:$0xff]
        %v924 = vld [vmem:[#allocation2 + $0x1690] sm:$0xff]
        %v925 = vld [vmem:[#allocation2 + $0x1698] sm:$0xff]
        %v926 = vld [vmem:[#allocation2 + $0x16a0] sm:$0xff]
        %v927 = vld [vmem:[#allocation2 + $0x16a8] sm:$0xff]
        %v928 = vld [vmem:[#allocation2 + $0x16b0] sm:$0xff]
        %v929 = vld [vmem:[#allocation2 + $0x16b8] sm:$0xff]
        %v930 = vld [vmem:[#allocation2 + $0x16c0] sm:$0xff]
        %v931 = vld [vmem:[#allocation2 + $0x16c8] sm:$0xff]
        %v932 = vld [vmem:[#allocation2 + $0x16d0] sm:$0xff]
        %v933 = vld [vmem:[#allocation2 + $0x16d8] sm:$0xff]
        %v934 = vld [vmem:[#allocation2 + $0x16e0] sm:$0xff]
        %v935 = vld [vmem:[#allocation2 + $0x16e8] sm:$0xff]
        %v936 = vld [vmem:[#allocation2 + $0x16f0] sm:$0xff]
        %v937 = vld [vmem:[#allocation2 + $0x16f8] sm:$0xff]
        %v938 = vld [vmem:[#allocation2 + $0x1700] sm:$0xff]
        %v939 = vld [vmem:[#allocation2 + $0x1708] sm:$0xff]
        %v940 = vld [vmem:[#allocation2 + $0x1710] sm:$0xff]
        %v941 = vld [vmem:[#allocation2 + $0x1718] sm:$0xff]
        %v942 = vld [vmem:[#allocation2 + $0x1720] sm:$0xff]
        %v943 = vld [vmem:[#allocation2 + $0x1728] sm:$0xff]
        %v944 = vld [vmem:[#allocation2 + $0x1730] sm:$0xff]
        %v945 = vld [vmem:[#allocation2 + $0x1738] sm:$0xff]
        %v946 = vld [vmem:[#allocation2 + $0x1740] sm:$0xff]
        %v947 = vld [vmem:[#allocation2 + $0x1748] sm:$0xff]
        %v948 = vld [vmem:[#allocation2 + $0x1750] sm:$0xff]
        %v949 = vld [vmem:[#allocation2 + $0x1758] sm:$0xff]
        %v950 = vld [vmem:[#allocation2 + $0x1760] sm:$0xff]
        %v951 = vld [vmem:[#allocation2 + $0x1768] sm:$0xff]
        %v952 = vld [vmem:[#allocation2 + $0x1770] sm:$0xff]
        %v953 = vld [vmem:[#allocation2 + $0x1778] sm:$0xff]
        %v954 = vld [vmem:[#allocation2 + $0x1780] sm:$0xff]
        %v955 = vld [vmem:[#allocation2 + $0x1788] sm:$0xff]
        %v956 = vld [vmem:[#allocation2 + $0x1790] sm:$0xff]
        %v957 = vld [vmem:[#allocation2 + $0x1798] sm:$0xff]
        %v958 = vld [vmem:[#allocation2 + $0x17a0] sm:$0xff]
        %v959 = vld [vmem:[#allocation2 + $0x17a8] sm:$0xff]
        %v960 = vld [vmem:[#allocation2 + $0x17b0] sm:$0xff]
        %v961 = vld [vmem:[#allocation2 + $0x17b8] sm:$0xff]
        %v962 = vld [vmem:[#allocation2 + $0x17c0] sm:$0xff]
        %v963 = vld [vmem:[#allocation2 + $0x17c8] sm:$0xff]
        %v964 = vld [vmem:[#allocation2 + $0x17d0] sm:$0xff]
        %v965 = vld [vmem:[#allocation2 + $0x17d8] sm:$0xff]
        %v966 = vld [vmem:[#allocation2 + $0x17e0] sm:$0xff]
        %v967 = vld [vmem:[#allocation2 + $0x17e8] sm:$0xff]
        %v968 = vld [vmem:[#allocation2 + $0x17f0] sm:$0xff]
        %v969 = vld [vmem:[#allocation2 + $0x17f8] sm:$0xff]
        %v973 = vunpack.c.l.b16 %v199
        %v974 = vunpack.c.h.b16 %v199
        %v975 = vunpack.c.l.b16 %v200
        %v976 = vunpack.c.h.b16 %v200
        %v977 = vunpack.c.l.b16 %v201
        %v978 = vunpack.c.h.b16 %v201
        %v979 = vpack.c.b16 %v973, %v973
        %v980 = vpack.c.b16 %v974, %v974
        %v981 = vpack.c.b16 %v975, %v975
        %v982 = vpack.c.b16 %v976, %v976
        %v983 = vpack.c.b16 %v977, %v977
        %v984 = vpack.c.b16 %v978, %v978
        %v1759 = vunpack.c.l.b16 %v202
        %v1760 = vunpack.c.h.b16 %v202
        %v1761 = vunpack.c.l.b16 %v203
        %v1762 = vunpack.c.h.b16 %v203
        %v1763 = vunpack.c.l.b16 %v204
        %v1764 = vunpack.c.h.b16 %v204
        %v1765 = vunpack.c.l.b16 %v205
        %v1766 = vunpack.c.h.b16 %v205
        %v1767 = vunpack.c.l.b16 %v206
        %v1768 = vunpack.c.h.b16 %v206
        %v1769 = vunpack.c.l.b16 %v207
        %v1770 = vunpack.c.h.b16 %v207
        %v1771 = vunpack.c.l.b16 %v208
        %v1772 = vunpack.c.h.b16 %v208
        %v1773 = vunpack.c.l.b16 %v209
        %v1774 = vunpack.c.h.b16 %v209
        %v1775 = vunpack.c.l.b16 %v210
        %v1776 = vunpack.c.h.b16 %v210
        %v1777 = vunpack.c.l.b16 %v211
        %v1778 = vunpack.c.h.b16 %v211
        %v1779 = vunpack.c.l.b16 %v212
        %v1780 = vunpack.c.h.b16 %v212
        %v1781 = vunpack.c.l.b16 %v213
        %v1782 = vunpack.c.h.b16 %v213
        %v1783 = vunpack.c.l.b16 %v214
        %v1784 = vunpack.c.h.b16 %v214
        %v1785 = vunpack.c.l.b16 %v215
        %v1786 = vunpack.c.h.b16 %v215
        %v1787 = vunpack.c.l.b16 %v216
        %v1788 = vunpack.c.h.b16 %v216
        %v1789 = vunpack.c.l.b16 %v217
        %v1790 = vunpack.c.h.b16 %v217
        %v1791 = vunpack.c.l.b16 %v218
        %v1792 = vunpack.c.h.b16 %v218
        %v1793 = vunpack.c.l.b16 %v219
        %v1794 = vunpack.c.h.b16 %v219
        %v1795 = vunpack.c.l.b16 %v220
        %v1796 = vunpack.c.h.b16 %v220
        %v1797 = vunpack.c.l.b16 %v221
        %v1798 = vunpack.c.h.b16 %v221
        %v1799 = vunpack.c.l.b16 %v222
        %v1800 = vunpack.c.h.b16 %v222
        %v1801 = vunpack.c.l.b16 %v223
        %v1802 = vunpack.c.h.b16 %v223
        %v1803 = vunpack.c.l.b16 %v224
        %v1804 = vunpack.c.h.b16 %v224
        %v1805 = vunpack.c.l.b16 %v225
        %v1806 = vunpack.c.h.b16 %v225
        %v1807 = vunpack.c.l.b16 %v226
        %v1808 = vunpack.c.h.b16 %v226
        %v1809 = vunpack.c.l.b16 %v227
        %v1810 = vunpack.c.h.b16 %v227
        %v1811 = vunpack.c.l.b16 %v228
        %v1812 = vunpack.c.h.b16 %v228
        %v1813 = vunpack.c.l.b16 %v229
        %v1814 = vunpack.c.h.b16 %v229
        %v1815 = vunpack.c.l.b16 %v230
        %v1816 = vunpack.c.h.b16 %v230
        %v1817 = vunpack.c.l.b16 %v231
        %v1818 = vunpack.c.h.b16 %v231
        %v1819 = vunpack.c.l.b16 %v232
        %v1820 = vunpack.c.h.b16 %v232
        %v1821 = vunpack.c.l.b16 %v233
        %v1822 = vunpack.c.h.b16 %v233
        %v1823 = vunpack.c.l.b16 %v234
        %v1824 = vunpack.c.h.b16 %v234
        %v1825 = vunpack.c.l.b16 %v235
        %v1826 = vunpack.c.h.b16 %v235
        %v1827 = vunpack.c.l.b16 %v236
        %v1828 = vunpack.c.h.b16 %v236
        %v1829 = vunpack.c.l.b16 %v237
        %v1830 = vunpack.c.h.b16 %v237
        %v1831 = vunpack.c.l.b16 %v238
        %v1832 = vunpack.c.h.b16 %v238
        %v1833 = vunpack.c.l.b16 %v239
        %v1834 = vunpack.c.h.b16 %v239
        %v1835 = vunpack.c.l.b16 %v240
        %v1836 = vunpack.c.h.b16 %v240
        %v1837 = vunpack.c.l.b16 %v241
        %v1838 = vunpack.c.h.b16 %v241
        %v1839 = vunpack.c.l.b16 %v242
        %v1840 = vunpack.c.h.b16 %v242
        %v1841 = vunpack.c.l.b16 %v243
        %v1842 = vunpack.c.h.b16 %v243
        %v1843 = vunpack.c.l.b16 %v244
        %v1844 = vunpack.c.h.b16 %v244
        %v1845 = vunpack.c.l.b16 %v245
        %v1846 = vunpack.c.h.b16 %v245
        %v1847 = vunpack.c.l.b16 %v246
        %v1848 = vunpack.c.h.b16 %v246
        %v1849 = vunpack.c.l.b16 %v247
        %v1850 = vunpack.c.h.b16 %v247
        %v1851 = vunpack.c.l.b16 %v248
        %v1852 = vunpack.c.h.b16 %v248
        %v1853 = vunpack.c.l.b16 %v249
        %v1854 = vunpack.c.h.b16 %v249
        %v1855 = vunpack.c.l.b16 %v250
        %v1856 = vunpack.c.h.b16 %v250
        %v1857 = vunpack.c.l.b16 %v251
        %v1858 = vunpack.c.h.b16 %v251
        %v1859 = vunpack.c.l.b16 %v252
        %v1860 = vunpack.c.h.b16 %v252
        %v1861 = vunpack.c.l.b16 %v253
        %v1862 = vunpack.c.h.b16 %v253
        %v1863 = vunpack.c.l.b16 %v254
        %v1864 = vunpack.c.h.b16 %v254
        %v1865 = vunpack.c.l.b16 %v255
        %v1866 = vunpack.c.h.b16 %v255
        %v1867 = vunpack.c.l.b16 %v256
        %v1868 = vunpack.c.h.b16 %v256
        %v1869 = vunpack.c.l.b16 %v257
        %v1870 = vunpack.c.h.b16 %v257
        %v1871 = vunpack.c.l.b16 %v258
        %v1872 = vunpack.c.h.b16 %v258
        %v1873 = vunpack.c.l.b16 %v259
        %v1874 = vunpack.c.h.b16 %v259
        %v1875 = vunpack.c.l.b16 %v260
        %v1876 = vunpack.c.h.b16 %v260
        %v1877 = vunpack.c.l.b16 %v261
        %v1878 = vunpack.c.h.b16 %v261
        %v1879 = vunpack.c.l.b16 %v262
        %v1880 = vunpack.c.h.b16 %v262
        %v1881 = vunpack.c.l.b16 %v263
        %v1882 = vunpack.c.h.b16 %v263
        %v1883 = vunpack.c.l.b16 %v264
        %v1884 = vunpack.c.h.b16 %v264
        %v1885 = vunpack.c.l.b16 %v265
        %v1886 = vunpack.c.h.b16 %v265
        %v1887 = vunpack.c.l.b16 %v266
        %v1888 = vunpack.c.h.b16 %v266
        %v1889 = vunpack.c.l.b16 %v267
        %v1890 = vunpack.c.h.b16 %v267
        %v1891 = vunpack.c.l.b16 %v268
        %v1892 = vunpack.c.h.b16 %v268
        %v1893 = vunpack.c.l.b16 %v269
        %v1894 = vunpack.c.h.b16 %v269
        %v1895 = vunpack.c.l.b16 %v270
        %v1896 = vunpack.c.h.b16 %v270
        %v1897 = vunpack.c.l.b16 %v271
        %v1898 = vunpack.c.h.b16 %v271
        %v1899 = vunpack.c.l.b16 %v272
        %v1900 = vunpack.c.h.b16 %v272
        %v1901 = vunpack.c.l.b16 %v273
        %v1902 = vunpack.c.h.b16 %v273
        %v1903 = vunpack.c.l.b16 %v274
        %v1904 = vunpack.c.h.b16 %v274
        %v1905 = vunpack.c.l.b16 %v275
        %v1906 = vunpack.c.h.b16 %v275
        %v1907 = vunpack.c.l.b16 %v276
        %v1908 = vunpack.c.h.b16 %v276
        %v1909 = vunpack.c.l.b16 %v277
        %v1910 = vunpack.c.h.b16 %v277
        %v1911 = vunpack.c.l.b16 %v278
        %v1912 = vunpack.c.h.b16 %v278
        %v1913 = vunpack.c.l.b16 %v279
        %v1914 = vunpack.c.h.b16 %v279
        %v1915 = vunpack.c.l.b16 %v280
        %v1916 = vunpack.c.h.b16 %v280
        %v1917 = vunpack.c.l.b16 %v281
        %v1918 = vunpack.c.h.b16 %v281
        %v1919 = vunpack.c.l.b16 %v282
        %v1920 = vunpack.c.h.b16 %v282
        %v1921 = vunpack.c.l.b16 %v283
        %v1922 = vunpack.c.h.b16 %v283
        %v1923 = vunpack.c.l.b16 %v284
        %v1924 = vunpack.c.h.b16 %v284
        %v1925 = vunpack.c.l.b16 %v285
        %v1926 = vunpack.c.h.b16 %v285
        %v1927 = vunpack.c.l.b16 %v286
        %v1928 = vunpack.c.h.b16 %v286
        %v1929 = vunpack.c.l.b16 %v287
        %v1930 = vunpack.c.h.b16 %v287
        %v1931 = vunpack.c.l.b16 %v288
        %v1932 = vunpack.c.h.b16 %v288
        %v1933 = vunpack.c.l.b16 %v289
        %v1934 = vunpack.c.h.b16 %v289
        %v1935 = vunpack.c.l.b16 %v290
        %v1936 = vunpack.c.h.b16 %v290
        %v1937 = vunpack.c.l.b16 %v291
        %v1938 = vunpack.c.h.b16 %v291
        %v1939 = vunpack.c.l.b16 %v292
        %v1940 = vunpack.c.h.b16 %v292
        %v1941 = vunpack.c.l.b16 %v293
        %v1942 = vunpack.c.h.b16 %v293
        %v1943 = vunpack.c.l.b16 %v294
        %v1944 = vunpack.c.h.b16 %v294
        %v1945 = vunpack.c.l.b16 %v295
        %v1946 = vunpack.c.h.b16 %v295
        %v1947 = vunpack.c.l.b16 %v296
        %v1948 = vunpack.c.h.b16 %v296
        %v1949 = vunpack.c.l.b16 %v297
        %v1950 = vunpack.c.h.b16 %v297
        %v1951 = vunpack.c.l.b16 %v298
        %v1952 = vunpack.c.h.b16 %v298
        %v1953 = vunpack.c.l.b16 %v299
        %v1954 = vunpack.c.h.b16 %v299
        %v1955 = vunpack.c.l.b16 %v300
        %v1956 = vunpack.c.h.b16 %v300
        %v1957 = vunpack.c.l.b16 %v301
        %v1958 = vunpack.c.h.b16 %v301
        %v1959 = vunpack.c.l.b16 %v302
        %v1960 = vunpack.c.h.b16 %v302
        %v1961 = vunpack.c.l.b16 %v303
        %v1962 = vunpack.c.h.b16 %v303
        %v1963 = vunpack.c.l.b16 %v304
        %v1964 = vunpack.c.h.b16 %v304
        %v1965 = vunpack.c.l.b16 %v305
        %v1966 = vunpack.c.h.b16 %v305
        %v1967 = vunpack.c.l.b16 %v306
        %v1968 = vunpack.c.h.b16 %v306
        %v1969 = vunpack.c.l.b16 %v307
        %v1970 = vunpack.c.h.b16 %v307
        %v1971 = vunpack.c.l.b16 %v308
        %v1972 = vunpack.c.h.b16 %v308
        %v1973 = vunpack.c.l.b16 %v309
        %v1974 = vunpack.c.h.b16 %v309
        %v1975 = vunpack.c.l.b16 %v310
        %v1976 = vunpack.c.h.b16 %v310
        %v1977 = vunpack.c.l.b16 %v311
        %v1978 = vunpack.c.h.b16 %v311
        %v1979 = vunpack.c.l.b16 %v312
        %v1980 = vunpack.c.h.b16 %v312
        %v1981 = vunpack.c.l.b16 %v313
        %v1982 = vunpack.c.h.b16 %v313
        %v1983 = vunpack.c.l.b16 %v314
        %v1984 = vunpack.c.h.b16 %v314
        %v1985 = vunpack.c.l.b16 %v315
        %v1986 = vunpack.c.h.b16 %v315
        %v1987 = vunpack.c.l.b16 %v316
        %v1988 = vunpack.c.h.b16 %v316
        %v1989 = vunpack.c.l.b16 %v317
        %v1990 = vunpack.c.h.b16 %v317
        %v1991 = vunpack.c.l.b16 %v318
        %v1992 = vunpack.c.h.b16 %v318
        %v1993 = vunpack.c.l.b16 %v319
        %v1994 = vunpack.c.h.b16 %v319
        %v1995 = vunpack.c.l.b16 %v320
        %v1996 = vunpack.c.h.b16 %v320
        %v1997 = vunpack.c.l.b16 %v321
        %v1998 = vunpack.c.h.b16 %v321
        %v1999 = vunpack.c.l.b16 %v322
        %v2000 = vunpack.c.h.b16 %v322
        %v2001 = vunpack.c.l.b16 %v323
        %v2002 = vunpack.c.h.b16 %v323
        %v2003 = vunpack.c.l.b16 %v324
        %v2004 = vunpack.c.h.b16 %v324
        %v2005 = vunpack.c.l.b16 %v325
        %v2006 = vunpack.c.h.b16 %v325
        %v2007 = vunpack.c.l.b16 %v326
        %v2008 = vunpack.c.h.b16 %v326
        %v2009 = vunpack.c.l.b16 %v327
        %v2010 = vunpack.c.h.b16 %v327
        %v2011 = vunpack.c.l.b16 %v328
        %v2012 = vunpack.c.h.b16 %v328
        %v2013 = vunpack.c.l.b16 %v329
        %v2014 = vunpack.c.h.b16 %v329
        %v2015 = vunpack.c.l.b16 %v330
        %v2016 = vunpack.c.h.b16 %v330
        %v2017 = vunpack.c.l.b16 %v331
        %v2018 = vunpack.c.h.b16 %v331
        %v2019 = vunpack.c.l.b16 %v332
        %v2020 = vunpack.c.h.b16 %v332
        %v2021 = vunpack.c.l.b16 %v333
        %v2022 = vunpack.c.h.b16 %v333
        %v2023 = vunpack.c.l.b16 %v334
        %v2024 = vunpack.c.h.b16 %v334
        %v2025 = vunpack.c.l.b16 %v335
        %v2026 = vunpack.c.h.b16 %v335
        %v2027 = vunpack.c.l.b16 %v336
        %v2028 = vunpack.c.h.b16 %v336
        %v2029 = vunpack.c.l.b16 %v337
        %v2030 = vunpack.c.h.b16 %v337
        %v2031 = vunpack.c.l.b16 %v338
        %v2032 = vunpack.c.h.b16 %v338
        %v2033 = vunpack.c.l.b16 %v339
        %v2034 = vunpack.c.h.b16 %v339
        %v2035 = vunpack.c.l.b16 %v340
        %v2036 = vunpack.c.h.b16 %v340
        %v2037 = vunpack.c.l.b16 %v341
        %v2038 = vunpack.c.h.b16 %v341
        %v2039 = vunpack.c.l.b16 %v342
        %v2040 = vunpack.c.h.b16 %v342
        %v2041 = vunpack.c.l.b16 %v343
        %v2042 = vunpack.c.h.b16 %v343
        %v2043 = vunpack.c.l.b16 %v344
        %v2044 = vunpack.c.h.b16 %v344
        %v2045 = vunpack.c.l.b16 %v345
        %v2046 = vunpack.c.h.b16 %v345
        %v2047 = vunpack.c.l.b16 %v346
        %v2048 = vunpack.c.h.b16 %v346
        %v2049 = vunpack.c.l.b16 %v347
        %v2050 = vunpack.c.h.b16 %v347
        %v2051 = vunpack.c.l.b16 %v348
        %v2052 = vunpack.c.h.b16 %v348
        %v2053 = vunpack.c.l.b16 %v349
        %v2054 = vunpack.c.h.b16 %v349
        %v2055 = vunpack.c.l.b16 %v350
        %v2056 = vunpack.c.h.b16 %v350
        %v2057 = vunpack.c.l.b16 %v351
        %v2058 = vunpack.c.h.b16 %v351
        %v2059 = vunpack.c.l.b16 %v352
        %v2060 = vunpack.c.h.b16 %v352
        %v2061 = vunpack.c.l.b16 %v353
        %v2062 = vunpack.c.h.b16 %v353
        %v2063 = vunpack.c.l.b16 %v354
        %v2064 = vunpack.c.h.b16 %v354
        %v2065 = vunpack.c.l.b16 %v355
        %v2066 = vunpack.c.h.b16 %v355
        %v2067 = vunpack.c.l.b16 %v356
        %v2068 = vunpack.c.h.b16 %v356
        %v2069 = vunpack.c.l.b16 %v357
        %v2070 = vunpack.c.h.b16 %v357
        %v2071 = vunpack.c.l.b16 %v358
        %v2072 = vunpack.c.h.b16 %v358
        %v2073 = vunpack.c.l.b16 %v359
        %v2074 = vunpack.c.h.b16 %v359
        %v2075 = vunpack.c.l.b16 %v360
        %v2076 = vunpack.c.h.b16 %v360
        %v2077 = vunpack.c.l.b16 %v361
        %v2078 = vunpack.c.h.b16 %v361
        %v2079 = vunpack.c.l.b16 %v362
        %v2080 = vunpack.c.h.b16 %v362
        %v2081 = vunpack.c.l.b16 %v363
        %v2082 = vunpack.c.h.b16 %v363
        %v2083 = vunpack.c.l.b16 %v364
        %v2084 = vunpack.c.h.b16 %v364
        %v2085 = vunpack.c.l.b16 %v365
        %v2086 = vunpack.c.h.b16 %v365
        %v2087 = vunpack.c.l.b16 %v366
        %v2088 = vunpack.c.h.b16 %v366
        %v2089 = vunpack.c.l.b16 %v367
        %v2090 = vunpack.c.h.b16 %v367
        %v2091 = vunpack.c.l.b16 %v368
        %v2092 = vunpack.c.h.b16 %v368
        %v2093 = vunpack.c.l.b16 %v369
        %v2094 = vunpack.c.h.b16 %v369
        %v2095 = vunpack.c.l.b16 %v370
        %v2096 = vunpack.c.h.b16 %v370
        %v2097 = vunpack.c.l.b16 %v371
        %v2098 = vunpack.c.h.b16 %v371
        %v2099 = vunpack.c.l.b16 %v372
        %v2100 = vunpack.c.h.b16 %v372
        %v2101 = vunpack.c.l.b16 %v373
        %v2102 = vunpack.c.h.b16 %v373
        %v2103 = vunpack.c.l.b16 %v374
        %v2104 = vunpack.c.h.b16 %v374
        %v2105 = vunpack.c.l.b16 %v375
        %v2106 = vunpack.c.h.b16 %v375
        %v2107 = vunpack.c.l.b16 %v376
        %v2108 = vunpack.c.h.b16 %v376
        %v2109 = vunpack.c.l.b16 %v377
        %v2110 = vunpack.c.h.b16 %v377
        %v2111 = vunpack.c.l.b16 %v378
        %v2112 = vunpack.c.h.b16 %v378
        %v2113 = vunpack.c.l.b16 %v379
        %v2114 = vunpack.c.h.b16 %v379
        %v2115 = vunpack.c.l.b16 %v380
        %v2116 = vunpack.c.h.b16 %v380
        %v2117 = vunpack.c.l.b16 %v381
        %v2118 = vunpack.c.h.b16 %v381
        %v2119 = vunpack.c.l.b16 %v382
        %v2120 = vunpack.c.h.b16 %v382
        %v2121 = vunpack.c.l.b16 %v383
        %v2122 = vunpack.c.h.b16 %v383
        %v2123 = vunpack.c.l.b16 %v384
        %v2124 = vunpack.c.h.b16 %v384
        %v2125 = vunpack.c.l.b16 %v385
        %v2126 = vunpack.c.h.b16 %v385
        %v2127 = vunpack.c.l.b16 %v386
        %v2128 = vunpack.c.h.b16 %v386
        %v2129 = vunpack.c.l.b16 %v387
        %v2130 = vunpack.c.h.b16 %v387
        %v2131 = vunpack.c.l.b16 %v388
        %v2132 = vunpack.c.h.b16 %v388
        %v2133 = vunpack.c.l.b16 %v389
        %v2134 = vunpack.c.h.b16 %v389
        %v2135 = vunpack.c.l.b16 %v390
        %v2136 = vunpack.c.h.b16 %v390
        %v2137 = vunpack.c.l.b16 %v391
        %v2138 = vunpack.c.h.b16 %v391
        %v2139 = vunpack.c.l.b16 %v392
        %v2140 = vunpack.c.h.b16 %v392
        %v2141 = vunpack.c.l.b16 %v393
        %v2142 = vunpack.c.h.b16 %v393
        %v2143 = vunpack.c.l.b16 %v394
        %v2144 = vunpack.c.h.b16 %v394
        %v2145 = vunpack.c.l.b16 %v395
        %v2146 = vunpack.c.h.b16 %v395
        %v2147 = vunpack.c.l.b16 %v396
        %v2148 = vunpack.c.h.b16 %v396
        %v2149 = vunpack.c.l.b16 %v397
        %v2150 = vunpack.c.h.b16 %v397
        %v2151 = vunpack.c.l.b16 %v398
        %v2152 = vunpack.c.h.b16 %v398
        %v2153 = vunpack.c.l.b16 %v399
        %v2154 = vunpack.c.h.b16 %v399
        %v2155 = vunpack.c.l.b16 %v400
        %v2156 = vunpack.c.h.b16 %v400
        %v2157 = vunpack.c.l.b16 %v401
        %v2158 = vunpack.c.h.b16 %v401
        %v2159 = vunpack.c.l.b16 %v402
        %v2160 = vunpack.c.h.b16 %v402
        %v2161 = vunpack.c.l.b16 %v403
        %v2162 = vunpack.c.h.b16 %v403
        %v2163 = vunpack.c.l.b16 %v404
        %v2164 = vunpack.c.h.b16 %v404
        %v2165 = vunpack.c.l.b16 %v405
        %v2166 = vunpack.c.h.b16 %v405
        %v2167 = vunpack.c.l.b16 %v406
        %v2168 = vunpack.c.h.b16 %v406
        %v2169 = vunpack.c.l.b16 %v407
        %v2170 = vunpack.c.h.b16 %v407
        %v2171 = vunpack.c.l.b16 %v408
        %v2172 = vunpack.c.h.b16 %v408
        %v2173 = vunpack.c.l.b16 %v409
        %v2174 = vunpack.c.h.b16 %v409
        %v2175 = vunpack.c.l.b16 %v410
        %v2176 = vunpack.c.h.b16 %v410
        %v2177 = vunpack.c.l.b16 %v411
        %v2178 = vunpack.c.h.b16 %v411
        %v2179 = vunpack.c.l.b16 %v412
        %v2180 = vunpack.c.h.b16 %v412
        %v2181 = vunpack.c.l.b16 %v413
        %v2182 = vunpack.c.h.b16 %v413
        %v2183 = vunpack.c.l.b16 %v414
        %v2184 = vunpack.c.h.b16 %v414
        %v2185 = vunpack.c.l.b16 %v415
        %v2186 = vunpack.c.h.b16 %v415
        %v2187 = vunpack.c.l.b16 %v416
        %v2188 = vunpack.c.h.b16 %v416
        %v2189 = vunpack.c.l.b16 %v417
        %v2190 = vunpack.c.h.b16 %v417
        %v2191 = vunpack.c.l.b16 %v418
        %v2192 = vunpack.c.h.b16 %v418
        %v2193 = vunpack.c.l.b16 %v419
        %v2194 = vunpack.c.h.b16 %v419
        %v2195 = vunpack.c.l.b16 %v420
        %v2196 = vunpack.c.h.b16 %v420
        %v2197 = vunpack.c.l.b16 %v421
        %v2198 = vunpack.c.h.b16 %v421
        %v2199 = vunpack.c.l.b16 %v422
        %v2200 = vunpack.c.h.b16 %v422
        %v2201 = vunpack.c.l.b16 %v423
        %v2202 = vunpack.c.h.b16 %v423
        %v2203 = vunpack.c.l.b16 %v424
        %v2204 = vunpack.c.h.b16 %v424
        %v2205 = vunpack.c.l.b16 %v425
        %v2206 = vunpack.c.h.b16 %v425
        %v2207 = vunpack.c.l.b16 %v426
        %v2208 = vunpack.c.h.b16 %v426
        %v2209 = vunpack.c.l.b16 %v427
        %v2210 = vunpack.c.h.b16 %v427
        %v2211 = vunpack.c.l.b16 %v428
        %v2212 = vunpack.c.h.b16 %v428
        %v2213 = vunpack.c.l.b16 %v429
        %v2214 = vunpack.c.h.b16 %v429
        %v2215 = vunpack.c.l.b16 %v430
        %v2216 = vunpack.c.h.b16 %v430
        %v2217 = vunpack.c.l.b16 %v431
        %v2218 = vunpack.c.h.b16 %v431
        %v2219 = vunpack.c.l.b16 %v432
        %v2220 = vunpack.c.h.b16 %v432
        %v2221 = vunpack.c.l.b16 %v433
        %v2222 = vunpack.c.h.b16 %v433
        %v2223 = vunpack.c.l.b16 %v434
        %v2224 = vunpack.c.h.b16 %v434
        %v2225 = vunpack.c.l.b16 %v435
        %v2226 = vunpack.c.h.b16 %v435
        %v2227 = vunpack.c.l.b16 %v436
        %v2228 = vunpack.c.h.b16 %v436
        %v2229 = vunpack.c.l.b16 %v437
        %v2230 = vunpack.c.h.b16 %v437
        %v2231 = vunpack.c.l.b16 %v438
        %v2232 = vunpack.c.h.b16 %v438
        %v2233 = vunpack.c.l.b16 %v439
        %v2234 = vunpack.c.h.b16 %v439
        %v2235 = vunpack.c.l.b16 %v440
        %v2236 = vunpack.c.h.b16 %v440
        %v2237 = vunpack.c.l.b16 %v441
        %v2238 = vunpack.c.h.b16 %v441
        %v2239 = vunpack.c.l.b16 %v442
        %v2240 = vunpack.c.h.b16 %v442
        %v2241 = vunpack.c.l.b16 %v443
        %v2242 = vunpack.c.h.b16 %v443
        %v2243 = vunpack.c.l.b16 %v444
        %v2244 = vunpack.c.h.b16 %v444
        %v2245 = vunpack.c.l.b16 %v445
        %v2246 = vunpack.c.h.b16 %v445
        %v2247 = vunpack.c.l.b16 %v446
        %v2248 = vunpack.c.h.b16 %v446
        %v2249 = vunpack.c.l.b16 %v447
        %v2250 = vunpack.c.h.b16 %v447
        %v2251 = vunpack.c.l.b16 %v448
        %v2252 = vunpack.c.h.b16 %v448
        %v2253 = vunpack.c.l.b16 %v449
        %v2254 = vunpack.c.h.b16 %v449
        %v2255 = vunpack.c.l.b16 %v450
        %v2256 = vunpack.c.h.b16 %v450
        %v2257 = vunpack.c.l.b16 %v451
        %v2258 = vunpack.c.h.b16 %v451
        %v2259 = vunpack.c.l.b16 %v452
        %v2260 = vunpack.c.h.b16 %v452
        %v2261 = vunpack.c.l.b16 %v453
        %v2262 = vunpack.c.h.b16 %v453
        %v2263 = vunpack.c.l.b16 %v454
        %v2264 = vunpack.c.h.b16 %v454
        %v2265 = vunpack.c.l.b16 %v455
        %v2266 = vunpack.c.h.b16 %v455
        %v2267 = vunpack.c.l.b16 %v456
        %v2268 = vunpack.c.h.b16 %v456
        %v2269 = vunpack.c.l.b16 %v457
        %v2270 = vunpack.c.h.b16 %v457
        %v2271 = vunpack.c.l.b16 %v458
        %v2272 = vunpack.c.h.b16 %v458
        %v2273 = vunpack.c.l.b16 %v459
        %v2274 = vunpack.c.h.b16 %v459
        %v2275 = vunpack.c.l.b16 %v460
        %v2276 = vunpack.c.h.b16 %v460
        %v2277 = vunpack.c.l.b16 %v461
        %v2278 = vunpack.c.h.b16 %v461
        %v2279 = vunpack.c.l.b16 %v462
        %v2280 = vunpack.c.h.b16 %v462
        %v2281 = vunpack.c.l.b16 %v463
        %v2282 = vunpack.c.h.b16 %v463
        %v2283 = vunpack.c.l.b16 %v464
        %v2284 = vunpack.c.h.b16 %v464
        %v2285 = vunpack.c.l.b16 %v465
        %v2286 = vunpack.c.h.b16 %v465
        %v2287 = vunpack.c.l.b16 %v466
        %v2288 = vunpack.c.h.b16 %v466
        %v2289 = vunpack.c.l.b16 %v467
        %v2290 = vunpack.c.h.b16 %v467
        %v2291 = vunpack.c.l.b16 %v468
        %v2292 = vunpack.c.h.b16 %v468
        %v2293 = vunpack.c.l.b16 %v469
        %v2294 = vunpack.c.h.b16 %v469
        %v2295 = vunpack.c.l.b16 %v470
        %v2296 = vunpack.c.h.b16 %v470
        %v2297 = vunpack.c.l.b16 %v471
        %v2298 = vunpack.c.h.b16 %v471
        %v2299 = vunpack.c.l.b16 %v472
        %v2300 = vunpack.c.h.b16 %v472
        %v2301 = vunpack.c.l.b16 %v473
        %v2302 = vunpack.c.h.b16 %v473
        %v2303 = vunpack.c.l.b16 %v474
        %v2304 = vunpack.c.h.b16 %v474
        %v2305 = vunpack.c.l.b16 %v475
        %v2306 = vunpack.c.h.b16 %v475
        %v2307 = vunpack.c.l.b16 %v476
        %v2308 = vunpack.c.h.b16 %v476
        %v2309 = vunpack.c.l.b16 %v477
        %v2310 = vunpack.c.h.b16 %v477
        %v2311 = vunpack.c.l.b16 %v478
        %v2312 = vunpack.c.h.b16 %v478
        %v2313 = vunpack.c.l.b16 %v479
        %v2314 = vunpack.c.h.b16 %v479
        %v2315 = vunpack.c.l.b16 %v480
        %v2316 = vunpack.c.h.b16 %v480
        %v2317 = vunpack.c.l.b16 %v481
        %v2318 = vunpack.c.h.b16 %v481
        %v2319 = vunpack.c.l.b16 %v482
        %v2320 = vunpack.c.h.b16 %v482
        %v2321 = vunpack.c.l.b16 %v483
        %v2322 = vunpack.c.h.b16 %v483
        %v2323 = vunpack.c.l.b16 %v484
        %v2324 = vunpack.c.h.b16 %v484
        %v2325 = vunpack.c.l.b16 %v485
        %v2326 = vunpack.c.h.b16 %v485
        %v2327 = vunpack.c.l.b16 %v486
        %v2328 = vunpack.c.h.b16 %v486
        %v2329 = vunpack.c.l.b16 %v487
        %v2330 = vunpack.c.h.b16 %v487
        %v2331 = vunpack.c.l.b16 %v488
        %v2332 = vunpack.c.h.b16 %v488
        %v2333 = vunpack.c.l.b16 %v489
        %v2334 = vunpack.c.h.b16 %v489
        %v2335 = vunpack.c.l.b16 %v490
        %v2336 = vunpack.c.h.b16 %v490
        %v2337 = vunpack.c.l.b16 %v491
        %v2338 = vunpack.c.h.b16 %v491
        %v2339 = vunpack.c.l.b16 %v492
        %v2340 = vunpack.c.h.b16 %v492
        %v2341 = vunpack.c.l.b16 %v493
        %v2342 = vunpack.c.h.b16 %v493
        %v2343 = vunpack.c.l.b16 %v494
        %v2344 = vunpack.c.h.b16 %v494
        %v2345 = vunpack.c.l.b16 %v495
        %v2346 = vunpack.c.h.b16 %v495
        %v2347 = vunpack.c.l.b16 %v496
        %v2348 = vunpack.c.h.b16 %v496
        %v2349 = vunpack.c.l.b16 %v497
        %v2350 = vunpack.c.h.b16 %v497
        %v2351 = vunpack.c.l.b16 %v498
        %v2352 = vunpack.c.h.b16 %v498
        %v2353 = vunpack.c.l.b16 %v499
        %v2354 = vunpack.c.h.b16 %v499
        %v2355 = vunpack.c.l.b16 %v500
        %v2356 = vunpack.c.h.b16 %v500
        %v2357 = vunpack.c.l.b16 %v501
        %v2358 = vunpack.c.h.b16 %v501
        %v2359 = vunpack.c.l.b16 %v502
        %v2360 = vunpack.c.h.b16 %v502
        %v2361 = vunpack.c.l.b16 %v503
        %v2362 = vunpack.c.h.b16 %v503
        %v2363 = vunpack.c.l.b16 %v504
        %v2364 = vunpack.c.h.b16 %v504
        %v2365 = vunpack.c.l.b16 %v505
        %v2366 = vunpack.c.h.b16 %v505
        %v2367 = vunpack.c.l.b16 %v506
        %v2368 = vunpack.c.h.b16 %v506
        %v2369 = vunpack.c.l.b16 %v507
        %v2370 = vunpack.c.h.b16 %v507
        %v2371 = vunpack.c.l.b16 %v508
        %v2372 = vunpack.c.h.b16 %v508
        %v2373 = vunpack.c.l.b16 %v509
        %v2374 = vunpack.c.h.b16 %v509
        %v2375 = vunpack.c.l.b16 %v510
        %v2376 = vunpack.c.h.b16 %v510
        %v2377 = vunpack.c.l.b16 %v511
        %v2378 = vunpack.c.h.b16 %v511
        %v2379 = vunpack.c.l.b16 %v512
        %v2380 = vunpack.c.h.b16 %v512
        %v2381 = vunpack.c.l.b16 %v513
        %v2382 = vunpack.c.h.b16 %v513
        %v2383 = vunpack.c.l.b16 %v514
        %v2384 = vunpack.c.h.b16 %v514
        %v2385 = vunpack.c.l.b16 %v515
        %v2386 = vunpack.c.h.b16 %v515
        %v2387 = vunpack.c.l.b16 %v516
        %v2388 = vunpack.c.h.b16 %v516
        %v2389 = vunpack.c.l.b16 %v517
        %v2390 = vunpack.c.h.b16 %v517
        %v2391 = vunpack.c.l.b16 %v518
        %v2392 = vunpack.c.h.b16 %v518
        %v2393 = vunpack.c.l.b16 %v519
        %v2394 = vunpack.c.h.b16 %v519
        %v2395 = vunpack.c.l.b16 %v520
        %v2396 = vunpack.c.h.b16 %v520
        %v2397 = vunpack.c.l.b16 %v521
        %v2398 = vunpack.c.h.b16 %v521
        %v2399 = vunpack.c.l.b16 %v522
        %v2400 = vunpack.c.h.b16 %v522
        %v2401 = vunpack.c.l.b16 %v523
        %v2402 = vunpack.c.h.b16 %v523
        %v2403 = vunpack.c.l.b16 %v524
        %v2404 = vunpack.c.h.b16 %v524
        %v2405 = vunpack.c.l.b16 %v525
        %v2406 = vunpack.c.h.b16 %v525
        %v2407 = vunpack.c.l.b16 %v526
        %v2408 = vunpack.c.h.b16 %v526
        %v2409 = vunpack.c.l.b16 %v527
        %v2410 = vunpack.c.h.b16 %v527
        %v2411 = vunpack.c.l.b16 %v528
        %v2412 = vunpack.c.h.b16 %v528
        %v2413 = vunpack.c.l.b16 %v529
        %v2414 = vunpack.c.h.b16 %v529
        %v2415 = vunpack.c.l.b16 %v530
        %v2416 = vunpack.c.h.b16 %v530
        %v2417 = vunpack.c.l.b16 %v531
        %v2418 = vunpack.c.h.b16 %v531
        %v2419 = vunpack.c.l.b16 %v532
        %v2420 = vunpack.c.h.b16 %v532
        %v2421 = vunpack.c.l.b16 %v533
        %v2422 = vunpack.c.h.b16 %v533
        %v2423 = vunpack.c.l.b16 %v534
        %v2424 = vunpack.c.h.b16 %v534
        %v2425 = vunpack.c.l.b16 %v535
        %v2426 = vunpack.c.h.b16 %v535
        %v2427 = vunpack.c.l.b16 %v536
        %v2428 = vunpack.c.h.b16 %v536
        %v2429 = vunpack.c.l.b16 %v537
        %v2430 = vunpack.c.h.b16 %v537
        %v2431 = vunpack.c.l.b16 %v538
        %v2432 = vunpack.c.h.b16 %v538
        %v2433 = vunpack.c.l.b16 %v539
        %v2434 = vunpack.c.h.b16 %v539
        %v2435 = vunpack.c.l.b16 %v540
        %v2436 = vunpack.c.h.b16 %v540
        %v2437 = vunpack.c.l.b16 %v541
        %v2438 = vunpack.c.h.b16 %v541
        %v2439 = vunpack.c.l.b16 %v542
        %v2440 = vunpack.c.h.b16 %v542
        %v2441 = vunpack.c.l.b16 %v543
        %v2442 = vunpack.c.h.b16 %v543
        %v2443 = vunpack.c.l.b16 %v544
        %v2444 = vunpack.c.h.b16 %v544
        %v2445 = vunpack.c.l.b16 %v545
        %v2446 = vunpack.c.h.b16 %v545
        %v2447 = vunpack.c.l.b16 %v546
        %v2448 = vunpack.c.h.b16 %v546
        %v2449 = vunpack.c.l.b16 %v547
        %v2450 = vunpack.c.h.b16 %v547
        %v2451 = vunpack.c.l.b16 %v548
        %v2452 = vunpack.c.h.b16 %v548
        %v2453 = vunpack.c.l.b16 %v549
        %v2454 = vunpack.c.h.b16 %v549
        %v2455 = vunpack.c.l.b16 %v550
        %v2456 = vunpack.c.h.b16 %v550
        %v2457 = vunpack.c.l.b16 %v551
        %v2458 = vunpack.c.h.b16 %v551
        %v2459 = vunpack.c.l.b16 %v552
        %v2460 = vunpack.c.h.b16 %v552
        %v2461 = vunpack.c.l.b16 %v553
        %v2462 = vunpack.c.h.b16 %v553
        %v2463 = vunpack.c.l.b16 %v554
        %v2464 = vunpack.c.h.b16 %v554
        %v2465 = vunpack.c.l.b16 %v555
        %v2466 = vunpack.c.h.b16 %v555
        %v2467 = vunpack.c.l.b16 %v556
        %v2468 = vunpack.c.h.b16 %v556
        %v2469 = vunpack.c.l.b16 %v557
        %v2470 = vunpack.c.h.b16 %v557
        %v2471 = vunpack.c.l.b16 %v558
        %v2472 = vunpack.c.h.b16 %v558
        %v2473 = vunpack.c.l.b16 %v559
        %v2474 = vunpack.c.h.b16 %v559
        %v2475 = vunpack.c.l.b16 %v560
        %v2476 = vunpack.c.h.b16 %v560
        %v2477 = vunpack.c.l.b16 %v561
        %v2478 = vunpack.c.h.b16 %v561
        %v2479 = vunpack.c.l.b16 %v562
        %v2480 = vunpack.c.h.b16 %v562
        %v2481 = vunpack.c.l.b16 %v563
        %v2482 = vunpack.c.h.b16 %v563
        %v2483 = vunpack.c.l.b16 %v564
        %v2484 = vunpack.c.h.b16 %v564
        %v2485 = vunpack.c.l.b16 %v565
        %v2486 = vunpack.c.h.b16 %v565
        %v2487 = vunpack.c.l.b16 %v566
        %v2488 = vunpack.c.h.b16 %v566
        %v2489 = vunpack.c.l.b16 %v567
        %v2490 = vunpack.c.h.b16 %v567
        %v2491 = vunpack.c.l.b16 %v568
        %v2492 = vunpack.c.h.b16 %v568
        %v2493 = vunpack.c.l.b16 %v569
        %v2494 = vunpack.c.h.b16 %v569
        %v2495 = vunpack.c.l.b16 %v570
        %v2496 = vunpack.c.h.b16 %v570
        %v2497 = vunpack.c.l.b16 %v571
        %v2498 = vunpack.c.h.b16 %v571
        %v2499 = vunpack.c.l.b16 %v572
        %v2500 = vunpack.c.h.b16 %v572
        %v2501 = vunpack.c.l.b16 %v573
        %v2502 = vunpack.c.h.b16 %v573
        %v2503 = vunpack.c.l.b16 %v574
        %v2504 = vunpack.c.h.b16 %v574
        %v2505 = vunpack.c.l.b16 %v575
        %v2506 = vunpack.c.h.b16 %v575
        %v2507 = vunpack.c.l.b16 %v576
        %v2508 = vunpack.c.h.b16 %v576
        %v2509 = vunpack.c.l.b16 %v577
        %v2510 = vunpack.c.h.b16 %v577
        %v2511 = vunpack.c.l.b16 %v578
        %v2512 = vunpack.c.h.b16 %v578
        %v2513 = vunpack.c.l.b16 %v579
        %v2514 = vunpack.c.h.b16 %v579
        %v2515 = vunpack.c.l.b16 %v580
        %v2516 = vunpack.c.h.b16 %v580
        %v2517 = vunpack.c.l.b16 %v581
        %v2518 = vunpack.c.h.b16 %v581
        %v2519 = vunpack.c.l.b16 %v582
        %v2520 = vunpack.c.h.b16 %v582
        %v2521 = vunpack.c.l.b16 %v583
        %v2522 = vunpack.c.h.b16 %v583
        %v2523 = vunpack.c.l.b16 %v584
        %v2524 = vunpack.c.h.b16 %v584
        %v2525 = vunpack.c.l.b16 %v585
        %v2526 = vunpack.c.h.b16 %v585
        %v2527 = vunpack.c.l.b16 %v586
        %v2528 = vunpack.c.h.b16 %v586
        %v2529 = vunpack.c.l.b16 %v587
        %v2530 = vunpack.c.h.b16 %v587
        %v2531 = vunpack.c.l.b16 %v588
        %v2532 = vunpack.c.h.b16 %v588
        %v2533 = vunpack.c.l.b16 %v589
        %v2534 = vunpack.c.h.b16 %v589
        %v2535 = vunpack.c.l.b16 %v590
        %v2536 = vunpack.c.h.b16 %v590
        %v2537 = vunpack.c.l.b16 %v591
        %v2538 = vunpack.c.h.b16 %v591
        %v2539 = vunpack.c.l.b16 %v592
        %v2540 = vunpack.c.h.b16 %v592
        %v2541 = vunpack.c.l.b16 %v593
        %v2542 = vunpack.c.h.b16 %v593
        %v2543 = vunpack.c.l.b16 %v594
        %v2544 = vunpack.c.h.b16 %v594
        %v2545 = vunpack.c.l.b16 %v595
        %v2546 = vunpack.c.h.b16 %v595
        %v2547 = vunpack.c.l.b16 %v596
        %v2548 = vunpack.c.h.b16 %v596
        %v2549 = vunpack.c.l.b16 %v597
        %v2550 = vunpack.c.h.b16 %v597
        %v2551 = vunpack.c.l.b16 %v598
        %v2552 = vunpack.c.h.b16 %v598
        %v2553 = vunpack.c.l.b16 %v599
        %v2554 = vunpack.c.h.b16 %v599
        %v2555 = vunpack.c.l.b16 %v600
        %v2556 = vunpack.c.h.b16 %v600
        %v2557 = vunpack.c.l.b16 %v601
        %v2558 = vunpack.c.h.b16 %v601
        %v2559 = vunpack.c.l.b16 %v602
        %v2560 = vunpack.c.h.b16 %v602
        %v2561 = vunpack.c.l.b16 %v603
        %v2562 = vunpack.c.h.b16 %v603
        %v2563 = vunpack.c.l.b16 %v604
        %v2564 = vunpack.c.h.b16 %v604
        %v2565 = vunpack.c.l.b16 %v605
        %v2566 = vunpack.c.h.b16 %v605
        %v2567 = vunpack.c.l.b16 %v606
        %v2568 = vunpack.c.h.b16 %v606
        %v2569 = vunpack.c.l.b16 %v607
        %v2570 = vunpack.c.h.b16 %v607
        %v2571 = vunpack.c.l.b16 %v608
        %v2572 = vunpack.c.h.b16 %v608
        %v2573 = vunpack.c.l.b16 %v609
        %v2574 = vunpack.c.h.b16 %v609
        %v2575 = vunpack.c.l.b16 %v610
        %v2576 = vunpack.c.h.b16 %v610
        %v2577 = vunpack.c.l.b16 %v611
        %v2578 = vunpack.c.h.b16 %v611
        %v2579 = vunpack.c.l.b16 %v612
        %v2580 = vunpack.c.h.b16 %v612
        %v2581 = vunpack.c.l.b16 %v613
        %v2582 = vunpack.c.h.b16 %v613
        %v2583 = vunpack.c.l.b16 %v614
        %v2584 = vunpack.c.h.b16 %v614
        %v2585 = vunpack.c.l.b16 %v615
        %v2586 = vunpack.c.h.b16 %v615
        %v2587 = vunpack.c.l.b16 %v616
        %v2588 = vunpack.c.h.b16 %v616
        %v2589 = vunpack.c.l.b16 %v617
        %v2590 = vunpack.c.h.b16 %v617
        %v2591 = vunpack.c.l.b16 %v618
        %v2592 = vunpack.c.h.b16 %v618
        %v2593 = vunpack.c.l.b16 %v619
        %v2594 = vunpack.c.h.b16 %v619
        %v2595 = vunpack.c.l.b16 %v620
        %v2596 = vunpack.c.h.b16 %v620
        %v2597 = vunpack.c.l.b16 %v621
        %v2598 = vunpack.c.h.b16 %v621
        %v2599 = vunpack.c.l.b16 %v622
        %v2600 = vunpack.c.h.b16 %v622
        %v2601 = vunpack.c.l.b16 %v623
        %v2602 = vunpack.c.h.b16 %v623
        %v2603 = vunpack.c.l.b16 %v624
        %v2604 = vunpack.c.h.b16 %v624
        %v2605 = vunpack.c.l.b16 %v625
        %v2606 = vunpack.c.h.b16 %v625
        %v2607 = vunpack.c.l.b16 %v626
        %v2608 = vunpack.c.h.b16 %v626
        %v2609 = vunpack.c.l.b16 %v627
        %v2610 = vunpack.c.h.b16 %v627
        %v2611 = vunpack.c.l.b16 %v628
        %v2612 = vunpack.c.h.b16 %v628
        %v2613 = vunpack.c.l.b16 %v629
        %v2614 = vunpack.c.h.b16 %v629
        %v2615 = vunpack.c.l.b16 %v630
        %v2616 = vunpack.c.h.b16 %v630
        %v2617 = vunpack.c.l.b16 %v631
        %v2618 = vunpack.c.h.b16 %v631
        %v2619 = vunpack.c.l.b16 %v632
        %v2620 = vunpack.c.h.b16 %v632
        %v2621 = vunpack.c.l.b16 %v633
        %v2622 = vunpack.c.h.b16 %v633
        %v2623 = vunpack.c.l.b16 %v634
        %v2624 = vunpack.c.h.b16 %v634
        %v2625 = vunpack.c.l.b16 %v635
        %v2626 = vunpack.c.h.b16 %v635
        %v2627 = vunpack.c.l.b16 %v636
        %v2628 = vunpack.c.h.b16 %v636
        %v2629 = vunpack.c.l.b16 %v637
        %v2630 = vunpack.c.h.b16 %v637
        %v2631 = vunpack.c.l.b16 %v638
        %v2632 = vunpack.c.h.b16 %v638
        %v2633 = vunpack.c.l.b16 %v639
        %v2634 = vunpack.c.h.b16 %v639
        %v2635 = vunpack.c.l.b16 %v640
        %v2636 = vunpack.c.h.b16 %v640
        %v2637 = vunpack.c.l.b16 %v641
        %v2638 = vunpack.c.h.b16 %v641
        %v2639 = vunpack.c.l.b16 %v642
        %v2640 = vunpack.c.h.b16 %v642
        %v2641 = vunpack.c.l.b16 %v643
        %v2642 = vunpack.c.h.b16 %v643
        %v2643 = vunpack.c.l.b16 %v644
        %v2644 = vunpack.c.h.b16 %v644
        %v2645 = vunpack.c.l.b16 %v645
        %v2646 = vunpack.c.h.b16 %v645
        %v2647 = vunpack.c.l.b16 %v646
        %v2648 = vunpack.c.h.b16 %v646
        %v2649 = vunpack.c.l.b16 %v647
        %v2650 = vunpack.c.h.b16 %v647
        %v2651 = vunpack.c.l.b16 %v648
        %v2652 = vunpack.c.h.b16 %v648
        %v2653 = vunpack.c.l.b16 %v649
        %v2654 = vunpack.c.h.b16 %v649
        %v2655 = vunpack.c.l.b16 %v650
        %v2656 = vunpack.c.h.b16 %v650
        %v2657 = vunpack.c.l.b16 %v651
        %v2658 = vunpack.c.h.b16 %v651
        %v2659 = vunpack.c.l.b16 %v652
        %v2660 = vunpack.c.h.b16 %v652
        %v2661 = vunpack.c.l.b16 %v653
        %v2662 = vunpack.c.h.b16 %v653
        %v2663 = vunpack.c.l.b16 %v654
        %v2664 = vunpack.c.h.b16 %v654
        %v2665 = vunpack.c.l.b16 %v655
        %v2666 = vunpack.c.h.b16 %v655
        %v2667 = vunpack.c.l.b16 %v656
        %v2668 = vunpack.c.h.b16 %v656
        %v2669 = vunpack.c.l.b16 %v657
        %v2670 = vunpack.c.h.b16 %v657
        %v2671 = vunpack.c.l.b16 %v658
        %v2672 = vunpack.c.h.b16 %v658
        %v2673 = vunpack.c.l.b16 %v659
        %v2674 = vunpack.c.h.b16 %v659
        %v2675 = vunpack.c.l.b16 %v660
        %v2676 = vunpack.c.h.b16 %v660
        %v2677 = vunpack.c.l.b16 %v661
        %v2678 = vunpack.c.h.b16 %v661
        %v2679 = vunpack.c.l.b16 %v662
        %v2680 = vunpack.c.h.b16 %v662
        %v2681 = vunpack.c.l.b16 %v663
        %v2682 = vunpack.c.h.b16 %v663
        %v2683 = vunpack.c.l.b16 %v664
        %v2684 = vunpack.c.h.b16 %v664
        %v2685 = vunpack.c.l.b16 %v665
        %v2686 = vunpack.c.h.b16 %v665
        %v2687 = vunpack.c.l.b16 %v666
        %v2688 = vunpack.c.h.b16 %v666
        %v2689 = vunpack.c.l.b16 %v667
        %v2690 = vunpack.c.h.b16 %v667
        %v2691 = vunpack.c.l.b16 %v668
        %v2692 = vunpack.c.h.b16 %v668
        %v2693 = vunpack.c.l.b16 %v669
        %v2694 = vunpack.c.h.b16 %v669
        %v2695 = vunpack.c.l.b16 %v670
        %v2696 = vunpack.c.h.b16 %v670
        %v2697 = vunpack.c.l.b16 %v671
        %v2698 = vunpack.c.h.b16 %v671
        %v2699 = vunpack.c.l.b16 %v672
        %v2700 = vunpack.c.h.b16 %v672
        %v2701 = vunpack.c.l.b16 %v673
        %v2702 = vunpack.c.h.b16 %v673
        %v2703 = vunpack.c.l.b16 %v674
        %v2704 = vunpack.c.h.b16 %v674
        %v2705 = vunpack.c.l.b16 %v675
        %v2706 = vunpack.c.h.b16 %v675
        %v2707 = vunpack.c.l.b16 %v676
        %v2708 = vunpack.c.h.b16 %v676
        %v2709 = vunpack.c.l.b16 %v677
        %v2710 = vunpack.c.h.b16 %v677
        %v2711 = vunpack.c.l.b16 %v678
        %v2712 = vunpack.c.h.b16 %v678
        %v2713 = vunpack.c.l.b16 %v679
        %v2714 = vunpack.c.h.b16 %v679
        %v2715 = vunpack.c.l.b16 %v680
        %v2716 = vunpack.c.h.b16 %v680
        %v2717 = vunpack.c.l.b16 %v681
        %v2718 = vunpack.c.h.b16 %v681
        %v2719 = vunpack.c.l.b16 %v682
        %v2720 = vunpack.c.h.b16 %v682
        %v2721 = vunpack.c.l.b16 %v683
        %v2722 = vunpack.c.h.b16 %v683
        %v2723 = vunpack.c.l.b16 %v684
        %v2724 = vunpack.c.h.b16 %v684
        %v2725 = vunpack.c.l.b16 %v685
        %v2726 = vunpack.c.h.b16 %v685
        %v2727 = vunpack.c.l.b16 %v686
        %v2728 = vunpack.c.h.b16 %v686
        %v2729 = vunpack.c.l.b16 %v687
        %v2730 = vunpack.c.h.b16 %v687
        %v2731 = vunpack.c.l.b16 %v688
        %v2732 = vunpack.c.h.b16 %v688
        %v2733 = vunpack.c.l.b16 %v689
        %v2734 = vunpack.c.h.b16 %v689
        %v2735 = vunpack.c.l.b16 %v690
        %v2736 = vunpack.c.h.b16 %v690
        %v2737 = vunpack.c.l.b16 %v691
        %v2738 = vunpack.c.h.b16 %v691
        %v2739 = vunpack.c.l.b16 %v692
        %v2740 = vunpack.c.h.b16 %v692
        %v2741 = vunpack.c.l.b16 %v693
        %v2742 = vunpack.c.h.b16 %v693
        %v2743 = vunpack.c.l.b16 %v694
        %v2744 = vunpack.c.h.b16 %v694
        %v2745 = vunpack.c.l.b16 %v695
        %v2746 = vunpack.c.h.b16 %v695
        %v2747 = vunpack.c.l.b16 %v696
        %v2748 = vunpack.c.h.b16 %v696
        %v2749 = vunpack.c.l.b16 %v697
        %v2750 = vunpack.c.h.b16 %v697
        %v2751 = vunpack.c.l.b16 %v698
        %v2752 = vunpack.c.h.b16 %v698
        %v2753 = vunpack.c.l.b16 %v699
        %v2754 = vunpack.c.h.b16 %v699
        %v2755 = vunpack.c.l.b16 %v700
        %v2756 = vunpack.c.h.b16 %v700
        %v2757 = vunpack.c.l.b16 %v701
        %v2758 = vunpack.c.h.b16 %v701
        %v2759 = vunpack.c.l.b16 %v702
        %v2760 = vunpack.c.h.b16 %v702
        %v2761 = vunpack.c.l.b16 %v703
        %v2762 = vunpack.c.h.b16 %v703
        %v2763 = vunpack.c.l.b16 %v704
        %v2764 = vunpack.c.h.b16 %v704
        %v2765 = vunpack.c.l.b16 %v705
        %v2766 = vunpack.c.h.b16 %v705
        %v2767 = vunpack.c.l.b16 %v706
        %v2768 = vunpack.c.h.b16 %v706
        %v2769 = vunpack.c.l.b16 %v707
        %v2770 = vunpack.c.h.b16 %v707
        %v2771 = vunpack.c.l.b16 %v708
        %v2772 = vunpack.c.h.b16 %v708
        %v2773 = vunpack.c.l.b16 %v709
        %v2774 = vunpack.c.h.b16 %v709
        %v2775 = vunpack.c.l.b16 %v710
        %v2776 = vunpack.c.h.b16 %v710
        %v2777 = vunpack.c.l.b16 %v711
        %v2778 = vunpack.c.h.b16 %v711
        %v2779 = vunpack.c.l.b16 %v712
        %v2780 = vunpack.c.h.b16 %v712
        %v2781 = vunpack.c.l.b16 %v713
        %v2782 = vunpack.c.h.b16 %v713
        %v2783 = vunpack.c.l.b16 %v714
        %v2784 = vunpack.c.h.b16 %v714
        %v2785 = vunpack.c.l.b16 %v715
        %v2786 = vunpack.c.h.b16 %v715
        %v2787 = vunpack.c.l.b16 %v716
        %v2788 = vunpack.c.h.b16 %v716
        %v2789 = vunpack.c.l.b16 %v717
        %v2790 = vunpack.c.h.b16 %v717
        %v2791 = vunpack.c.l.b16 %v718
        %v2792 = vunpack.c.h.b16 %v718
        %v2793 = vunpack.c.l.b16 %v719
        %v2794 = vunpack.c.h.b16 %v719
        %v2795 = vunpack.c.l.b16 %v720
        %v2796 = vunpack.c.h.b16 %v720
        %v2797 = vunpack.c.l.b16 %v721
        %v2798 = vunpack.c.h.b16 %v721
        %v2799 = vunpack.c.l.b16 %v722
        %v2800 = vunpack.c.h.b16 %v722
        %v2801 = vunpack.c.l.b16 %v723
        %v2802 = vunpack.c.h.b16 %v723
        %v2803 = vunpack.c.l.b16 %v724
        %v2804 = vunpack.c.h.b16 %v724
        %v2805 = vunpack.c.l.b16 %v725
        %v2806 = vunpack.c.h.b16 %v725
        %v2807 = vunpack.c.l.b16 %v726
        %v2808 = vunpack.c.h.b16 %v726
        %v2809 = vunpack.c.l.b16 %v727
        %v2810 = vunpack.c.h.b16 %v727
        %v2811 = vunpack.c.l.b16 %v728
        %v2812 = vunpack.c.h.b16 %v728
        %v2813 = vunpack.c.l.b16 %v729
        %v2814 = vunpack.c.h.b16 %v729
        %v2815 = vunpack.c.l.b16 %v730
        %v2816 = vunpack.c.h.b16 %v730
        %v2817 = vunpack.c.l.b16 %v731
        %v2818 = vunpack.c.h.b16 %v731
        %v2819 = vunpack.c.l.b16 %v732
        %v2820 = vunpack.c.h.b16 %v732
        %v2821 = vunpack.c.l.b16 %v733
        %v2822 = vunpack.c.h.b16 %v733
        %v2823 = vunpack.c.l.b16 %v734
        %v2824 = vunpack.c.h.b16 %v734
        %v2825 = vunpack.c.l.b16 %v735
        %v2826 = vunpack.c.h.b16 %v735
        %v2827 = vunpack.c.l.b16 %v736
        %v2828 = vunpack.c.h.b16 %v736
        %v2829 = vunpack.c.l.b16 %v737
        %v2830 = vunpack.c.h.b16 %v737
        %v2831 = vunpack.c.l.b16 %v738
        %v2832 = vunpack.c.h.b16 %v738
        %v2833 = vunpack.c.l.b16 %v739
        %v2834 = vunpack.c.h.b16 %v739
        %v2835 = vunpack.c.l.b16 %v740
        %v2836 = vunpack.c.h.b16 %v740
        %v2837 = vunpack.c.l.b16 %v741
        %v2838 = vunpack.c.h.b16 %v741
        %v2839 = vunpack.c.l.b16 %v742
        %v2840 = vunpack.c.h.b16 %v742
        %v2841 = vunpack.c.l.b16 %v743
        %v2842 = vunpack.c.h.b16 %v743
        %v2843 = vunpack.c.l.b16 %v744
        %v2844 = vunpack.c.h.b16 %v744
        %v2845 = vunpack.c.l.b16 %v745
        %v2846 = vunpack.c.h.b16 %v745
        %v2847 = vunpack.c.l.b16 %v746
        %v2848 = vunpack.c.h.b16 %v746
        %v2849 = vunpack.c.l.b16 %v747
        %v2850 = vunpack.c.h.b16 %v747
        %v2851 = vunpack.c.l.b16 %v748
        %v2852 = vunpack.c.h.b16 %v748
        %v2853 = vunpack.c.l.b16 %v749
        %v2854 = vunpack.c.h.b16 %v749
        %v2855 = vunpack.c.l.b16 %v750
        %v2856 = vunpack.c.h.b16 %v750
        %v2857 = vunpack.c.l.b16 %v751
        %v2858 = vunpack.c.h.b16 %v751
        %v2859 = vunpack.c.l.b16 %v752
        %v2860 = vunpack.c.h.b16 %v752
        %v2861 = vunpack.c.l.b16 %v753
        %v2862 = vunpack.c.h.b16 %v753
        %v2863 = vunpack.c.l.b16 %v754
        %v2864 = vunpack.c.h.b16 %v754
        %v2865 = vunpack.c.l.b16 %v755
        %v2866 = vunpack.c.h.b16 %v755
        %v2867 = vunpack.c.l.b16 %v756
        %v2868 = vunpack.c.h.b16 %v756
        %v2869 = vunpack.c.l.b16 %v757
        %v2870 = vunpack.c.h.b16 %v757
        %v2871 = vunpack.c.l.b16 %v758
        %v2872 = vunpack.c.h.b16 %v758
        %v2873 = vunpack.c.l.b16 %v759
        %v2874 = vunpack.c.h.b16 %v759
        %v2875 = vunpack.c.l.b16 %v760
        %v2876 = vunpack.c.h.b16 %v760
        %v2877 = vunpack.c.l.b16 %v761
        %v2878 = vunpack.c.h.b16 %v761
        %v2879 = vunpack.c.l.b16 %v762
        %v2880 = vunpack.c.h.b16 %v762
        %v2881 = vunpack.c.l.b16 %v763
        %v2882 = vunpack.c.h.b16 %v763
        %v2883 = vunpack.c.l.b16 %v764
        %v2884 = vunpack.c.h.b16 %v764
        %v2885 = vunpack.c.l.b16 %v765
        %v2886 = vunpack.c.h.b16 %v765
        %v2887 = vunpack.c.l.b16 %v766
        %v2888 = vunpack.c.h.b16 %v766
        %v2889 = vunpack.c.l.b16 %v767
        %v2890 = vunpack.c.h.b16 %v767
        %v2891 = vunpack.c.l.b16 %v768
        %v2892 = vunpack.c.h.b16 %v768
        %v2893 = vunpack.c.l.b16 %v769
        %v2894 = vunpack.c.h.b16 %v769
        %v2895 = vunpack.c.l.b16 %v770
        %v2896 = vunpack.c.h.b16 %v770
        %v2897 = vunpack.c.l.b16 %v771
        %v2898 = vunpack.c.h.b16 %v771
        %v2899 = vunpack.c.l.b16 %v772
        %v2900 = vunpack.c.h.b16 %v772
        %v2901 = vunpack.c.l.b16 %v773
        %v2902 = vunpack.c.h.b16 %v773
        %v2903 = vunpack.c.l.b16 %v774
        %v2904 = vunpack.c.h.b16 %v774
        %v2905 = vunpack.c.l.b16 %v775
        %v2906 = vunpack.c.h.b16 %v775
        %v2907 = vunpack.c.l.b16 %v776
        %v2908 = vunpack.c.h.b16 %v776
        %v2909 = vunpack.c.l.b16 %v777
        %v2910 = vunpack.c.h.b16 %v777
        %v2911 = vunpack.c.l.b16 %v778
        %v2912 = vunpack.c.h.b16 %v778
        %v2913 = vunpack.c.l.b16 %v779
        %v2914 = vunpack.c.h.b16 %v779
        %v2915 = vunpack.c.l.b16 %v780
        %v2916 = vunpack.c.h.b16 %v780
        %v2917 = vunpack.c.l.b16 %v781
        %v2918 = vunpack.c.h.b16 %v781
        %v2919 = vunpack.c.l.b16 %v782
        %v2920 = vunpack.c.h.b16 %v782
        %v2921 = vunpack.c.l.b16 %v783
        %v2922 = vunpack.c.h.b16 %v783
        %v2923 = vunpack.c.l.b16 %v784
        %v2924 = vunpack.c.h.b16 %v784
        %v2925 = vunpack.c.l.b16 %v785
        %v2926 = vunpack.c.h.b16 %v785
        %v2927 = vunpack.c.l.b16 %v786
        %v2928 = vunpack.c.h.b16 %v786
        %v2929 = vunpack.c.l.b16 %v787
        %v2930 = vunpack.c.h.b16 %v787
        %v2931 = vunpack.c.l.b16 %v788
        %v2932 = vunpack.c.h.b16 %v788
        %v2933 = vunpack.c.l.b16 %v789
        %v2934 = vunpack.c.h.b16 %v789
        %v2935 = vunpack.c.l.b16 %v790
        %v2936 = vunpack.c.h.b16 %v790
        %v2937 = vunpack.c.l.b16 %v791
        %v2938 = vunpack.c.h.b16 %v791
        %v2939 = vunpack.c.l.b16 %v792
        %v2940 = vunpack.c.h.b16 %v792
        %v2941 = vunpack.c.l.b16 %v793
        %v2942 = vunpack.c.h.b16 %v793
        %v2943 = vunpack.c.l.b16 %v794
        %v2944 = vunpack.c.h.b16 %v794
        %v2945 = vunpack.c.l.b16 %v795
        %v2946 = vunpack.c.h.b16 %v795
        %v2947 = vunpack.c.l.b16 %v796
        %v2948 = vunpack.c.h.b16 %v796
        %v2949 = vunpack.c.l.b16 %v797
        %v2950 = vunpack.c.h.b16 %v797
        %v2951 = vunpack.c.l.b16 %v798
        %v2952 = vunpack.c.h.b16 %v798
        %v2953 = vunpack.c.l.b16 %v799
        %v2954 = vunpack.c.h.b16 %v799
        %v2955 = vunpack.c.l.b16 %v800
        %v2956 = vunpack.c.h.b16 %v800
        %v2957 = vunpack.c.l.b16 %v801
        %v2958 = vunpack.c.h.b16 %v801
        %v2959 = vunpack.c.l.b16 %v802
        %v2960 = vunpack.c.h.b16 %v802
        %v2961 = vunpack.c.l.b16 %v803
        %v2962 = vunpack.c.h.b16 %v803
        %v2963 = vunpack.c.l.b16 %v804
        %v2964 = vunpack.c.h.b16 %v804
        %v2965 = vunpack.c.l.b16 %v805
        %v2966 = vunpack.c.h.b16 %v805
        %v2967 = vunpack.c.l.b16 %v806
        %v2968 = vunpack.c.h.b16 %v806
        %v2969 = vunpack.c.l.b16 %v807
        %v2970 = vunpack.c.h.b16 %v807
        %v2971 = vunpack.c.l.b16 %v808
        %v2972 = vunpack.c.h.b16 %v808
        %v2973 = vunpack.c.l.b16 %v809
        %v2974 = vunpack.c.h.b16 %v809
        %v2975 = vunpack.c.l.b16 %v810
        %v2976 = vunpack.c.h.b16 %v810
        %v2977 = vunpack.c.l.b16 %v811
        %v2978 = vunpack.c.h.b16 %v811
        %v2979 = vunpack.c.l.b16 %v812
        %v2980 = vunpack.c.h.b16 %v812
        %v2981 = vunpack.c.l.b16 %v813
        %v2982 = vunpack.c.h.b16 %v813
        %v2983 = vunpack.c.l.b16 %v814
        %v2984 = vunpack.c.h.b16 %v814
        %v2985 = vunpack.c.l.b16 %v815
        %v2986 = vunpack.c.h.b16 %v815
        %v2987 = vunpack.c.l.b16 %v816
        %v2988 = vunpack.c.h.b16 %v816
        %v2989 = vunpack.c.l.b16 %v817
        %v2990 = vunpack.c.h.b16 %v817
        %v2991 = vunpack.c.l.b16 %v818
        %v2992 = vunpack.c.h.b16 %v818
        %v2993 = vunpack.c.l.b16 %v819
        %v2994 = vunpack.c.h.b16 %v819
        %v2995 = vunpack.c.l.b16 %v820
        %v2996 = vunpack.c.h.b16 %v820
        %v2997 = vunpack.c.l.b16 %v821
        %v2998 = vunpack.c.h.b16 %v821
        %v2999 = vunpack.c.l.b16 %v822
        %v3000 = vunpack.c.h.b16 %v822
        %v3001 = vunpack.c.l.b16 %v823
        %v3002 = vunpack.c.h.b16 %v823
        %v3003 = vunpack.c.l.b16 %v824
        %v3004 = vunpack.c.h.b16 %v824
        %v3005 = vunpack.c.l.b16 %v825
        %v3006 = vunpack.c.h.b16 %v825
        %v3007 = vunpack.c.l.b16 %v826
        %v3008 = vunpack.c.h.b16 %v826
        %v3009 = vunpack.c.l.b16 %v827
        %v3010 = vunpack.c.h.b16 %v827
        %v3011 = vunpack.c.l.b16 %v828
        %v3012 = vunpack.c.h.b16 %v828
        %v3013 = vunpack.c.l.b16 %v829
        %v3014 = vunpack.c.h.b16 %v829
        %v3015 = vunpack.c.l.b16 %v830
        %v3016 = vunpack.c.h.b16 %v830
        %v3017 = vunpack.c.l.b16 %v831
        %v3018 = vunpack.c.h.b16 %v831
        %v3019 = vunpack.c.l.b16 %v832
        %v3020 = vunpack.c.h.b16 %v832
        %v3021 = vunpack.c.l.b16 %v833
        %v3022 = vunpack.c.h.b16 %v833
        %v3023 = vunpack.c.l.b16 %v834
        %v3024 = vunpack.c.h.b16 %v834
        %v3025 = vunpack.c.l.b16 %v835
        %v3026 = vunpack.c.h.b16 %v835
        %v3027 = vunpack.c.l.b16 %v836
        %v3028 = vunpack.c.h.b16 %v836
        %v3029 = vunpack.c.l.b16 %v837
        %v3030 = vunpack.c.h.b16 %v837
        %v3031 = vunpack.c.l.b16 %v838
        %v3032 = vunpack.c.h.b16 %v838
        %v3033 = vunpack.c.l.b16 %v839
        %v3034 = vunpack.c.h.b16 %v839
        %v3035 = vunpack.c.l.b16 %v840
        %v3036 = vunpack.c.h.b16 %v840
        %v3037 = vunpack.c.l.b16 %v841
        %v3038 = vunpack.c.h.b16 %v841
        %v3039 = vunpack.c.l.b16 %v842
        %v3040 = vunpack.c.h.b16 %v842
        %v3041 = vunpack.c.l.b16 %v843
        %v3042 = vunpack.c.h.b16 %v843
        %v3043 = vunpack.c.l.b16 %v844
        %v3044 = vunpack.c.h.b16 %v844
        %v3045 = vunpack.c.l.b16 %v845
        %v3046 = vunpack.c.h.b16 %v845
        %v3047 = vunpack.c.l.b16 %v846
        %v3048 = vunpack.c.h.b16 %v846
        %v3049 = vunpack.c.l.b16 %v847
        %v3050 = vunpack.c.h.b16 %v847
        %v3051 = vunpack.c.l.b16 %v848
        %v3052 = vunpack.c.h.b16 %v848
        %v3053 = vunpack.c.l.b16 %v849
        %v3054 = vunpack.c.h.b16 %v849
        %v3055 = vunpack.c.l.b16 %v850
        %v3056 = vunpack.c.h.b16 %v850
        %v3057 = vunpack.c.l.b16 %v851
        %v3058 = vunpack.c.h.b16 %v851
        %v3059 = vunpack.c.l.b16 %v852
        %v3060 = vunpack.c.h.b16 %v852
        %v3061 = vunpack.c.l.b16 %v853
        %v3062 = vunpack.c.h.b16 %v853
        %v3063 = vunpack.c.l.b16 %v854
        %v3064 = vunpack.c.h.b16 %v854
        %v3065 = vunpack.c.l.b16 %v855
        %v3066 = vunpack.c.h.b16 %v855
        %v3067 = vunpack.c.l.b16 %v856
        %v3068 = vunpack.c.h.b16 %v856
        %v3069 = vunpack.c.l.b16 %v857
        %v3070 = vunpack.c.h.b16 %v857
        %v3071 = vunpack.c.l.b16 %v858
        %v3072 = vunpack.c.h.b16 %v858
        %v3073 = vunpack.c.l.b16 %v859
        %v3074 = vunpack.c.h.b16 %v859
        %v3075 = vunpack.c.l.b16 %v860
        %v3076 = vunpack.c.h.b16 %v860
        %v3077 = vunpack.c.l.b16 %v861
        %v3078 = vunpack.c.h.b16 %v861
        %v3079 = vunpack.c.l.b16 %v862
        %v3080 = vunpack.c.h.b16 %v862
        %v3081 = vunpack.c.l.b16 %v863
        %v3082 = vunpack.c.h.b16 %v863
        %v3083 = vunpack.c.l.b16 %v864
        %v3084 = vunpack.c.h.b16 %v864
        %v3085 = vunpack.c.l.b16 %v865
        %v3086 = vunpack.c.h.b16 %v865
        %v3087 = vunpack.c.l.b16 %v866
        %v3088 = vunpack.c.h.b16 %v866
        %v3089 = vunpack.c.l.b16 %v867
        %v3090 = vunpack.c.h.b16 %v867
        %v3091 = vunpack.c.l.b16 %v868
        %v3092 = vunpack.c.h.b16 %v868
        %v3093 = vunpack.c.l.b16 %v869
        %v3094 = vunpack.c.h.b16 %v869
        %v3095 = vunpack.c.l.b16 %v870
        %v3096 = vunpack.c.h.b16 %v870
        %v3097 = vunpack.c.l.b16 %v871
        %v3098 = vunpack.c.h.b16 %v871
        %v3099 = vunpack.c.l.b16 %v872
        %v3100 = vunpack.c.h.b16 %v872
        %v3101 = vunpack.c.l.b16 %v873
        %v3102 = vunpack.c.h.b16 %v873
        %v3103 = vunpack.c.l.b16 %v874
        %v3104 = vunpack.c.h.b16 %v874
        %v3105 = vunpack.c.l.b16 %v875
        %v3106 = vunpack.c.h.b16 %v875
        %v3107 = vunpack.c.l.b16 %v876
        %v3108 = vunpack.c.h.b16 %v876
        %v3109 = vunpack.c.l.b16 %v877
        %v3110 = vunpack.c.h.b16 %v877
        %v3111 = vunpack.c.l.b16 %v878
        %v3112 = vunpack.c.h.b16 %v878
        %v3113 = vunpack.c.l.b16 %v879
        %v3114 = vunpack.c.h.b16 %v879
        %v3115 = vunpack.c.l.b16 %v880
        %v3116 = vunpack.c.h.b16 %v880
        %v3117 = vunpack.c.l.b16 %v881
        %v3118 = vunpack.c.h.b16 %v881
        %v3119 = vunpack.c.l.b16 %v882
        %v3120 = vunpack.c.h.b16 %v882
        %v3121 = vunpack.c.l.b16 %v883
        %v3122 = vunpack.c.h.b16 %v883
        %v3123 = vunpack.c.l.b16 %v884
        %v3124 = vunpack.c.h.b16 %v884
        %v3125 = vunpack.c.l.b16 %v885
        %v3126 = vunpack.c.h.b16 %v885
        %v3127 = vunpack.c.l.b16 %v886
        %v3128 = vunpack.c.h.b16 %v886
        %v3129 = vunpack.c.l.b16 %v887
        %v3130 = vunpack.c.h.b16 %v887
        %v3131 = vunpack.c.l.b16 %v888
        %v3132 = vunpack.c.h.b16 %v888
        %v3133 = vunpack.c.l.b16 %v889
        %v3134 = vunpack.c.h.b16 %v889
        %v3135 = vunpack.c.l.b16 %v890
        %v3136 = vunpack.c.h.b16 %v890
        %v3137 = vunpack.c.l.b16 %v891
        %v3138 = vunpack.c.h.b16 %v891
        %v3139 = vunpack.c.l.b16 %v892
        %v3140 = vunpack.c.h.b16 %v892
        %v3141 = vunpack.c.l.b16 %v893
        %v3142 = vunpack.c.h.b16 %v893
        %v3143 = vunpack.c.l.b16 %v894
        %v3144 = vunpack.c.h.b16 %v894
        %v3145 = vunpack.c.l.b16 %v895
        %v3146 = vunpack.c.h.b16 %v895
        %v3147 = vunpack.c.l.b16 %v896
        %v3148 = vunpack.c.h.b16 %v896
        %v3149 = vunpack.c.l.b16 %v897
        %v3150 = vunpack.c.h.b16 %v897
        %v3151 = vunpack.c.l.b16 %v898
        %v3152 = vunpack.c.h.b16 %v898
        %v3153 = vunpack.c.l.b16 %v899
        %v3154 = vunpack.c.h.b16 %v899
        %v3155 = vunpack.c.l.b16 %v900
        %v3156 = vunpack.c.h.b16 %v900
        %v3157 = vunpack.c.l.b16 %v901
        %v3158 = vunpack.c.h.b16 %v901
        %v3159 = vunpack.c.l.b16 %v902
        %v3160 = vunpack.c.h.b16 %v902
        %v3161 = vunpack.c.l.b16 %v903
        %v3162 = vunpack.c.h.b16 %v903
        %v3163 = vunpack.c.l.b16 %v904
        %v3164 = vunpack.c.h.b16 %v904
        %v3165 = vunpack.c.l.b16 %v905
        %v3166 = vunpack.c.h.b16 %v905
        %v3167 = vunpack.c.l.b16 %v906
        %v3168 = vunpack.c.h.b16 %v906
        %v3169 = vunpack.c.l.b16 %v907
        %v3170 = vunpack.c.h.b16 %v907
        %v3171 = vunpack.c.l.b16 %v908
        %v3172 = vunpack.c.h.b16 %v908
        %v3173 = vunpack.c.l.b16 %v909
        %v3174 = vunpack.c.h.b16 %v909
        %v3175 = vunpack.c.l.b16 %v910
        %v3176 = vunpack.c.h.b16 %v910
        %v3177 = vunpack.c.l.b16 %v911
        %v3178 = vunpack.c.h.b16 %v911
        %v3179 = vunpack.c.l.b16 %v912
        %v3180 = vunpack.c.h.b16 %v912
        %v3181 = vunpack.c.l.b16 %v913
        %v3182 = vunpack.c.h.b16 %v913
        %v3183 = vunpack.c.l.b16 %v914
        %v3184 = vunpack.c.h.b16 %v914
        %v3185 = vunpack.c.l.b16 %v915
        %v3186 = vunpack.c.h.b16 %v915
        %v3187 = vunpack.c.l.b16 %v916
        %v3188 = vunpack.c.h.b16 %v916
        %v3189 = vunpack.c.l.b16 %v917
        %v3190 = vunpack.c.h.b16 %v917
        %v3191 = vunpack.c.l.b16 %v918
        %v3192 = vunpack.c.h.b16 %v918
        %v3193 = vunpack.c.l.b16 %v919
        %v3194 = vunpack.c.h.b16 %v919
        %v3195 = vunpack.c.l.b16 %v920
        %v3196 = vunpack.c.h.b16 %v920
        %v3197 = vunpack.c.l.b16 %v921
        %v3198 = vunpack.c.h.b16 %v921
        %v3199 = vunpack.c.l.b16 %v922
        %v3200 = vunpack.c.h.b16 %v922
        %v3201 = vunpack.c.l.b16 %v923
        %v3202 = vunpack.c.h.b16 %v923
        %v3203 = vunpack.c.l.b16 %v924
        %v3204 = vunpack.c.h.b16 %v924
        %v3205 = vunpack.c.l.b16 %v925
        %v3206 = vunpack.c.h.b16 %v925
        %v3207 = vunpack.c.l.b16 %v926
        %v3208 = vunpack.c.h.b16 %v926
        %v3209 = vunpack.c.l.b16 %v927
        %v3210 = vunpack.c.h.b16 %v927
        %v3211 = vunpack.c.l.b16 %v928
        %v3212 = vunpack.c.h.b16 %v928
        %v3213 = vunpack.c.l.b16 %v929
        %v3214 = vunpack.c.h.b16 %v929
        %v3215 = vunpack.c.l.b16 %v930
        %v3216 = vunpack.c.h.b16 %v930
        %v3217 = vunpack.c.l.b16 %v931
        %v3218 = vunpack.c.h.b16 %v931
        %v3219 = vunpack.c.l.b16 %v932
        %v3220 = vunpack.c.h.b16 %v932
        %v3221 = vunpack.c.l.b16 %v933
        %v3222 = vunpack.c.h.b16 %v933
        %v3223 = vunpack.c.l.b16 %v934
        %v3224 = vunpack.c.h.b16 %v934
        %v3225 = vunpack.c.l.b16 %v935
        %v3226 = vunpack.c.h.b16 %v935
        %v3227 = vunpack.c.l.b16 %v936
        %v3228 = vunpack.c.h.b16 %v936
        %v3229 = vunpack.c.l.b16 %v937
        %v3230 = vunpack.c.h.b16 %v937
        %v3231 = vunpack.c.l.b16 %v938
        %v3232 = vunpack.c.h.b16 %v938
        %v3233 = vunpack.c.l.b16 %v939
        %v3234 = vunpack.c.h.b16 %v939
        %v3235 = vunpack.c.l.b16 %v940
        %v3236 = vunpack.c.h.b16 %v940
        %v3237 = vunpack.c.l.b16 %v941
        %v3238 = vunpack.c.h.b16 %v941
        %v3239 = vunpack.c.l.b16 %v942
        %v3240 = vunpack.c.h.b16 %v942
        %v3241 = vunpack.c.l.b16 %v943
        %v3242 = vunpack.c.h.b16 %v943
        %v3243 = vunpack.c.l.b16 %v944
        %v3244 = vunpack.c.h.b16 %v944
        %v3245 = vunpack.c.l.b16 %v945
        %v3246 = vunpack.c.h.b16 %v945
        %v3247 = vunpack.c.l.b16 %v946
        %v3248 = vunpack.c.h.b16 %v946
        %v3249 = vunpack.c.l.b16 %v947
        %v3250 = vunpack.c.h.b16 %v947
        %v3251 = vunpack.c.l.b16 %v948
        %v3252 = vunpack.c.h.b16 %v948
        %v3253 = vunpack.c.l.b16 %v949
        %v3254 = vunpack.c.h.b16 %v949
        %v3255 = vunpack.c.l.b16 %v950
        %v3256 = vunpack.c.h.b16 %v950
        %v3257 = vunpack.c.l.b16 %v951
        %v3258 = vunpack.c.h.b16 %v951
        %v3259 = vunpack.c.l.b16 %v952
        %v3260 = vunpack.c.h.b16 %v952
        %v3261 = vunpack.c.l.b16 %v953
        %v3262 = vunpack.c.h.b16 %v953
        %v3263 = vunpack.c.l.b16 %v954
        %v3264 = vunpack.c.h.b16 %v954
        %v3265 = vunpack.c.l.b16 %v955
        %v3266 = vunpack.c.h.b16 %v955
        %v3267 = vunpack.c.l.b16 %v956
        %v3268 = vunpack.c.h.b16 %v956
        %v3269 = vunpack.c.l.b16 %v957
        %v3270 = vunpack.c.h.b16 %v957
        %v3271 = vunpack.c.l.b16 %v958
        %v3272 = vunpack.c.h.b16 %v958
        %v3273 = vunpack.c.l.b16 %v959
        %v3274 = vunpack.c.h.b16 %v959
        %v3275 = vunpack.c.l.b16 %v960
        %v3276 = vunpack.c.h.b16 %v960
        %v3277 = vunpack.c.l.b16 %v961
        %v3278 = vunpack.c.h.b16 %v961
        %v3279 = vunpack.c.l.b16 %v962
        %v3280 = vunpack.c.h.b16 %v962
        %v3281 = vunpack.c.l.b16 %v963
        %v3282 = vunpack.c.h.b16 %v963
        %v3283 = vunpack.c.l.b16 %v964
        %v3284 = vunpack.c.h.b16 %v964
        %v3285 = vunpack.c.l.b16 %v965
        %v3286 = vunpack.c.h.b16 %v965
        %v3287 = vunpack.c.l.b16 %v966
        %v3288 = vunpack.c.h.b16 %v966
        %v3289 = vunpack.c.l.b16 %v967
        %v3290 = vunpack.c.h.b16 %v967
        %v3291 = vunpack.c.l.b16 %v968
        %v3292 = vunpack.c.h.b16 %v968
        %v3293 = vunpack.c.l.b16 %v969
        %v3294 = vunpack.c.h.b16 %v969
        %v3295 = vpack.c.b16 %v1775, %v1759
        %v3296 = vpack.c.b16 %v1776, %v1760
        %v3297 = vpack.c.b16 %v1777, %v1761
        %v3298 = vpack.c.b16 %v1778, %v1762
        %v3299 = vpack.c.b16 %v1779, %v1763
        %v3300 = vpack.c.b16 %v1780, %v1764
        %v3301 = vpack.c.b16 %v1781, %v1765
        %v3302 = vpack.c.b16 %v1782, %v1766
        %v3303 = vpack.c.b16 %v1783, %v1767
        %v3304 = vpack.c.b16 %v1784, %v1768
        %v3305 = vpack.c.b16 %v1785, %v1769
        %v3306 = vpack.c.b16 %v1786, %v1770
        %v3307 = vpack.c.b16 %v1787, %v1771
        %v3308 = vpack.c.b16 %v1788, %v1772
        %v3309 = vpack.c.b16 %v1789, %v1773
        %v3310 = vpack.c.b16 %v1790, %v1774
        %v3311 = vpack.c.b16 %v1807, %v1791
        %v3312 = vpack.c.b16 %v1808, %v1792
        %v3313 = vpack.c.b16 %v1809, %v1793
        %v3314 = vpack.c.b16 %v1810, %v1794
        %v3315 = vpack.c.b16 %v1811, %v1795
        %v3316 = vpack.c.b16 %v1812, %v1796
        %v3317 = vpack.c.b16 %v1813, %v1797
        %v3318 = vpack.c.b16 %v1814, %v1798
        %v3319 = vpack.c.b16 %v1815, %v1799
        %v3320 = vpack.c.b16 %v1816, %v1800
        %v3321 = vpack.c.b16 %v1817, %v1801
        %v3322 = vpack.c.b16 %v1818, %v1802
        %v3323 = vpack.c.b16 %v1819, %v1803
        %v3324 = vpack.c.b16 %v1820, %v1804
        %v3325 = vpack.c.b16 %v1821, %v1805
        %v3326 = vpack.c.b16 %v1822, %v1806
        %v3327 = vpack.c.b16 %v1839, %v1823
        %v3328 = vpack.c.b16 %v1840, %v1824
        %v3329 = vpack.c.b16 %v1841, %v1825
        %v3330 = vpack.c.b16 %v1842, %v1826
        %v3331 = vpack.c.b16 %v1843, %v1827
        %v3332 = vpack.c.b16 %v1844, %v1828
        %v3333 = vpack.c.b16 %v1845, %v1829
        %v3334 = vpack.c.b16 %v1846, %v1830
        %v3335 = vpack.c.b16 %v1847, %v1831
        %v3336 = vpack.c.b16 %v1848, %v1832
        %v3337 = vpack.c.b16 %v1849, %v1833
        %v3338 = vpack.c.b16 %v1850, %v1834
        %v3339 = vpack.c.b16 %v1851, %v1835
        %v3340 = vpack.c.b16 %v1852, %v1836
        %v3341 = vpack.c.b16 %v1853, %v1837
        %v3342 = vpack.c.b16 %v1854, %v1838
        %v3343 = vpack.c.b16 %v1871, %v1855
        %v3344 = vpack.c.b16 %v1872, %v1856
        %v3345 = vpack.c.b16 %v1873, %v1857
        %v3346 = vpack.c.b16 %v1874, %v1858
        %v3347 = vpack.c.b16 %v1875, %v1859
        %v3348 = vpack.c.b16 %v1876, %v1860
        %v3349 = vpack.c.b16 %v1877, %v1861
        %v3350 = vpack.c.b16 %v1878, %v1862
        %v3351 = vpack.c.b16 %v1879, %v1863
        %v3352 = vpack.c.b16 %v1880, %v1864
        %v3353 = vpack.c.b16 %v1881, %v1865
        %v3354 = vpack.c.b16 %v1882, %v1866
        %v3355 = vpack.c.b16 %v1883, %v1867
        %v3356 = vpack.c.b16 %v1884, %v1868
        %v3357 = vpack.c.b16 %v1885, %v1869
        %v3358 = vpack.c.b16 %v1886, %v1870
        %v3359 = vpack.c.b16 %v1903, %v1887
        %v3360 = vpack.c.b16 %v1904, %v1888
        %v3361 = vpack.c.b16 %v1905, %v1889
        %v3362 = vpack.c.b16 %v1906, %v1890
        %v3363 = vpack.c.b16 %v1907, %v1891
        %v3364 = vpack.c.b16 %v1908, %v1892
        %v3365 = vpack.c.b16 %v1909, %v1893
        %v3366 = vpack.c.b16 %v1910, %v1894
        %v3367 = vpack.c.b16 %v1911, %v1895
        %v3368 = vpack.c.b16 %v1912, %v1896
        %v3369 = vpack.c.b16 %v1913, %v1897
        %v3370 = vpack.c.b16 %v1914, %v1898
        %v3371 = vpack.c.b16 %v1915, %v1899
        %v3372 = vpack.c.b16 %v1916, %v1900
        %v3373 = vpack.c.b16 %v1917, %v1901
        %v3374 = vpack.c.b16 %v1918, %v1902
        %v3375 = vpack.c.b16 %v1935, %v1919
        %v3376 = vpack.c.b16 %v1936, %v1920
        %v3377 = vpack.c.b16 %v1937, %v1921
        %v3378 = vpack.c.b16 %v1938, %v1922
        %v3379 = vpack.c.b16 %v1939, %v1923
        %v3380 = vpack.c.b16 %v1940, %v1924
        %v3381 = vpack.c.b16 %v1941, %v1925
        %v3382 = vpack.c.b16 %v1942, %v1926
        %v3383 = vpack.c.b16 %v1943, %v1927
        %v3384 = vpack.c.b16 %v1944, %v1928
        %v3385 = vpack.c.b16 %v1945, %v1929
        %v3386 = vpack.c.b16 %v1946, %v1930
        %v3387 = vpack.c.b16 %v1947, %v1931
        %v3388 = vpack.c.b16 %v1948, %v1932
        %v3389 = vpack.c.b16 %v1949, %v1933
        %v3390 = vpack.c.b16 %v1950, %v1934
        %v3391 = vpack.c.b16 %v1967, %v1951
        %v3392 = vpack.c.b16 %v1968, %v1952
        %v3393 = vpack.c.b16 %v1969, %v1953
        %v3394 = vpack.c.b16 %v1970, %v1954
        %v3395 = vpack.c.b16 %v1971, %v1955
        %v3396 = vpack.c.b16 %v1972, %v1956
        %v3397 = vpack.c.b16 %v1973, %v1957
        %v3398 = vpack.c.b16 %v1974, %v1958
        %v3399 = vpack.c.b16 %v1975, %v1959
        %v3400 = vpack.c.b16 %v1976, %v1960
        %v3401 = vpack.c.b16 %v1977, %v1961
        %v3402 = vpack.c.b16 %v1978, %v1962
        %v3403 = vpack.c.b16 %v1979, %v1963
        %v3404 = vpack.c.b16 %v1980, %v1964
        %v3405 = vpack.c.b16 %v1981, %v1965
        %v3406 = vpack.c.b16 %v1982, %v1966
        %v3407 = vpack.c.b16 %v1999, %v1983
        %v3408 = vpack.c.b16 %v2000, %v1984
        %v3409 = vpack.c.b16 %v2001, %v1985
        %v3410 = vpack.c.b16 %v2002, %v1986
        %v3411 = vpack.c.b16 %v2003, %v1987
        %v3412 = vpack.c.b16 %v2004, %v1988
        %v3413 = vpack.c.b16 %v2005, %v1989
        %v3414 = vpack.c.b16 %v2006, %v1990
        %v3415 = vpack.c.b16 %v2007, %v1991
        %v3416 = vpack.c.b16 %v2008, %v1992
        %v3417 = vpack.c.b16 %v2009, %v1993
        %v3418 = vpack.c.b16 %v2010, %v1994
        %v3419 = vpack.c.b16 %v2011, %v1995
        %v3420 = vpack.c.b16 %v2012, %v1996
        %v3421 = vpack.c.b16 %v2013, %v1997
        %v3422 = vpack.c.b16 %v2014, %v1998
        %v3423 = vpack.c.b16 %v2031, %v2015
        %v3424 = vpack.c.b16 %v2032, %v2016
        %v3425 = vpack.c.b16 %v2033, %v2017
        %v3426 = vpack.c.b16 %v2034, %v2018
        %v3427 = vpack.c.b16 %v2035, %v2019
        %v3428 = vpack.c.b16 %v2036, %v2020
        %v3429 = vpack.c.b16 %v2037, %v2021
        %v3430 = vpack.c.b16 %v2038, %v2022
        %v3431 = vpack.c.b16 %v2039, %v2023
        %v3432 = vpack.c.b16 %v2040, %v2024
        %v3433 = vpack.c.b16 %v2041, %v2025
        %v3434 = vpack.c.b16 %v2042, %v2026
        %v3435 = vpack.c.b16 %v2043, %v2027
        %v3436 = vpack.c.b16 %v2044, %v2028
        %v3437 = vpack.c.b16 %v2045, %v2029
        %v3438 = vpack.c.b16 %v2046, %v2030
        %v3439 = vpack.c.b16 %v2063, %v2047
        %v3440 = vpack.c.b16 %v2064, %v2048
        %v3441 = vpack.c.b16 %v2065, %v2049
        %v3442 = vpack.c.b16 %v2066, %v2050
        %v3443 = vpack.c.b16 %v2067, %v2051
        %v3444 = vpack.c.b16 %v2068, %v2052
        %v3445 = vpack.c.b16 %v2069, %v2053
        %v3446 = vpack.c.b16 %v2070, %v2054
        %v3447 = vpack.c.b16 %v2071, %v2055
        %v3448 = vpack.c.b16 %v2072, %v2056
        %v3449 = vpack.c.b16 %v2073, %v2057
        %v3450 = vpack.c.b16 %v2074, %v2058
        %v3451 = vpack.c.b16 %v2075, %v2059
        %v3452 = vpack.c.b16 %v2076, %v2060
        %v3453 = vpack.c.b16 %v2077, %v2061
        %v3454 = vpack.c.b16 %v2078, %v2062
        %v3455 = vpack.c.b16 %v2095, %v2079
        %v3456 = vpack.c.b16 %v2096, %v2080
        %v3457 = vpack.c.b16 %v2097, %v2081
        %v3458 = vpack.c.b16 %v2098, %v2082
        %v3459 = vpack.c.b16 %v2099, %v2083
        %v3460 = vpack.c.b16 %v2100, %v2084
        %v3461 = vpack.c.b16 %v2101, %v2085
        %v3462 = vpack.c.b16 %v2102, %v2086
        %v3463 = vpack.c.b16 %v2103, %v2087
        %v3464 = vpack.c.b16 %v2104, %v2088
        %v3465 = vpack.c.b16 %v2105, %v2089
        %v3466 = vpack.c.b16 %v2106, %v2090
        %v3467 = vpack.c.b16 %v2107, %v2091
        %v3468 = vpack.c.b16 %v2108, %v2092
        %v3469 = vpack.c.b16 %v2109, %v2093
        %v3470 = vpack.c.b16 %v2110, %v2094
        %v3471 = vpack.c.b16 %v2127, %v2111
        %v3472 = vpack.c.b16 %v2128, %v2112
        %v3473 = vpack.c.b16 %v2129, %v2113
        %v3474 = vpack.c.b16 %v2130, %v2114
        %v3475 = vpack.c.b16 %v2131, %v2115
        %v3476 = vpack.c.b16 %v2132, %v2116
        %v3477 = vpack.c.b16 %v2133, %v2117
        %v3478 = vpack.c.b16 %v2134, %v2118
        %v3479 = vpack.c.b16 %v2135, %v2119
        %v3480 = vpack.c.b16 %v2136, %v2120
        %v3481 = vpack.c.b16 %v2137, %v2121
        %v3482 = vpack.c.b16 %v2138, %v2122
        %v3483 = vpack.c.b16 %v2139, %v2123
        %v3484 = vpack.c.b16 %v2140, %v2124
        %v3485 = vpack.c.b16 %v2141, %v2125
        %v3486 = vpack.c.b16 %v2142, %v2126
        %v3487 = vpack.c.b16 %v2159, %v2143
        %v3488 = vpack.c.b16 %v2160, %v2144
        %v3489 = vpack.c.b16 %v2161, %v2145
        %v3490 = vpack.c.b16 %v2162, %v2146
        %v3491 = vpack.c.b16 %v2163, %v2147
        %v3492 = vpack.c.b16 %v2164, %v2148
        %v3493 = vpack.c.b16 %v2165, %v2149
        %v3494 = vpack.c.b16 %v2166, %v2150
        %v3495 = vpack.c.b16 %v2167, %v2151
        %v3496 = vpack.c.b16 %v2168, %v2152
        %v3497 = vpack.c.b16 %v2169, %v2153
        %v3498 = vpack.c.b16 %v2170, %v2154
        %v3499 = vpack.c.b16 %v2171, %v2155
        %v3500 = vpack.c.b16 %v2172, %v2156
        %v3501 = vpack.c.b16 %v2173, %v2157
        %v3502 = vpack.c.b16 %v2174, %v2158
        %v3503 = vpack.c.b16 %v2191, %v2175
        %v3504 = vpack.c.b16 %v2192, %v2176
        %v3505 = vpack.c.b16 %v2193, %v2177
        %v3506 = vpack.c.b16 %v2194, %v2178
        %v3507 = vpack.c.b16 %v2195, %v2179
        %v3508 = vpack.c.b16 %v2196, %v2180
        %v3509 = vpack.c.b16 %v2197, %v2181
        %v3510 = vpack.c.b16 %v2198, %v2182
        %v3511 = vpack.c.b16 %v2199, %v2183
        %v3512 = vpack.c.b16 %v2200, %v2184
        %v3513 = vpack.c.b16 %v2201, %v2185
        %v3514 = vpack.c.b16 %v2202, %v2186
        %v3515 = vpack.c.b16 %v2203, %v2187
        %v3516 = vpack.c.b16 %v2204, %v2188
        %v3517 = vpack.c.b16 %v2205, %v2189
        %v3518 = vpack.c.b16 %v2206, %v2190
        %v3519 = vpack.c.b16 %v2223, %v2207
        %v3520 = vpack.c.b16 %v2224, %v2208
        %v3521 = vpack.c.b16 %v2225, %v2209
        %v3522 = vpack.c.b16 %v2226, %v2210
        %v3523 = vpack.c.b16 %v2227, %v2211
        %v3524 = vpack.c.b16 %v2228, %v2212
        %v3525 = vpack.c.b16 %v2229, %v2213
        %v3526 = vpack.c.b16 %v2230, %v2214
        %v3527 = vpack.c.b16 %v2231, %v2215
        %v3528 = vpack.c.b16 %v2232, %v2216
        %v3529 = vpack.c.b16 %v2233, %v2217
        %v3530 = vpack.c.b16 %v2234, %v2218
        %v3531 = vpack.c.b16 %v2235, %v2219
        %v3532 = vpack.c.b16 %v2236, %v2220
        %v3533 = vpack.c.b16 %v2237, %v2221
        %v3534 = vpack.c.b16 %v2238, %v2222
        %v3535 = vpack.c.b16 %v2255, %v2239
        %v3536 = vpack.c.b16 %v2256, %v2240
        %v3537 = vpack.c.b16 %v2257, %v2241
        %v3538 = vpack.c.b16 %v2258, %v2242
        %v3539 = vpack.c.b16 %v2259, %v2243
        %v3540 = vpack.c.b16 %v2260, %v2244
        %v3541 = vpack.c.b16 %v2261, %v2245
        %v3542 = vpack.c.b16 %v2262, %v2246
        %v3543 = vpack.c.b16 %v2263, %v2247
        %v3544 = vpack.c.b16 %v2264, %v2248
        %v3545 = vpack.c.b16 %v2265, %v2249
        %v3546 = vpack.c.b16 %v2266, %v2250
        %v3547 = vpack.c.b16 %v2267, %v2251
        %v3548 = vpack.c.b16 %v2268, %v2252
        %v3549 = vpack.c.b16 %v2269, %v2253
        %v3550 = vpack.c.b16 %v2270, %v2254
        %v3551 = vpack.c.b16 %v2287, %v2271
        %v3552 = vpack.c.b16 %v2288, %v2272
        %v3553 = vpack.c.b16 %v2289, %v2273
        %v3554 = vpack.c.b16 %v2290, %v2274
        %v3555 = vpack.c.b16 %v2291, %v2275
        %v3556 = vpack.c.b16 %v2292, %v2276
        %v3557 = vpack.c.b16 %v2293, %v2277
        %v3558 = vpack.c.b16 %v2294, %v2278
        %v3559 = vpack.c.b16 %v2295, %v2279
        %v3560 = vpack.c.b16 %v2296, %v2280
        %v3561 = vpack.c.b16 %v2297, %v2281
        %v3562 = vpack.c.b16 %v2298, %v2282
        %v3563 = vpack.c.b16 %v2299, %v2283
        %v3564 = vpack.c.b16 %v2300, %v2284
        %v3565 = vpack.c.b16 %v2301, %v2285
        %v3566 = vpack.c.b16 %v2302, %v2286
        %v3567 = vpack.c.b16 %v2319, %v2303
        %v3568 = vpack.c.b16 %v2320, %v2304
        %v3569 = vpack.c.b16 %v2321, %v2305
        %v3570 = vpack.c.b16 %v2322, %v2306
        %v3571 = vpack.c.b16 %v2323, %v2307
        %v3572 = vpack.c.b16 %v2324, %v2308
        %v3573 = vpack.c.b16 %v2325, %v2309
        %v3574 = vpack.c.b16 %v2326, %v2310
        %v3575 = vpack.c.b16 %v2327, %v2311
        %v3576 = vpack.c.b16 %v2328, %v2312
        %v3577 = vpack.c.b16 %v2329, %v2313
        %v3578 = vpack.c.b16 %v2330, %v2314
        %v3579 = vpack.c.b16 %v2331, %v2315
        %v3580 = vpack.c.b16 %v2332, %v2316
        %v3581 = vpack.c.b16 %v2333, %v2317
        %v3582 = vpack.c.b16 %v2334, %v2318
        %v3583 = vpack.c.b16 %v2351, %v2335
        %v3584 = vpack.c.b16 %v2352, %v2336
        %v3585 = vpack.c.b16 %v2353, %v2337
        %v3586 = vpack.c.b16 %v2354, %v2338
        %v3587 = vpack.c.b16 %v2355, %v2339
        %v3588 = vpack.c.b16 %v2356, %v2340
        %v3589 = vpack.c.b16 %v2357, %v2341
        %v3590 = vpack.c.b16 %v2358, %v2342
        %v3591 = vpack.c.b16 %v2359, %v2343
        %v3592 = vpack.c.b16 %v2360, %v2344
        %v3593 = vpack.c.b16 %v2361, %v2345
        %v3594 = vpack.c.b16 %v2362, %v2346
        %v3595 = vpack.c.b16 %v2363, %v2347
        %v3596 = vpack.c.b16 %v2364, %v2348
        %v3597 = vpack.c.b16 %v2365, %v2349
        %v3598 = vpack.c.b16 %v2366, %v2350
        %v3599 = vpack.c.b16 %v2383, %v2367
        %v3600 = vpack.c.b16 %v2384, %v2368
        %v3601 = vpack.c.b16 %v2385, %v2369
        %v3602 = vpack.c.b16 %v2386, %v2370
        %v3603 = vpack.c.b16 %v2387, %v2371
        %v3604 = vpack.c.b16 %v2388, %v2372
        %v3605 = vpack.c.b16 %v2389, %v2373
        %v3606 = vpack.c.b16 %v2390, %v2374
        %v3607 = vpack.c.b16 %v2391, %v2375
        %v3608 = vpack.c.b16 %v2392, %v2376
        %v3609 = vpack.c.b16 %v2393, %v2377
        %v3610 = vpack.c.b16 %v2394, %v2378
        %v3611 = vpack.c.b16 %v2395, %v2379
        %v3612 = vpack.c.b16 %v2396, %v2380
        %v3613 = vpack.c.b16 %v2397, %v2381
        %v3614 = vpack.c.b16 %v2398, %v2382
        %v3615 = vpack.c.b16 %v2415, %v2399
        %v3616 = vpack.c.b16 %v2416, %v2400
        %v3617 = vpack.c.b16 %v2417, %v2401
        %v3618 = vpack.c.b16 %v2418, %v2402
        %v3619 = vpack.c.b16 %v2419, %v2403
        %v3620 = vpack.c.b16 %v2420, %v2404
        %v3621 = vpack.c.b16 %v2421, %v2405
        %v3622 = vpack.c.b16 %v2422, %v2406
        %v3623 = vpack.c.b16 %v2423, %v2407
        %v3624 = vpack.c.b16 %v2424, %v2408
        %v3625 = vpack.c.b16 %v2425, %v2409
        %v3626 = vpack.c.b16 %v2426, %v2410
        %v3627 = vpack.c.b16 %v2427, %v2411
        %v3628 = vpack.c.b16 %v2428, %v2412
        %v3629 = vpack.c.b16 %v2429, %v2413
        %v3630 = vpack.c.b16 %v2430, %v2414
        %v3631 = vpack.c.b16 %v2447, %v2431
        %v3632 = vpack.c.b16 %v2448, %v2432
        %v3633 = vpack.c.b16 %v2449, %v2433
        %v3634 = vpack.c.b16 %v2450, %v2434
        %v3635 = vpack.c.b16 %v2451, %v2435
        %v3636 = vpack.c.b16 %v2452, %v2436
        %v3637 = vpack.c.b16 %v2453, %v2437
        %v3638 = vpack.c.b16 %v2454, %v2438
        %v3639 = vpack.c.b16 %v2455, %v2439
        %v3640 = vpack.c.b16 %v2456, %v2440
        %v3641 = vpack.c.b16 %v2457, %v2441
        %v3642 = vpack.c.b16 %v2458, %v2442
        %v3643 = vpack.c.b16 %v2459, %v2443
        %v3644 = vpack.c.b16 %v2460, %v2444
        %v3645 = vpack.c.b16 %v2461, %v2445
        %v3646 = vpack.c.b16 %v2462, %v2446
        %v3647 = vpack.c.b16 %v2479, %v2463
        %v3648 = vpack.c.b16 %v2480, %v2464
        %v3649 = vpack.c.b16 %v2481, %v2465
        %v3650 = vpack.c.b16 %v2482, %v2466
        %v3651 = vpack.c.b16 %v2483, %v2467
        %v3652 = vpack.c.b16 %v2484, %v2468
        %v3653 = vpack.c.b16 %v2485, %v2469
        %v3654 = vpack.c.b16 %v2486, %v2470
        %v3655 = vpack.c.b16 %v2487, %v2471
        %v3656 = vpack.c.b16 %v2488, %v2472
        %v3657 = vpack.c.b16 %v2489, %v2473
        %v3658 = vpack.c.b16 %v2490, %v2474
        %v3659 = vpack.c.b16 %v2491, %v2475
        %v3660 = vpack.c.b16 %v2492, %v2476
        %v3661 = vpack.c.b16 %v2493, %v2477
        %v3662 = vpack.c.b16 %v2494, %v2478
        %v3663 = vpack.c.b16 %v2511, %v2495
        %v3664 = vpack.c.b16 %v2512, %v2496
        %v3665 = vpack.c.b16 %v2513, %v2497
        %v3666 = vpack.c.b16 %v2514, %v2498
        %v3667 = vpack.c.b16 %v2515, %v2499
        %v3668 = vpack.c.b16 %v2516, %v2500
        %v3669 = vpack.c.b16 %v2517, %v2501
        %v3670 = vpack.c.b16 %v2518, %v2502
        %v3671 = vpack.c.b16 %v2519, %v2503
        %v3672 = vpack.c.b16 %v2520, %v2504
        %v3673 = vpack.c.b16 %v2521, %v2505
        %v3674 = vpack.c.b16 %v2522, %v2506
        %v3675 = vpack.c.b16 %v2523, %v2507
        %v3676 = vpack.c.b16 %v2524, %v2508
        %v3677 = vpack.c.b16 %v2525, %v2509
        %v3678 = vpack.c.b16 %v2526, %v2510
        %v3679 = vpack.c.b16 %v2543, %v2527
        %v3680 = vpack.c.b16 %v2544, %v2528
        %v3681 = vpack.c.b16 %v2545, %v2529
        %v3682 = vpack.c.b16 %v2546, %v2530
        %v3683 = vpack.c.b16 %v2547, %v2531
        %v3684 = vpack.c.b16 %v2548, %v2532
        %v3685 = vpack.c.b16 %v2549, %v2533
        %v3686 = vpack.c.b16 %v2550, %v2534
        %v3687 = vpack.c.b16 %v2551, %v2535
        %v3688 = vpack.c.b16 %v2552, %v2536
        %v3689 = vpack.c.b16 %v2553, %v2537
        %v3690 = vpack.c.b16 %v2554, %v2538
        %v3691 = vpack.c.b16 %v2555, %v2539
        %v3692 = vpack.c.b16 %v2556, %v2540
        %v3693 = vpack.c.b16 %v2557, %v2541
        %v3694 = vpack.c.b16 %v2558, %v2542
        %v3695 = vpack.c.b16 %v2575, %v2559
        %v3696 = vpack.c.b16 %v2576, %v2560
        %v3697 = vpack.c.b16 %v2577, %v2561
        %v3698 = vpack.c.b16 %v2578, %v2562
        %v3699 = vpack.c.b16 %v2579, %v2563
        %v3700 = vpack.c.b16 %v2580, %v2564
        %v3701 = vpack.c.b16 %v2581, %v2565
        %v3702 = vpack.c.b16 %v2582, %v2566
        %v3703 = vpack.c.b16 %v2583, %v2567
        %v3704 = vpack.c.b16 %v2584, %v2568
        %v3705 = vpack.c.b16 %v2585, %v2569
        %v3706 = vpack.c.b16 %v2586, %v2570
        %v3707 = vpack.c.b16 %v2587, %v2571
        %v3708 = vpack.c.b16 %v2588, %v2572
        %v3709 = vpack.c.b16 %v2589, %v2573
        %v3710 = vpack.c.b16 %v2590, %v2574
        %v3711 = vpack.c.b16 %v2607, %v2591
        %v3712 = vpack.c.b16 %v2608, %v2592
        %v3713 = vpack.c.b16 %v2609, %v2593
        %v3714 = vpack.c.b16 %v2610, %v2594
        %v3715 = vpack.c.b16 %v2611, %v2595
        %v3716 = vpack.c.b16 %v2612, %v2596
        %v3717 = vpack.c.b16 %v2613, %v2597
        %v3718 = vpack.c.b16 %v2614, %v2598
        %v3719 = vpack.c.b16 %v2615, %v2599
        %v3720 = vpack.c.b16 %v2616, %v2600
        %v3721 = vpack.c.b16 %v2617, %v2601
        %v3722 = vpack.c.b16 %v2618, %v2602
        %v3723 = vpack.c.b16 %v2619, %v2603
        %v3724 = vpack.c.b16 %v2620, %v2604
        %v3725 = vpack.c.b16 %v2621, %v2605
        %v3726 = vpack.c.b16 %v2622, %v2606
        %v3727 = vpack.c.b16 %v2639, %v2623
        %v3728 = vpack.c.b16 %v2640, %v2624
        %v3729 = vpack.c.b16 %v2641, %v2625
        %v3730 = vpack.c.b16 %v2642, %v2626
        %v3731 = vpack.c.b16 %v2643, %v2627
        %v3732 = vpack.c.b16 %v2644, %v2628
        %v3733 = vpack.c.b16 %v2645, %v2629
        %v3734 = vpack.c.b16 %v2646, %v2630
        %v3735 = vpack.c.b16 %v2647, %v2631
        %v3736 = vpack.c.b16 %v2648, %v2632
        %v3737 = vpack.c.b16 %v2649, %v2633
        %v3738 = vpack.c.b16 %v2650, %v2634
        %v3739 = vpack.c.b16 %v2651, %v2635
        %v3740 = vpack.c.b16 %v2652, %v2636
        %v3741 = vpack.c.b16 %v2653, %v2637
        %v3742 = vpack.c.b16 %v2654, %v2638
        %v3743 = vpack.c.b16 %v2671, %v2655
        %v3744 = vpack.c.b16 %v2672, %v2656
        %v3745 = vpack.c.b16 %v2673, %v2657
        %v3746 = vpack.c.b16 %v2674, %v2658
        %v3747 = vpack.c.b16 %v2675, %v2659
        %v3748 = vpack.c.b16 %v2676, %v2660
        %v3749 = vpack.c.b16 %v2677, %v2661
        %v3750 = vpack.c.b16 %v2678, %v2662
        %v3751 = vpack.c.b16 %v2679, %v2663
        %v3752 = vpack.c.b16 %v2680, %v2664
        %v3753 = vpack.c.b16 %v2681, %v2665
        %v3754 = vpack.c.b16 %v2682, %v2666
        %v3755 = vpack.c.b16 %v2683, %v2667
        %v3756 = vpack.c.b16 %v2684, %v2668
        %v3757 = vpack.c.b16 %v2685, %v2669
        %v3758 = vpack.c.b16 %v2686, %v2670
        %v3759 = vpack.c.b16 %v2703, %v2687
        %v3760 = vpack.c.b16 %v2704, %v2688
        %v3761 = vpack.c.b16 %v2705, %v2689
        %v3762 = vpack.c.b16 %v2706, %v2690
        %v3763 = vpack.c.b16 %v2707, %v2691
        %v3764 = vpack.c.b16 %v2708, %v2692
        %v3765 = vpack.c.b16 %v2709, %v2693
        %v3766 = vpack.c.b16 %v2710, %v2694
        %v3767 = vpack.c.b16 %v2711, %v2695
        %v3768 = vpack.c.b16 %v2712, %v2696
        %v3769 = vpack.c.b16 %v2713, %v2697
        %v3770 = vpack.c.b16 %v2714, %v2698
        %v3771 = vpack.c.b16 %v2715, %v2699
        %v3772 = vpack.c.b16 %v2716, %v2700
        %v3773 = vpack.c.b16 %v2717, %v2701
        %v3774 = vpack.c.b16 %v2718, %v2702
        %v3775 = vpack.c.b16 %v2735, %v2719
        %v3776 = vpack.c.b16 %v2736, %v2720
        %v3777 = vpack.c.b16 %v2737, %v2721
        %v3778 = vpack.c.b16 %v2738, %v2722
        %v3779 = vpack.c.b16 %v2739, %v2723
        %v3780 = vpack.c.b16 %v2740, %v2724
        %v3781 = vpack.c.b16 %v2741, %v2725
        %v3782 = vpack.c.b16 %v2742, %v2726
        %v3783 = vpack.c.b16 %v2743, %v2727
        %v3784 = vpack.c.b16 %v2744, %v2728
        %v3785 = vpack.c.b16 %v2745, %v2729
        %v3786 = vpack.c.b16 %v2746, %v2730
        %v3787 = vpack.c.b16 %v2747, %v2731
        %v3788 = vpack.c.b16 %v2748, %v2732
        %v3789 = vpack.c.b16 %v2749, %v2733
        %v3790 = vpack.c.b16 %v2750, %v2734
        %v3791 = vpack.c.b16 %v2767, %v2751
        %v3792 = vpack.c.b16 %v2768, %v2752
        %v3793 = vpack.c.b16 %v2769, %v2753
        %v3794 = vpack.c.b16 %v2770, %v2754
        %v3795 = vpack.c.b16 %v2771, %v2755
        %v3796 = vpack.c.b16 %v2772, %v2756
        %v3797 = vpack.c.b16 %v2773, %v2757
        %v3798 = vpack.c.b16 %v2774, %v2758
        %v3799 = vpack.c.b16 %v2775, %v2759
        %v3800 = vpack.c.b16 %v2776, %v2760
        %v3801 = vpack.c.b16 %v2777, %v2761
        %v3802 = vpack.c.b16 %v2778, %v2762
        %v3803 = vpack.c.b16 %v2779, %v2763
        %v3804 = vpack.c.b16 %v2780, %v2764
        %v3805 = vpack.c.b16 %v2781, %v2765
        %v3806 = vpack.c.b16 %v2782, %v2766
        %v3807 = vpack.c.b16 %v2799, %v2783
        %v3808 = vpack.c.b16 %v2800, %v2784
        %v3809 = vpack.c.b16 %v2801, %v2785
        %v3810 = vpack.c.b16 %v2802, %v2786
        %v3811 = vpack.c.b16 %v2803, %v2787
        %v3812 = vpack.c.b16 %v2804, %v2788
        %v3813 = vpack.c.b16 %v2805, %v2789
        %v3814 = vpack.c.b16 %v2806, %v2790
        %v3815 = vpack.c.b16 %v2807, %v2791
        %v3816 = vpack.c.b16 %v2808, %v2792
        %v3817 = vpack.c.b16 %v2809, %v2793
        %v3818 = vpack.c.b16 %v2810, %v2794
        %v3819 = vpack.c.b16 %v2811, %v2795
        %v3820 = vpack.c.b16 %v2812, %v2796
        %v3821 = vpack.c.b16 %v2813, %v2797
        %v3822 = vpack.c.b16 %v2814, %v2798
        %v3823 = vpack.c.b16 %v2831, %v2815
        %v3824 = vpack.c.b16 %v2832, %v2816
        %v3825 = vpack.c.b16 %v2833, %v2817
        %v3826 = vpack.c.b16 %v2834, %v2818
        %v3827 = vpack.c.b16 %v2835, %v2819
        %v3828 = vpack.c.b16 %v2836, %v2820
        %v3829 = vpack.c.b16 %v2837, %v2821
        %v3830 = vpack.c.b16 %v2838, %v2822
        %v3831 = vpack.c.b16 %v2839, %v2823
        %v3832 = vpack.c.b16 %v2840, %v2824
        %v3833 = vpack.c.b16 %v2841, %v2825
        %v3834 = vpack.c.b16 %v2842, %v2826
        %v3835 = vpack.c.b16 %v2843, %v2827
        %v3836 = vpack.c.b16 %v2844, %v2828
        %v3837 = vpack.c.b16 %v2845, %v2829
        %v3838 = vpack.c.b16 %v2846, %v2830
        %v3839 = vpack.c.b16 %v2863, %v2847
        %v3840 = vpack.c.b16 %v2864, %v2848
        %v3841 = vpack.c.b16 %v2865, %v2849
        %v3842 = vpack.c.b16 %v2866, %v2850
        %v3843 = vpack.c.b16 %v2867, %v2851
        %v3844 = vpack.c.b16 %v2868, %v2852
        %v3845 = vpack.c.b16 %v2869, %v2853
        %v3846 = vpack.c.b16 %v2870, %v2854
        %v3847 = vpack.c.b16 %v2871, %v2855
        %v3848 = vpack.c.b16 %v2872, %v2856
        %v3849 = vpack.c.b16 %v2873, %v2857
        %v3850 = vpack.c.b16 %v2874, %v2858
        %v3851 = vpack.c.b16 %v2875, %v2859
        %v3852 = vpack.c.b16 %v2876, %v2860
        %v3853 = vpack.c.b16 %v2877, %v2861
        %v3854 = vpack.c.b16 %v2878, %v2862
        %v3855 = vpack.c.b16 %v2895, %v2879
        %v3856 = vpack.c.b16 %v2896, %v2880
        %v3857 = vpack.c.b16 %v2897, %v2881
        %v3858 = vpack.c.b16 %v2898, %v2882
        %v3859 = vpack.c.b16 %v2899, %v2883
        %v3860 = vpack.c.b16 %v2900, %v2884
        %v3861 = vpack.c.b16 %v2901, %v2885
        %v3862 = vpack.c.b16 %v2902, %v2886
        %v3863 = vpack.c.b16 %v2903, %v2887
        %v3864 = vpack.c.b16 %v2904, %v2888
        %v3865 = vpack.c.b16 %v2905, %v2889
        %v3866 = vpack.c.b16 %v2906, %v2890
        %v3867 = vpack.c.b16 %v2907, %v2891
        %v3868 = vpack.c.b16 %v2908, %v2892
        %v3869 = vpack.c.b16 %v2909, %v2893
        %v3870 = vpack.c.b16 %v2910, %v2894
        %v3871 = vpack.c.b16 %v2927, %v2911
        %v3872 = vpack.c.b16 %v2928, %v2912
        %v3873 = vpack.c.b16 %v2929, %v2913
        %v3874 = vpack.c.b16 %v2930, %v2914
        %v3875 = vpack.c.b16 %v2931, %v2915
        %v3876 = vpack.c.b16 %v2932, %v2916
        %v3877 = vpack.c.b16 %v2933, %v2917
        %v3878 = vpack.c.b16 %v2934, %v2918
        %v3879 = vpack.c.b16 %v2935, %v2919
        %v3880 = vpack.c.b16 %v2936, %v2920
        %v3881 = vpack.c.b16 %v2937, %v2921
        %v3882 = vpack.c.b16 %v2938, %v2922
        %v3883 = vpack.c.b16 %v2939, %v2923
        %v3884 = vpack.c.b16 %v2940, %v2924
        %v3885 = vpack.c.b16 %v2941, %v2925
        %v3886 = vpack.c.b16 %v2942, %v2926
        %v3887 = vpack.c.b16 %v2959, %v2943
        %v3888 = vpack.c.b16 %v2960, %v2944
        %v3889 = vpack.c.b16 %v2961, %v2945
        %v3890 = vpack.c.b16 %v2962, %v2946
        %v3891 = vpack.c.b16 %v2963, %v2947
        %v3892 = vpack.c.b16 %v2964, %v2948
        %v3893 = vpack.c.b16 %v2965, %v2949
        %v3894 = vpack.c.b16 %v2966, %v2950
        %v3895 = vpack.c.b16 %v2967, %v2951
        %v3896 = vpack.c.b16 %v2968, %v2952
        %v3897 = vpack.c.b16 %v2969, %v2953
        %v3898 = vpack.c.b16 %v2970, %v2954
        %v3899 = vpack.c.b16 %v2971, %v2955
        %v3900 = vpack.c.b16 %v2972, %v2956
        %v3901 = vpack.c.b16 %v2973, %v2957
        %v3902 = vpack.c.b16 %v2974, %v2958
        %v3903 = vpack.c.b16 %v2991, %v2975
        %v3904 = vpack.c.b16 %v2992, %v2976
        %v3905 = vpack.c.b16 %v2993, %v2977
        %v3906 = vpack.c.b16 %v2994, %v2978
        %v3907 = vpack.c.b16 %v2995, %v2979
        %v3908 = vpack.c.b16 %v2996, %v2980
        %v3909 = vpack.c.b16 %v2997, %v2981
        %v3910 = vpack.c.b16 %v2998, %v2982
        %v3911 = vpack.c.b16 %v2999, %v2983
        %v3912 = vpack.c.b16 %v3000, %v2984
        %v3913 = vpack.c.b16 %v3001, %v2985
        %v3914 = vpack.c.b16 %v3002, %v2986
        %v3915 = vpack.c.b16 %v3003, %v2987
        %v3916 = vpack.c.b16 %v3004, %v2988
        %v3917 = vpack.c.b16 %v3005, %v2989
        %v3918 = vpack.c.b16 %v3006, %v2990
        %v3919 = vpack.c.b16 %v3023, %v3007
        %v3920 = vpack.c.b16 %v3024, %v3008
        %v3921 = vpack.c.b16 %v3025, %v3009
        %v3922 = vpack.c.b16 %v3026, %v3010
        %v3923 = vpack.c.b16 %v3027, %v3011
        %v3924 = vpack.c.b16 %v3028, %v3012
        %v3925 = vpack.c.b16 %v3029, %v3013
        %v3926 = vpack.c.b16 %v3030, %v3014
        %v3927 = vpack.c.b16 %v3031, %v3015
        %v3928 = vpack.c.b16 %v3032, %v3016
        %v3929 = vpack.c.b16 %v3033, %v3017
        %v3930 = vpack.c.b16 %v3034, %v3018
        %v3931 = vpack.c.b16 %v3035, %v3019
        %v3932 = vpack.c.b16 %v3036, %v3020
        %v3933 = vpack.c.b16 %v3037, %v3021
        %v3934 = vpack.c.b16 %v3038, %v3022
        %v3935 = vpack.c.b16 %v3055, %v3039
        %v3936 = vpack.c.b16 %v3056, %v3040
        %v3937 = vpack.c.b16 %v3057, %v3041
        %v3938 = vpack.c.b16 %v3058, %v3042
        %v3939 = vpack.c.b16 %v3059, %v3043
        %v3940 = vpack.c.b16 %v3060, %v3044
        %v3941 = vpack.c.b16 %v3061, %v3045
        %v3942 = vpack.c.b16 %v3062, %v3046
        %v3943 = vpack.c.b16 %v3063, %v3047
        %v3944 = vpack.c.b16 %v3064, %v3048
        %v3945 = vpack.c.b16 %v3065, %v3049
        %v3946 = vpack.c.b16 %v3066, %v3050
        %v3947 = vpack.c.b16 %v3067, %v3051
        %v3948 = vpack.c.b16 %v3068, %v3052
        %v3949 = vpack.c.b16 %v3069, %v3053
        %v3950 = vpack.c.b16 %v3070, %v3054
        %v3951 = vpack.c.b16 %v3087, %v3071
        %v3952 = vpack.c.b16 %v3088, %v3072
        %v3953 = vpack.c.b16 %v3089, %v3073
        %v3954 = vpack.c.b16 %v3090, %v3074
        %v3955 = vpack.c.b16 %v3091, %v3075
        %v3956 = vpack.c.b16 %v3092, %v3076
        %v3957 = vpack.c.b16 %v3093, %v3077
        %v3958 = vpack.c.b16 %v3094, %v3078
        %v3959 = vpack.c.b16 %v3095, %v3079
        %v3960 = vpack.c.b16 %v3096, %v3080
        %v3961 = vpack.c.b16 %v3097, %v3081
        %v3962 = vpack.c.b16 %v3098, %v3082
        %v3963 = vpack.c.b16 %v3099, %v3083
        %v3964 = vpack.c.b16 %v3100, %v3084
        %v3965 = vpack.c.b16 %v3101, %v3085
        %v3966 = vpack.c.b16 %v3102, %v3086
        %v3967 = vpack.c.b16 %v3119, %v3103
        %v3968 = vpack.c.b16 %v3120, %v3104
        %v3969 = vpack.c.b16 %v3121, %v3105
        %v3970 = vpack.c.b16 %v3122, %v3106
        %v3971 = vpack.c.b16 %v3123, %v3107
        %v3972 = vpack.c.b16 %v3124, %v3108
        %v3973 = vpack.c.b16 %v3125, %v3109
        %v3974 = vpack.c.b16 %v3126, %v3110
        %v3975 = vpack.c.b16 %v3127, %v3111
        %v3976 = vpack.c.b16 %v3128, %v3112
        %v3977 = vpack.c.b16 %v3129, %v3113
        %v3978 = vpack.c.b16 %v3130, %v3114
        %v3979 = vpack.c.b16 %v3131, %v3115
        %v3980 = vpack.c.b16 %v3132, %v3116
        %v3981 = vpack.c.b16 %v3133, %v3117
        %v3982 = vpack.c.b16 %v3134, %v3118
        %v3983 = vpack.c.b16 %v3151, %v3135
        %v3984 = vpack.c.b16 %v3152, %v3136
        %v3985 = vpack.c.b16 %v3153, %v3137
        %v3986 = vpack.c.b16 %v3154, %v3138
        %v3987 = vpack.c.b16 %v3155, %v3139
        %v3988 = vpack.c.b16 %v3156, %v3140
        %v3989 = vpack.c.b16 %v3157, %v3141
        %v3990 = vpack.c.b16 %v3158, %v3142
        %v3991 = vpack.c.b16 %v3159, %v3143
        %v3992 = vpack.c.b16 %v3160, %v3144
        %v3993 = vpack.c.b16 %v3161, %v3145
        %v3994 = vpack.c.b16 %v3162, %v3146
        %v3995 = vpack.c.b16 %v3163, %v3147
        %v3996 = vpack.c.b16 %v3164, %v3148
        %v3997 = vpack.c.b16 %v3165, %v3149
        %v3998 = vpack.c.b16 %v3166, %v3150
        %v3999 = vpack.c.b16 %v3183, %v3167
        %v4000 = vpack.c.b16 %v3184, %v3168
        %v4001 = vpack.c.b16 %v3185, %v3169
        %v4002 = vpack.c.b16 %v3186, %v3170
        %v4003 = vpack.c.b16 %v3187, %v3171
        %v4004 = vpack.c.b16 %v3188, %v3172
        %v4005 = vpack.c.b16 %v3189, %v3173
        %v4006 = vpack.c.b16 %v3190, %v3174
        %v4007 = vpack.c.b16 %v3191, %v3175
        %v4008 = vpack.c.b16 %v3192, %v3176
        %v4009 = vpack.c.b16 %v3193, %v3177
        %v4010 = vpack.c.b16 %v3194, %v3178
        %v4011 = vpack.c.b16 %v3195, %v3179
        %v4012 = vpack.c.b16 %v3196, %v3180
        %v4013 = vpack.c.b16 %v3197, %v3181
        %v4014 = vpack.c.b16 %v3198, %v3182
        %v4015 = vpack.c.b16 %v3215, %v3199
        %v4016 = vpack.c.b16 %v3216, %v3200
        %v4017 = vpack.c.b16 %v3217, %v3201
        %v4018 = vpack.c.b16 %v3218, %v3202
        %v4019 = vpack.c.b16 %v3219, %v3203
        %v4020 = vpack.c.b16 %v3220, %v3204
        %v4021 = vpack.c.b16 %v3221, %v3205
        %v4022 = vpack.c.b16 %v3222, %v3206
        %v4023 = vpack.c.b16 %v3223, %v3207
        %v4024 = vpack.c.b16 %v3224, %v3208
        %v4025 = vpack.c.b16 %v3225, %v3209
        %v4026 = vpack.c.b16 %v3226, %v3210
        %v4027 = vpack.c.b16 %v3227, %v3211
        %v4028 = vpack.c.b16 %v3228, %v3212
        %v4029 = vpack.c.b16 %v3229, %v3213
        %v4030 = vpack.c.b16 %v3230, %v3214
        %v4031 = vpack.c.b16 %v3247, %v3231
        %v4032 = vpack.c.b16 %v3248, %v3232
        %v4033 = vpack.c.b16 %v3249, %v3233
        %v4034 = vpack.c.b16 %v3250, %v3234
        %v4035 = vpack.c.b16 %v3251, %v3235
        %v4036 = vpack.c.b16 %v3252, %v3236
        %v4037 = vpack.c.b16 %v3253, %v3237
        %v4038 = vpack.c.b16 %v3254, %v3238
        %v4039 = vpack.c.b16 %v3255, %v3239
        %v4040 = vpack.c.b16 %v3256, %v3240
        %v4041 = vpack.c.b16 %v3257, %v3241
        %v4042 = vpack.c.b16 %v3258, %v3242
        %v4043 = vpack.c.b16 %v3259, %v3243
        %v4044 = vpack.c.b16 %v3260, %v3244
        %v4045 = vpack.c.b16 %v3261, %v3245
        %v4046 = vpack.c.b16 %v3262, %v3246
        %v4047 = vpack.c.b16 %v3279, %v3263
        %v4048 = vpack.c.b16 %v3280, %v3264
        %v4049 = vpack.c.b16 %v3281, %v3265
        %v4050 = vpack.c.b16 %v3282, %v3266
        %v4051 = vpack.c.b16 %v3283, %v3267
        %v4052 = vpack.c.b16 %v3284, %v3268
        %v4053 = vpack.c.b16 %v3285, %v3269
        %v4054 = vpack.c.b16 %v3286, %v3270
        %v4055 = vpack.c.b16 %v3287, %v3271
        %v4056 = vpack.c.b16 %v3288, %v3272
        %v4057 = vpack.c.b16 %v3289, %v3273
        %v4058 = vpack.c.b16 %v3290, %v3274
        %v4059 = vpack.c.b16 %v3291, %v3275
        %v4060 = vpack.c.b16 %v3292, %v3276
        %v4061 = vpack.c.b16 %v3293, %v3277
        %v4062 = vpack.c.b16 %v3294, %v3278
        %4831 = vmatprep.subr.bf16.mxu0 %v3408
        %4832 = vmatpush1.bf16.msra.mxu0 %v3407
        %4833 = vmatprep.subr.bf16.mxu0 %v3392
        %4834 = vmatpush1.bf16.msra.mxu0 %v3391
        %4835 = vmatprep.subr.bf16.mxu0 %v3376
        %4836 = vmatpush1.bf16.msra.mxu0 %v3375
        %4837 = vmatprep.subr.bf16.mxu0 %v3360
        %4838 = vmatpush1.bf16.msra.mxu0 %v3359
        %4839 = vmatprep.subr.bf16.mxu0 %v3344
        %4840 = vmatpush1.bf16.msra.mxu0 %v3343
        %4841 = vmatprep.subr.bf16.mxu0 %v3328
        %4842 = vmatpush1.bf16.msra.mxu0 %v3327
        %4843 = vmatprep.subr.bf16.mxu0 %v3312
        %4844 = vmatpush1.bf16.msra.mxu0 %v3311
        %4845 = vmatprep.subr.bf16.mxu0 %v3296
        %4846 = vmatpush1.bf16.msra.mxu0 %v3295
        %4847 = vmatprep.subr.bf16.mxu0 %v3536
        %4848 = vmatpush2.bf16.msra.mxu0 %v3535
        %4849 = vmatprep.subr.bf16.mxu0 %v3520
        %4850 = vmatpush2.bf16.msra.mxu0 %v3519
        %4851 = vmatprep.subr.bf16.mxu0 %v3504
        %4852 = vmatpush2.bf16.msra.mxu0 %v3503
        %4853 = vmatprep.subr.bf16.mxu0 %v3488
        %4854 = vmatpush2.bf16.msra.mxu0 %v3487
        %4855 = vmatprep.subr.bf16.mxu0 %v3472
        %4856 = vmatpush2.bf16.msra.mxu0 %v3471
        %4857 = vmatprep.subr.bf16.mxu0 %v3456
        %4858 = vmatpush2.bf16.msra.mxu0 %v3455
        %4859 = vmatprep.subr.bf16.mxu0 %v3440
        %4860 = vmatpush2.bf16.msra.mxu0 %v3439
        %4861 = vmatprep.subr.bf16.mxu0 %v3424
        %4862 = vmatpush2.bf16.msra.mxu0 %v3423
        %4863 = vmatprep.mubr.bf16.mxu0 %v980
        %4864 = vmatmul.mubr.bf16.gmra.mxu0 %v979
        %v4865 = vpop.f32.mrf.mxu0
        %v4866 = vadd.f32 0.0, %v4865
        %v4867 = vpop.f32.mrf.mxu0
        %v4868 = vadd.f32 0.0, %v4867
        %v4869 = vpop.f32.mrf.mxu0
        %v4870 = vpop.f32.mrf.mxu0
        %4871 = vdwg.mxu0
        %4872 = vmatprep.subr.bf16.mxu0 %v3664
        %4873 = vmatpush1.bf16.msra.mxu0 %v3663
        %4874 = vmatprep.subr.bf16.mxu0 %v3648
        %4875 = vmatpush1.bf16.msra.mxu0 %v3647
        %4876 = vmatprep.subr.bf16.mxu0 %v3632
        %4877 = vmatpush1.bf16.msra.mxu0 %v3631
        %4878 = vmatprep.subr.bf16.mxu0 %v3616
        %4879 = vmatpush1.bf16.msra.mxu0 %v3615
        %4880 = vmatprep.subr.bf16.mxu0 %v3600
        %4881 = vmatpush1.bf16.msra.mxu0 %v3599
        %4882 = vmatprep.subr.bf16.mxu0 %v3584
        %4883 = vmatpush1.bf16.msra.mxu0 %v3583
        %4884 = vmatprep.subr.bf16.mxu0 %v3568
        %4885 = vmatpush1.bf16.msra.mxu0 %v3567
        %4886 = vmatprep.subr.bf16.mxu0 %v3552
        %4887 = vmatpush1.bf16.msra.mxu0 %v3551
        %4888 = vmatprep.subr.bf16.mxu0 %v3792
        %4889 = vmatpush2.bf16.msra.mxu0 %v3791
        %4890 = vmatprep.subr.bf16.mxu0 %v3776
        %4891 = vmatpush2.bf16.msra.mxu0 %v3775
        %4892 = vmatprep.subr.bf16.mxu0 %v3760
        %4893 = vmatpush2.bf16.msra.mxu0 %v3759
        %4894 = vmatprep.subr.bf16.mxu0 %v3744
        %4895 = vmatpush2.bf16.msra.mxu0 %v3743
        %4896 = vmatprep.subr.bf16.mxu0 %v3728
        %4897 = vmatpush2.bf16.msra.mxu0 %v3727
        %4898 = vmatprep.subr.bf16.mxu0 %v3712
        %4899 = vmatpush2.bf16.msra.mxu0 %v3711
        %4900 = vmatprep.subr.bf16.mxu0 %v3696
        %4901 = vmatpush2.bf16.msra.mxu0 %v3695
        %4902 = vmatprep.subr.bf16.mxu0 %v3680
        %4903 = vmatpush2.bf16.msra.mxu0 %v3679
        %4904 = vmatprep.mubr.bf16.mxu0 %v982
        %4905 = vmatmul.mubr.bf16.gmra.mxu0 %v981
        %v4906 = vpop.f32.mrf.mxu0
        %v4907 = vadd.f32 %v4866, %v4906
        %v4908 = vpop.f32.mrf.mxu0
        %v4909 = vadd.f32 %v4868, %v4908
        %v4910 = vpop.f32.mrf.mxu0
        %v4911 = vpop.f32.mrf.mxu0
        %4912 = vdwg.mxu0
        %4913 = vmatprep.subr.bf16.mxu0 %v3920
        %4914 = vmatpush1.bf16.msra.mxu0 %v3919
        %4915 = vmatprep.subr.bf16.mxu0 %v3904
        %4916 = vmatpush1.bf16.msra.mxu0 %v3903
        %4917 = vmatprep.subr.bf16.mxu0 %v3888
        %4918 = vmatpush1.bf16.msra.mxu0 %v3887
        %4919 = vmatprep.subr.bf16.mxu0 %v3872
        %4920 = vmatpush1.bf16.msra.mxu0 %v3871
        %4921 = vmatprep.subr.bf16.mxu0 %v3856
        %4922 = vmatpush1.bf16.msra.mxu0 %v3855
        %4923 = vmatprep.subr.bf16.mxu0 %v3840
        %4924 = vmatpush1.bf16.msra.mxu0 %v3839
        %4925 = vmatprep.subr.bf16.mxu0 %v3824
        %4926 = vmatpush1.bf16.msra.mxu0 %v3823
        %4927 = vmatprep.subr.bf16.mxu0 %v3808
        %4928 = vmatpush1.bf16.msra.mxu0 %v3807
        %4929 = vmatprep.subr.bf16.mxu0 %v4048
        %4930 = vmatpush2.bf16.msra.mxu0 %v4047
        %4931 = vmatprep.subr.bf16.mxu0 %v4032
        %4932 = vmatpush2.bf16.msra.mxu0 %v4031
        %4933 = vmatprep.subr.bf16.mxu0 %v4016
        %4934 = vmatpush2.bf16.msra.mxu0 %v4015
        %4935 = vmatprep.subr.bf16.mxu0 %v4000
        %4936 = vmatpush2.bf16.msra.mxu0 %v3999
        %4937 = vmatprep.subr.bf16.mxu0 %v3984
        %4938 = vmatpush2.bf16.msra.mxu0 %v3983
        %4939 = vmatprep.subr.bf16.mxu0 %v3968
        %4940 = vmatpush2.bf16.msra.mxu0 %v3967
        %4941 = vmatprep.subr.bf16.mxu0 %v3952
        %4942 = vmatpush2.bf16.msra.mxu0 %v3951
        %4943 = vmatprep.subr.bf16.mxu0 %v3936
        %4944 = vmatpush2.bf16.msra.mxu0 %v3935
        %4945 = vmatprep.mubr.bf16.mxu0 %v984
        %4946 = vmatmul.mubr.bf16.gmra.mxu0 %v983
        %v4947 = vpop.f32.mrf.mxu0
        %v4948 = vadd.f32 %v4907, %v4947
        %v4949 = vpop.f32.mrf.mxu0
        %v4950 = vadd.f32 %v4909, %v4949
        %v4951 = vpop.f32.mrf.mxu0
        %v4952 = vpop.f32.mrf.mxu0
        %4953 = vdwg.mxu0
        %4954 = vmatprep.subr.bf16.mxu0 %v3410
        %4955 = vmatpush1.bf16.msra.mxu0 %v3409
        %4956 = vmatprep.subr.bf16.mxu0 %v3394
        %4957 = vmatpush1.bf16.msra.mxu0 %v3393
        %4958 = vmatprep.subr.bf16.mxu0 %v3378
        %4959 = vmatpush1.bf16.msra.mxu0 %v3377
        %4960 = vmatprep.subr.bf16.mxu0 %v3362
        %4961 = vmatpush1.bf16.msra.mxu0 %v3361
        %4962 = vmatprep.subr.bf16.mxu0 %v3346
        %4963 = vmatpush1.bf16.msra.mxu0 %v3345
        %4964 = vmatprep.subr.bf16.mxu0 %v3330
        %4965 = vmatpush1.bf16.msra.mxu0 %v3329
        %4966 = vmatprep.subr.bf16.mxu0 %v3314
        %4967 = vmatpush1.bf16.msra.mxu0 %v3313
        %4968 = vmatprep.subr.bf16.mxu0 %v3298
        %4969 = vmatpush1.bf16.msra.mxu0 %v3297
        %4970 = vmatprep.subr.bf16.mxu0 %v3538
        %4971 = vmatpush2.bf16.msra.mxu0 %v3537
        %4972 = vmatprep.subr.bf16.mxu0 %v3522
        %4973 = vmatpush2.bf16.msra.mxu0 %v3521
        %4974 = vmatprep.subr.bf16.mxu0 %v3506
        %4975 = vmatpush2.bf16.msra.mxu0 %v3505
        %4976 = vmatprep.subr.bf16.mxu0 %v3490
        %4977 = vmatpush2.bf16.msra.mxu0 %v3489
        %4978 = vmatprep.subr.bf16.mxu0 %v3474
        %4979 = vmatpush2.bf16.msra.mxu0 %v3473
        %4980 = vmatprep.subr.bf16.mxu0 %v3458
        %4981 = vmatpush2.bf16.msra.mxu0 %v3457
        %4982 = vmatprep.subr.bf16.mxu0 %v3442
        %4983 = vmatpush2.bf16.msra.mxu0 %v3441
        %4984 = vmatprep.subr.bf16.mxu0 %v3426
        %4985 = vmatpush2.bf16.msra.mxu0 %v3425
        %4986 = vmatprep.mubr.bf16.mxu0 %v980
        %4987 = vmatmul.mubr.bf16.gmra.mxu0 %v979
        %v4988 = vpop.f32.mrf.mxu0
        %v4989 = vadd.f32 0.0, %v4988
        %v4990 = vpop.f32.mrf.mxu0
        %v4991 = vadd.f32 0.0, %v4990
        %v4992 = vpop.f32.mrf.mxu0
        %v4993 = vpop.f32.mrf.mxu0
        %4994 = vdwg.mxu0
        %4995 = vmatprep.subr.bf16.mxu0 %v3666
        %4996 = vmatpush1.bf16.msra.mxu0 %v3665
        %4997 = vmatprep.subr.bf16.mxu0 %v3650
        %4998 = vmatpush1.bf16.msra.mxu0 %v3649
        %4999 = vmatprep.subr.bf16.mxu0 %v3634
        %5000 = vmatpush1.bf16.msra.mxu0 %v3633
        %5001 = vmatprep.subr.bf16.mxu0 %v3618
        %5002 = vmatpush1.bf16.msra.mxu0 %v3617
        %5003 = vmatprep.subr.bf16.mxu0 %v3602
        %5004 = vmatpush1.bf16.msra.mxu0 %v3601
        %5005 = vmatprep.subr.bf16.mxu0 %v3586
        %5006 = vmatpush1.bf16.msra.mxu0 %v3585
        %5007 = vmatprep.subr.bf16.mxu0 %v3570
        %5008 = vmatpush1.bf16.msra.mxu0 %v3569
        %5009 = vmatprep.subr.bf16.mxu0 %v3554
        %5010 = vmatpush1.bf16.msra.mxu0 %v3553
        %5011 = vmatprep.subr.bf16.mxu0 %v3794
        %5012 = vmatpush2.bf16.msra.mxu0 %v3793
        %5013 = vmatprep.subr.bf16.mxu0 %v3778
        %5014 = vmatpush2.bf16.msra.mxu0 %v3777
        %5015 = vmatprep.subr.bf16.mxu0 %v3762
        %5016 = vmatpush2.bf16.msra.mxu0 %v3761
        %5017 = vmatprep.subr.bf16.mxu0 %v3746
        %5018 = vmatpush2.bf16.msra.mxu0 %v3745
        %5019 = vmatprep.subr.bf16.mxu0 %v3730
        %5020 = vmatpush2.bf16.msra.mxu0 %v3729
        %5021 = vmatprep.subr.bf16.mxu0 %v3714
        %5022 = vmatpush2.bf16.msra.mxu0 %v3713
        %5023 = vmatprep.subr.bf16.mxu0 %v3698
        %5024 = vmatpush2.bf16.msra.mxu0 %v3697
        %5025 = vmatprep.subr.bf16.mxu0 %v3682
        %5026 = vmatpush2.bf16.msra.mxu0 %v3681
        %5027 = vmatprep.mubr.bf16.mxu0 %v982
        %5028 = vmatmul.mubr.bf16.gmra.mxu0 %v981
        %v5029 = vpop.f32.mrf.mxu0
        %v5030 = vadd.f32 %v4989, %v5029
        %v5031 = vpop.f32.mrf.mxu0
        %v5032 = vadd.f32 %v4991, %v5031
        %v5033 = vpop.f32.mrf.mxu0
        %v5034 = vpop.f32.mrf.mxu0
        %5035 = vdwg.mxu0
        %5036 = vmatprep.subr.bf16.mxu0 %v3922
        %5037 = vmatpush1.bf16.msra.mxu0 %v3921
        %5038 = vmatprep.subr.bf16.mxu0 %v3906
        %5039 = vmatpush1.bf16.msra.mxu0 %v3905
        %5040 = vmatprep.subr.bf16.mxu0 %v3890
        %5041 = vmatpush1.bf16.msra.mxu0 %v3889
        %5042 = vmatprep.subr.bf16.mxu0 %v3874
        %5043 = vmatpush1.bf16.msra.mxu0 %v3873
        %5044 = vmatprep.subr.bf16.mxu0 %v3858
        %5045 = vmatpush1.bf16.msra.mxu0 %v3857
        %5046 = vmatprep.subr.bf16.mxu0 %v3842
        %5047 = vmatpush1.bf16.msra.mxu0 %v3841
        %5048 = vmatprep.subr.bf16.mxu0 %v3826
        %5049 = vmatpush1.bf16.msra.mxu0 %v3825
        %5050 = vmatprep.subr.bf16.mxu0 %v3810
        %5051 = vmatpush1.bf16.msra.mxu0 %v3809
        %5052 = vmatprep.subr.bf16.mxu0 %v4050
        %5053 = vmatpush2.bf16.msra.mxu0 %v4049
        %5054 = vmatprep.subr.bf16.mxu0 %v4034
        %5055 = vmatpush2.bf16.msra.mxu0 %v4033
        %5056 = vmatprep.subr.bf16.mxu0 %v4018
        %5057 = vmatpush2.bf16.msra.mxu0 %v4017
        %5058 = vmatprep.subr.bf16.mxu0 %v4002
        %5059 = vmatpush2.bf16.msra.mxu0 %v4001
        %5060 = vmatprep.subr.bf16.mxu0 %v3986
        %5061 = vmatpush2.bf16.msra.mxu0 %v3985
        %5062 = vmatprep.subr.bf16.mxu0 %v3970
        %5063 = vmatpush2.bf16.msra.mxu0 %v3969
        %5064 = vmatprep.subr.bf16.mxu0 %v3954
        %5065 = vmatpush2.bf16.msra.mxu0 %v3953
        %5066 = vmatprep.subr.bf16.mxu0 %v3938
        %5067 = vmatpush2.bf16.msra.mxu0 %v3937
        %5068 = vmatprep.mubr.bf16.mxu0 %v984
        %5069 = vmatmul.mubr.bf16.gmra.mxu0 %v983
        %v5070 = vpop.f32.mrf.mxu0
        %v5071 = vadd.f32 %v5030, %v5070
        %v5072 = vpop.f32.mrf.mxu0
        %v5073 = vadd.f32 %v5032, %v5072
        %v5074 = vpop.f32.mrf.mxu0
        %v5075 = vpop.f32.mrf.mxu0
        %5076 = vdwg.mxu0
        %5077 = vmatprep.subr.bf16.mxu0 %v3412
        %5078 = vmatpush1.bf16.msra.mxu0 %v3411
        %5079 = vmatprep.subr.bf16.mxu0 %v3396
        %5080 = vmatpush1.bf16.msra.mxu0 %v3395
        %5081 = vmatprep.subr.bf16.mxu0 %v3380
        %5082 = vmatpush1.bf16.msra.mxu0 %v3379
        %5083 = vmatprep.subr.bf16.mxu0 %v3364
        %5084 = vmatpush1.bf16.msra.mxu0 %v3363
        %5085 = vmatprep.subr.bf16.mxu0 %v3348
        %5086 = vmatpush1.bf16.msra.mxu0 %v3347
        %5087 = vmatprep.subr.bf16.mxu0 %v3332
        %5088 = vmatpush1.bf16.msra.mxu0 %v3331
        %5089 = vmatprep.subr.bf16.mxu0 %v3316
        %5090 = vmatpush1.bf16.msra.mxu0 %v3315
        %5091 = vmatprep.subr.bf16.mxu0 %v3300
        %5092 = vmatpush1.bf16.msra.mxu0 %v3299
        %5093 = vmatprep.subr.bf16.mxu0 %v3540
        %5094 = vmatpush2.bf16.msra.mxu0 %v3539
        %5095 = vmatprep.subr.bf16.mxu0 %v3524
        %5096 = vmatpush2.bf16.msra.mxu0 %v3523
        %5097 = vmatprep.subr.bf16.mxu0 %v3508
        %5098 = vmatpush2.bf16.msra.mxu0 %v3507
        %5099 = vmatprep.subr.bf16.mxu0 %v3492
        %5100 = vmatpush2.bf16.msra.mxu0 %v3491
        %5101 = vmatprep.subr.bf16.mxu0 %v3476
        %5102 = vmatpush2.bf16.msra.mxu0 %v3475
        %5103 = vmatprep.subr.bf16.mxu0 %v3460
        %5104 = vmatpush2.bf16.msra.mxu0 %v3459
        %5105 = vmatprep.subr.bf16.mxu0 %v3444
        %5106 = vmatpush2.bf16.msra.mxu0 %v3443
        %5107 = vmatprep.subr.bf16.mxu0 %v3428
        %5108 = vmatpush2.bf16.msra.mxu0 %v3427
        %5109 = vmatprep.mubr.bf16.mxu0 %v980
        %5110 = vmatmul.mubr.bf16.gmra.mxu0 %v979
        %v5111 = vpop.f32.mrf.mxu0
        %v5112 = vadd.f32 0.0, %v5111
        %v5113 = vpop.f32.mrf.mxu0
        %v5114 = vadd.f32 0.0, %v5113
        %v5115 = vpop.f32.mrf.mxu0
        %v5116 = vpop.f32.mrf.mxu0
        %5117 = vdwg.mxu0
        %5118 = vmatprep.subr.bf16.mxu0 %v3668
        %5119 = vmatpush1.bf16.msra.mxu0 %v3667
        %5120 = vmatprep.subr.bf16.mxu0 %v3652
        %5121 = vmatpush1.bf16.msra.mxu0 %v3651
        %5122 = vmatprep.subr.bf16.mxu0 %v3636
        %5123 = vmatpush1.bf16.msra.mxu0 %v3635
        %5124 = vmatprep.subr.bf16.mxu0 %v3620
        %5125 = vmatpush1.bf16.msra.mxu0 %v3619
        %5126 = vmatprep.subr.bf16.mxu0 %v3604
        %5127 = vmatpush1.bf16.msra.mxu0 %v3603
        %5128 = vmatprep.subr.bf16.mxu0 %v3588
        %5129 = vmatpush1.bf16.msra.mxu0 %v3587
        %5130 = vmatprep.subr.bf16.mxu0 %v3572
        %5131 = vmatpush1.bf16.msra.mxu0 %v3571
        %5132 = vmatprep.subr.bf16.mxu0 %v3556
        %5133 = vmatpush1.bf16.msra.mxu0 %v3555
        %5134 = vmatprep.subr.bf16.mxu0 %v3796
        %5135 = vmatpush2.bf16.msra.mxu0 %v3795
        %5136 = vmatprep.subr.bf16.mxu0 %v3780
        %5137 = vmatpush2.bf16.msra.mxu0 %v3779
        %5138 = vmatprep.subr.bf16.mxu0 %v3764
        %5139 = vmatpush2.bf16.msra.mxu0 %v3763
        %5140 = vmatprep.subr.bf16.mxu0 %v3748
        %5141 = vmatpush2.bf16.msra.mxu0 %v3747
        %5142 = vmatprep.subr.bf16.mxu0 %v3732
        %5143 = vmatpush2.bf16.msra.mxu0 %v3731
        %5144 = vmatprep.subr.bf16.mxu0 %v3716
        %5145 = vmatpush2.bf16.msra.mxu0 %v3715
        %5146 = vmatprep.subr.bf16.mxu0 %v3700
        %5147 = vmatpush2.bf16.msra.mxu0 %v3699
        %5148 = vmatprep.subr.bf16.mxu0 %v3684
        %5149 = vmatpush2.bf16.msra.mxu0 %v3683
        %5150 = vmatprep.mubr.bf16.mxu0 %v982
        %5151 = vmatmul.mubr.bf16.gmra.mxu0 %v981
        %v5152 = vpop.f32.mrf.mxu0
        %v5153 = vadd.f32 %v5112, %v5152
        %v5154 = vpop.f32.mrf.mxu0
        %v5155 = vadd.f32 %v5114, %v5154
        %v5156 = vpop.f32.mrf.mxu0
        %v5157 = vpop.f32.mrf.mxu0
        %5158 = vdwg.mxu0
        %5159 = vmatprep.subr.bf16.mxu0 %v3924
        %5160 = vmatpush1.bf16.msra.mxu0 %v3923
        %5161 = vmatprep.subr.bf16.mxu0 %v3908
        %5162 = vmatpush1.bf16.msra.mxu0 %v3907
        %5163 = vmatprep.subr.bf16.mxu0 %v3892
        %5164 = vmatpush1.bf16.msra.mxu0 %v3891
        %5165 = vmatprep.subr.bf16.mxu0 %v3876
        %5166 = vmatpush1.bf16.msra.mxu0 %v3875
        %5167 = vmatprep.subr.bf16.mxu0 %v3860
        %5168 = vmatpush1.bf16.msra.mxu0 %v3859
        %5169 = vmatprep.subr.bf16.mxu0 %v3844
        %5170 = vmatpush1.bf16.msra.mxu0 %v3843
        %5171 = vmatprep.subr.bf16.mxu0 %v3828
        %5172 = vmatpush1.bf16.msra.mxu0 %v3827
        %5173 = vmatprep.subr.bf16.mxu0 %v3812
        %5174 = vmatpush1.bf16.msra.mxu0 %v3811
        %5175 = vmatprep.subr.bf16.mxu0 %v4052
        %5176 = vmatpush2.bf16.msra.mxu0 %v4051
        %5177 = vmatprep.subr.bf16.mxu0 %v4036
        %5178 = vmatpush2.bf16.msra.mxu0 %v4035
        %5179 = vmatprep.subr.bf16.mxu0 %v4020
        %5180 = vmatpush2.bf16.msra.mxu0 %v4019
        %5181 = vmatprep.subr.bf16.mxu0 %v4004
        %5182 = vmatpush2.bf16.msra.mxu0 %v4003
        %5183 = vmatprep.subr.bf16.mxu0 %v3988
        %5184 = vmatpush2.bf16.msra.mxu0 %v3987
        %5185 = vmatprep.subr.bf16.mxu0 %v3972
        %5186 = vmatpush2.bf16.msra.mxu0 %v3971
        %5187 = vmatprep.subr.bf16.mxu0 %v3956
        %5188 = vmatpush2.bf16.msra.mxu0 %v3955
        %5189 = vmatprep.subr.bf16.mxu0 %v3940
        %5190 = vmatpush2.bf16.msra.mxu0 %v3939
        %5191 = vmatprep.mubr.bf16.mxu0 %v984
        %5192 = vmatmul.mubr.bf16.gmra.mxu0 %v983
        %v5193 = vpop.f32.mrf.mxu0
        %v5194 = vadd.f32 %v5153, %v5193
        %v5195 = vpop.f32.mrf.mxu0
        %v5196 = vadd.f32 %v5155, %v5195
        %v5197 = vpop.f32.mrf.mxu0
        %v5198 = vpop.f32.mrf.mxu0
        %5199 = vdwg.mxu0
        %5200 = vmatprep.subr.bf16.mxu0 %v3414
        %5201 = vmatpush1.bf16.msra.mxu0 %v3413
        %5202 = vmatprep.subr.bf16.mxu0 %v3398
        %5203 = vmatpush1.bf16.msra.mxu0 %v3397
        %5204 = vmatprep.subr.bf16.mxu0 %v3382
        %5205 = vmatpush1.bf16.msra.mxu0 %v3381
        %5206 = vmatprep.subr.bf16.mxu0 %v3366
        %5207 = vmatpush1.bf16.msra.mxu0 %v3365
        %5208 = vmatprep.subr.bf16.mxu0 %v3350
        %5209 = vmatpush1.bf16.msra.mxu0 %v3349
        %5210 = vmatprep.subr.bf16.mxu0 %v3334
        %5211 = vmatpush1.bf16.msra.mxu0 %v3333
        %5212 = vmatprep.subr.bf16.mxu0 %v3318
        %5213 = vmatpush1.bf16.msra.mxu0 %v3317
        %5214 = vmatprep.subr.bf16.mxu0 %v3302
        %5215 = vmatpush1.bf16.msra.mxu0 %v3301
        %5216 = vmatprep.subr.bf16.mxu0 %v3542
        %5217 = vmatpush2.bf16.msra.mxu0 %v3541
        %5218 = vmatprep.subr.bf16.mxu0 %v3526
        %5219 = vmatpush2.bf16.msra.mxu0 %v3525
        %5220 = vmatprep.subr.bf16.mxu0 %v3510
        %5221 = vmatpush2.bf16.msra.mxu0 %v3509
        %5222 = vmatprep.subr.bf16.mxu0 %v3494
        %5223 = vmatpush2.bf16.msra.mxu0 %v3493
        %5224 = vmatprep.subr.bf16.mxu0 %v3478
        %5225 = vmatpush2.bf16.msra.mxu0 %v3477
        %5226 = vmatprep.subr.bf16.mxu0 %v3462
        %5227 = vmatpush2.bf16.msra.mxu0 %v3461
        %5228 = vmatprep.subr.bf16.mxu0 %v3446
        %5229 = vmatpush2.bf16.msra.mxu0 %v3445
        %5230 = vmatprep.subr.bf16.mxu0 %v3430
        %5231 = vmatpush2.bf16.msra.mxu0 %v3429
        %5232 = vmatprep.mubr.bf16.mxu0 %v980
        %5233 = vmatmul.mubr.bf16.gmra.mxu0 %v979
        %v5234 = vpop.f32.mrf.mxu0
        %v5235 = vadd.f32 0.0, %v5234
        %v5236 = vpop.f32.mrf.mxu0
        %v5237 = vadd.f32 0.0, %v5236
        %v5238 = vpop.f32.mrf.mxu0
        %v5239 = vpop.f32.mrf.mxu0
        %5240 = vdwg.mxu0
        %5241 = vmatprep.subr.bf16.mxu0 %v3670
        %5242 = vmatpush1.bf16.msra.mxu0 %v3669
        %5243 = vmatprep.subr.bf16.mxu0 %v3654
        %5244 = vmatpush1.bf16.msra.mxu0 %v3653
        %5245 = vmatprep.subr.bf16.mxu0 %v3638
        %5246 = vmatpush1.bf16.msra.mxu0 %v3637
        %5247 = vmatprep.subr.bf16.mxu0 %v3622
        %5248 = vmatpush1.bf16.msra.mxu0 %v3621
        %5249 = vmatprep.subr.bf16.mxu0 %v3606
        %5250 = vmatpush1.bf16.msra.mxu0 %v3605
        %5251 = vmatprep.subr.bf16.mxu0 %v3590
        %5252 = vmatpush1.bf16.msra.mxu0 %v3589
        %5253 = vmatprep.subr.bf16.mxu0 %v3574
        %5254 = vmatpush1.bf16.msra.mxu0 %v3573
        %5255 = vmatprep.subr.bf16.mxu0 %v3558
        %5256 = vmatpush1.bf16.msra.mxu0 %v3557
        %5257 = vmatprep.subr.bf16.mxu0 %v3798
        %5258 = vmatpush2.bf16.msra.mxu0 %v3797
        %5259 = vmatprep.subr.bf16.mxu0 %v3782
        %5260 = vmatpush2.bf16.msra.mxu0 %v3781
        %5261 = vmatprep.subr.bf16.mxu0 %v3766
        %5262 = vmatpush2.bf16.msra.mxu0 %v3765
        %5263 = vmatprep.subr.bf16.mxu0 %v3750
        %5264 = vmatpush2.bf16.msra.mxu0 %v3749
        %5265 = vmatprep.subr.bf16.mxu0 %v3734
        %5266 = vmatpush2.bf16.msra.mxu0 %v3733
        %5267 = vmatprep.subr.bf16.mxu0 %v3718
        %5268 = vmatpush2.bf16.msra.mxu0 %v3717
        %5269 = vmatprep.subr.bf16.mxu0 %v3702
        %5270 = vmatpush2.bf16.msra.mxu0 %v3701
        %5271 = vmatprep.subr.bf16.mxu0 %v3686
        %5272 = vmatpush2.bf16.msra.mxu0 %v3685
        %5273 = vmatprep.mubr.bf16.mxu0 %v982
        %5274 = vmatmul.mubr.bf16.gmra.mxu0 %v981
        %v5275 = vpop.f32.mrf.mxu0
        %v5276 = vadd.f32 %v5235, %v5275
        %v5277 = vpop.f32.mrf.mxu0
        %v5278 = vadd.f32 %v5237, %v5277
        %v5279 = vpop.f32.mrf.mxu0
        %v5280 = vpop.f32.mrf.mxu0
        %5281 = vdwg.mxu0
        %5282 = vmatprep.subr.bf16.mxu0 %v3926
        %5283 = vmatpush1.bf16.msra.mxu0 %v3925
        %5284 = vmatprep.subr.bf16.mxu0 %v3910
        %5285 = vmatpush1.bf16.msra.mxu0 %v3909
        %5286 = vmatprep.subr.bf16.mxu0 %v3894
        %5287 = vmatpush1.bf16.msra.mxu0 %v3893
        %5288 = vmatprep.subr.bf16.mxu0 %v3878
        %5289 = vmatpush1.bf16.msra.mxu0 %v3877
        %5290 = vmatprep.subr.bf16.mxu0 %v3862
        %5291 = vmatpush1.bf16.msra.mxu0 %v3861
        %5292 = vmatprep.subr.bf16.mxu0 %v3846
        %5293 = vmatpush1.bf16.msra.mxu0 %v3845
        %5294 = vmatprep.subr.bf16.mxu0 %v3830
        %5295 = vmatpush1.bf16.msra.mxu0 %v3829
        %5296 = vmatprep.subr.bf16.mxu0 %v3814
        %5297 = vmatpush1.bf16.msra.mxu0 %v3813
        %5298 = vmatprep.subr.bf16.mxu0 %v4054
        %5299 = vmatpush2.bf16.msra.mxu0 %v4053
        %5300 = vmatprep.subr.bf16.mxu0 %v4038
        %5301 = vmatpush2.bf16.msra.mxu0 %v4037
        %5302 = vmatprep.subr.bf16.mxu0 %v4022
        %5303 = vmatpush2.bf16.msra.mxu0 %v4021
        %5304 = vmatprep.subr.bf16.mxu0 %v4006
        %5305 = vmatpush2.bf16.msra.mxu0 %v4005
        %5306 = vmatprep.subr.bf16.mxu0 %v3990
        %5307 = vmatpush2.bf16.msra.mxu0 %v3989
        %5308 = vmatprep.subr.bf16.mxu0 %v3974
        %5309 = vmatpush2.bf16.msra.mxu0 %v3973
        %5310 = vmatprep.subr.bf16.mxu0 %v3958
        %5311 = vmatpush2.bf16.msra.mxu0 %v3957
        %5312 = vmatprep.subr.bf16.mxu0 %v3942
        %5313 = vmatpush2.bf16.msra.mxu0 %v3941
        %5314 = vmatprep.mubr.bf16.mxu0 %v984
        %5315 = vmatmul.mubr.bf16.gmra.mxu0 %v983
        %v5316 = vpop.f32.mrf.mxu0
        %v5317 = vadd.f32 %v5276, %v5316
        %v5318 = vpop.f32.mrf.mxu0
        %v5319 = vadd.f32 %v5278, %v5318
        %v5320 = vpop.f32.mrf.mxu0
        %v5321 = vpop.f32.mrf.mxu0
        %5322 = vdwg.mxu0
        %5323 = vmatprep.subr.bf16.mxu0 %v3416
        %5324 = vmatpush1.bf16.msra.mxu0 %v3415
        %5325 = vmatprep.subr.bf16.mxu0 %v3400
        %5326 = vmatpush1.bf16.msra.mxu0 %v3399
        %5327 = vmatprep.subr.bf16.mxu0 %v3384
        %5328 = vmatpush1.bf16.msra.mxu0 %v3383
        %5329 = vmatprep.subr.bf16.mxu0 %v3368
        %5330 = vmatpush1.bf16.msra.mxu0 %v3367
        %5331 = vmatprep.subr.bf16.mxu0 %v3352
        %5332 = vmatpush1.bf16.msra.mxu0 %v3351
        %5333 = vmatprep.subr.bf16.mxu0 %v3336
        %5334 = vmatpush1.bf16.msra.mxu0 %v3335
        %5335 = vmatprep.subr.bf16.mxu0 %v3320
        %5336 = vmatpush1.bf16.msra.mxu0 %v3319
        %5337 = vmatprep.subr.bf16.mxu0 %v3304
        %5338 = vmatpush1.bf16.msra.mxu0 %v3303
        %5339 = vmatprep.subr.bf16.mxu0 %v3544
        %5340 = vmatpush2.bf16.msra.mxu0 %v3543
        %5341 = vmatprep.subr.bf16.mxu0 %v3528
        %5342 = vmatpush2.bf16.msra.mxu0 %v3527
        %5343 = vmatprep.subr.bf16.mxu0 %v3512
        %5344 = vmatpush2.bf16.msra.mxu0 %v3511
        %5345 = vmatprep.subr.bf16.mxu0 %v3496
        %5346 = vmatpush2.bf16.msra.mxu0 %v3495
        %5347 = vmatprep.subr.bf16.mxu0 %v3480
        %5348 = vmatpush2.bf16.msra.mxu0 %v3479
        %5349 = vmatprep.subr.bf16.mxu0 %v3464
        %5350 = vmatpush2.bf16.msra.mxu0 %v3463
        %5351 = vmatprep.subr.bf16.mxu0 %v3448
        %5352 = vmatpush2.bf16.msra.mxu0 %v3447
        %5353 = vmatprep.subr.bf16.mxu0 %v3432
        %5354 = vmatpush2.bf16.msra.mxu0 %v3431
        %5355 = vmatprep.mubr.bf16.mxu0 %v980
        %5356 = vmatmul.mubr.bf16.gmra.mxu0 %v979
        %v5357 = vpop.f32.mrf.mxu0
        %v5358 = vadd.f32 0.0, %v5357
        %v5359 = vpop.f32.mrf.mxu0
        %v5360 = vadd.f32 0.0, %v5359
        %v5361 = vpop.f32.mrf.mxu0
        %v5362 = vpop.f32.mrf.mxu0
        %5363 = vdwg.mxu0
        %5364 = vmatprep.subr.bf16.mxu0 %v3672
        %5365 = vmatpush1.bf16.msra.mxu0 %v3671
        %5366 = vmatprep.subr.bf16.mxu0 %v3656
        %5367 = vmatpush1.bf16.msra.mxu0 %v3655
        %5368 = vmatprep.subr.bf16.mxu0 %v3640
        %5369 = vmatpush1.bf16.msra.mxu0 %v3639
        %5370 = vmatprep.subr.bf16.mxu0 %v3624
        %5371 = vmatpush1.bf16.msra.mxu0 %v3623
        %5372 = vmatprep.subr.bf16.mxu0 %v3608
        %5373 = vmatpush1.bf16.msra.mxu0 %v3607
        %5374 = vmatprep.subr.bf16.mxu0 %v3592
        %5375 = vmatpush1.bf16.msra.mxu0 %v3591
        %5376 = vmatprep.subr.bf16.mxu0 %v3576
        %5377 = vmatpush1.bf16.msra.mxu0 %v3575
        %5378 = vmatprep.subr.bf16.mxu0 %v3560
        %5379 = vmatpush1.bf16.msra.mxu0 %v3559
        %5380 = vmatprep.subr.bf16.mxu0 %v3800
        %5381 = vmatpush2.bf16.msra.mxu0 %v3799
        %5382 = vmatprep.subr.bf16.mxu0 %v3784
        %5383 = vmatpush2.bf16.msra.mxu0 %v3783
        %5384 = vmatprep.subr.bf16.mxu0 %v3768
        %5385 = vmatpush2.bf16.msra.mxu0 %v3767
        %5386 = vmatprep.subr.bf16.mxu0 %v3752
        %5387 = vmatpush2.bf16.msra.mxu0 %v3751
        %5388 = vmatprep.subr.bf16.mxu0 %v3736
        %5389 = vmatpush2.bf16.msra.mxu0 %v3735
        %5390 = vmatprep.subr.bf16.mxu0 %v3720
        %5391 = vmatpush2.bf16.msra.mxu0 %v3719
        %5392 = vmatprep.subr.bf16.mxu0 %v3704
        %5393 = vmatpush2.bf16.msra.mxu0 %v3703
        %5394 = vmatprep.subr.bf16.mxu0 %v3688
        %5395 = vmatpush2.bf16.msra.mxu0 %v3687
        %5396 = vmatprep.mubr.bf16.mxu0 %v982
        %5397 = vmatmul.mubr.bf16.gmra.mxu0 %v981
        %v5398 = vpop.f32.mrf.mxu0
        %v5399 = vadd.f32 %v5358, %v5398
        %v5400 = vpop.f32.mrf.mxu0
        %v5401 = vadd.f32 %v5360, %v5400
        %v5402 = vpop.f32.mrf.mxu0
        %v5403 = vpop.f32.mrf.mxu0
        %5404 = vdwg.mxu0
        %5405 = vmatprep.subr.bf16.mxu0 %v3928
        %5406 = vmatpush1.bf16.msra.mxu0 %v3927
        %5407 = vmatprep.subr.bf16.mxu0 %v3912
        %5408 = vmatpush1.bf16.msra.mxu0 %v3911
        %5409 = vmatprep.subr.bf16.mxu0 %v3896
        %5410 = vmatpush1.bf16.msra.mxu0 %v3895
        %5411 = vmatprep.subr.bf16.mxu0 %v3880
        %5412 = vmatpush1.bf16.msra.mxu0 %v3879
        %5413 = vmatprep.subr.bf16.mxu0 %v3864
        %5414 = vmatpush1.bf16.msra.mxu0 %v3863
        %5415 = vmatprep.subr.bf16.mxu0 %v3848
        %5416 = vmatpush1.bf16.msra.mxu0 %v3847
        %5417 = vmatprep.subr.bf16.mxu0 %v3832
        %5418 = vmatpush1.bf16.msra.mxu0 %v3831
        %5419 = vmatprep.subr.bf16.mxu0 %v3816
        %5420 = vmatpush1.bf16.msra.mxu0 %v3815
        %5421 = vmatprep.subr.bf16.mxu0 %v4056
        %5422 = vmatpush2.bf16.msra.mxu0 %v4055
        %5423 = vmatprep.subr.bf16.mxu0 %v4040
        %5424 = vmatpush2.bf16.msra.mxu0 %v4039
        %5425 = vmatprep.subr.bf16.mxu0 %v4024
        %5426 = vmatpush2.bf16.msra.mxu0 %v4023
        %5427 = vmatprep.subr.bf16.mxu0 %v4008
        %5428 = vmatpush2.bf16.msra.mxu0 %v4007
        %5429 = vmatprep.subr.bf16.mxu0 %v3992
        %5430 = vmatpush2.bf16.msra.mxu0 %v3991
        %5431 = vmatprep.subr.bf16.mxu0 %v3976
        %5432 = vmatpush2.bf16.msra.mxu0 %v3975
        %5433 = vmatprep.subr.bf16.mxu0 %v3960
        %5434 = vmatpush2.bf16.msra.mxu0 %v3959
        %5435 = vmatprep.subr.bf16.mxu0 %v3944
        %5436 = vmatpush2.bf16.msra.mxu0 %v3943
        %5437 = vmatprep.mubr.bf16.mxu0 %v984
        %5438 = vmatmul.mubr.bf16.gmra.mxu0 %v983
        %v5439 = vpop.f32.mrf.mxu0
        %v5440 = vadd.f32 %v5399, %v5439
        %v5441 = vpop.f32.mrf.mxu0
        %v5442 = vadd.f32 %v5401, %v5441
        %v5443 = vpop.f32.mrf.mxu0
        %v5444 = vpop.f32.mrf.mxu0
        %5445 = vdwg.mxu0
        %5446 = vmatprep.subr.bf16.mxu0 %v3418
        %5447 = vmatpush1.bf16.msra.mxu0 %v3417
        %5448 = vmatprep.subr.bf16.mxu0 %v3402
        %5449 = vmatpush1.bf16.msra.mxu0 %v3401
        %5450 = vmatprep.subr.bf16.mxu0 %v3386
        %5451 = vmatpush1.bf16.msra.mxu0 %v3385
        %5452 = vmatprep.subr.bf16.mxu0 %v3370
        %5453 = vmatpush1.bf16.msra.mxu0 %v3369
        %5454 = vmatprep.subr.bf16.mxu0 %v3354
        %5455 = vmatpush1.bf16.msra.mxu0 %v3353
        %5456 = vmatprep.subr.bf16.mxu0 %v3338
        %5457 = vmatpush1.bf16.msra.mxu0 %v3337
        %5458 = vmatprep.subr.bf16.mxu0 %v3322
        %5459 = vmatpush1.bf16.msra.mxu0 %v3321
        %5460 = vmatprep.subr.bf16.mxu0 %v3306
        %5461 = vmatpush1.bf16.msra.mxu0 %v3305
        %5462 = vmatprep.subr.bf16.mxu0 %v3546
        %5463 = vmatpush2.bf16.msra.mxu0 %v3545
        %5464 = vmatprep.subr.bf16.mxu0 %v3530
        %5465 = vmatpush2.bf16.msra.mxu0 %v3529
        %5466 = vmatprep.subr.bf16.mxu0 %v3514
        %5467 = vmatpush2.bf16.msra.mxu0 %v3513
        %5468 = vmatprep.subr.bf16.mxu0 %v3498
        %5469 = vmatpush2.bf16.msra.mxu0 %v3497
        %5470 = vmatprep.subr.bf16.mxu0 %v3482
        %5471 = vmatpush2.bf16.msra.mxu0 %v3481
        %5472 = vmatprep.subr.bf16.mxu0 %v3466
        %5473 = vmatpush2.bf16.msra.mxu0 %v3465
        %5474 = vmatprep.subr.bf16.mxu0 %v3450
        %5475 = vmatpush2.bf16.msra.mxu0 %v3449
        %5476 = vmatprep.subr.bf16.mxu0 %v3434
        %5477 = vmatpush2.bf16.msra.mxu0 %v3433
        %5478 = vmatprep.mubr.bf16.mxu0 %v980
        %5479 = vmatmul.mubr.bf16.gmra.mxu0 %v979
        %v5480 = vpop.f32.mrf.mxu0
        %v5481 = vadd.f32 0.0, %v5480
        %v5482 = vpop.f32.mrf.mxu0
        %v5483 = vadd.f32 0.0, %v5482
        %v5484 = vpop.f32.mrf.mxu0
        %v5485 = vpop.f32.mrf.mxu0
        %5486 = vdwg.mxu0
        %5487 = vmatprep.subr.bf16.mxu0 %v3674
        %5488 = vmatpush1.bf16.msra.mxu0 %v3673
        %5489 = vmatprep.subr.bf16.mxu0 %v3658
        %5490 = vmatpush1.bf16.msra.mxu0 %v3657
        %5491 = vmatprep.subr.bf16.mxu0 %v3642
        %5492 = vmatpush1.bf16.msra.mxu0 %v3641
        %5493 = vmatprep.subr.bf16.mxu0 %v3626
        %5494 = vmatpush1.bf16.msra.mxu0 %v3625
        %5495 = vmatprep.subr.bf16.mxu0 %v3610
        %5496 = vmatpush1.bf16.msra.mxu0 %v3609
        %5497 = vmatprep.subr.bf16.mxu0 %v3594
        %5498 = vmatpush1.bf16.msra.mxu0 %v3593
        %5499 = vmatprep.subr.bf16.mxu0 %v3578
        %5500 = vmatpush1.bf16.msra.mxu0 %v3577
        %5501 = vmatprep.subr.bf16.mxu0 %v3562
        %5502 = vmatpush1.bf16.msra.mxu0 %v3561
        %5503 = vmatprep.subr.bf16.mxu0 %v3802
        %5504 = vmatpush2.bf16.msra.mxu0 %v3801
        %5505 = vmatprep.subr.bf16.mxu0 %v3786
        %5506 = vmatpush2.bf16.msra.mxu0 %v3785
        %5507 = vmatprep.subr.bf16.mxu0 %v3770
        %5508 = vmatpush2.bf16.msra.mxu0 %v3769
        %5509 = vmatprep.subr.bf16.mxu0 %v3754
        %5510 = vmatpush2.bf16.msra.mxu0 %v3753
        %5511 = vmatprep.subr.bf16.mxu0 %v3738
        %5512 = vmatpush2.bf16.msra.mxu0 %v3737
        %5513 = vmatprep.subr.bf16.mxu0 %v3722
        %5514 = vmatpush2.bf16.msra.mxu0 %v3721
        %5515 = vmatprep.subr.bf16.mxu0 %v3706
        %5516 = vmatpush2.bf16.msra.mxu0 %v3705
        %5517 = vmatprep.subr.bf16.mxu0 %v3690
        %5518 = vmatpush2.bf16.msra.mxu0 %v3689
        %5519 = vmatprep.mubr.bf16.mxu0 %v982
        %5520 = vmatmul.mubr.bf16.gmra.mxu0 %v981
        %v5521 = vpop.f32.mrf.mxu0
        %v5522 = vadd.f32 %v5481, %v5521
        %v5523 = vpop.f32.mrf.mxu0
        %v5524 = vadd.f32 %v5483, %v5523
        %v5525 = vpop.f32.mrf.mxu0
        %v5526 = vpop.f32.mrf.mxu0
        %5527 = vdwg.mxu0
        %5528 = vmatprep.subr.bf16.mxu0 %v3930
        %5529 = vmatpush1.bf16.msra.mxu0 %v3929
        %5530 = vmatprep.subr.bf16.mxu0 %v3914
        %5531 = vmatpush1.bf16.msra.mxu0 %v3913
        %5532 = vmatprep.subr.bf16.mxu0 %v3898
        %5533 = vmatpush1.bf16.msra.mxu0 %v3897
        %5534 = vmatprep.subr.bf16.mxu0 %v3882
        %5535 = vmatpush1.bf16.msra.mxu0 %v3881
        %5536 = vmatprep.subr.bf16.mxu0 %v3866
        %5537 = vmatpush1.bf16.msra.mxu0 %v3865
        %5538 = vmatprep.subr.bf16.mxu0 %v3850
        %5539 = vmatpush1.bf16.msra.mxu0 %v3849
        %5540 = vmatprep.subr.bf16.mxu0 %v3834
        %5541 = vmatpush1.bf16.msra.mxu0 %v3833
        %5542 = vmatprep.subr.bf16.mxu0 %v3818
        %5543 = vmatpush1.bf16.msra.mxu0 %v3817
        %5544 = vmatprep.subr.bf16.mxu0 %v4058
        %5545 = vmatpush2.bf16.msra.mxu0 %v4057
        %5546 = vmatprep.subr.bf16.mxu0 %v4042
        %5547 = vmatpush2.bf16.msra.mxu0 %v4041
        %5548 = vmatprep.subr.bf16.mxu0 %v4026
        %5549 = vmatpush2.bf16.msra.mxu0 %v4025
        %5550 = vmatprep.subr.bf16.mxu0 %v4010
        %5551 = vmatpush2.bf16.msra.mxu0 %v4009
        %5552 = vmatprep.subr.bf16.mxu0 %v3994
        %5553 = vmatpush2.bf16.msra.mxu0 %v3993
        %5554 = vmatprep.subr.bf16.mxu0 %v3978
        %5555 = vmatpush2.bf16.msra.mxu0 %v3977
        %5556 = vmatprep.subr.bf16.mxu0 %v3962
        %5557 = vmatpush2.bf16.msra.mxu0 %v3961
        %5558 = vmatprep.subr.bf16.mxu0 %v3946
        %5559 = vmatpush2.bf16.msra.mxu0 %v3945
        %5560 = vmatprep.mubr.bf16.mxu0 %v984
        %5561 = vmatmul.mubr.bf16.gmra.mxu0 %v983
        %v5562 = vpop.f32.mrf.mxu0
        %v5563 = vadd.f32 %v5522, %v5562
        %v5564 = vpop.f32.mrf.mxu0
        %v5565 = vadd.f32 %v5524, %v5564
        %v5566 = vpop.f32.mrf.mxu0
        %v5567 = vpop.f32.mrf.mxu0
        %5568 = vdwg.mxu0
        %5569 = vmatprep.subr.bf16.mxu0 %v3420
        %5570 = vmatpush1.bf16.msra.mxu0 %v3419
        %5571 = vmatprep.subr.bf16.mxu0 %v3404
        %5572 = vmatpush1.bf16.msra.mxu0 %v3403
        %5573 = vmatprep.subr.bf16.mxu0 %v3388
        %5574 = vmatpush1.bf16.msra.mxu0 %v3387
        %5575 = vmatprep.subr.bf16.mxu0 %v3372
        %5576 = vmatpush1.bf16.msra.mxu0 %v3371
        %5577 = vmatprep.subr.bf16.mxu0 %v3356
        %5578 = vmatpush1.bf16.msra.mxu0 %v3355
        %5579 = vmatprep.subr.bf16.mxu0 %v3340
        %5580 = vmatpush1.bf16.msra.mxu0 %v3339
        %5581 = vmatprep.subr.bf16.mxu0 %v3324
        %5582 = vmatpush1.bf16.msra.mxu0 %v3323
        %5583 = vmatprep.subr.bf16.mxu0 %v3308
        %5584 = vmatpush1.bf16.msra.mxu0 %v3307
        %5585 = vmatprep.subr.bf16.mxu0 %v3548
        %5586 = vmatpush2.bf16.msra.mxu0 %v3547
        %5587 = vmatprep.subr.bf16.mxu0 %v3532
        %5588 = vmatpush2.bf16.msra.mxu0 %v3531
        %5589 = vmatprep.subr.bf16.mxu0 %v3516
        %5590 = vmatpush2.bf16.msra.mxu0 %v3515
        %5591 = vmatprep.subr.bf16.mxu0 %v3500
        %5592 = vmatpush2.bf16.msra.mxu0 %v3499
        %5593 = vmatprep.subr.bf16.mxu0 %v3484
        %5594 = vmatpush2.bf16.msra.mxu0 %v3483
        %5595 = vmatprep.subr.bf16.mxu0 %v3468
        %5596 = vmatpush2.bf16.msra.mxu0 %v3467
        %5597 = vmatprep.subr.bf16.mxu0 %v3452
        %5598 = vmatpush2.bf16.msra.mxu0 %v3451
        %5599 = vmatprep.subr.bf16.mxu0 %v3436
        %5600 = vmatpush2.bf16.msra.mxu0 %v3435
        %5601 = vmatprep.mubr.bf16.mxu0 %v980
        %5602 = vmatmul.mubr.bf16.gmra.mxu0 %v979
        %v5603 = vpop.f32.mrf.mxu0
        %v5604 = vadd.f32 0.0, %v5603
        %v5605 = vpop.f32.mrf.mxu0
        %v5606 = vadd.f32 0.0, %v5605
        %v5607 = vpop.f32.mrf.mxu0
        %v5608 = vpop.f32.mrf.mxu0
        %5609 = vdwg.mxu0
        %5610 = vmatprep.subr.bf16.mxu0 %v3676
        %5611 = vmatpush1.bf16.msra.mxu0 %v3675
        %5612 = vmatprep.subr.bf16.mxu0 %v3660
        %5613 = vmatpush1.bf16.msra.mxu0 %v3659
        %5614 = vmatprep.subr.bf16.mxu0 %v3644
        %5615 = vmatpush1.bf16.msra.mxu0 %v3643
        %5616 = vmatprep.subr.bf16.mxu0 %v3628
        %5617 = vmatpush1.bf16.msra.mxu0 %v3627
        %5618 = vmatprep.subr.bf16.mxu0 %v3612
        %5619 = vmatpush1.bf16.msra.mxu0 %v3611
        %5620 = vmatprep.subr.bf16.mxu0 %v3596
        %5621 = vmatpush1.bf16.msra.mxu0 %v3595
        %5622 = vmatprep.subr.bf16.mxu0 %v3580
        %5623 = vmatpush1.bf16.msra.mxu0 %v3579
        %5624 = vmatprep.subr.bf16.mxu0 %v3564
        %5625 = vmatpush1.bf16.msra.mxu0 %v3563
        %5626 = vmatprep.subr.bf16.mxu0 %v3804
        %5627 = vmatpush2.bf16.msra.mxu0 %v3803
        %5628 = vmatprep.subr.bf16.mxu0 %v3788
        %5629 = vmatpush2.bf16.msra.mxu0 %v3787
        %5630 = vmatprep.subr.bf16.mxu0 %v3772
        %5631 = vmatpush2.bf16.msra.mxu0 %v3771
        %5632 = vmatprep.subr.bf16.mxu0 %v3756
        %5633 = vmatpush2.bf16.msra.mxu0 %v3755
        %5634 = vmatprep.subr.bf16.mxu0 %v3740
        %5635 = vmatpush2.bf16.msra.mxu0 %v3739
        %5636 = vmatprep.subr.bf16.mxu0 %v3724
        %5637 = vmatpush2.bf16.msra.mxu0 %v3723
        %5638 = vmatprep.subr.bf16.mxu0 %v3708
        %5639 = vmatpush2.bf16.msra.mxu0 %v3707
        %5640 = vmatprep.subr.bf16.mxu0 %v3692
        %5641 = vmatpush2.bf16.msra.mxu0 %v3691
        %5642 = vmatprep.mubr.bf16.mxu0 %v982
        %5643 = vmatmul.mubr.bf16.gmra.mxu0 %v981
        %v5644 = vpop.f32.mrf.mxu0
        %v5645 = vadd.f32 %v5604, %v5644
        %v5646 = vpop.f32.mrf.mxu0
        %v5647 = vadd.f32 %v5606, %v5646
        %v5648 = vpop.f32.mrf.mxu0
        %v5649 = vpop.f32.mrf.mxu0
        %5650 = vdwg.mxu0
        %5651 = vmatprep.subr.bf16.mxu0 %v3932
        %5652 = vmatpush1.bf16.msra.mxu0 %v3931
        %5653 = vmatprep.subr.bf16.mxu0 %v3916
        %5654 = vmatpush1.bf16.msra.mxu0 %v3915
        %5655 = vmatprep.subr.bf16.mxu0 %v3900
        %5656 = vmatpush1.bf16.msra.mxu0 %v3899
        %5657 = vmatprep.subr.bf16.mxu0 %v3884
        %5658 = vmatpush1.bf16.msra.mxu0 %v3883
        %5659 = vmatprep.subr.bf16.mxu0 %v3868
        %5660 = vmatpush1.bf16.msra.mxu0 %v3867
        %5661 = vmatprep.subr.bf16.mxu0 %v3852
        %5662 = vmatpush1.bf16.msra.mxu0 %v3851
        %5663 = vmatprep.subr.bf16.mxu0 %v3836
        %5664 = vmatpush1.bf16.msra.mxu0 %v3835
        %5665 = vmatprep.subr.bf16.mxu0 %v3820
        %5666 = vmatpush1.bf16.msra.mxu0 %v3819
        %5667 = vmatprep.subr.bf16.mxu0 %v4060
        %5668 = vmatpush2.bf16.msra.mxu0 %v4059
        %5669 = vmatprep.subr.bf16.mxu0 %v4044
        %5670 = vmatpush2.bf16.msra.mxu0 %v4043
        %5671 = vmatprep.subr.bf16.mxu0 %v4028
        %5672 = vmatpush2.bf16.msra.mxu0 %v4027
        %5673 = vmatprep.subr.bf16.mxu0 %v4012
        %5674 = vmatpush2.bf16.msra.mxu0 %v4011
        %5675 = vmatprep.subr.bf16.mxu0 %v3996
        %5676 = vmatpush2.bf16.msra.mxu0 %v3995
        %5677 = vmatprep.subr.bf16.mxu0 %v3980
        %5678 = vmatpush2.bf16.msra.mxu0 %v3979
        %5679 = vmatprep.subr.bf16.mxu0 %v3964
        %5680 = vmatpush2.bf16.msra.mxu0 %v3963
        %5681 = vmatprep.subr.bf16.mxu0 %v3948
        %5682 = vmatpush2.bf16.msra.mxu0 %v3947
        %5683 = vmatprep.mubr.bf16.mxu0 %v984
        %5684 = vmatmul.mubr.bf16.gmra.mxu0 %v983
        %v5685 = vpop.f32.mrf.mxu0
        %v5686 = vadd.f32 %v5645, %v5685
        %v5687 = vpop.f32.mrf.mxu0
        %v5688 = vadd.f32 %v5647, %v5687
        %v5689 = vpop.f32.mrf.mxu0
        %v5690 = vpop.f32.mrf.mxu0
        %5691 = vdwg.mxu0
        %5692 = vmatprep.subr.bf16.mxu0 %v3422
        %5693 = vmatpush1.bf16.msra.mxu0 %v3421
        %5694 = vmatprep.subr.bf16.mxu0 %v3406
        %5695 = vmatpush1.bf16.msra.mxu0 %v3405
        %5696 = vmatprep.subr.bf16.mxu0 %v3390
        %5697 = vmatpush1.bf16.msra.mxu0 %v3389
        %5698 = vmatprep.subr.bf16.mxu0 %v3374
        %5699 = vmatpush1.bf16.msra.mxu0 %v3373
        %5700 = vmatprep.subr.bf16.mxu0 %v3358
        %5701 = vmatpush1.bf16.msra.mxu0 %v3357
        %5702 = vmatprep.subr.bf16.mxu0 %v3342
        %5703 = vmatpush1.bf16.msra.mxu0 %v3341
        %5704 = vmatprep.subr.bf16.mxu0 %v3326
        %5705 = vmatpush1.bf16.msra.mxu0 %v3325
        %5706 = vmatprep.subr.bf16.mxu0 %v3310
        %5707 = vmatpush1.bf16.msra.mxu0 %v3309
        %5708 = vmatprep.subr.bf16.mxu0 %v3550
        %5709 = vmatpush2.bf16.msra.mxu0 %v3549
        %5710 = vmatprep.subr.bf16.mxu0 %v3534
        %5711 = vmatpush2.bf16.msra.mxu0 %v3533
        %5712 = vmatprep.subr.bf16.mxu0 %v3518
        %5713 = vmatpush2.bf16.msra.mxu0 %v3517
        %5714 = vmatprep.subr.bf16.mxu0 %v3502
        %5715 = vmatpush2.bf16.msra.mxu0 %v3501
        %5716 = vmatprep.subr.bf16.mxu0 %v3486
        %5717 = vmatpush2.bf16.msra.mxu0 %v3485
        %5718 = vmatprep.subr.bf16.mxu0 %v3470
        %5719 = vmatpush2.bf16.msra.mxu0 %v3469
        %5720 = vmatprep.subr.bf16.mxu0 %v3454
        %5721 = vmatpush2.bf16.msra.mxu0 %v3453
        %5722 = vmatprep.subr.bf16.mxu0 %v3438
        %5723 = vmatpush2.bf16.msra.mxu0 %v3437
        %5724 = vmatprep.mubr.bf16.mxu0 %v980
        %5725 = vmatmul.mubr.bf16.gmra.mxu0 %v979
        %v5726 = vpop.f32.mrf.mxu0
        %v5727 = vadd.f32 0.0, %v5726
        %v5728 = vpop.f32.mrf.mxu0
        %v5729 = vadd.f32 0.0, %v5728
        %v5730 = vpop.f32.mrf.mxu0
        %v5731 = vpop.f32.mrf.mxu0
        %5732 = vdwg.mxu0
        %5733 = vmatprep.subr.bf16.mxu0 %v3678
        %5734 = vmatpush1.bf16.msra.mxu0 %v3677
        %5735 = vmatprep.subr.bf16.mxu0 %v3662
        %5736 = vmatpush1.bf16.msra.mxu0 %v3661
        %5737 = vmatprep.subr.bf16.mxu0 %v3646
        %5738 = vmatpush1.bf16.msra.mxu0 %v3645
        %5739 = vmatprep.subr.bf16.mxu0 %v3630
        %5740 = vmatpush1.bf16.msra.mxu0 %v3629
        %5741 = vmatprep.subr.bf16.mxu0 %v3614
        %5742 = vmatpush1.bf16.msra.mxu0 %v3613
        %5743 = vmatprep.subr.bf16.mxu0 %v3598
        %5744 = vmatpush1.bf16.msra.mxu0 %v3597
        %5745 = vmatprep.subr.bf16.mxu0 %v3582
        %5746 = vmatpush1.bf16.msra.mxu0 %v3581
        %5747 = vmatprep.subr.bf16.mxu0 %v3566
        %5748 = vmatpush1.bf16.msra.mxu0 %v3565
        %5749 = vmatprep.subr.bf16.mxu0 %v3806
        %5750 = vmatpush2.bf16.msra.mxu0 %v3805
        %5751 = vmatprep.subr.bf16.mxu0 %v3790
        %5752 = vmatpush2.bf16.msra.mxu0 %v3789
        %5753 = vmatprep.subr.bf16.mxu0 %v3774
        %5754 = vmatpush2.bf16.msra.mxu0 %v3773
        %5755 = vmatprep.subr.bf16.mxu0 %v3758
        %5756 = vmatpush2.bf16.msra.mxu0 %v3757
        %5757 = vmatprep.subr.bf16.mxu0 %v3742
        %5758 = vmatpush2.bf16.msra.mxu0 %v3741
        %5759 = vmatprep.subr.bf16.mxu0 %v3726
        %5760 = vmatpush2.bf16.msra.mxu0 %v3725
        %5761 = vmatprep.subr.bf16.mxu0 %v3710
        %5762 = vmatpush2.bf16.msra.mxu0 %v3709
        %5763 = vmatprep.subr.bf16.mxu0 %v3694
        %5764 = vmatpush2.bf16.msra.mxu0 %v3693
        %5765 = vmatprep.mubr.bf16.mxu0 %v982
        %5766 = vmatmul.mubr.bf16.gmra.mxu0 %v981
        %v5767 = vpop.f32.mrf.mxu0
        %v5768 = vadd.f32 %v5727, %v5767
        %v5769 = vpop.f32.mrf.mxu0
        %v5770 = vadd.f32 %v5729, %v5769
        %v5771 = vpop.f32.mrf.mxu0
        %v5772 = vpop.f32.mrf.mxu0
        %5773 = vdwg.mxu0
        %5774 = vmatprep.subr.bf16.mxu0 %v3934
        %5775 = vmatpush1.bf16.msra.mxu0 %v3933
        %5776 = vmatprep.subr.bf16.mxu0 %v3918
        %5777 = vmatpush1.bf16.msra.mxu0 %v3917
        %5778 = vmatprep.subr.bf16.mxu0 %v3902
        %5779 = vmatpush1.bf16.msra.mxu0 %v3901
        %5780 = vmatprep.subr.bf16.mxu0 %v3886
        %5781 = vmatpush1.bf16.msra.mxu0 %v3885
        %5782 = vmatprep.subr.bf16.mxu0 %v3870
        %5783 = vmatpush1.bf16.msra.mxu0 %v3869
        %5784 = vmatprep.subr.bf16.mxu0 %v3854
        %5785 = vmatpush1.bf16.msra.mxu0 %v3853
        %5786 = vmatprep.subr.bf16.mxu0 %v3838
        %5787 = vmatpush1.bf16.msra.mxu0 %v3837
        %5788 = vmatprep.subr.bf16.mxu0 %v3822
        %5789 = vmatpush1.bf16.msra.mxu0 %v3821
        %5790 = vmatprep.subr.bf16.mxu0 %v4062
        %5791 = vmatpush2.bf16.msra.mxu0 %v4061
        %5792 = vmatprep.subr.bf16.mxu0 %v4046
        %5793 = vmatpush2.bf16.msra.mxu0 %v4045
        %5794 = vmatprep.subr.bf16.mxu0 %v4030
        %5795 = vmatpush2.bf16.msra.mxu0 %v4029
        %5796 = vmatprep.subr.bf16.mxu0 %v4014
        %5797 = vmatpush2.bf16.msra.mxu0 %v4013
        %5798 = vmatprep.subr.bf16.mxu0 %v3998
        %5799 = vmatpush2.bf16.msra.mxu0 %v3997
        %5800 = vmatprep.subr.bf16.mxu0 %v3982
        %5801 = vmatpush2.bf16.msra.mxu0 %v3981
        %5802 = vmatprep.subr.bf16.mxu0 %v3966
        %5803 = vmatpush2.bf16.msra.mxu0 %v3965
        %5804 = vmatprep.subr.bf16.mxu0 %v3950
        %5805 = vmatpush2.bf16.msra.mxu0 %v3949
        %5806 = vmatprep.mubr.bf16.mxu0 %v984
        %5807 = vmatmul.mubr.bf16.gmra.mxu0 %v983
        %v5808 = vpop.f32.mrf.mxu0
        %v5809 = vadd.f32 %v5768, %v5808
        %v5810 = vpop.f32.mrf.mxu0
        %v5811 = vadd.f32 %v5770, %v5810
        %v5812 = vpop.f32.mrf.mxu0
        %v5813 = vpop.f32.mrf.mxu0
        %5814 = vdwg.mxu0
        %v5815 = vmax.f32 %v4948, 0.0
        %v5816 = vmax.f32 %v4950, 0.0
        %v5817 = vmax.f32 %v5071, 0.0
        %v5818 = vmax.f32 %v5073, 0.0
        %v5819 = vmax.f32 %v5194, 0.0
        %v5820 = vmax.f32 %v5196, 0.0
        %v5821 = vmax.f32 %v5317, 0.0
        %v5822 = vmax.f32 %v5319, 0.0
        %v5823 = vmax.f32 %v5440, 0.0
        %v5824 = vmax.f32 %v5442, 0.0
        %v5825 = vmax.f32 %v5563, 0.0
        %v5826 = vmax.f32 %v5565, 0.0
        %v5827 = vmax.f32 %v5686, 0.0
        %v5828 = vmax.f32 %v5688, 0.0
        %v5829 = vmax.f32 %v5809, 0.0
        %v5830 = vmax.f32 %v5811, 0.0
        %v5831 = vpack.c.bf16 %v5815, %v5815
        %v5832 = vpack.c.bf16 %v5816, %v5816
        %v5833 = vpack.c.bf16 %v5817, %v5817
        %v5834 = vpack.c.bf16 %v5818, %v5818
        %v5835 = vpack.c.bf16 %v5819, %v5819
        %v5836 = vpack.c.bf16 %v5820, %v5820
        %v5837 = vpack.c.bf16 %v5821, %v5821
        %v5838 = vpack.c.bf16 %v5822, %v5822
        %v5839 = vpack.c.bf16 %v5823, %v5823
        %v5840 = vpack.c.bf16 %v5824, %v5824
        %v5841 = vpack.c.bf16 %v5825, %v5825
        %v5842 = vpack.c.bf16 %v5826, %v5826
        %v5843 = vpack.c.bf16 %v5827, %v5827
        %v5844 = vpack.c.bf16 %v5828, %v5828
        %v5845 = vpack.c.bf16 %v5829, %v5829
        %v5846 = vpack.c.bf16 %v5830, %v5830
        %v5847 = vld [vmem:[#allocation5] sm:$0xff]
        %v5848 = vld [vmem:[#allocation5 + $0x8] sm:$0xff]
        %v5849 = vld [vmem:[#allocation5 + $0x10] sm:$0xff]
        %v5850 = vld [vmem:[#allocation5 + $0x18] sm:$0xff]
        %v5851 = vld [vmem:[#allocation5 + $0x20] sm:$0xff]
        %v5852 = vld [vmem:[#allocation5 + $0x28] sm:$0xff]
        %v5853 = vld [vmem:[#allocation5 + $0x30] sm:$0xff]
        %v5854 = vld [vmem:[#allocation5 + $0x38] sm:$0xff]
        %v5855 = vld [vmem:[#allocation5 + $0x40] sm:$0xff]
        %v5856 = vld [vmem:[#allocation5 + $0x48] sm:$0xff]
        %v5857 = vld [vmem:[#allocation5 + $0x50] sm:$0xff]
        %v5858 = vld [vmem:[#allocation5 + $0x58] sm:$0xff]
        %v5859 = vld [vmem:[#allocation5 + $0x60] sm:$0xff]
        %v5860 = vld [vmem:[#allocation5 + $0x68] sm:$0xff]
        %v5861 = vld [vmem:[#allocation5 + $0x70] sm:$0xff]
        %v5862 = vld [vmem:[#allocation5 + $0x78] sm:$0xff]
        %v5863 = vld [vmem:[#allocation5 + $0x80] sm:$0xff]
        %v5864 = vld [vmem:[#allocation5 + $0x88] sm:$0xff]
        %v5865 = vld [vmem:[#allocation5 + $0x90] sm:$0xff]
        %v5866 = vld [vmem:[#allocation5 + $0x98] sm:$0xff]
        %v5867 = vld [vmem:[#allocation5 + $0xa0] sm:$0xff]
        %v5868 = vld [vmem:[#allocation5 + $0xa8] sm:$0xff]
        %v5869 = vld [vmem:[#allocation5 + $0xb0] sm:$0xff]
        %v5870 = vld [vmem:[#allocation5 + $0xb8] sm:$0xff]
        %v5871 = vld [vmem:[#allocation5 + $0xc0] sm:$0xff]
        %v5872 = vld [vmem:[#allocation5 + $0xc8] sm:$0xff]
        %v5873 = vld [vmem:[#allocation5 + $0xd0] sm:$0xff]
        %v5874 = vld [vmem:[#allocation5 + $0xd8] sm:$0xff]
        %v5875 = vld [vmem:[#allocation5 + $0xe0] sm:$0xff]
        %v5876 = vld [vmem:[#allocation5 + $0xe8] sm:$0xff]
        %v5877 = vld [vmem:[#allocation5 + $0xf0] sm:$0xff]
        %v5878 = vld [vmem:[#allocation5 + $0xf8] sm:$0xff]
        %v5879 = vld [vmem:[#allocation5 + $0x100] sm:$0xff]
        %v5880 = vld [vmem:[#allocation5 + $0x108] sm:$0xff]
        %v5881 = vld [vmem:[#allocation5 + $0x110] sm:$0xff]
        %v5882 = vld [vmem:[#allocation5 + $0x118] sm:$0xff]
        %v5883 = vld [vmem:[#allocation5 + $0x120] sm:$0xff]
        %v5884 = vld [vmem:[#allocation5 + $0x128] sm:$0xff]
        %v5885 = vld [vmem:[#allocation5 + $0x130] sm:$0xff]
        %v5886 = vld [vmem:[#allocation5 + $0x138] sm:$0xff]
        %v5887 = vld [vmem:[#allocation5 + $0x140] sm:$0xff]
        %v5888 = vld [vmem:[#allocation5 + $0x148] sm:$0xff]
        %v5889 = vld [vmem:[#allocation5 + $0x150] sm:$0xff]
        %v5890 = vld [vmem:[#allocation5 + $0x158] sm:$0xff]
        %v5891 = vld [vmem:[#allocation5 + $0x160] sm:$0xff]
        %v5892 = vld [vmem:[#allocation5 + $0x168] sm:$0xff]
        %v5893 = vld [vmem:[#allocation5 + $0x170] sm:$0xff]
        %v5894 = vld [vmem:[#allocation5 + $0x178] sm:$0xff]
        %v5895 = vld [vmem:[#allocation5 + $0x180] sm:$0xff]
        %v5896 = vld [vmem:[#allocation5 + $0x188] sm:$0xff]
        %v5897 = vld [vmem:[#allocation5 + $0x190] sm:$0xff]
        %v5898 = vld [vmem:[#allocation5 + $0x198] sm:$0xff]
        %v5899 = vld [vmem:[#allocation5 + $0x1a0] sm:$0xff]
        %v5900 = vld [vmem:[#allocation5 + $0x1a8] sm:$0xff]
        %v5901 = vld [vmem:[#allocation5 + $0x1b0] sm:$0xff]
        %v5902 = vld [vmem:[#allocation5 + $0x1b8] sm:$0xff]
        %v5903 = vld [vmem:[#allocation5 + $0x1c0] sm:$0xff]
        %v5904 = vld [vmem:[#allocation5 + $0x1c8] sm:$0xff]
        %v5905 = vld [vmem:[#allocation5 + $0x1d0] sm:$0xff]
        %v5906 = vld [vmem:[#allocation5 + $0x1d8] sm:$0xff]
        %v5907 = vld [vmem:[#allocation5 + $0x1e0] sm:$0xff]
        %v5908 = vld [vmem:[#allocation5 + $0x1e8] sm:$0xff]
        %v5909 = vld [vmem:[#allocation5 + $0x1f0] sm:$0xff]
        %v5910 = vld [vmem:[#allocation5 + $0x1f8] sm:$0xff]
        %v5911 = vld [vmem:[#allocation5 + $0x200] sm:$0xff]
        %v5912 = vld [vmem:[#allocation5 + $0x208] sm:$0xff]
        %v5913 = vld [vmem:[#allocation5 + $0x210] sm:$0xff]
        %v5914 = vld [vmem:[#allocation5 + $0x218] sm:$0xff]
        %v5915 = vld [vmem:[#allocation5 + $0x220] sm:$0xff]
        %v5916 = vld [vmem:[#allocation5 + $0x228] sm:$0xff]
        %v5917 = vld [vmem:[#allocation5 + $0x230] sm:$0xff]
        %v5918 = vld [vmem:[#allocation5 + $0x238] sm:$0xff]
        %v5919 = vld [vmem:[#allocation5 + $0x240] sm:$0xff]
        %v5920 = vld [vmem:[#allocation5 + $0x248] sm:$0xff]
        %v5921 = vld [vmem:[#allocation5 + $0x250] sm:$0xff]
        %v5922 = vld [vmem:[#allocation5 + $0x258] sm:$0xff]
        %v5923 = vld [vmem:[#allocation5 + $0x260] sm:$0xff]
        %v5924 = vld [vmem:[#allocation5 + $0x268] sm:$0xff]
        %v5925 = vld [vmem:[#allocation5 + $0x270] sm:$0xff]
        %v5926 = vld [vmem:[#allocation5 + $0x278] sm:$0xff]
        %v5927 = vld [vmem:[#allocation5 + $0x280] sm:$0xff]
        %v5928 = vld [vmem:[#allocation5 + $0x288] sm:$0xff]
        %v5929 = vld [vmem:[#allocation5 + $0x290] sm:$0xff]
        %v5930 = vld [vmem:[#allocation5 + $0x298] sm:$0xff]
        %v5931 = vld [vmem:[#allocation5 + $0x2a0] sm:$0xff]
        %v5932 = vld [vmem:[#allocation5 + $0x2a8] sm:$0xff]
        %v5933 = vld [vmem:[#allocation5 + $0x2b0] sm:$0xff]
        %v5934 = vld [vmem:[#allocation5 + $0x2b8] sm:$0xff]
        %v5935 = vld [vmem:[#allocation5 + $0x2c0] sm:$0xff]
        %v5936 = vld [vmem:[#allocation5 + $0x2c8] sm:$0xff]
        %v5937 = vld [vmem:[#allocation5 + $0x2d0] sm:$0xff]
        %v5938 = vld [vmem:[#allocation5 + $0x2d8] sm:$0xff]
        %v5939 = vld [vmem:[#allocation5 + $0x2e0] sm:$0xff]
        %v5940 = vld [vmem:[#allocation5 + $0x2e8] sm:$0xff]
        %v5941 = vld [vmem:[#allocation5 + $0x2f0] sm:$0xff]
        %v5942 = vld [vmem:[#allocation5 + $0x2f8] sm:$0xff]
        %v5943 = vld [vmem:[#allocation5 + $0x300] sm:$0xff]
        %v5944 = vld [vmem:[#allocation5 + $0x308] sm:$0xff]
        %v5945 = vld [vmem:[#allocation5 + $0x310] sm:$0xff]
        %v5946 = vld [vmem:[#allocation5 + $0x318] sm:$0xff]
        %v5947 = vld [vmem:[#allocation5 + $0x320] sm:$0xff]
        %v5948 = vld [vmem:[#allocation5 + $0x328] sm:$0xff]
        %v5949 = vld [vmem:[#allocation5 + $0x330] sm:$0xff]
        %v5950 = vld [vmem:[#allocation5 + $0x338] sm:$0xff]
        %v5951 = vld [vmem:[#allocation5 + $0x340] sm:$0xff]
        %v5952 = vld [vmem:[#allocation5 + $0x348] sm:$0xff]
        %v5953 = vld [vmem:[#allocation5 + $0x350] sm:$0xff]
        %v5954 = vld [vmem:[#allocation5 + $0x358] sm:$0xff]
        %v5955 = vld [vmem:[#allocation5 + $0x360] sm:$0xff]
        %v5956 = vld [vmem:[#allocation5 + $0x368] sm:$0xff]
        %v5957 = vld [vmem:[#allocation5 + $0x370] sm:$0xff]
        %v5958 = vld [vmem:[#allocation5 + $0x378] sm:$0xff]
        %v5959 = vld [vmem:[#allocation5 + $0x380] sm:$0xff]
        %v5960 = vld [vmem:[#allocation5 + $0x388] sm:$0xff]
        %v5961 = vld [vmem:[#allocation5 + $0x390] sm:$0xff]
        %v5962 = vld [vmem:[#allocation5 + $0x398] sm:$0xff]
        %v5963 = vld [vmem:[#allocation5 + $0x3a0] sm:$0xff]
        %v5964 = vld [vmem:[#allocation5 + $0x3a8] sm:$0xff]
        %v5965 = vld [vmem:[#allocation5 + $0x3b0] sm:$0xff]
        %v5966 = vld [vmem:[#allocation5 + $0x3b8] sm:$0xff]
        %v5967 = vld [vmem:[#allocation5 + $0x3c0] sm:$0xff]
        %v5968 = vld [vmem:[#allocation5 + $0x3c8] sm:$0xff]
        %v5969 = vld [vmem:[#allocation5 + $0x3d0] sm:$0xff]
        %v5970 = vld [vmem:[#allocation5 + $0x3d8] sm:$0xff]
        %v5971 = vld [vmem:[#allocation5 + $0x3e0] sm:$0xff]
        %v5972 = vld [vmem:[#allocation5 + $0x3e8] sm:$0xff]
        %v5973 = vld [vmem:[#allocation5 + $0x3f0] sm:$0xff]
        %v5974 = vld [vmem:[#allocation5 + $0x3f8] sm:$0xff]
        %v5975 = vld [vmem:[#allocation5 + $0x400] sm:$0xff]
        %v5976 = vld [vmem:[#allocation5 + $0x408] sm:$0xff]
        %v5977 = vld [vmem:[#allocation5 + $0x410] sm:$0xff]
        %v5978 = vld [vmem:[#allocation5 + $0x418] sm:$0xff]
        %v5979 = vld [vmem:[#allocation5 + $0x420] sm:$0xff]
        %v5980 = vld [vmem:[#allocation5 + $0x428] sm:$0xff]
        %v5981 = vld [vmem:[#allocation5 + $0x430] sm:$0xff]
        %v5982 = vld [vmem:[#allocation5 + $0x438] sm:$0xff]
        %v5983 = vld [vmem:[#allocation5 + $0x440] sm:$0xff]
        %v5984 = vld [vmem:[#allocation5 + $0x448] sm:$0xff]
        %v5985 = vld [vmem:[#allocation5 + $0x450] sm:$0xff]
        %v5986 = vld [vmem:[#allocation5 + $0x458] sm:$0xff]
        %v5987 = vld [vmem:[#allocation5 + $0x460] sm:$0xff]
        %v5988 = vld [vmem:[#allocation5 + $0x468] sm:$0xff]
        %v5989 = vld [vmem:[#allocation5 + $0x470] sm:$0xff]
        %v5990 = vld [vmem:[#allocation5 + $0x478] sm:$0xff]
        %v5991 = vld [vmem:[#allocation5 + $0x480] sm:$0xff]
        %v5992 = vld [vmem:[#allocation5 + $0x488] sm:$0xff]
        %v5993 = vld [vmem:[#allocation5 + $0x490] sm:$0xff]
        %v5994 = vld [vmem:[#allocation5 + $0x498] sm:$0xff]
        %v5995 = vld [vmem:[#allocation5 + $0x4a0] sm:$0xff]
        %v5996 = vld [vmem:[#allocation5 + $0x4a8] sm:$0xff]
        %v5997 = vld [vmem:[#allocation5 + $0x4b0] sm:$0xff]
        %v5998 = vld [vmem:[#allocation5 + $0x4b8] sm:$0xff]
        %v5999 = vld [vmem:[#allocation5 + $0x4c0] sm:$0xff]
        %v6000 = vld [vmem:[#allocation5 + $0x4c8] sm:$0xff]
        %v6001 = vld [vmem:[#allocation5 + $0x4d0] sm:$0xff]
        %v6002 = vld [vmem:[#allocation5 + $0x4d8] sm:$0xff]
        %v6003 = vld [vmem:[#allocation5 + $0x4e0] sm:$0xff]
        %v6004 = vld [vmem:[#allocation5 + $0x4e8] sm:$0xff]
        %v6005 = vld [vmem:[#allocation5 + $0x4f0] sm:$0xff]
        %v6006 = vld [vmem:[#allocation5 + $0x4f8] sm:$0xff]
        %v6007 = vld [vmem:[#allocation5 + $0x500] sm:$0xff]
        %v6008 = vld [vmem:[#allocation5 + $0x508] sm:$0xff]
        %v6009 = vld [vmem:[#allocation5 + $0x510] sm:$0xff]
        %v6010 = vld [vmem:[#allocation5 + $0x518] sm:$0xff]
        %v6011 = vld [vmem:[#allocation5 + $0x520] sm:$0xff]
        %v6012 = vld [vmem:[#allocation5 + $0x528] sm:$0xff]
        %v6013 = vld [vmem:[#allocation5 + $0x530] sm:$0xff]
        %v6014 = vld [vmem:[#allocation5 + $0x538] sm:$0xff]
        %v6015 = vld [vmem:[#allocation5 + $0x540] sm:$0xff]
        %v6016 = vld [vmem:[#allocation5 + $0x548] sm:$0xff]
        %v6017 = vld [vmem:[#allocation5 + $0x550] sm:$0xff]
        %v6018 = vld [vmem:[#allocation5 + $0x558] sm:$0xff]
        %v6019 = vld [vmem:[#allocation5 + $0x560] sm:$0xff]
        %v6020 = vld [vmem:[#allocation5 + $0x568] sm:$0xff]
        %v6021 = vld [vmem:[#allocation5 + $0x570] sm:$0xff]
        %v6022 = vld [vmem:[#allocation5 + $0x578] sm:$0xff]
        %v6023 = vld [vmem:[#allocation5 + $0x580] sm:$0xff]
        %v6024 = vld [vmem:[#allocation5 + $0x588] sm:$0xff]
        %v6025 = vld [vmem:[#allocation5 + $0x590] sm:$0xff]
        %v6026 = vld [vmem:[#allocation5 + $0x598] sm:$0xff]
        %v6027 = vld [vmem:[#allocation5 + $0x5a0] sm:$0xff]
        %v6028 = vld [vmem:[#allocation5 + $0x5a8] sm:$0xff]
        %v6029 = vld [vmem:[#allocation5 + $0x5b0] sm:$0xff]
        %v6030 = vld [vmem:[#allocation5 + $0x5b8] sm:$0xff]
        %v6031 = vld [vmem:[#allocation5 + $0x5c0] sm:$0xff]
        %v6032 = vld [vmem:[#allocation5 + $0x5c8] sm:$0xff]
        %v6033 = vld [vmem:[#allocation5 + $0x5d0] sm:$0xff]
        %v6034 = vld [vmem:[#allocation5 + $0x5d8] sm:$0xff]
        %v6035 = vld [vmem:[#allocation5 + $0x5e0] sm:$0xff]
        %v6036 = vld [vmem:[#allocation5 + $0x5e8] sm:$0xff]
        %v6037 = vld [vmem:[#allocation5 + $0x5f0] sm:$0xff]
        %v6038 = vld [vmem:[#allocation5 + $0x5f8] sm:$0xff]
        %v6039 = vld [vmem:[#allocation5 + $0x600] sm:$0xff]
        %v6040 = vld [vmem:[#allocation5 + $0x608] sm:$0xff]
        %v6041 = vld [vmem:[#allocation5 + $0x610] sm:$0xff]
        %v6042 = vld [vmem:[#allocation5 + $0x618] sm:$0xff]
        %v6043 = vld [vmem:[#allocation5 + $0x620] sm:$0xff]
        %v6044 = vld [vmem:[#allocation5 + $0x628] sm:$0xff]
        %v6045 = vld [vmem:[#allocation5 + $0x630] sm:$0xff]
        %v6046 = vld [vmem:[#allocation5 + $0x638] sm:$0xff]
        %v6047 = vld [vmem:[#allocation5 + $0x640] sm:$0xff]
        %v6048 = vld [vmem:[#allocation5 + $0x648] sm:$0xff]
        %v6049 = vld [vmem:[#allocation5 + $0x650] sm:$0xff]
        %v6050 = vld [vmem:[#allocation5 + $0x658] sm:$0xff]
        %v6051 = vld [vmem:[#allocation5 + $0x660] sm:$0xff]
        %v6052 = vld [vmem:[#allocation5 + $0x668] sm:$0xff]
        %v6053 = vld [vmem:[#allocation5 + $0x670] sm:$0xff]
        %v6054 = vld [vmem:[#allocation5 + $0x678] sm:$0xff]
        %v6055 = vld [vmem:[#allocation5 + $0x680] sm:$0xff]
        %v6056 = vld [vmem:[#allocation5 + $0x688] sm:$0xff]
        %v6057 = vld [vmem:[#allocation5 + $0x690] sm:$0xff]
        %v6058 = vld [vmem:[#allocation5 + $0x698] sm:$0xff]
        %v6059 = vld [vmem:[#allocation5 + $0x6a0] sm:$0xff]
        %v6060 = vld [vmem:[#allocation5 + $0x6a8] sm:$0xff]
        %v6061 = vld [vmem:[#allocation5 + $0x6b0] sm:$0xff]
        %v6062 = vld [vmem:[#allocation5 + $0x6b8] sm:$0xff]
        %v6063 = vld [vmem:[#allocation5 + $0x6c0] sm:$0xff]
        %v6064 = vld [vmem:[#allocation5 + $0x6c8] sm:$0xff]
        %v6065 = vld [vmem:[#allocation5 + $0x6d0] sm:$0xff]
        %v6066 = vld [vmem:[#allocation5 + $0x6d8] sm:$0xff]
        %v6067 = vld [vmem:[#allocation5 + $0x6e0] sm:$0xff]
        %v6068 = vld [vmem:[#allocation5 + $0x6e8] sm:$0xff]
        %v6069 = vld [vmem:[#allocation5 + $0x6f0] sm:$0xff]
        %v6070 = vld [vmem:[#allocation5 + $0x6f8] sm:$0xff]
        %v6071 = vld [vmem:[#allocation5 + $0x700] sm:$0xff]
        %v6072 = vld [vmem:[#allocation5 + $0x708] sm:$0xff]
        %v6073 = vld [vmem:[#allocation5 + $0x710] sm:$0xff]
        %v6074 = vld [vmem:[#allocation5 + $0x718] sm:$0xff]
        %v6075 = vld [vmem:[#allocation5 + $0x720] sm:$0xff]
        %v6076 = vld [vmem:[#allocation5 + $0x728] sm:$0xff]
        %v6077 = vld [vmem:[#allocation5 + $0x730] sm:$0xff]
        %v6078 = vld [vmem:[#allocation5 + $0x738] sm:$0xff]
        %v6079 = vld [vmem:[#allocation5 + $0x740] sm:$0xff]
        %v6080 = vld [vmem:[#allocation5 + $0x748] sm:$0xff]
        %v6081 = vld [vmem:[#allocation5 + $0x750] sm:$0xff]
        %v6082 = vld [vmem:[#allocation5 + $0x758] sm:$0xff]
        %v6083 = vld [vmem:[#allocation5 + $0x760] sm:$0xff]
        %v6084 = vld [vmem:[#allocation5 + $0x768] sm:$0xff]
        %v6085 = vld [vmem:[#allocation5 + $0x770] sm:$0xff]
        %v6086 = vld [vmem:[#allocation5 + $0x778] sm:$0xff]
        %v6087 = vld [vmem:[#allocation5 + $0x780] sm:$0xff]
        %v6088 = vld [vmem:[#allocation5 + $0x788] sm:$0xff]
        %v6089 = vld [vmem:[#allocation5 + $0x790] sm:$0xff]
        %v6090 = vld [vmem:[#allocation5 + $0x798] sm:$0xff]
        %v6091 = vld [vmem:[#allocation5 + $0x7a0] sm:$0xff]
        %v6092 = vld [vmem:[#allocation5 + $0x7a8] sm:$0xff]
        %v6093 = vld [vmem:[#allocation5 + $0x7b0] sm:$0xff]
        %v6094 = vld [vmem:[#allocation5 + $0x7b8] sm:$0xff]
        %v6095 = vld [vmem:[#allocation5 + $0x7c0] sm:$0xff]
        %v6096 = vld [vmem:[#allocation5 + $0x7c8] sm:$0xff]
        %v6097 = vld [vmem:[#allocation5 + $0x7d0] sm:$0xff]
        %v6098 = vld [vmem:[#allocation5 + $0x7d8] sm:$0xff]
        %v6099 = vld [vmem:[#allocation5 + $0x7e0] sm:$0xff]
        %v6100 = vld [vmem:[#allocation5 + $0x7e8] sm:$0xff]
        %v6101 = vld [vmem:[#allocation5 + $0x7f0] sm:$0xff]
        %v6102 = vld [vmem:[#allocation5 + $0x7f8] sm:$0xff]
        %v6103 = vld [vmem:[#allocation5 + $0x800] sm:$0xff]
        %v6104 = vld [vmem:[#allocation5 + $0x808] sm:$0xff]
        %v6105 = vld [vmem:[#allocation5 + $0x810] sm:$0xff]
        %v6106 = vld [vmem:[#allocation5 + $0x818] sm:$0xff]
        %v6107 = vld [vmem:[#allocation5 + $0x820] sm:$0xff]
        %v6108 = vld [vmem:[#allocation5 + $0x828] sm:$0xff]
        %v6109 = vld [vmem:[#allocation5 + $0x830] sm:$0xff]
        %v6110 = vld [vmem:[#allocation5 + $0x838] sm:$0xff]
        %v6111 = vld [vmem:[#allocation5 + $0x840] sm:$0xff]
        %v6112 = vld [vmem:[#allocation5 + $0x848] sm:$0xff]
        %v6113 = vld [vmem:[#allocation5 + $0x850] sm:$0xff]
        %v6114 = vld [vmem:[#allocation5 + $0x858] sm:$0xff]
        %v6115 = vld [vmem:[#allocation5 + $0x860] sm:$0xff]
        %v6116 = vld [vmem:[#allocation5 + $0x868] sm:$0xff]
        %v6117 = vld [vmem:[#allocation5 + $0x870] sm:$0xff]
        %v6118 = vld [vmem:[#allocation5 + $0x878] sm:$0xff]
        %v6119 = vld [vmem:[#allocation5 + $0x880] sm:$0xff]
        %v6120 = vld [vmem:[#allocation5 + $0x888] sm:$0xff]
        %v6121 = vld [vmem:[#allocation5 + $0x890] sm:$0xff]
        %v6122 = vld [vmem:[#allocation5 + $0x898] sm:$0xff]
        %v6123 = vld [vmem:[#allocation5 + $0x8a0] sm:$0xff]
        %v6124 = vld [vmem:[#allocation5 + $0x8a8] sm:$0xff]
        %v6125 = vld [vmem:[#allocation5 + $0x8b0] sm:$0xff]
        %v6126 = vld [vmem:[#allocation5 + $0x8b8] sm:$0xff]
        %v6127 = vld [vmem:[#allocation5 + $0x8c0] sm:$0xff]
        %v6128 = vld [vmem:[#allocation5 + $0x8c8] sm:$0xff]
        %v6129 = vld [vmem:[#allocation5 + $0x8d0] sm:$0xff]
        %v6130 = vld [vmem:[#allocation5 + $0x8d8] sm:$0xff]
        %v6131 = vld [vmem:[#allocation5 + $0x8e0] sm:$0xff]
        %v6132 = vld [vmem:[#allocation5 + $0x8e8] sm:$0xff]
        %v6133 = vld [vmem:[#allocation5 + $0x8f0] sm:$0xff]
        %v6134 = vld [vmem:[#allocation5 + $0x8f8] sm:$0xff]
        %v6135 = vld [vmem:[#allocation5 + $0x900] sm:$0xff]
        %v6136 = vld [vmem:[#allocation5 + $0x908] sm:$0xff]
        %v6137 = vld [vmem:[#allocation5 + $0x910] sm:$0xff]
        %v6138 = vld [vmem:[#allocation5 + $0x918] sm:$0xff]
        %v6139 = vld [vmem:[#allocation5 + $0x920] sm:$0xff]
        %v6140 = vld [vmem:[#allocation5 + $0x928] sm:$0xff]
        %v6141 = vld [vmem:[#allocation5 + $0x930] sm:$0xff]
        %v6142 = vld [vmem:[#allocation5 + $0x938] sm:$0xff]
        %v6143 = vld [vmem:[#allocation5 + $0x940] sm:$0xff]
        %v6144 = vld [vmem:[#allocation5 + $0x948] sm:$0xff]
        %v6145 = vld [vmem:[#allocation5 + $0x950] sm:$0xff]
        %v6146 = vld [vmem:[#allocation5 + $0x958] sm:$0xff]
        %v6147 = vld [vmem:[#allocation5 + $0x960] sm:$0xff]
        %v6148 = vld [vmem:[#allocation5 + $0x968] sm:$0xff]
        %v6149 = vld [vmem:[#allocation5 + $0x970] sm:$0xff]
        %v6150 = vld [vmem:[#allocation5 + $0x978] sm:$0xff]
        %v6151 = vld [vmem:[#allocation5 + $0x980] sm:$0xff]
        %v6152 = vld [vmem:[#allocation5 + $0x988] sm:$0xff]
        %v6153 = vld [vmem:[#allocation5 + $0x990] sm:$0xff]
        %v6154 = vld [vmem:[#allocation5 + $0x998] sm:$0xff]
        %v6155 = vld [vmem:[#allocation5 + $0x9a0] sm:$0xff]
        %v6156 = vld [vmem:[#allocation5 + $0x9a8] sm:$0xff]
        %v6157 = vld [vmem:[#allocation5 + $0x9b0] sm:$0xff]
        %v6158 = vld [vmem:[#allocation5 + $0x9b8] sm:$0xff]
        %v6159 = vld [vmem:[#allocation5 + $0x9c0] sm:$0xff]
        %v6160 = vld [vmem:[#allocation5 + $0x9c8] sm:$0xff]
        %v6161 = vld [vmem:[#allocation5 + $0x9d0] sm:$0xff]
        %v6162 = vld [vmem:[#allocation5 + $0x9d8] sm:$0xff]
        %v6163 = vld [vmem:[#allocation5 + $0x9e0] sm:$0xff]
        %v6164 = vld [vmem:[#allocation5 + $0x9e8] sm:$0xff]
        %v6165 = vld [vmem:[#allocation5 + $0x9f0] sm:$0xff]
        %v6166 = vld [vmem:[#allocation5 + $0x9f8] sm:$0xff]
        %v6167 = vld [vmem:[#allocation5 + $0xa00] sm:$0xff]
        %v6168 = vld [vmem:[#allocation5 + $0xa08] sm:$0xff]
        %v6169 = vld [vmem:[#allocation5 + $0xa10] sm:$0xff]
        %v6170 = vld [vmem:[#allocation5 + $0xa18] sm:$0xff]
        %v6171 = vld [vmem:[#allocation5 + $0xa20] sm:$0xff]
        %v6172 = vld [vmem:[#allocation5 + $0xa28] sm:$0xff]
        %v6173 = vld [vmem:[#allocation5 + $0xa30] sm:$0xff]
        %v6174 = vld [vmem:[#allocation5 + $0xa38] sm:$0xff]
        %v6175 = vld [vmem:[#allocation5 + $0xa40] sm:$0xff]
        %v6176 = vld [vmem:[#allocation5 + $0xa48] sm:$0xff]
        %v6177 = vld [vmem:[#allocation5 + $0xa50] sm:$0xff]
        %v6178 = vld [vmem:[#allocation5 + $0xa58] sm:$0xff]
        %v6179 = vld [vmem:[#allocation5 + $0xa60] sm:$0xff]
        %v6180 = vld [vmem:[#allocation5 + $0xa68] sm:$0xff]
        %v6181 = vld [vmem:[#allocation5 + $0xa70] sm:$0xff]
        %v6182 = vld [vmem:[#allocation5 + $0xa78] sm:$0xff]
        %v6183 = vld [vmem:[#allocation5 + $0xa80] sm:$0xff]
        %v6184 = vld [vmem:[#allocation5 + $0xa88] sm:$0xff]
        %v6185 = vld [vmem:[#allocation5 + $0xa90] sm:$0xff]
        %v6186 = vld [vmem:[#allocation5 + $0xa98] sm:$0xff]
        %v6187 = vld [vmem:[#allocation5 + $0xaa0] sm:$0xff]
        %v6188 = vld [vmem:[#allocation5 + $0xaa8] sm:$0xff]
        %v6189 = vld [vmem:[#allocation5 + $0xab0] sm:$0xff]
        %v6190 = vld [vmem:[#allocation5 + $0xab8] sm:$0xff]
        %v6191 = vld [vmem:[#allocation5 + $0xac0] sm:$0xff]
        %v6192 = vld [vmem:[#allocation5 + $0xac8] sm:$0xff]
        %v6193 = vld [vmem:[#allocation5 + $0xad0] sm:$0xff]
        %v6194 = vld [vmem:[#allocation5 + $0xad8] sm:$0xff]
        %v6195 = vld [vmem:[#allocation5 + $0xae0] sm:$0xff]
        %v6196 = vld [vmem:[#allocation5 + $0xae8] sm:$0xff]
        %v6197 = vld [vmem:[#allocation5 + $0xaf0] sm:$0xff]
        %v6198 = vld [vmem:[#allocation5 + $0xaf8] sm:$0xff]
        %v6199 = vld [vmem:[#allocation5 + $0xb00] sm:$0xff]
        %v6200 = vld [vmem:[#allocation5 + $0xb08] sm:$0xff]
        %v6201 = vld [vmem:[#allocation5 + $0xb10] sm:$0xff]
        %v6202 = vld [vmem:[#allocation5 + $0xb18] sm:$0xff]
        %v6203 = vld [vmem:[#allocation5 + $0xb20] sm:$0xff]
        %v6204 = vld [vmem:[#allocation5 + $0xb28] sm:$0xff]
        %v6205 = vld [vmem:[#allocation5 + $0xb30] sm:$0xff]
        %v6206 = vld [vmem:[#allocation5 + $0xb38] sm:$0xff]
        %v6207 = vld [vmem:[#allocation5 + $0xb40] sm:$0xff]
        %v6208 = vld [vmem:[#allocation5 + $0xb48] sm:$0xff]
        %v6209 = vld [vmem:[#allocation5 + $0xb50] sm:$0xff]
        %v6210 = vld [vmem:[#allocation5 + $0xb58] sm:$0xff]
        %v6211 = vld [vmem:[#allocation5 + $0xb60] sm:$0xff]
        %v6212 = vld [vmem:[#allocation5 + $0xb68] sm:$0xff]
        %v6213 = vld [vmem:[#allocation5 + $0xb70] sm:$0xff]
        %v6214 = vld [vmem:[#allocation5 + $0xb78] sm:$0xff]
        %v6215 = vld [vmem:[#allocation5 + $0xb80] sm:$0xff]
        %v6216 = vld [vmem:[#allocation5 + $0xb88] sm:$0xff]
        %v6217 = vld [vmem:[#allocation5 + $0xb90] sm:$0xff]
        %v6218 = vld [vmem:[#allocation5 + $0xb98] sm:$0xff]
        %v6219 = vld [vmem:[#allocation5 + $0xba0] sm:$0xff]
        %v6220 = vld [vmem:[#allocation5 + $0xba8] sm:$0xff]
        %v6221 = vld [vmem:[#allocation5 + $0xbb0] sm:$0xff]
        %v6222 = vld [vmem:[#allocation5 + $0xbb8] sm:$0xff]
        %v6223 = vld [vmem:[#allocation5 + $0xbc0] sm:$0xff]
        %v6224 = vld [vmem:[#allocation5 + $0xbc8] sm:$0xff]
        %v6225 = vld [vmem:[#allocation5 + $0xbd0] sm:$0xff]
        %v6226 = vld [vmem:[#allocation5 + $0xbd8] sm:$0xff]
        %v6227 = vld [vmem:[#allocation5 + $0xbe0] sm:$0xff]
        %v6228 = vld [vmem:[#allocation5 + $0xbe8] sm:$0xff]
        %v6229 = vld [vmem:[#allocation5 + $0xbf0] sm:$0xff]
        %v6230 = vld [vmem:[#allocation5 + $0xbf8] sm:$0xff]
        %v6231 = vld [vmem:[#allocation5 + $0xc00] sm:$0xff]
        %v6232 = vld [vmem:[#allocation5 + $0xc08] sm:$0xff]
        %v6233 = vld [vmem:[#allocation5 + $0xc10] sm:$0xff]
        %v6234 = vld [vmem:[#allocation5 + $0xc18] sm:$0xff]
        %v6235 = vld [vmem:[#allocation5 + $0xc20] sm:$0xff]
        %v6236 = vld [vmem:[#allocation5 + $0xc28] sm:$0xff]
        %v6237 = vld [vmem:[#allocation5 + $0xc30] sm:$0xff]
        %v6238 = vld [vmem:[#allocation5 + $0xc38] sm:$0xff]
        %v6239 = vld [vmem:[#allocation5 + $0xc40] sm:$0xff]
        %v6240 = vld [vmem:[#allocation5 + $0xc48] sm:$0xff]
        %v6241 = vld [vmem:[#allocation5 + $0xc50] sm:$0xff]
        %v6242 = vld [vmem:[#allocation5 + $0xc58] sm:$0xff]
        %v6243 = vld [vmem:[#allocation5 + $0xc60] sm:$0xff]
        %v6244 = vld [vmem:[#allocation5 + $0xc68] sm:$0xff]
        %v6245 = vld [vmem:[#allocation5 + $0xc70] sm:$0xff]
        %v6246 = vld [vmem:[#allocation5 + $0xc78] sm:$0xff]
        %v6247 = vld [vmem:[#allocation5 + $0xc80] sm:$0xff]
        %v6248 = vld [vmem:[#allocation5 + $0xc88] sm:$0xff]
        %v6249 = vld [vmem:[#allocation5 + $0xc90] sm:$0xff]
        %v6250 = vld [vmem:[#allocation5 + $0xc98] sm:$0xff]
        %v6251 = vld [vmem:[#allocation5 + $0xca0] sm:$0xff]
        %v6252 = vld [vmem:[#allocation5 + $0xca8] sm:$0xff]
        %v6253 = vld [vmem:[#allocation5 + $0xcb0] sm:$0xff]
        %v6254 = vld [vmem:[#allocation5 + $0xcb8] sm:$0xff]
        %v6255 = vld [vmem:[#allocation5 + $0xcc0] sm:$0xff]
        %v6256 = vld [vmem:[#allocation5 + $0xcc8] sm:$0xff]
        %v6257 = vld [vmem:[#allocation5 + $0xcd0] sm:$0xff]
        %v6258 = vld [vmem:[#allocation5 + $0xcd8] sm:$0xff]
        %v6259 = vld [vmem:[#allocation5 + $0xce0] sm:$0xff]
        %v6260 = vld [vmem:[#allocation5 + $0xce8] sm:$0xff]
        %v6261 = vld [vmem:[#allocation5 + $0xcf0] sm:$0xff]
        %v6262 = vld [vmem:[#allocation5 + $0xcf8] sm:$0xff]
        %v6263 = vld [vmem:[#allocation5 + $0xd00] sm:$0xff]
        %v6264 = vld [vmem:[#allocation5 + $0xd08] sm:$0xff]
        %v6265 = vld [vmem:[#allocation5 + $0xd10] sm:$0xff]
        %v6266 = vld [vmem:[#allocation5 + $0xd18] sm:$0xff]
        %v6267 = vld [vmem:[#allocation5 + $0xd20] sm:$0xff]
        %v6268 = vld [vmem:[#allocation5 + $0xd28] sm:$0xff]
        %v6269 = vld [vmem:[#allocation5 + $0xd30] sm:$0xff]
        %v6270 = vld [vmem:[#allocation5 + $0xd38] sm:$0xff]
        %v6271 = vld [vmem:[#allocation5 + $0xd40] sm:$0xff]
        %v6272 = vld [vmem:[#allocation5 + $0xd48] sm:$0xff]
        %v6273 = vld [vmem:[#allocation5 + $0xd50] sm:$0xff]
        %v6274 = vld [vmem:[#allocation5 + $0xd58] sm:$0xff]
        %v6275 = vld [vmem:[#allocation5 + $0xd60] sm:$0xff]
        %v6276 = vld [vmem:[#allocation5 + $0xd68] sm:$0xff]
        %v6277 = vld [vmem:[#allocation5 + $0xd70] sm:$0xff]
        %v6278 = vld [vmem:[#allocation5 + $0xd78] sm:$0xff]
        %v6279 = vld [vmem:[#allocation5 + $0xd80] sm:$0xff]
        %v6280 = vld [vmem:[#allocation5 + $0xd88] sm:$0xff]
        %v6281 = vld [vmem:[#allocation5 + $0xd90] sm:$0xff]
        %v6282 = vld [vmem:[#allocation5 + $0xd98] sm:$0xff]
        %v6283 = vld [vmem:[#allocation5 + $0xda0] sm:$0xff]
        %v6284 = vld [vmem:[#allocation5 + $0xda8] sm:$0xff]
        %v6285 = vld [vmem:[#allocation5 + $0xdb0] sm:$0xff]
        %v6286 = vld [vmem:[#allocation5 + $0xdb8] sm:$0xff]
        %v6287 = vld [vmem:[#allocation5 + $0xdc0] sm:$0xff]
        %v6288 = vld [vmem:[#allocation5 + $0xdc8] sm:$0xff]
        %v6289 = vld [vmem:[#allocation5 + $0xdd0] sm:$0xff]
        %v6290 = vld [vmem:[#allocation5 + $0xdd8] sm:$0xff]
        %v6291 = vld [vmem:[#allocation5 + $0xde0] sm:$0xff]
        %v6292 = vld [vmem:[#allocation5 + $0xde8] sm:$0xff]
        %v6293 = vld [vmem:[#allocation5 + $0xdf0] sm:$0xff]
        %v6294 = vld [vmem:[#allocation5 + $0xdf8] sm:$0xff]
        %v6295 = vld [vmem:[#allocation5 + $0xe00] sm:$0xff]
        %v6296 = vld [vmem:[#allocation5 + $0xe08] sm:$0xff]
        %v6297 = vld [vmem:[#allocation5 + $0xe10] sm:$0xff]
        %v6298 = vld [vmem:[#allocation5 + $0xe18] sm:$0xff]
        %v6299 = vld [vmem:[#allocation5 + $0xe20] sm:$0xff]
        %v6300 = vld [vmem:[#allocation5 + $0xe28] sm:$0xff]
        %v6301 = vld [vmem:[#allocation5 + $0xe30] sm:$0xff]
        %v6302 = vld [vmem:[#allocation5 + $0xe38] sm:$0xff]
        %v6303 = vld [vmem:[#allocation5 + $0xe40] sm:$0xff]
        %v6304 = vld [vmem:[#allocation5 + $0xe48] sm:$0xff]
        %v6305 = vld [vmem:[#allocation5 + $0xe50] sm:$0xff]
        %v6306 = vld [vmem:[#allocation5 + $0xe58] sm:$0xff]
        %v6307 = vld [vmem:[#allocation5 + $0xe60] sm:$0xff]
        %v6308 = vld [vmem:[#allocation5 + $0xe68] sm:$0xff]
        %v6309 = vld [vmem:[#allocation5 + $0xe70] sm:$0xff]
        %v6310 = vld [vmem:[#allocation5 + $0xe78] sm:$0xff]
        %v6311 = vld [vmem:[#allocation5 + $0xe80] sm:$0xff]
        %v6312 = vld [vmem:[#allocation5 + $0xe88] sm:$0xff]
        %v6313 = vld [vmem:[#allocation5 + $0xe90] sm:$0xff]
        %v6314 = vld [vmem:[#allocation5 + $0xe98] sm:$0xff]
        %v6315 = vld [vmem:[#allocation5 + $0xea0] sm:$0xff]
        %v6316 = vld [vmem:[#allocation5 + $0xea8] sm:$0xff]
        %v6317 = vld [vmem:[#allocation5 + $0xeb0] sm:$0xff]
        %v6318 = vld [vmem:[#allocation5 + $0xeb8] sm:$0xff]
        %v6319 = vld [vmem:[#allocation5 + $0xec0] sm:$0xff]
        %v6320 = vld [vmem:[#allocation5 + $0xec8] sm:$0xff]
        %v6321 = vld [vmem:[#allocation5 + $0xed0] sm:$0xff]
        %v6322 = vld [vmem:[#allocation5 + $0xed8] sm:$0xff]
        %v6323 = vld [vmem:[#allocation5 + $0xee0] sm:$0xff]
        %v6324 = vld [vmem:[#allocation5 + $0xee8] sm:$0xff]
        %v6325 = vld [vmem:[#allocation5 + $0xef0] sm:$0xff]
        %v6326 = vld [vmem:[#allocation5 + $0xef8] sm:$0xff]
        %v6327 = vld [vmem:[#allocation5 + $0xf00] sm:$0xff]
        %v6328 = vld [vmem:[#allocation5 + $0xf08] sm:$0xff]
        %v6329 = vld [vmem:[#allocation5 + $0xf10] sm:$0xff]
        %v6330 = vld [vmem:[#allocation5 + $0xf18] sm:$0xff]
        %v6331 = vld [vmem:[#allocation5 + $0xf20] sm:$0xff]
        %v6332 = vld [vmem:[#allocation5 + $0xf28] sm:$0xff]
        %v6333 = vld [vmem:[#allocation5 + $0xf30] sm:$0xff]
        %v6334 = vld [vmem:[#allocation5 + $0xf38] sm:$0xff]
        %v6335 = vld [vmem:[#allocation5 + $0xf40] sm:$0xff]
        %v6336 = vld [vmem:[#allocation5 + $0xf48] sm:$0xff]
        %v6337 = vld [vmem:[#allocation5 + $0xf50] sm:$0xff]
        %v6338 = vld [vmem:[#allocation5 + $0xf58] sm:$0xff]
        %v6339 = vld [vmem:[#allocation5 + $0xf60] sm:$0xff]
        %v6340 = vld [vmem:[#allocation5 + $0xf68] sm:$0xff]
        %v6341 = vld [vmem:[#allocation5 + $0xf70] sm:$0xff]
        %v6342 = vld [vmem:[#allocation5 + $0xf78] sm:$0xff]
        %v6343 = vld [vmem:[#allocation5 + $0xf80] sm:$0xff]
        %v6344 = vld [vmem:[#allocation5 + $0xf88] sm:$0xff]
        %v6345 = vld [vmem:[#allocation5 + $0xf90] sm:$0xff]
        %v6346 = vld [vmem:[#allocation5 + $0xf98] sm:$0xff]
        %v6347 = vld [vmem:[#allocation5 + $0xfa0] sm:$0xff]
        %v6348 = vld [vmem:[#allocation5 + $0xfa8] sm:$0xff]
        %v6349 = vld [vmem:[#allocation5 + $0xfb0] sm:$0xff]
        %v6350 = vld [vmem:[#allocation5 + $0xfb8] sm:$0xff]
        %v6351 = vld [vmem:[#allocation5 + $0xfc0] sm:$0xff]
        %v6352 = vld [vmem:[#allocation5 + $0xfc8] sm:$0xff]
        %v6353 = vld [vmem:[#allocation5 + $0xfd0] sm:$0xff]
        %v6354 = vld [vmem:[#allocation5 + $0xfd8] sm:$0xff]
        %v6355 = vld [vmem:[#allocation5 + $0xfe0] sm:$0xff]
        %v6356 = vld [vmem:[#allocation5 + $0xfe8] sm:$0xff]
        %v6357 = vld [vmem:[#allocation5 + $0xff0] sm:$0xff]
        %v6358 = vld [vmem:[#allocation5 + $0xff8] sm:$0xff]
        %v6359 = vld [vmem:[#allocation5 + $0x1000] sm:$0xff]
        %v6360 = vld [vmem:[#allocation5 + $0x1008] sm:$0xff]
        %v6361 = vld [vmem:[#allocation5 + $0x1010] sm:$0xff]
        %v6362 = vld [vmem:[#allocation5 + $0x1018] sm:$0xff]
        %v6363 = vld [vmem:[#allocation5 + $0x1020] sm:$0xff]
        %v6364 = vld [vmem:[#allocation5 + $0x1028] sm:$0xff]
        %v6365 = vld [vmem:[#allocation5 + $0x1030] sm:$0xff]
        %v6366 = vld [vmem:[#allocation5 + $0x1038] sm:$0xff]
        %v6367 = vld [vmem:[#allocation5 + $0x1040] sm:$0xff]
        %v6368 = vld [vmem:[#allocation5 + $0x1048] sm:$0xff]
        %v6369 = vld [vmem:[#allocation5 + $0x1050] sm:$0xff]
        %v6370 = vld [vmem:[#allocation5 + $0x1058] sm:$0xff]
        %v6371 = vld [vmem:[#allocation5 + $0x1060] sm:$0xff]
        %v6372 = vld [vmem:[#allocation5 + $0x1068] sm:$0xff]
        %v6373 = vld [vmem:[#allocation5 + $0x1070] sm:$0xff]
        %v6374 = vld [vmem:[#allocation5 + $0x1078] sm:$0xff]
        %v6375 = vld [vmem:[#allocation5 + $0x1080] sm:$0xff]
        %v6376 = vld [vmem:[#allocation5 + $0x1088] sm:$0xff]
        %v6377 = vld [vmem:[#allocation5 + $0x1090] sm:$0xff]
        %v6378 = vld [vmem:[#allocation5 + $0x1098] sm:$0xff]
        %v6379 = vld [vmem:[#allocation5 + $0x10a0] sm:$0xff]
        %v6380 = vld [vmem:[#allocation5 + $0x10a8] sm:$0xff]
        %v6381 = vld [vmem:[#allocation5 + $0x10b0] sm:$0xff]
        %v6382 = vld [vmem:[#allocation5 + $0x10b8] sm:$0xff]
        %v6383 = vld [vmem:[#allocation5 + $0x10c0] sm:$0xff]
        %v6384 = vld [vmem:[#allocation5 + $0x10c8] sm:$0xff]
        %v6385 = vld [vmem:[#allocation5 + $0x10d0] sm:$0xff]
        %v6386 = vld [vmem:[#allocation5 + $0x10d8] sm:$0xff]
        %v6387 = vld [vmem:[#allocation5 + $0x10e0] sm:$0xff]
        %v6388 = vld [vmem:[#allocation5 + $0x10e8] sm:$0xff]
        %v6389 = vld [vmem:[#allocation5 + $0x10f0] sm:$0xff]
        %v6390 = vld [vmem:[#allocation5 + $0x10f8] sm:$0xff]
        %v6391 = vld [vmem:[#allocation5 + $0x1100] sm:$0xff]
        %v6392 = vld [vmem:[#allocation5 + $0x1108] sm:$0xff]
        %v6393 = vld [vmem:[#allocation5 + $0x1110] sm:$0xff]
        %v6394 = vld [vmem:[#allocation5 + $0x1118] sm:$0xff]
        %v6395 = vld [vmem:[#allocation5 + $0x1120] sm:$0xff]
        %v6396 = vld [vmem:[#allocation5 + $0x1128] sm:$0xff]
        %v6397 = vld [vmem:[#allocation5 + $0x1130] sm:$0xff]
        %v6398 = vld [vmem:[#allocation5 + $0x1138] sm:$0xff]
        %v6399 = vld [vmem:[#allocation5 + $0x1140] sm:$0xff]
        %v6400 = vld [vmem:[#allocation5 + $0x1148] sm:$0xff]
        %v6401 = vld [vmem:[#allocation5 + $0x1150] sm:$0xff]
        %v6402 = vld [vmem:[#allocation5 + $0x1158] sm:$0xff]
        %v6403 = vld [vmem:[#allocation5 + $0x1160] sm:$0xff]
        %v6404 = vld [vmem:[#allocation5 + $0x1168] sm:$0xff]
        %v6405 = vld [vmem:[#allocation5 + $0x1170] sm:$0xff]
        %v6406 = vld [vmem:[#allocation5 + $0x1178] sm:$0xff]
        %v6407 = vld [vmem:[#allocation5 + $0x1180] sm:$0xff]
        %v6408 = vld [vmem:[#allocation5 + $0x1188] sm:$0xff]
        %v6409 = vld [vmem:[#allocation5 + $0x1190] sm:$0xff]
        %v6410 = vld [vmem:[#allocation5 + $0x1198] sm:$0xff]
        %v6411 = vld [vmem:[#allocation5 + $0x11a0] sm:$0xff]
        %v6412 = vld [vmem:[#allocation5 + $0x11a8] sm:$0xff]
        %v6413 = vld [vmem:[#allocation5 + $0x11b0] sm:$0xff]
        %v6414 = vld [vmem:[#allocation5 + $0x11b8] sm:$0xff]
        %v6415 = vld [vmem:[#allocation5 + $0x11c0] sm:$0xff]
        %v6416 = vld [vmem:[#allocation5 + $0x11c8] sm:$0xff]
        %v6417 = vld [vmem:[#allocation5 + $0x11d0] sm:$0xff]
        %v6418 = vld [vmem:[#allocation5 + $0x11d8] sm:$0xff]
        %v6419 = vld [vmem:[#allocation5 + $0x11e0] sm:$0xff]
        %v6420 = vld [vmem:[#allocation5 + $0x11e8] sm:$0xff]
        %v6421 = vld [vmem:[#allocation5 + $0x11f0] sm:$0xff]
        %v6422 = vld [vmem:[#allocation5 + $0x11f8] sm:$0xff]
        %v6423 = vld [vmem:[#allocation5 + $0x1200] sm:$0xff]
        %v6424 = vld [vmem:[#allocation5 + $0x1208] sm:$0xff]
        %v6425 = vld [vmem:[#allocation5 + $0x1210] sm:$0xff]
        %v6426 = vld [vmem:[#allocation5 + $0x1218] sm:$0xff]
        %v6427 = vld [vmem:[#allocation5 + $0x1220] sm:$0xff]
        %v6428 = vld [vmem:[#allocation5 + $0x1228] sm:$0xff]
        %v6429 = vld [vmem:[#allocation5 + $0x1230] sm:$0xff]
        %v6430 = vld [vmem:[#allocation5 + $0x1238] sm:$0xff]
        %v6431 = vld [vmem:[#allocation5 + $0x1240] sm:$0xff]
        %v6432 = vld [vmem:[#allocation5 + $0x1248] sm:$0xff]
        %v6433 = vld [vmem:[#allocation5 + $0x1250] sm:$0xff]
        %v6434 = vld [vmem:[#allocation5 + $0x1258] sm:$0xff]
        %v6435 = vld [vmem:[#allocation5 + $0x1260] sm:$0xff]
        %v6436 = vld [vmem:[#allocation5 + $0x1268] sm:$0xff]
        %v6437 = vld [vmem:[#allocation5 + $0x1270] sm:$0xff]
        %v6438 = vld [vmem:[#allocation5 + $0x1278] sm:$0xff]
        %v6439 = vld [vmem:[#allocation5 + $0x1280] sm:$0xff]
        %v6440 = vld [vmem:[#allocation5 + $0x1288] sm:$0xff]
        %v6441 = vld [vmem:[#allocation5 + $0x1290] sm:$0xff]
        %v6442 = vld [vmem:[#allocation5 + $0x1298] sm:$0xff]
        %v6443 = vld [vmem:[#allocation5 + $0x12a0] sm:$0xff]
        %v6444 = vld [vmem:[#allocation5 + $0x12a8] sm:$0xff]
        %v6445 = vld [vmem:[#allocation5 + $0x12b0] sm:$0xff]
        %v6446 = vld [vmem:[#allocation5 + $0x12b8] sm:$0xff]
        %v6447 = vld [vmem:[#allocation5 + $0x12c0] sm:$0xff]
        %v6448 = vld [vmem:[#allocation5 + $0x12c8] sm:$0xff]
        %v6449 = vld [vmem:[#allocation5 + $0x12d0] sm:$0xff]
        %v6450 = vld [vmem:[#allocation5 + $0x12d8] sm:$0xff]
        %v6451 = vld [vmem:[#allocation5 + $0x12e0] sm:$0xff]
        %v6452 = vld [vmem:[#allocation5 + $0x12e8] sm:$0xff]
        %v6453 = vld [vmem:[#allocation5 + $0x12f0] sm:$0xff]
        %v6454 = vld [vmem:[#allocation5 + $0x12f8] sm:$0xff]
        %v6455 = vld [vmem:[#allocation5 + $0x1300] sm:$0xff]
        %v6456 = vld [vmem:[#allocation5 + $0x1308] sm:$0xff]
        %v6457 = vld [vmem:[#allocation5 + $0x1310] sm:$0xff]
        %v6458 = vld [vmem:[#allocation5 + $0x1318] sm:$0xff]
        %v6459 = vld [vmem:[#allocation5 + $0x1320] sm:$0xff]
        %v6460 = vld [vmem:[#allocation5 + $0x1328] sm:$0xff]
        %v6461 = vld [vmem:[#allocation5 + $0x1330] sm:$0xff]
        %v6462 = vld [vmem:[#allocation5 + $0x1338] sm:$0xff]
        %v6463 = vld [vmem:[#allocation5 + $0x1340] sm:$0xff]
        %v6464 = vld [vmem:[#allocation5 + $0x1348] sm:$0xff]
        %v6465 = vld [vmem:[#allocation5 + $0x1350] sm:$0xff]
        %v6466 = vld [vmem:[#allocation5 + $0x1358] sm:$0xff]
        %v6467 = vld [vmem:[#allocation5 + $0x1360] sm:$0xff]
        %v6468 = vld [vmem:[#allocation5 + $0x1368] sm:$0xff]
        %v6469 = vld [vmem:[#allocation5 + $0x1370] sm:$0xff]
        %v6470 = vld [vmem:[#allocation5 + $0x1378] sm:$0xff]
        %v6471 = vld [vmem:[#allocation5 + $0x1380] sm:$0xff]
        %v6472 = vld [vmem:[#allocation5 + $0x1388] sm:$0xff]
        %v6473 = vld [vmem:[#allocation5 + $0x1390] sm:$0xff]
        %v6474 = vld [vmem:[#allocation5 + $0x1398] sm:$0xff]
        %v6475 = vld [vmem:[#allocation5 + $0x13a0] sm:$0xff]
        %v6476 = vld [vmem:[#allocation5 + $0x13a8] sm:$0xff]
        %v6477 = vld [vmem:[#allocation5 + $0x13b0] sm:$0xff]
        %v6478 = vld [vmem:[#allocation5 + $0x13b8] sm:$0xff]
        %v6479 = vld [vmem:[#allocation5 + $0x13c0] sm:$0xff]
        %v6480 = vld [vmem:[#allocation5 + $0x13c8] sm:$0xff]
        %v6481 = vld [vmem:[#allocation5 + $0x13d0] sm:$0xff]
        %v6482 = vld [vmem:[#allocation5 + $0x13d8] sm:$0xff]
        %v6483 = vld [vmem:[#allocation5 + $0x13e0] sm:$0xff]
        %v6484 = vld [vmem:[#allocation5 + $0x13e8] sm:$0xff]
        %v6485 = vld [vmem:[#allocation5 + $0x13f0] sm:$0xff]
        %v6486 = vld [vmem:[#allocation5 + $0x13f8] sm:$0xff]
        %v6487 = vld [vmem:[#allocation5 + $0x1400] sm:$0xff]
        %v6488 = vld [vmem:[#allocation5 + $0x1408] sm:$0xff]
        %v6489 = vld [vmem:[#allocation5 + $0x1410] sm:$0xff]
        %v6490 = vld [vmem:[#allocation5 + $0x1418] sm:$0xff]
        %v6491 = vld [vmem:[#allocation5 + $0x1420] sm:$0xff]
        %v6492 = vld [vmem:[#allocation5 + $0x1428] sm:$0xff]
        %v6493 = vld [vmem:[#allocation5 + $0x1430] sm:$0xff]
        %v6494 = vld [vmem:[#allocation5 + $0x1438] sm:$0xff]
        %v6495 = vld [vmem:[#allocation5 + $0x1440] sm:$0xff]
        %v6496 = vld [vmem:[#allocation5 + $0x1448] sm:$0xff]
        %v6497 = vld [vmem:[#allocation5 + $0x1450] sm:$0xff]
        %v6498 = vld [vmem:[#allocation5 + $0x1458] sm:$0xff]
        %v6499 = vld [vmem:[#allocation5 + $0x1460] sm:$0xff]
        %v6500 = vld [vmem:[#allocation5 + $0x1468] sm:$0xff]
        %v6501 = vld [vmem:[#allocation5 + $0x1470] sm:$0xff]
        %v6502 = vld [vmem:[#allocation5 + $0x1478] sm:$0xff]
        %v6503 = vld [vmem:[#allocation5 + $0x1480] sm:$0xff]
        %v6504 = vld [vmem:[#allocation5 + $0x1488] sm:$0xff]
        %v6505 = vld [vmem:[#allocation5 + $0x1490] sm:$0xff]
        %v6506 = vld [vmem:[#allocation5 + $0x1498] sm:$0xff]
        %v6507 = vld [vmem:[#allocation5 + $0x14a0] sm:$0xff]
        %v6508 = vld [vmem:[#allocation5 + $0x14a8] sm:$0xff]
        %v6509 = vld [vmem:[#allocation5 + $0x14b0] sm:$0xff]
        %v6510 = vld [vmem:[#allocation5 + $0x14b8] sm:$0xff]
        %v6511 = vld [vmem:[#allocation5 + $0x14c0] sm:$0xff]
        %v6512 = vld [vmem:[#allocation5 + $0x14c8] sm:$0xff]
        %v6513 = vld [vmem:[#allocation5 + $0x14d0] sm:$0xff]
        %v6514 = vld [vmem:[#allocation5 + $0x14d8] sm:$0xff]
        %v6515 = vld [vmem:[#allocation5 + $0x14e0] sm:$0xff]
        %v6516 = vld [vmem:[#allocation5 + $0x14e8] sm:$0xff]
        %v6517 = vld [vmem:[#allocation5 + $0x14f0] sm:$0xff]
        %v6518 = vld [vmem:[#allocation5 + $0x14f8] sm:$0xff]
        %v6519 = vld [vmem:[#allocation5 + $0x1500] sm:$0xff]
        %v6520 = vld [vmem:[#allocation5 + $0x1508] sm:$0xff]
        %v6521 = vld [vmem:[#allocation5 + $0x1510] sm:$0xff]
        %v6522 = vld [vmem:[#allocation5 + $0x1518] sm:$0xff]
        %v6523 = vld [vmem:[#allocation5 + $0x1520] sm:$0xff]
        %v6524 = vld [vmem:[#allocation5 + $0x1528] sm:$0xff]
        %v6525 = vld [vmem:[#allocation5 + $0x1530] sm:$0xff]
        %v6526 = vld [vmem:[#allocation5 + $0x1538] sm:$0xff]
        %v6527 = vld [vmem:[#allocation5 + $0x1540] sm:$0xff]
        %v6528 = vld [vmem:[#allocation5 + $0x1548] sm:$0xff]
        %v6529 = vld [vmem:[#allocation5 + $0x1550] sm:$0xff]
        %v6530 = vld [vmem:[#allocation5 + $0x1558] sm:$0xff]
        %v6531 = vld [vmem:[#allocation5 + $0x1560] sm:$0xff]
        %v6532 = vld [vmem:[#allocation5 + $0x1568] sm:$0xff]
        %v6533 = vld [vmem:[#allocation5 + $0x1570] sm:$0xff]
        %v6534 = vld [vmem:[#allocation5 + $0x1578] sm:$0xff]
        %v6535 = vld [vmem:[#allocation5 + $0x1580] sm:$0xff]
        %v6536 = vld [vmem:[#allocation5 + $0x1588] sm:$0xff]
        %v6537 = vld [vmem:[#allocation5 + $0x1590] sm:$0xff]
        %v6538 = vld [vmem:[#allocation5 + $0x1598] sm:$0xff]
        %v6539 = vld [vmem:[#allocation5 + $0x15a0] sm:$0xff]
        %v6540 = vld [vmem:[#allocation5 + $0x15a8] sm:$0xff]
        %v6541 = vld [vmem:[#allocation5 + $0x15b0] sm:$0xff]
        %v6542 = vld [vmem:[#allocation5 + $0x15b8] sm:$0xff]
        %v6543 = vld [vmem:[#allocation5 + $0x15c0] sm:$0xff]
        %v6544 = vld [vmem:[#allocation5 + $0x15c8] sm:$0xff]
        %v6545 = vld [vmem:[#allocation5 + $0x15d0] sm:$0xff]
        %v6546 = vld [vmem:[#allocation5 + $0x15d8] sm:$0xff]
        %v6547 = vld [vmem:[#allocation5 + $0x15e0] sm:$0xff]
        %v6548 = vld [vmem:[#allocation5 + $0x15e8] sm:$0xff]
        %v6549 = vld [vmem:[#allocation5 + $0x15f0] sm:$0xff]
        %v6550 = vld [vmem:[#allocation5 + $0x15f8] sm:$0xff]
        %v6551 = vld [vmem:[#allocation5 + $0x1600] sm:$0xff]
        %v6552 = vld [vmem:[#allocation5 + $0x1608] sm:$0xff]
        %v6553 = vld [vmem:[#allocation5 + $0x1610] sm:$0xff]
        %v6554 = vld [vmem:[#allocation5 + $0x1618] sm:$0xff]
        %v6555 = vld [vmem:[#allocation5 + $0x1620] sm:$0xff]
        %v6556 = vld [vmem:[#allocation5 + $0x1628] sm:$0xff]
        %v6557 = vld [vmem:[#allocation5 + $0x1630] sm:$0xff]
        %v6558 = vld [vmem:[#allocation5 + $0x1638] sm:$0xff]
        %v6559 = vld [vmem:[#allocation5 + $0x1640] sm:$0xff]
        %v6560 = vld [vmem:[#allocation5 + $0x1648] sm:$0xff]
        %v6561 = vld [vmem:[#allocation5 + $0x1650] sm:$0xff]
        %v6562 = vld [vmem:[#allocation5 + $0x1658] sm:$0xff]
        %v6563 = vld [vmem:[#allocation5 + $0x1660] sm:$0xff]
        %v6564 = vld [vmem:[#allocation5 + $0x1668] sm:$0xff]
        %v6565 = vld [vmem:[#allocation5 + $0x1670] sm:$0xff]
        %v6566 = vld [vmem:[#allocation5 + $0x1678] sm:$0xff]
        %v6567 = vld [vmem:[#allocation5 + $0x1680] sm:$0xff]
        %v6568 = vld [vmem:[#allocation5 + $0x1688] sm:$0xff]
        %v6569 = vld [vmem:[#allocation5 + $0x1690] sm:$0xff]
        %v6570 = vld [vmem:[#allocation5 + $0x1698] sm:$0xff]
        %v6571 = vld [vmem:[#allocation5 + $0x16a0] sm:$0xff]
        %v6572 = vld [vmem:[#allocation5 + $0x16a8] sm:$0xff]
        %v6573 = vld [vmem:[#allocation5 + $0x16b0] sm:$0xff]
        %v6574 = vld [vmem:[#allocation5 + $0x16b8] sm:$0xff]
        %v6575 = vld [vmem:[#allocation5 + $0x16c0] sm:$0xff]
        %v6576 = vld [vmem:[#allocation5 + $0x16c8] sm:$0xff]
        %v6577 = vld [vmem:[#allocation5 + $0x16d0] sm:$0xff]
        %v6578 = vld [vmem:[#allocation5 + $0x16d8] sm:$0xff]
        %v6579 = vld [vmem:[#allocation5 + $0x16e0] sm:$0xff]
        %v6580 = vld [vmem:[#allocation5 + $0x16e8] sm:$0xff]
        %v6581 = vld [vmem:[#allocation5 + $0x16f0] sm:$0xff]
        %v6582 = vld [vmem:[#allocation5 + $0x16f8] sm:$0xff]
        %v6583 = vld [vmem:[#allocation5 + $0x1700] sm:$0xff]
        %v6584 = vld [vmem:[#allocation5 + $0x1708] sm:$0xff]
        %v6585 = vld [vmem:[#allocation5 + $0x1710] sm:$0xff]
        %v6586 = vld [vmem:[#allocation5 + $0x1718] sm:$0xff]
        %v6587 = vld [vmem:[#allocation5 + $0x1720] sm:$0xff]
        %v6588 = vld [vmem:[#allocation5 + $0x1728] sm:$0xff]
        %v6589 = vld [vmem:[#allocation5 + $0x1730] sm:$0xff]
        %v6590 = vld [vmem:[#allocation5 + $0x1738] sm:$0xff]
        %v6591 = vld [vmem:[#allocation5 + $0x1740] sm:$0xff]
        %v6592 = vld [vmem:[#allocation5 + $0x1748] sm:$0xff]
        %v6593 = vld [vmem:[#allocation5 + $0x1750] sm:$0xff]
        %v6594 = vld [vmem:[#allocation5 + $0x1758] sm:$0xff]
        %v6595 = vld [vmem:[#allocation5 + $0x1760] sm:$0xff]
        %v6596 = vld [vmem:[#allocation5 + $0x1768] sm:$0xff]
        %v6597 = vld [vmem:[#allocation5 + $0x1770] sm:$0xff]
        %v6598 = vld [vmem:[#allocation5 + $0x1778] sm:$0xff]
        %v6599 = vld [vmem:[#allocation5 + $0x1780] sm:$0xff]
        %v6600 = vld [vmem:[#allocation5 + $0x1788] sm:$0xff]
        %v6601 = vld [vmem:[#allocation5 + $0x1790] sm:$0xff]
        %v6602 = vld [vmem:[#allocation5 + $0x1798] sm:$0xff]
        %v6603 = vld [vmem:[#allocation5 + $0x17a0] sm:$0xff]
        %v6604 = vld [vmem:[#allocation5 + $0x17a8] sm:$0xff]
        %v6605 = vld [vmem:[#allocation5 + $0x17b0] sm:$0xff]
        %v6606 = vld [vmem:[#allocation5 + $0x17b8] sm:$0xff]
        %v6607 = vld [vmem:[#allocation5 + $0x17c0] sm:$0xff]
        %v6608 = vld [vmem:[#allocation5 + $0x17c8] sm:$0xff]
        %v6609 = vld [vmem:[#allocation5 + $0x17d0] sm:$0xff]
        %v6610 = vld [vmem:[#allocation5 + $0x17d8] sm:$0xff]
        %v6611 = vld [vmem:[#allocation5 + $0x17e0] sm:$0xff]
        %v6612 = vld [vmem:[#allocation5 + $0x17e8] sm:$0xff]
        %v6613 = vld [vmem:[#allocation5 + $0x17f0] sm:$0xff]
        %v6614 = vld [vmem:[#allocation5 + $0x17f8] sm:$0xff]
        %v7383 = vunpack.c.l.b16 %v5847
        %v7384 = vunpack.c.h.b16 %v5847
        %v7385 = vunpack.c.l.b16 %v5848
        %v7386 = vunpack.c.h.b16 %v5848
        %v7387 = vunpack.c.l.b16 %v5849
        %v7388 = vunpack.c.h.b16 %v5849
        %v7389 = vunpack.c.l.b16 %v5850
        %v7390 = vunpack.c.h.b16 %v5850
        %v7391 = vunpack.c.l.b16 %v5851
        %v7392 = vunpack.c.h.b16 %v5851
        %v7393 = vunpack.c.l.b16 %v5852
        %v7394 = vunpack.c.h.b16 %v5852
        %v7395 = vunpack.c.l.b16 %v5853
        %v7396 = vunpack.c.h.b16 %v5853
        %v7397 = vunpack.c.l.b16 %v5854
        %v7398 = vunpack.c.h.b16 %v5854
        %v7399 = vunpack.c.l.b16 %v5855
        %v7400 = vunpack.c.h.b16 %v5855
        %v7401 = vunpack.c.l.b16 %v5856
        %v7402 = vunpack.c.h.b16 %v5856
        %v7403 = vunpack.c.l.b16 %v5857
        %v7404 = vunpack.c.h.b16 %v5857
        %v7405 = vunpack.c.l.b16 %v5858
        %v7406 = vunpack.c.h.b16 %v5858
        %v7407 = vunpack.c.l.b16 %v5859
        %v7408 = vunpack.c.h.b16 %v5859
        %v7409 = vunpack.c.l.b16 %v5860
        %v7410 = vunpack.c.h.b16 %v5860
        %v7411 = vunpack.c.l.b16 %v5861
        %v7412 = vunpack.c.h.b16 %v5861
        %v7413 = vunpack.c.l.b16 %v5862
        %v7414 = vunpack.c.h.b16 %v5862
        %v7415 = vunpack.c.l.b16 %v5863
        %v7416 = vunpack.c.h.b16 %v5863
        %v7417 = vunpack.c.l.b16 %v5864
        %v7418 = vunpack.c.h.b16 %v5864
        %v7419 = vunpack.c.l.b16 %v5865
        %v7420 = vunpack.c.h.b16 %v5865
        %v7421 = vunpack.c.l.b16 %v5866
        %v7422 = vunpack.c.h.b16 %v5866
        %v7423 = vunpack.c.l.b16 %v5867
        %v7424 = vunpack.c.h.b16 %v5867
        %v7425 = vunpack.c.l.b16 %v5868
        %v7426 = vunpack.c.h.b16 %v5868
        %v7427 = vunpack.c.l.b16 %v5869
        %v7428 = vunpack.c.h.b16 %v5869
        %v7429 = vunpack.c.l.b16 %v5870
        %v7430 = vunpack.c.h.b16 %v5870
        %v7431 = vunpack.c.l.b16 %v5871
        %v7432 = vunpack.c.h.b16 %v5871
        %v7433 = vunpack.c.l.b16 %v5872
        %v7434 = vunpack.c.h.b16 %v5872
        %v7435 = vunpack.c.l.b16 %v5873
        %v7436 = vunpack.c.h.b16 %v5873
        %v7437 = vunpack.c.l.b16 %v5874
        %v7438 = vunpack.c.h.b16 %v5874
        %v7439 = vunpack.c.l.b16 %v5875
        %v7440 = vunpack.c.h.b16 %v5875
        %v7441 = vunpack.c.l.b16 %v5876
        %v7442 = vunpack.c.h.b16 %v5876
        %v7443 = vunpack.c.l.b16 %v5877
        %v7444 = vunpack.c.h.b16 %v5877
        %v7445 = vunpack.c.l.b16 %v5878
        %v7446 = vunpack.c.h.b16 %v5878
        %v7447 = vunpack.c.l.b16 %v5879
        %v7448 = vunpack.c.h.b16 %v5879
        %v7449 = vunpack.c.l.b16 %v5880
        %v7450 = vunpack.c.h.b16 %v5880
        %v7451 = vunpack.c.l.b16 %v5881
        %v7452 = vunpack.c.h.b16 %v5881
        %v7453 = vunpack.c.l.b16 %v5882
        %v7454 = vunpack.c.h.b16 %v5882
        %v7455 = vunpack.c.l.b16 %v5883
        %v7456 = vunpack.c.h.b16 %v5883
        %v7457 = vunpack.c.l.b16 %v5884
        %v7458 = vunpack.c.h.b16 %v5884
        %v7459 = vunpack.c.l.b16 %v5885
        %v7460 = vunpack.c.h.b16 %v5885
        %v7461 = vunpack.c.l.b16 %v5886
        %v7462 = vunpack.c.h.b16 %v5886
        %v7463 = vunpack.c.l.b16 %v5887
        %v7464 = vunpack.c.h.b16 %v5887
        %v7465 = vunpack.c.l.b16 %v5888
        %v7466 = vunpack.c.h.b16 %v5888
        %v7467 = vunpack.c.l.b16 %v5889
        %v7468 = vunpack.c.h.b16 %v5889
        %v7469 = vunpack.c.l.b16 %v5890
        %v7470 = vunpack.c.h.b16 %v5890
        %v7471 = vunpack.c.l.b16 %v5891
        %v7472 = vunpack.c.h.b16 %v5891
        %v7473 = vunpack.c.l.b16 %v5892
        %v7474 = vunpack.c.h.b16 %v5892
        %v7475 = vunpack.c.l.b16 %v5893
        %v7476 = vunpack.c.h.b16 %v5893
        %v7477 = vunpack.c.l.b16 %v5894
        %v7478 = vunpack.c.h.b16 %v5894
        %v7479 = vunpack.c.l.b16 %v5895
        %v7480 = vunpack.c.h.b16 %v5895
        %v7481 = vunpack.c.l.b16 %v5896
        %v7482 = vunpack.c.h.b16 %v5896
        %v7483 = vunpack.c.l.b16 %v5897
        %v7484 = vunpack.c.h.b16 %v5897
        %v7485 = vunpack.c.l.b16 %v5898
        %v7486 = vunpack.c.h.b16 %v5898
        %v7487 = vunpack.c.l.b16 %v5899
        %v7488 = vunpack.c.h.b16 %v5899
        %v7489 = vunpack.c.l.b16 %v5900
        %v7490 = vunpack.c.h.b16 %v5900
        %v7491 = vunpack.c.l.b16 %v5901
        %v7492 = vunpack.c.h.b16 %v5901
        %v7493 = vunpack.c.l.b16 %v5902
        %v7494 = vunpack.c.h.b16 %v5902
        %v7495 = vunpack.c.l.b16 %v5903
        %v7496 = vunpack.c.h.b16 %v5903
        %v7497 = vunpack.c.l.b16 %v5904
        %v7498 = vunpack.c.h.b16 %v5904
        %v7499 = vunpack.c.l.b16 %v5905
        %v7500 = vunpack.c.h.b16 %v5905
        %v7501 = vunpack.c.l.b16 %v5906
        %v7502 = vunpack.c.h.b16 %v5906
        %v7503 = vunpack.c.l.b16 %v5907
        %v7504 = vunpack.c.h.b16 %v5907
        %v7505 = vunpack.c.l.b16 %v5908
        %v7506 = vunpack.c.h.b16 %v5908
        %v7507 = vunpack.c.l.b16 %v5909
        %v7508 = vunpack.c.h.b16 %v5909
        %v7509 = vunpack.c.l.b16 %v5910
        %v7510 = vunpack.c.h.b16 %v5910
        %v7511 = vunpack.c.l.b16 %v5911
        %v7512 = vunpack.c.h.b16 %v5911
        %v7513 = vunpack.c.l.b16 %v5912
        %v7514 = vunpack.c.h.b16 %v5912
        %v7515 = vunpack.c.l.b16 %v5913
        %v7516 = vunpack.c.h.b16 %v5913
        %v7517 = vunpack.c.l.b16 %v5914
        %v7518 = vunpack.c.h.b16 %v5914
        %v7519 = vunpack.c.l.b16 %v5915
        %v7520 = vunpack.c.h.b16 %v5915
        %v7521 = vunpack.c.l.b16 %v5916
        %v7522 = vunpack.c.h.b16 %v5916
        %v7523 = vunpack.c.l.b16 %v5917
        %v7524 = vunpack.c.h.b16 %v5917
        %v7525 = vunpack.c.l.b16 %v5918
        %v7526 = vunpack.c.h.b16 %v5918
        %v7527 = vunpack.c.l.b16 %v5919
        %v7528 = vunpack.c.h.b16 %v5919
        %v7529 = vunpack.c.l.b16 %v5920
        %v7530 = vunpack.c.h.b16 %v5920
        %v7531 = vunpack.c.l.b16 %v5921
        %v7532 = vunpack.c.h.b16 %v5921
        %v7533 = vunpack.c.l.b16 %v5922
        %v7534 = vunpack.c.h.b16 %v5922
        %v7535 = vunpack.c.l.b16 %v5923
        %v7536 = vunpack.c.h.b16 %v5923
        %v7537 = vunpack.c.l.b16 %v5924
        %v7538 = vunpack.c.h.b16 %v5924
        %v7539 = vunpack.c.l.b16 %v5925
        %v7540 = vunpack.c.h.b16 %v5925
        %v7541 = vunpack.c.l.b16 %v5926
        %v7542 = vunpack.c.h.b16 %v5926
        %v7543 = vunpack.c.l.b16 %v5927
        %v7544 = vunpack.c.h.b16 %v5927
        %v7545 = vunpack.c.l.b16 %v5928
        %v7546 = vunpack.c.h.b16 %v5928
        %v7547 = vunpack.c.l.b16 %v5929
        %v7548 = vunpack.c.h.b16 %v5929
        %v7549 = vunpack.c.l.b16 %v5930
        %v7550 = vunpack.c.h.b16 %v5930
        %v7551 = vunpack.c.l.b16 %v5931
        %v7552 = vunpack.c.h.b16 %v5931
        %v7553 = vunpack.c.l.b16 %v5932
        %v7554 = vunpack.c.h.b16 %v5932
        %v7555 = vunpack.c.l.b16 %v5933
        %v7556 = vunpack.c.h.b16 %v5933
        %v7557 = vunpack.c.l.b16 %v5934
        %v7558 = vunpack.c.h.b16 %v5934
        %v7559 = vunpack.c.l.b16 %v5935
        %v7560 = vunpack.c.h.b16 %v5935
        %v7561 = vunpack.c.l.b16 %v5936
        %v7562 = vunpack.c.h.b16 %v5936
        %v7563 = vunpack.c.l.b16 %v5937
        %v7564 = vunpack.c.h.b16 %v5937
        %v7565 = vunpack.c.l.b16 %v5938
        %v7566 = vunpack.c.h.b16 %v5938
        %v7567 = vunpack.c.l.b16 %v5939
        %v7568 = vunpack.c.h.b16 %v5939
        %v7569 = vunpack.c.l.b16 %v5940
        %v7570 = vunpack.c.h.b16 %v5940
        %v7571 = vunpack.c.l.b16 %v5941
        %v7572 = vunpack.c.h.b16 %v5941
        %v7573 = vunpack.c.l.b16 %v5942
        %v7574 = vunpack.c.h.b16 %v5942
        %v7575 = vunpack.c.l.b16 %v5943
        %v7576 = vunpack.c.h.b16 %v5943
        %v7577 = vunpack.c.l.b16 %v5944
        %v7578 = vunpack.c.h.b16 %v5944
        %v7579 = vunpack.c.l.b16 %v5945
        %v7580 = vunpack.c.h.b16 %v5945
        %v7581 = vunpack.c.l.b16 %v5946
        %v7582 = vunpack.c.h.b16 %v5946
        %v7583 = vunpack.c.l.b16 %v5947
        %v7584 = vunpack.c.h.b16 %v5947
        %v7585 = vunpack.c.l.b16 %v5948
        %v7586 = vunpack.c.h.b16 %v5948
        %v7587 = vunpack.c.l.b16 %v5949
        %v7588 = vunpack.c.h.b16 %v5949
        %v7589 = vunpack.c.l.b16 %v5950
        %v7590 = vunpack.c.h.b16 %v5950
        %v7591 = vunpack.c.l.b16 %v5951
        %v7592 = vunpack.c.h.b16 %v5951
        %v7593 = vunpack.c.l.b16 %v5952
        %v7594 = vunpack.c.h.b16 %v5952
        %v7595 = vunpack.c.l.b16 %v5953
        %v7596 = vunpack.c.h.b16 %v5953
        %v7597 = vunpack.c.l.b16 %v5954
        %v7598 = vunpack.c.h.b16 %v5954
        %v7599 = vunpack.c.l.b16 %v5955
        %v7600 = vunpack.c.h.b16 %v5955
        %v7601 = vunpack.c.l.b16 %v5956
        %v7602 = vunpack.c.h.b16 %v5956
        %v7603 = vunpack.c.l.b16 %v5957
        %v7604 = vunpack.c.h.b16 %v5957
        %v7605 = vunpack.c.l.b16 %v5958
        %v7606 = vunpack.c.h.b16 %v5958
        %v7607 = vunpack.c.l.b16 %v5959
        %v7608 = vunpack.c.h.b16 %v5959
        %v7609 = vunpack.c.l.b16 %v5960
        %v7610 = vunpack.c.h.b16 %v5960
        %v7611 = vunpack.c.l.b16 %v5961
        %v7612 = vunpack.c.h.b16 %v5961
        %v7613 = vunpack.c.l.b16 %v5962
        %v7614 = vunpack.c.h.b16 %v5962
        %v7615 = vunpack.c.l.b16 %v5963
        %v7616 = vunpack.c.h.b16 %v5963
        %v7617 = vunpack.c.l.b16 %v5964
        %v7618 = vunpack.c.h.b16 %v5964
        %v7619 = vunpack.c.l.b16 %v5965
        %v7620 = vunpack.c.h.b16 %v5965
        %v7621 = vunpack.c.l.b16 %v5966
        %v7622 = vunpack.c.h.b16 %v5966
        %v7623 = vunpack.c.l.b16 %v5967
        %v7624 = vunpack.c.h.b16 %v5967
        %v7625 = vunpack.c.l.b16 %v5968
        %v7626 = vunpack.c.h.b16 %v5968
        %v7627 = vunpack.c.l.b16 %v5969
        %v7628 = vunpack.c.h.b16 %v5969
        %v7629 = vunpack.c.l.b16 %v5970
        %v7630 = vunpack.c.h.b16 %v5970
        %v7631 = vunpack.c.l.b16 %v5971
        %v7632 = vunpack.c.h.b16 %v5971
        %v7633 = vunpack.c.l.b16 %v5972
        %v7634 = vunpack.c.h.b16 %v5972
        %v7635 = vunpack.c.l.b16 %v5973
        %v7636 = vunpack.c.h.b16 %v5973
        %v7637 = vunpack.c.l.b16 %v5974
        %v7638 = vunpack.c.h.b16 %v5974
        %v7639 = vunpack.c.l.b16 %v5975
        %v7640 = vunpack.c.h.b16 %v5975
        %v7641 = vunpack.c.l.b16 %v5976
        %v7642 = vunpack.c.h.b16 %v5976
        %v7643 = vunpack.c.l.b16 %v5977
        %v7644 = vunpack.c.h.b16 %v5977
        %v7645 = vunpack.c.l.b16 %v5978
        %v7646 = vunpack.c.h.b16 %v5978
        %v7647 = vunpack.c.l.b16 %v5979
        %v7648 = vunpack.c.h.b16 %v5979
        %v7649 = vunpack.c.l.b16 %v5980
        %v7650 = vunpack.c.h.b16 %v5980
        %v7651 = vunpack.c.l.b16 %v5981
        %v7652 = vunpack.c.h.b16 %v5981
        %v7653 = vunpack.c.l.b16 %v5982
        %v7654 = vunpack.c.h.b16 %v5982
        %v7655 = vunpack.c.l.b16 %v5983
        %v7656 = vunpack.c.h.b16 %v5983
        %v7657 = vunpack.c.l.b16 %v5984
        %v7658 = vunpack.c.h.b16 %v5984
        %v7659 = vunpack.c.l.b16 %v5985
        %v7660 = vunpack.c.h.b16 %v5985
        %v7661 = vunpack.c.l.b16 %v5986
        %v7662 = vunpack.c.h.b16 %v5986
        %v7663 = vunpack.c.l.b16 %v5987
        %v7664 = vunpack.c.h.b16 %v5987
        %v7665 = vunpack.c.l.b16 %v5988
        %v7666 = vunpack.c.h.b16 %v5988
        %v7667 = vunpack.c.l.b16 %v5989
        %v7668 = vunpack.c.h.b16 %v5989
        %v7669 = vunpack.c.l.b16 %v5990
        %v7670 = vunpack.c.h.b16 %v5990
        %v7671 = vunpack.c.l.b16 %v5991
        %v7672 = vunpack.c.h.b16 %v5991
        %v7673 = vunpack.c.l.b16 %v5992
        %v7674 = vunpack.c.h.b16 %v5992
        %v7675 = vunpack.c.l.b16 %v5993
        %v7676 = vunpack.c.h.b16 %v5993
        %v7677 = vunpack.c.l.b16 %v5994
        %v7678 = vunpack.c.h.b16 %v5994
        %v7679 = vunpack.c.l.b16 %v5995
        %v7680 = vunpack.c.h.b16 %v5995
        %v7681 = vunpack.c.l.b16 %v5996
        %v7682 = vunpack.c.h.b16 %v5996
        %v7683 = vunpack.c.l.b16 %v5997
        %v7684 = vunpack.c.h.b16 %v5997
        %v7685 = vunpack.c.l.b16 %v5998
        %v7686 = vunpack.c.h.b16 %v5998
        %v7687 = vunpack.c.l.b16 %v5999
        %v7688 = vunpack.c.h.b16 %v5999
        %v7689 = vunpack.c.l.b16 %v6000
        %v7690 = vunpack.c.h.b16 %v6000
        %v7691 = vunpack.c.l.b16 %v6001
        %v7692 = vunpack.c.h.b16 %v6001
        %v7693 = vunpack.c.l.b16 %v6002
        %v7694 = vunpack.c.h.b16 %v6002
        %v7695 = vunpack.c.l.b16 %v6003
        %v7696 = vunpack.c.h.b16 %v6003
        %v7697 = vunpack.c.l.b16 %v6004
        %v7698 = vunpack.c.h.b16 %v6004
        %v7699 = vunpack.c.l.b16 %v6005
        %v7700 = vunpack.c.h.b16 %v6005
        %v7701 = vunpack.c.l.b16 %v6006
        %v7702 = vunpack.c.h.b16 %v6006
        %v7703 = vunpack.c.l.b16 %v6007
        %v7704 = vunpack.c.h.b16 %v6007
        %v7705 = vunpack.c.l.b16 %v6008
        %v7706 = vunpack.c.h.b16 %v6008
        %v7707 = vunpack.c.l.b16 %v6009
        %v7708 = vunpack.c.h.b16 %v6009
        %v7709 = vunpack.c.l.b16 %v6010
        %v7710 = vunpack.c.h.b16 %v6010
        %v7711 = vunpack.c.l.b16 %v6011
        %v7712 = vunpack.c.h.b16 %v6011
        %v7713 = vunpack.c.l.b16 %v6012
        %v7714 = vunpack.c.h.b16 %v6012
        %v7715 = vunpack.c.l.b16 %v6013
        %v7716 = vunpack.c.h.b16 %v6013
        %v7717 = vunpack.c.l.b16 %v6014
        %v7718 = vunpack.c.h.b16 %v6014
        %v7719 = vunpack.c.l.b16 %v6015
        %v7720 = vunpack.c.h.b16 %v6015
        %v7721 = vunpack.c.l.b16 %v6016
        %v7722 = vunpack.c.h.b16 %v6016
        %v7723 = vunpack.c.l.b16 %v6017
        %v7724 = vunpack.c.h.b16 %v6017
        %v7725 = vunpack.c.l.b16 %v6018
        %v7726 = vunpack.c.h.b16 %v6018
        %v7727 = vunpack.c.l.b16 %v6019
        %v7728 = vunpack.c.h.b16 %v6019
        %v7729 = vunpack.c.l.b16 %v6020
        %v7730 = vunpack.c.h.b16 %v6020
        %v7731 = vunpack.c.l.b16 %v6021
        %v7732 = vunpack.c.h.b16 %v6021
        %v7733 = vunpack.c.l.b16 %v6022
        %v7734 = vunpack.c.h.b16 %v6022
        %v7735 = vunpack.c.l.b16 %v6023
        %v7736 = vunpack.c.h.b16 %v6023
        %v7737 = vunpack.c.l.b16 %v6024
        %v7738 = vunpack.c.h.b16 %v6024
        %v7739 = vunpack.c.l.b16 %v6025
        %v7740 = vunpack.c.h.b16 %v6025
        %v7741 = vunpack.c.l.b16 %v6026
        %v7742 = vunpack.c.h.b16 %v6026
        %v7743 = vunpack.c.l.b16 %v6027
        %v7744 = vunpack.c.h.b16 %v6027
        %v7745 = vunpack.c.l.b16 %v6028
        %v7746 = vunpack.c.h.b16 %v6028
        %v7747 = vunpack.c.l.b16 %v6029
        %v7748 = vunpack.c.h.b16 %v6029
        %v7749 = vunpack.c.l.b16 %v6030
        %v7750 = vunpack.c.h.b16 %v6030
        %v7751 = vunpack.c.l.b16 %v6031
        %v7752 = vunpack.c.h.b16 %v6031
        %v7753 = vunpack.c.l.b16 %v6032
        %v7754 = vunpack.c.h.b16 %v6032
        %v7755 = vunpack.c.l.b16 %v6033
        %v7756 = vunpack.c.h.b16 %v6033
        %v7757 = vunpack.c.l.b16 %v6034
        %v7758 = vunpack.c.h.b16 %v6034
        %v7759 = vunpack.c.l.b16 %v6035
        %v7760 = vunpack.c.h.b16 %v6035
        %v7761 = vunpack.c.l.b16 %v6036
        %v7762 = vunpack.c.h.b16 %v6036
        %v7763 = vunpack.c.l.b16 %v6037
        %v7764 = vunpack.c.h.b16 %v6037
        %v7765 = vunpack.c.l.b16 %v6038
        %v7766 = vunpack.c.h.b16 %v6038
        %v7767 = vunpack.c.l.b16 %v6039
        %v7768 = vunpack.c.h.b16 %v6039
        %v7769 = vunpack.c.l.b16 %v6040
        %v7770 = vunpack.c.h.b16 %v6040
        %v7771 = vunpack.c.l.b16 %v6041
        %v7772 = vunpack.c.h.b16 %v6041
        %v7773 = vunpack.c.l.b16 %v6042
        %v7774 = vunpack.c.h.b16 %v6042
        %v7775 = vunpack.c.l.b16 %v6043
        %v7776 = vunpack.c.h.b16 %v6043
        %v7777 = vunpack.c.l.b16 %v6044
        %v7778 = vunpack.c.h.b16 %v6044
        %v7779 = vunpack.c.l.b16 %v6045
        %v7780 = vunpack.c.h.b16 %v6045
        %v7781 = vunpack.c.l.b16 %v6046
        %v7782 = vunpack.c.h.b16 %v6046
        %v7783 = vunpack.c.l.b16 %v6047
        %v7784 = vunpack.c.h.b16 %v6047
        %v7785 = vunpack.c.l.b16 %v6048
        %v7786 = vunpack.c.h.b16 %v6048
        %v7787 = vunpack.c.l.b16 %v6049
        %v7788 = vunpack.c.h.b16 %v6049
        %v7789 = vunpack.c.l.b16 %v6050
        %v7790 = vunpack.c.h.b16 %v6050
        %v7791 = vunpack.c.l.b16 %v6051
        %v7792 = vunpack.c.h.b16 %v6051
        %v7793 = vunpack.c.l.b16 %v6052
        %v7794 = vunpack.c.h.b16 %v6052
        %v7795 = vunpack.c.l.b16 %v6053
        %v7796 = vunpack.c.h.b16 %v6053
        %v7797 = vunpack.c.l.b16 %v6054
        %v7798 = vunpack.c.h.b16 %v6054
        %v7799 = vunpack.c.l.b16 %v6055
        %v7800 = vunpack.c.h.b16 %v6055
        %v7801 = vunpack.c.l.b16 %v6056
        %v7802 = vunpack.c.h.b16 %v6056
        %v7803 = vunpack.c.l.b16 %v6057
        %v7804 = vunpack.c.h.b16 %v6057
        %v7805 = vunpack.c.l.b16 %v6058
        %v7806 = vunpack.c.h.b16 %v6058
        %v7807 = vunpack.c.l.b16 %v6059
        %v7808 = vunpack.c.h.b16 %v6059
        %v7809 = vunpack.c.l.b16 %v6060
        %v7810 = vunpack.c.h.b16 %v6060
        %v7811 = vunpack.c.l.b16 %v6061
        %v7812 = vunpack.c.h.b16 %v6061
        %v7813 = vunpack.c.l.b16 %v6062
        %v7814 = vunpack.c.h.b16 %v6062
        %v7815 = vunpack.c.l.b16 %v6063
        %v7816 = vunpack.c.h.b16 %v6063
        %v7817 = vunpack.c.l.b16 %v6064
        %v7818 = vunpack.c.h.b16 %v6064
        %v7819 = vunpack.c.l.b16 %v6065
        %v7820 = vunpack.c.h.b16 %v6065
        %v7821 = vunpack.c.l.b16 %v6066
        %v7822 = vunpack.c.h.b16 %v6066
        %v7823 = vunpack.c.l.b16 %v6067
        %v7824 = vunpack.c.h.b16 %v6067
        %v7825 = vunpack.c.l.b16 %v6068
        %v7826 = vunpack.c.h.b16 %v6068
        %v7827 = vunpack.c.l.b16 %v6069
        %v7828 = vunpack.c.h.b16 %v6069
        %v7829 = vunpack.c.l.b16 %v6070
        %v7830 = vunpack.c.h.b16 %v6070
        %v7831 = vunpack.c.l.b16 %v6071
        %v7832 = vunpack.c.h.b16 %v6071
        %v7833 = vunpack.c.l.b16 %v6072
        %v7834 = vunpack.c.h.b16 %v6072
        %v7835 = vunpack.c.l.b16 %v6073
        %v7836 = vunpack.c.h.b16 %v6073
        %v7837 = vunpack.c.l.b16 %v6074
        %v7838 = vunpack.c.h.b16 %v6074
        %v7839 = vunpack.c.l.b16 %v6075
        %v7840 = vunpack.c.h.b16 %v6075
        %v7841 = vunpack.c.l.b16 %v6076
        %v7842 = vunpack.c.h.b16 %v6076
        %v7843 = vunpack.c.l.b16 %v6077
        %v7844 = vunpack.c.h.b16 %v6077
        %v7845 = vunpack.c.l.b16 %v6078
        %v7846 = vunpack.c.h.b16 %v6078
        %v7847 = vunpack.c.l.b16 %v6079
        %v7848 = vunpack.c.h.b16 %v6079
        %v7849 = vunpack.c.l.b16 %v6080
        %v7850 = vunpack.c.h.b16 %v6080
        %v7851 = vunpack.c.l.b16 %v6081
        %v7852 = vunpack.c.h.b16 %v6081
        %v7853 = vunpack.c.l.b16 %v6082
        %v7854 = vunpack.c.h.b16 %v6082
        %v7855 = vunpack.c.l.b16 %v6083
        %v7856 = vunpack.c.h.b16 %v6083
        %v7857 = vunpack.c.l.b16 %v6084
        %v7858 = vunpack.c.h.b16 %v6084
        %v7859 = vunpack.c.l.b16 %v6085
        %v7860 = vunpack.c.h.b16 %v6085
        %v7861 = vunpack.c.l.b16 %v6086
        %v7862 = vunpack.c.h.b16 %v6086
        %v7863 = vunpack.c.l.b16 %v6087
        %v7864 = vunpack.c.h.b16 %v6087
        %v7865 = vunpack.c.l.b16 %v6088
        %v7866 = vunpack.c.h.b16 %v6088
        %v7867 = vunpack.c.l.b16 %v6089
        %v7868 = vunpack.c.h.b16 %v6089
        %v7869 = vunpack.c.l.b16 %v6090
        %v7870 = vunpack.c.h.b16 %v6090
        %v7871 = vunpack.c.l.b16 %v6091
        %v7872 = vunpack.c.h.b16 %v6091
        %v7873 = vunpack.c.l.b16 %v6092
        %v7874 = vunpack.c.h.b16 %v6092
        %v7875 = vunpack.c.l.b16 %v6093
        %v7876 = vunpack.c.h.b16 %v6093
        %v7877 = vunpack.c.l.b16 %v6094
        %v7878 = vunpack.c.h.b16 %v6094
        %v7879 = vunpack.c.l.b16 %v6095
        %v7880 = vunpack.c.h.b16 %v6095
        %v7881 = vunpack.c.l.b16 %v6096
        %v7882 = vunpack.c.h.b16 %v6096
        %v7883 = vunpack.c.l.b16 %v6097
        %v7884 = vunpack.c.h.b16 %v6097
        %v7885 = vunpack.c.l.b16 %v6098
        %v7886 = vunpack.c.h.b16 %v6098
        %v7887 = vunpack.c.l.b16 %v6099
        %v7888 = vunpack.c.h.b16 %v6099
        %v7889 = vunpack.c.l.b16 %v6100
        %v7890 = vunpack.c.h.b16 %v6100
        %v7891 = vunpack.c.l.b16 %v6101
        %v7892 = vunpack.c.h.b16 %v6101
        %v7893 = vunpack.c.l.b16 %v6102
        %v7894 = vunpack.c.h.b16 %v6102
        %v7895 = vunpack.c.l.b16 %v6103
        %v7896 = vunpack.c.h.b16 %v6103
        %v7897 = vunpack.c.l.b16 %v6104
        %v7898 = vunpack.c.h.b16 %v6104
        %v7899 = vunpack.c.l.b16 %v6105
        %v7900 = vunpack.c.h.b16 %v6105
        %v7901 = vunpack.c.l.b16 %v6106
        %v7902 = vunpack.c.h.b16 %v6106
        %v7903 = vunpack.c.l.b16 %v6107
        %v7904 = vunpack.c.h.b16 %v6107
        %v7905 = vunpack.c.l.b16 %v6108
        %v7906 = vunpack.c.h.b16 %v6108
        %v7907 = vunpack.c.l.b16 %v6109
        %v7908 = vunpack.c.h.b16 %v6109
        %v7909 = vunpack.c.l.b16 %v6110
        %v7910 = vunpack.c.h.b16 %v6110
        %v7911 = vunpack.c.l.b16 %v6111
        %v7912 = vunpack.c.h.b16 %v6111
        %v7913 = vunpack.c.l.b16 %v6112
        %v7914 = vunpack.c.h.b16 %v6112
        %v7915 = vunpack.c.l.b16 %v6113
        %v7916 = vunpack.c.h.b16 %v6113
        %v7917 = vunpack.c.l.b16 %v6114
        %v7918 = vunpack.c.h.b16 %v6114
        %v7919 = vunpack.c.l.b16 %v6115
        %v7920 = vunpack.c.h.b16 %v6115
        %v7921 = vunpack.c.l.b16 %v6116
        %v7922 = vunpack.c.h.b16 %v6116
        %v7923 = vunpack.c.l.b16 %v6117
        %v7924 = vunpack.c.h.b16 %v6117
        %v7925 = vunpack.c.l.b16 %v6118
        %v7926 = vunpack.c.h.b16 %v6118
        %v7927 = vunpack.c.l.b16 %v6119
        %v7928 = vunpack.c.h.b16 %v6119
        %v7929 = vunpack.c.l.b16 %v6120
        %v7930 = vunpack.c.h.b16 %v6120
        %v7931 = vunpack.c.l.b16 %v6121
        %v7932 = vunpack.c.h.b16 %v6121
        %v7933 = vunpack.c.l.b16 %v6122
        %v7934 = vunpack.c.h.b16 %v6122
        %v7935 = vunpack.c.l.b16 %v6123
        %v7936 = vunpack.c.h.b16 %v6123
        %v7937 = vunpack.c.l.b16 %v6124
        %v7938 = vunpack.c.h.b16 %v6124
        %v7939 = vunpack.c.l.b16 %v6125
        %v7940 = vunpack.c.h.b16 %v6125
        %v7941 = vunpack.c.l.b16 %v6126
        %v7942 = vunpack.c.h.b16 %v6126
        %v7943 = vunpack.c.l.b16 %v6127
        %v7944 = vunpack.c.h.b16 %v6127
        %v7945 = vunpack.c.l.b16 %v6128
        %v7946 = vunpack.c.h.b16 %v6128
        %v7947 = vunpack.c.l.b16 %v6129
        %v7948 = vunpack.c.h.b16 %v6129
        %v7949 = vunpack.c.l.b16 %v6130
        %v7950 = vunpack.c.h.b16 %v6130
        %v7951 = vunpack.c.l.b16 %v6131
        %v7952 = vunpack.c.h.b16 %v6131
        %v7953 = vunpack.c.l.b16 %v6132
        %v7954 = vunpack.c.h.b16 %v6132
        %v7955 = vunpack.c.l.b16 %v6133
        %v7956 = vunpack.c.h.b16 %v6133
        %v7957 = vunpack.c.l.b16 %v6134
        %v7958 = vunpack.c.h.b16 %v6134
        %v7959 = vunpack.c.l.b16 %v6135
        %v7960 = vunpack.c.h.b16 %v6135
        %v7961 = vunpack.c.l.b16 %v6136
        %v7962 = vunpack.c.h.b16 %v6136
        %v7963 = vunpack.c.l.b16 %v6137
        %v7964 = vunpack.c.h.b16 %v6137
        %v7965 = vunpack.c.l.b16 %v6138
        %v7966 = vunpack.c.h.b16 %v6138
        %v7967 = vunpack.c.l.b16 %v6139
        %v7968 = vunpack.c.h.b16 %v6139
        %v7969 = vunpack.c.l.b16 %v6140
        %v7970 = vunpack.c.h.b16 %v6140
        %v7971 = vunpack.c.l.b16 %v6141
        %v7972 = vunpack.c.h.b16 %v6141
        %v7973 = vunpack.c.l.b16 %v6142
        %v7974 = vunpack.c.h.b16 %v6142
        %v7975 = vunpack.c.l.b16 %v6143
        %v7976 = vunpack.c.h.b16 %v6143
        %v7977 = vunpack.c.l.b16 %v6144
        %v7978 = vunpack.c.h.b16 %v6144
        %v7979 = vunpack.c.l.b16 %v6145
        %v7980 = vunpack.c.h.b16 %v6145
        %v7981 = vunpack.c.l.b16 %v6146
        %v7982 = vunpack.c.h.b16 %v6146
        %v7983 = vunpack.c.l.b16 %v6147
        %v7984 = vunpack.c.h.b16 %v6147
        %v7985 = vunpack.c.l.b16 %v6148
        %v7986 = vunpack.c.h.b16 %v6148
        %v7987 = vunpack.c.l.b16 %v6149
        %v7988 = vunpack.c.h.b16 %v6149
        %v7989 = vunpack.c.l.b16 %v6150
        %v7990 = vunpack.c.h.b16 %v6150
        %v7991 = vunpack.c.l.b16 %v6151
        %v7992 = vunpack.c.h.b16 %v6151
        %v7993 = vunpack.c.l.b16 %v6152
        %v7994 = vunpack.c.h.b16 %v6152
        %v7995 = vunpack.c.l.b16 %v6153
        %v7996 = vunpack.c.h.b16 %v6153
        %v7997 = vunpack.c.l.b16 %v6154
        %v7998 = vunpack.c.h.b16 %v6154
        %v7999 = vunpack.c.l.b16 %v6155
        %v8000 = vunpack.c.h.b16 %v6155
        %v8001 = vunpack.c.l.b16 %v6156
        %v8002 = vunpack.c.h.b16 %v6156
        %v8003 = vunpack.c.l.b16 %v6157
        %v8004 = vunpack.c.h.b16 %v6157
        %v8005 = vunpack.c.l.b16 %v6158
        %v8006 = vunpack.c.h.b16 %v6158
        %v8007 = vunpack.c.l.b16 %v6159
        %v8008 = vunpack.c.h.b16 %v6159
        %v8009 = vunpack.c.l.b16 %v6160
        %v8010 = vunpack.c.h.b16 %v6160
        %v8011 = vunpack.c.l.b16 %v6161
        %v8012 = vunpack.c.h.b16 %v6161
        %v8013 = vunpack.c.l.b16 %v6162
        %v8014 = vunpack.c.h.b16 %v6162
        %v8015 = vunpack.c.l.b16 %v6163
        %v8016 = vunpack.c.h.b16 %v6163
        %v8017 = vunpack.c.l.b16 %v6164
        %v8018 = vunpack.c.h.b16 %v6164
        %v8019 = vunpack.c.l.b16 %v6165
        %v8020 = vunpack.c.h.b16 %v6165
        %v8021 = vunpack.c.l.b16 %v6166
        %v8022 = vunpack.c.h.b16 %v6166
        %v8023 = vunpack.c.l.b16 %v6167
        %v8024 = vunpack.c.h.b16 %v6167
        %v8025 = vunpack.c.l.b16 %v6168
        %v8026 = vunpack.c.h.b16 %v6168
        %v8027 = vunpack.c.l.b16 %v6169
        %v8028 = vunpack.c.h.b16 %v6169
        %v8029 = vunpack.c.l.b16 %v6170
        %v8030 = vunpack.c.h.b16 %v6170
        %v8031 = vunpack.c.l.b16 %v6171
        %v8032 = vunpack.c.h.b16 %v6171
        %v8033 = vunpack.c.l.b16 %v6172
        %v8034 = vunpack.c.h.b16 %v6172
        %v8035 = vunpack.c.l.b16 %v6173
        %v8036 = vunpack.c.h.b16 %v6173
        %v8037 = vunpack.c.l.b16 %v6174
        %v8038 = vunpack.c.h.b16 %v6174
        %v8039 = vunpack.c.l.b16 %v6175
        %v8040 = vunpack.c.h.b16 %v6175
        %v8041 = vunpack.c.l.b16 %v6176
        %v8042 = vunpack.c.h.b16 %v6176
        %v8043 = vunpack.c.l.b16 %v6177
        %v8044 = vunpack.c.h.b16 %v6177
        %v8045 = vunpack.c.l.b16 %v6178
        %v8046 = vunpack.c.h.b16 %v6178
        %v8047 = vunpack.c.l.b16 %v6179
        %v8048 = vunpack.c.h.b16 %v6179
        %v8049 = vunpack.c.l.b16 %v6180
        %v8050 = vunpack.c.h.b16 %v6180
        %v8051 = vunpack.c.l.b16 %v6181
        %v8052 = vunpack.c.h.b16 %v6181
        %v8053 = vunpack.c.l.b16 %v6182
        %v8054 = vunpack.c.h.b16 %v6182
        %v8055 = vunpack.c.l.b16 %v6183
        %v8056 = vunpack.c.h.b16 %v6183
        %v8057 = vunpack.c.l.b16 %v6184
        %v8058 = vunpack.c.h.b16 %v6184
        %v8059 = vunpack.c.l.b16 %v6185
        %v8060 = vunpack.c.h.b16 %v6185
        %v8061 = vunpack.c.l.b16 %v6186
        %v8062 = vunpack.c.h.b16 %v6186
        %v8063 = vunpack.c.l.b16 %v6187
        %v8064 = vunpack.c.h.b16 %v6187
        %v8065 = vunpack.c.l.b16 %v6188
        %v8066 = vunpack.c.h.b16 %v6188
        %v8067 = vunpack.c.l.b16 %v6189
        %v8068 = vunpack.c.h.b16 %v6189
        %v8069 = vunpack.c.l.b16 %v6190
        %v8070 = vunpack.c.h.b16 %v6190
        %v8071 = vunpack.c.l.b16 %v6191
        %v8072 = vunpack.c.h.b16 %v6191
        %v8073 = vunpack.c.l.b16 %v6192
        %v8074 = vunpack.c.h.b16 %v6192
        %v8075 = vunpack.c.l.b16 %v6193
        %v8076 = vunpack.c.h.b16 %v6193
        %v8077 = vunpack.c.l.b16 %v6194
        %v8078 = vunpack.c.h.b16 %v6194
        %v8079 = vunpack.c.l.b16 %v6195
        %v8080 = vunpack.c.h.b16 %v6195
        %v8081 = vunpack.c.l.b16 %v6196
        %v8082 = vunpack.c.h.b16 %v6196
        %v8083 = vunpack.c.l.b16 %v6197
        %v8084 = vunpack.c.h.b16 %v6197
        %v8085 = vunpack.c.l.b16 %v6198
        %v8086 = vunpack.c.h.b16 %v6198
        %v8087 = vunpack.c.l.b16 %v6199
        %v8088 = vunpack.c.h.b16 %v6199
        %v8089 = vunpack.c.l.b16 %v6200
        %v8090 = vunpack.c.h.b16 %v6200
        %v8091 = vunpack.c.l.b16 %v6201
        %v8092 = vunpack.c.h.b16 %v6201
        %v8093 = vunpack.c.l.b16 %v6202
        %v8094 = vunpack.c.h.b16 %v6202
        %v8095 = vunpack.c.l.b16 %v6203
        %v8096 = vunpack.c.h.b16 %v6203
        %v8097 = vunpack.c.l.b16 %v6204
        %v8098 = vunpack.c.h.b16 %v6204
        %v8099 = vunpack.c.l.b16 %v6205
        %v8100 = vunpack.c.h.b16 %v6205
        %v8101 = vunpack.c.l.b16 %v6206
        %v8102 = vunpack.c.h.b16 %v6206
        %v8103 = vunpack.c.l.b16 %v6207
        %v8104 = vunpack.c.h.b16 %v6207
        %v8105 = vunpack.c.l.b16 %v6208
        %v8106 = vunpack.c.h.b16 %v6208
        %v8107 = vunpack.c.l.b16 %v6209
        %v8108 = vunpack.c.h.b16 %v6209
        %v8109 = vunpack.c.l.b16 %v6210
        %v8110 = vunpack.c.h.b16 %v6210
        %v8111 = vunpack.c.l.b16 %v6211
        %v8112 = vunpack.c.h.b16 %v6211
        %v8113 = vunpack.c.l.b16 %v6212
        %v8114 = vunpack.c.h.b16 %v6212
        %v8115 = vunpack.c.l.b16 %v6213
        %v8116 = vunpack.c.h.b16 %v6213
        %v8117 = vunpack.c.l.b16 %v6214
        %v8118 = vunpack.c.h.b16 %v6214
        %v8119 = vunpack.c.l.b16 %v6215
        %v8120 = vunpack.c.h.b16 %v6215
        %v8121 = vunpack.c.l.b16 %v6216
        %v8122 = vunpack.c.h.b16 %v6216
        %v8123 = vunpack.c.l.b16 %v6217
        %v8124 = vunpack.c.h.b16 %v6217
        %v8125 = vunpack.c.l.b16 %v6218
        %v8126 = vunpack.c.h.b16 %v6218
        %v8127 = vunpack.c.l.b16 %v6219
        %v8128 = vunpack.c.h.b16 %v6219
        %v8129 = vunpack.c.l.b16 %v6220
        %v8130 = vunpack.c.h.b16 %v6220
        %v8131 = vunpack.c.l.b16 %v6221
        %v8132 = vunpack.c.h.b16 %v6221
        %v8133 = vunpack.c.l.b16 %v6222
        %v8134 = vunpack.c.h.b16 %v6222
        %v8135 = vunpack.c.l.b16 %v6223
        %v8136 = vunpack.c.h.b16 %v6223
        %v8137 = vunpack.c.l.b16 %v6224
        %v8138 = vunpack.c.h.b16 %v6224
        %v8139 = vunpack.c.l.b16 %v6225
        %v8140 = vunpack.c.h.b16 %v6225
        %v8141 = vunpack.c.l.b16 %v6226
        %v8142 = vunpack.c.h.b16 %v6226
        %v8143 = vunpack.c.l.b16 %v6227
        %v8144 = vunpack.c.h.b16 %v6227
        %v8145 = vunpack.c.l.b16 %v6228
        %v8146 = vunpack.c.h.b16 %v6228
        %v8147 = vunpack.c.l.b16 %v6229
        %v8148 = vunpack.c.h.b16 %v6229
        %v8149 = vunpack.c.l.b16 %v6230
        %v8150 = vunpack.c.h.b16 %v6230
        %v8151 = vunpack.c.l.b16 %v6231
        %v8152 = vunpack.c.h.b16 %v6231
        %v8153 = vunpack.c.l.b16 %v6232
        %v8154 = vunpack.c.h.b16 %v6232
        %v8155 = vunpack.c.l.b16 %v6233
        %v8156 = vunpack.c.h.b16 %v6233
        %v8157 = vunpack.c.l.b16 %v6234
        %v8158 = vunpack.c.h.b16 %v6234
        %v8159 = vunpack.c.l.b16 %v6235
        %v8160 = vunpack.c.h.b16 %v6235
        %v8161 = vunpack.c.l.b16 %v6236
        %v8162 = vunpack.c.h.b16 %v6236
        %v8163 = vunpack.c.l.b16 %v6237
        %v8164 = vunpack.c.h.b16 %v6237
        %v8165 = vunpack.c.l.b16 %v6238
        %v8166 = vunpack.c.h.b16 %v6238
        %v8167 = vunpack.c.l.b16 %v6239
        %v8168 = vunpack.c.h.b16 %v6239
        %v8169 = vunpack.c.l.b16 %v6240
        %v8170 = vunpack.c.h.b16 %v6240
        %v8171 = vunpack.c.l.b16 %v6241
        %v8172 = vunpack.c.h.b16 %v6241
        %v8173 = vunpack.c.l.b16 %v6242
        %v8174 = vunpack.c.h.b16 %v6242
        %v8175 = vunpack.c.l.b16 %v6243
        %v8176 = vunpack.c.h.b16 %v6243
        %v8177 = vunpack.c.l.b16 %v6244
        %v8178 = vunpack.c.h.b16 %v6244
        %v8179 = vunpack.c.l.b16 %v6245
        %v8180 = vunpack.c.h.b16 %v6245
        %v8181 = vunpack.c.l.b16 %v6246
        %v8182 = vunpack.c.h.b16 %v6246
        %v8183 = vunpack.c.l.b16 %v6247
        %v8184 = vunpack.c.h.b16 %v6247
        %v8185 = vunpack.c.l.b16 %v6248
        %v8186 = vunpack.c.h.b16 %v6248
        %v8187 = vunpack.c.l.b16 %v6249
        %v8188 = vunpack.c.h.b16 %v6249
        %v8189 = vunpack.c.l.b16 %v6250
        %v8190 = vunpack.c.h.b16 %v6250
        %v8191 = vunpack.c.l.b16 %v6251
        %v8192 = vunpack.c.h.b16 %v6251
        %v8193 = vunpack.c.l.b16 %v6252
        %v8194 = vunpack.c.h.b16 %v6252
        %v8195 = vunpack.c.l.b16 %v6253
        %v8196 = vunpack.c.h.b16 %v6253
        %v8197 = vunpack.c.l.b16 %v6254
        %v8198 = vunpack.c.h.b16 %v6254
        %v8199 = vunpack.c.l.b16 %v6255
        %v8200 = vunpack.c.h.b16 %v6255
        %v8201 = vunpack.c.l.b16 %v6256
        %v8202 = vunpack.c.h.b16 %v6256
        %v8203 = vunpack.c.l.b16 %v6257
        %v8204 = vunpack.c.h.b16 %v6257
        %v8205 = vunpack.c.l.b16 %v6258
        %v8206 = vunpack.c.h.b16 %v6258
        %v8207 = vunpack.c.l.b16 %v6259
        %v8208 = vunpack.c.h.b16 %v6259
        %v8209 = vunpack.c.l.b16 %v6260
        %v8210 = vunpack.c.h.b16 %v6260
        %v8211 = vunpack.c.l.b16 %v6261
        %v8212 = vunpack.c.h.b16 %v6261
        %v8213 = vunpack.c.l.b16 %v6262
        %v8214 = vunpack.c.h.b16 %v6262
        %v8215 = vunpack.c.l.b16 %v6263
        %v8216 = vunpack.c.h.b16 %v6263
        %v8217 = vunpack.c.l.b16 %v6264
        %v8218 = vunpack.c.h.b16 %v6264
        %v8219 = vunpack.c.l.b16 %v6265
        %v8220 = vunpack.c.h.b16 %v6265
        %v8221 = vunpack.c.l.b16 %v6266
        %v8222 = vunpack.c.h.b16 %v6266
        %v8223 = vunpack.c.l.b16 %v6267
        %v8224 = vunpack.c.h.b16 %v6267
        %v8225 = vunpack.c.l.b16 %v6268
        %v8226 = vunpack.c.h.b16 %v6268
        %v8227 = vunpack.c.l.b16 %v6269
        %v8228 = vunpack.c.h.b16 %v6269
        %v8229 = vunpack.c.l.b16 %v6270
        %v8230 = vunpack.c.h.b16 %v6270
        %v8231 = vunpack.c.l.b16 %v6271
        %v8232 = vunpack.c.h.b16 %v6271
        %v8233 = vunpack.c.l.b16 %v6272
        %v8234 = vunpack.c.h.b16 %v6272
        %v8235 = vunpack.c.l.b16 %v6273
        %v8236 = vunpack.c.h.b16 %v6273
        %v8237 = vunpack.c.l.b16 %v6274
        %v8238 = vunpack.c.h.b16 %v6274
        %v8239 = vunpack.c.l.b16 %v6275
        %v8240 = vunpack.c.h.b16 %v6275
        %v8241 = vunpack.c.l.b16 %v6276
        %v8242 = vunpack.c.h.b16 %v6276
        %v8243 = vunpack.c.l.b16 %v6277
        %v8244 = vunpack.c.h.b16 %v6277
        %v8245 = vunpack.c.l.b16 %v6278
        %v8246 = vunpack.c.h.b16 %v6278
        %v8247 = vunpack.c.l.b16 %v6279
        %v8248 = vunpack.c.h.b16 %v6279
        %v8249 = vunpack.c.l.b16 %v6280
        %v8250 = vunpack.c.h.b16 %v6280
        %v8251 = vunpack.c.l.b16 %v6281
        %v8252 = vunpack.c.h.b16 %v6281
        %v8253 = vunpack.c.l.b16 %v6282
        %v8254 = vunpack.c.h.b16 %v6282
        %v8255 = vunpack.c.l.b16 %v6283
        %v8256 = vunpack.c.h.b16 %v6283
        %v8257 = vunpack.c.l.b16 %v6284
        %v8258 = vunpack.c.h.b16 %v6284
        %v8259 = vunpack.c.l.b16 %v6285
        %v8260 = vunpack.c.h.b16 %v6285
        %v8261 = vunpack.c.l.b16 %v6286
        %v8262 = vunpack.c.h.b16 %v6286
        %v8263 = vunpack.c.l.b16 %v6287
        %v8264 = vunpack.c.h.b16 %v6287
        %v8265 = vunpack.c.l.b16 %v6288
        %v8266 = vunpack.c.h.b16 %v6288
        %v8267 = vunpack.c.l.b16 %v6289
        %v8268 = vunpack.c.h.b16 %v6289
        %v8269 = vunpack.c.l.b16 %v6290
        %v8270 = vunpack.c.h.b16 %v6290
        %v8271 = vunpack.c.l.b16 %v6291
        %v8272 = vunpack.c.h.b16 %v6291
        %v8273 = vunpack.c.l.b16 %v6292
        %v8274 = vunpack.c.h.b16 %v6292
        %v8275 = vunpack.c.l.b16 %v6293
        %v8276 = vunpack.c.h.b16 %v6293
        %v8277 = vunpack.c.l.b16 %v6294
        %v8278 = vunpack.c.h.b16 %v6294
        %v8279 = vunpack.c.l.b16 %v6295
        %v8280 = vunpack.c.h.b16 %v6295
        %v8281 = vunpack.c.l.b16 %v6296
        %v8282 = vunpack.c.h.b16 %v6296
        %v8283 = vunpack.c.l.b16 %v6297
        %v8284 = vunpack.c.h.b16 %v6297
        %v8285 = vunpack.c.l.b16 %v6298
        %v8286 = vunpack.c.h.b16 %v6298
        %v8287 = vunpack.c.l.b16 %v6299
        %v8288 = vunpack.c.h.b16 %v6299
        %v8289 = vunpack.c.l.b16 %v6300
        %v8290 = vunpack.c.h.b16 %v6300
        %v8291 = vunpack.c.l.b16 %v6301
        %v8292 = vunpack.c.h.b16 %v6301
        %v8293 = vunpack.c.l.b16 %v6302
        %v8294 = vunpack.c.h.b16 %v6302
        %v8295 = vunpack.c.l.b16 %v6303
        %v8296 = vunpack.c.h.b16 %v6303
        %v8297 = vunpack.c.l.b16 %v6304
        %v8298 = vunpack.c.h.b16 %v6304
        %v8299 = vunpack.c.l.b16 %v6305
        %v8300 = vunpack.c.h.b16 %v6305
        %v8301 = vunpack.c.l.b16 %v6306
        %v8302 = vunpack.c.h.b16 %v6306
        %v8303 = vunpack.c.l.b16 %v6307
        %v8304 = vunpack.c.h.b16 %v6307
        %v8305 = vunpack.c.l.b16 %v6308
        %v8306 = vunpack.c.h.b16 %v6308
        %v8307 = vunpack.c.l.b16 %v6309
        %v8308 = vunpack.c.h.b16 %v6309
        %v8309 = vunpack.c.l.b16 %v6310
        %v8310 = vunpack.c.h.b16 %v6310
        %v8311 = vunpack.c.l.b16 %v6311
        %v8312 = vunpack.c.h.b16 %v6311
        %v8313 = vunpack.c.l.b16 %v6312
        %v8314 = vunpack.c.h.b16 %v6312
        %v8315 = vunpack.c.l.b16 %v6313
        %v8316 = vunpack.c.h.b16 %v6313
        %v8317 = vunpack.c.l.b16 %v6314
        %v8318 = vunpack.c.h.b16 %v6314
        %v8319 = vunpack.c.l.b16 %v6315
        %v8320 = vunpack.c.h.b16 %v6315
        %v8321 = vunpack.c.l.b16 %v6316
        %v8322 = vunpack.c.h.b16 %v6316
        %v8323 = vunpack.c.l.b16 %v6317
        %v8324 = vunpack.c.h.b16 %v6317
        %v8325 = vunpack.c.l.b16 %v6318
        %v8326 = vunpack.c.h.b16 %v6318
        %v8327 = vunpack.c.l.b16 %v6319
        %v8328 = vunpack.c.h.b16 %v6319
        %v8329 = vunpack.c.l.b16 %v6320
        %v8330 = vunpack.c.h.b16 %v6320
        %v8331 = vunpack.c.l.b16 %v6321
        %v8332 = vunpack.c.h.b16 %v6321
        %v8333 = vunpack.c.l.b16 %v6322
        %v8334 = vunpack.c.h.b16 %v6322
        %v8335 = vunpack.c.l.b16 %v6323
        %v8336 = vunpack.c.h.b16 %v6323
        %v8337 = vunpack.c.l.b16 %v6324
        %v8338 = vunpack.c.h.b16 %v6324
        %v8339 = vunpack.c.l.b16 %v6325
        %v8340 = vunpack.c.h.b16 %v6325
        %v8341 = vunpack.c.l.b16 %v6326
        %v8342 = vunpack.c.h.b16 %v6326
        %v8343 = vunpack.c.l.b16 %v6327
        %v8344 = vunpack.c.h.b16 %v6327
        %v8345 = vunpack.c.l.b16 %v6328
        %v8346 = vunpack.c.h.b16 %v6328
        %v8347 = vunpack.c.l.b16 %v6329
        %v8348 = vunpack.c.h.b16 %v6329
        %v8349 = vunpack.c.l.b16 %v6330
        %v8350 = vunpack.c.h.b16 %v6330
        %v8351 = vunpack.c.l.b16 %v6331
        %v8352 = vunpack.c.h.b16 %v6331
        %v8353 = vunpack.c.l.b16 %v6332
        %v8354 = vunpack.c.h.b16 %v6332
        %v8355 = vunpack.c.l.b16 %v6333
        %v8356 = vunpack.c.h.b16 %v6333
        %v8357 = vunpack.c.l.b16 %v6334
        %v8358 = vunpack.c.h.b16 %v6334
        %v8359 = vunpack.c.l.b16 %v6335
        %v8360 = vunpack.c.h.b16 %v6335
        %v8361 = vunpack.c.l.b16 %v6336
        %v8362 = vunpack.c.h.b16 %v6336
        %v8363 = vunpack.c.l.b16 %v6337
        %v8364 = vunpack.c.h.b16 %v6337
        %v8365 = vunpack.c.l.b16 %v6338
        %v8366 = vunpack.c.h.b16 %v6338
        %v8367 = vunpack.c.l.b16 %v6339
        %v8368 = vunpack.c.h.b16 %v6339
        %v8369 = vunpack.c.l.b16 %v6340
        %v8370 = vunpack.c.h.b16 %v6340
        %v8371 = vunpack.c.l.b16 %v6341
        %v8372 = vunpack.c.h.b16 %v6341
        %v8373 = vunpack.c.l.b16 %v6342
        %v8374 = vunpack.c.h.b16 %v6342
        %v8375 = vunpack.c.l.b16 %v6343
        %v8376 = vunpack.c.h.b16 %v6343
        %v8377 = vunpack.c.l.b16 %v6344
        %v8378 = vunpack.c.h.b16 %v6344
        %v8379 = vunpack.c.l.b16 %v6345
        %v8380 = vunpack.c.h.b16 %v6345
        %v8381 = vunpack.c.l.b16 %v6346
        %v8382 = vunpack.c.h.b16 %v6346
        %v8383 = vunpack.c.l.b16 %v6347
        %v8384 = vunpack.c.h.b16 %v6347
        %v8385 = vunpack.c.l.b16 %v6348
        %v8386 = vunpack.c.h.b16 %v6348
        %v8387 = vunpack.c.l.b16 %v6349
        %v8388 = vunpack.c.h.b16 %v6349
        %v8389 = vunpack.c.l.b16 %v6350
        %v8390 = vunpack.c.h.b16 %v6350
        %v8391 = vunpack.c.l.b16 %v6351
        %v8392 = vunpack.c.h.b16 %v6351
        %v8393 = vunpack.c.l.b16 %v6352
        %v8394 = vunpack.c.h.b16 %v6352
        %v8395 = vunpack.c.l.b16 %v6353
        %v8396 = vunpack.c.h.b16 %v6353
        %v8397 = vunpack.c.l.b16 %v6354
        %v8398 = vunpack.c.h.b16 %v6354
        %v8399 = vunpack.c.l.b16 %v6355
        %v8400 = vunpack.c.h.b16 %v6355
        %v8401 = vunpack.c.l.b16 %v6356
        %v8402 = vunpack.c.h.b16 %v6356
        %v8403 = vunpack.c.l.b16 %v6357
        %v8404 = vunpack.c.h.b16 %v6357
        %v8405 = vunpack.c.l.b16 %v6358
        %v8406 = vunpack.c.h.b16 %v6358
        %v8407 = vunpack.c.l.b16 %v6359
        %v8408 = vunpack.c.h.b16 %v6359
        %v8409 = vunpack.c.l.b16 %v6360
        %v8410 = vunpack.c.h.b16 %v6360
        %v8411 = vunpack.c.l.b16 %v6361
        %v8412 = vunpack.c.h.b16 %v6361
        %v8413 = vunpack.c.l.b16 %v6362
        %v8414 = vunpack.c.h.b16 %v6362
        %v8415 = vunpack.c.l.b16 %v6363
        %v8416 = vunpack.c.h.b16 %v6363
        %v8417 = vunpack.c.l.b16 %v6364
        %v8418 = vunpack.c.h.b16 %v6364
        %v8419 = vunpack.c.l.b16 %v6365
        %v8420 = vunpack.c.h.b16 %v6365
        %v8421 = vunpack.c.l.b16 %v6366
        %v8422 = vunpack.c.h.b16 %v6366
        %v8423 = vunpack.c.l.b16 %v6367
        %v8424 = vunpack.c.h.b16 %v6367
        %v8425 = vunpack.c.l.b16 %v6368
        %v8426 = vunpack.c.h.b16 %v6368
        %v8427 = vunpack.c.l.b16 %v6369
        %v8428 = vunpack.c.h.b16 %v6369
        %v8429 = vunpack.c.l.b16 %v6370
        %v8430 = vunpack.c.h.b16 %v6370
        %v8431 = vunpack.c.l.b16 %v6371
        %v8432 = vunpack.c.h.b16 %v6371
        %v8433 = vunpack.c.l.b16 %v6372
        %v8434 = vunpack.c.h.b16 %v6372
        %v8435 = vunpack.c.l.b16 %v6373
        %v8436 = vunpack.c.h.b16 %v6373
        %v8437 = vunpack.c.l.b16 %v6374
        %v8438 = vunpack.c.h.b16 %v6374
        %v8439 = vunpack.c.l.b16 %v6375
        %v8440 = vunpack.c.h.b16 %v6375
        %v8441 = vunpack.c.l.b16 %v6376
        %v8442 = vunpack.c.h.b16 %v6376
        %v8443 = vunpack.c.l.b16 %v6377
        %v8444 = vunpack.c.h.b16 %v6377
        %v8445 = vunpack.c.l.b16 %v6378
        %v8446 = vunpack.c.h.b16 %v6378
        %v8447 = vunpack.c.l.b16 %v6379
        %v8448 = vunpack.c.h.b16 %v6379
        %v8449 = vunpack.c.l.b16 %v6380
        %v8450 = vunpack.c.h.b16 %v6380
        %v8451 = vunpack.c.l.b16 %v6381
        %v8452 = vunpack.c.h.b16 %v6381
        %v8453 = vunpack.c.l.b16 %v6382
        %v8454 = vunpack.c.h.b16 %v6382
        %v8455 = vunpack.c.l.b16 %v6383
        %v8456 = vunpack.c.h.b16 %v6383
        %v8457 = vunpack.c.l.b16 %v6384
        %v8458 = vunpack.c.h.b16 %v6384
        %v8459 = vunpack.c.l.b16 %v6385
        %v8460 = vunpack.c.h.b16 %v6385
        %v8461 = vunpack.c.l.b16 %v6386
        %v8462 = vunpack.c.h.b16 %v6386
        %v8463 = vunpack.c.l.b16 %v6387
        %v8464 = vunpack.c.h.b16 %v6387
        %v8465 = vunpack.c.l.b16 %v6388
        %v8466 = vunpack.c.h.b16 %v6388
        %v8467 = vunpack.c.l.b16 %v6389
        %v8468 = vunpack.c.h.b16 %v6389
        %v8469 = vunpack.c.l.b16 %v6390
        %v8470 = vunpack.c.h.b16 %v6390
        %v8471 = vunpack.c.l.b16 %v6391
        %v8472 = vunpack.c.h.b16 %v6391
        %v8473 = vunpack.c.l.b16 %v6392
        %v8474 = vunpack.c.h.b16 %v6392
        %v8475 = vunpack.c.l.b16 %v6393
        %v8476 = vunpack.c.h.b16 %v6393
        %v8477 = vunpack.c.l.b16 %v6394
        %v8478 = vunpack.c.h.b16 %v6394
        %v8479 = vunpack.c.l.b16 %v6395
        %v8480 = vunpack.c.h.b16 %v6395
        %v8481 = vunpack.c.l.b16 %v6396
        %v8482 = vunpack.c.h.b16 %v6396
        %v8483 = vunpack.c.l.b16 %v6397
        %v8484 = vunpack.c.h.b16 %v6397
        %v8485 = vunpack.c.l.b16 %v6398
        %v8486 = vunpack.c.h.b16 %v6398
        %v8487 = vunpack.c.l.b16 %v6399
        %v8488 = vunpack.c.h.b16 %v6399
        %v8489 = vunpack.c.l.b16 %v6400
        %v8490 = vunpack.c.h.b16 %v6400
        %v8491 = vunpack.c.l.b16 %v6401
        %v8492 = vunpack.c.h.b16 %v6401
        %v8493 = vunpack.c.l.b16 %v6402
        %v8494 = vunpack.c.h.b16 %v6402
        %v8495 = vunpack.c.l.b16 %v6403
        %v8496 = vunpack.c.h.b16 %v6403
        %v8497 = vunpack.c.l.b16 %v6404
        %v8498 = vunpack.c.h.b16 %v6404
        %v8499 = vunpack.c.l.b16 %v6405
        %v8500 = vunpack.c.h.b16 %v6405
        %v8501 = vunpack.c.l.b16 %v6406
        %v8502 = vunpack.c.h.b16 %v6406
        %v8503 = vunpack.c.l.b16 %v6407
        %v8504 = vunpack.c.h.b16 %v6407
        %v8505 = vunpack.c.l.b16 %v6408
        %v8506 = vunpack.c.h.b16 %v6408
        %v8507 = vunpack.c.l.b16 %v6409
        %v8508 = vunpack.c.h.b16 %v6409
        %v8509 = vunpack.c.l.b16 %v6410
        %v8510 = vunpack.c.h.b16 %v6410
        %v8511 = vunpack.c.l.b16 %v6411
        %v8512 = vunpack.c.h.b16 %v6411
        %v8513 = vunpack.c.l.b16 %v6412
        %v8514 = vunpack.c.h.b16 %v6412
        %v8515 = vunpack.c.l.b16 %v6413
        %v8516 = vunpack.c.h.b16 %v6413
        %v8517 = vunpack.c.l.b16 %v6414
        %v8518 = vunpack.c.h.b16 %v6414
        %v8519 = vunpack.c.l.b16 %v6415
        %v8520 = vunpack.c.h.b16 %v6415
        %v8521 = vunpack.c.l.b16 %v6416
        %v8522 = vunpack.c.h.b16 %v6416
        %v8523 = vunpack.c.l.b16 %v6417
        %v8524 = vunpack.c.h.b16 %v6417
        %v8525 = vunpack.c.l.b16 %v6418
        %v8526 = vunpack.c.h.b16 %v6418
        %v8527 = vunpack.c.l.b16 %v6419
        %v8528 = vunpack.c.h.b16 %v6419
        %v8529 = vunpack.c.l.b16 %v6420
        %v8530 = vunpack.c.h.b16 %v6420
        %v8531 = vunpack.c.l.b16 %v6421
        %v8532 = vunpack.c.h.b16 %v6421
        %v8533 = vunpack.c.l.b16 %v6422
        %v8534 = vunpack.c.h.b16 %v6422
        %v8535 = vunpack.c.l.b16 %v6423
        %v8536 = vunpack.c.h.b16 %v6423
        %v8537 = vunpack.c.l.b16 %v6424
        %v8538 = vunpack.c.h.b16 %v6424
        %v8539 = vunpack.c.l.b16 %v6425
        %v8540 = vunpack.c.h.b16 %v6425
        %v8541 = vunpack.c.l.b16 %v6426
        %v8542 = vunpack.c.h.b16 %v6426
        %v8543 = vunpack.c.l.b16 %v6427
        %v8544 = vunpack.c.h.b16 %v6427
        %v8545 = vunpack.c.l.b16 %v6428
        %v8546 = vunpack.c.h.b16 %v6428
        %v8547 = vunpack.c.l.b16 %v6429
        %v8548 = vunpack.c.h.b16 %v6429
        %v8549 = vunpack.c.l.b16 %v6430
        %v8550 = vunpack.c.h.b16 %v6430
        %v8551 = vunpack.c.l.b16 %v6431
        %v8552 = vunpack.c.h.b16 %v6431
        %v8553 = vunpack.c.l.b16 %v6432
        %v8554 = vunpack.c.h.b16 %v6432
        %v8555 = vunpack.c.l.b16 %v6433
        %v8556 = vunpack.c.h.b16 %v6433
        %v8557 = vunpack.c.l.b16 %v6434
        %v8558 = vunpack.c.h.b16 %v6434
        %v8559 = vunpack.c.l.b16 %v6435
        %v8560 = vunpack.c.h.b16 %v6435
        %v8561 = vunpack.c.l.b16 %v6436
        %v8562 = vunpack.c.h.b16 %v6436
        %v8563 = vunpack.c.l.b16 %v6437
        %v8564 = vunpack.c.h.b16 %v6437
        %v8565 = vunpack.c.l.b16 %v6438
        %v8566 = vunpack.c.h.b16 %v6438
        %v8567 = vunpack.c.l.b16 %v6439
        %v8568 = vunpack.c.h.b16 %v6439
        %v8569 = vunpack.c.l.b16 %v6440
        %v8570 = vunpack.c.h.b16 %v6440
        %v8571 = vunpack.c.l.b16 %v6441
        %v8572 = vunpack.c.h.b16 %v6441
        %v8573 = vunpack.c.l.b16 %v6442
        %v8574 = vunpack.c.h.b16 %v6442
        %v8575 = vunpack.c.l.b16 %v6443
        %v8576 = vunpack.c.h.b16 %v6443
        %v8577 = vunpack.c.l.b16 %v6444
        %v8578 = vunpack.c.h.b16 %v6444
        %v8579 = vunpack.c.l.b16 %v6445
        %v8580 = vunpack.c.h.b16 %v6445
        %v8581 = vunpack.c.l.b16 %v6446
        %v8582 = vunpack.c.h.b16 %v6446
        %v8583 = vunpack.c.l.b16 %v6447
        %v8584 = vunpack.c.h.b16 %v6447
        %v8585 = vunpack.c.l.b16 %v6448
        %v8586 = vunpack.c.h.b16 %v6448
        %v8587 = vunpack.c.l.b16 %v6449
        %v8588 = vunpack.c.h.b16 %v6449
        %v8589 = vunpack.c.l.b16 %v6450
        %v8590 = vunpack.c.h.b16 %v6450
        %v8591 = vunpack.c.l.b16 %v6451
        %v8592 = vunpack.c.h.b16 %v6451
        %v8593 = vunpack.c.l.b16 %v6452
        %v8594 = vunpack.c.h.b16 %v6452
        %v8595 = vunpack.c.l.b16 %v6453
        %v8596 = vunpack.c.h.b16 %v6453
        %v8597 = vunpack.c.l.b16 %v6454
        %v8598 = vunpack.c.h.b16 %v6454
        %v8599 = vunpack.c.l.b16 %v6455
        %v8600 = vunpack.c.h.b16 %v6455
        %v8601 = vunpack.c.l.b16 %v6456
        %v8602 = vunpack.c.h.b16 %v6456
        %v8603 = vunpack.c.l.b16 %v6457
        %v8604 = vunpack.c.h.b16 %v6457
        %v8605 = vunpack.c.l.b16 %v6458
        %v8606 = vunpack.c.h.b16 %v6458
        %v8607 = vunpack.c.l.b16 %v6459
        %v8608 = vunpack.c.h.b16 %v6459
        %v8609 = vunpack.c.l.b16 %v6460
        %v8610 = vunpack.c.h.b16 %v6460
        %v8611 = vunpack.c.l.b16 %v6461
        %v8612 = vunpack.c.h.b16 %v6461
        %v8613 = vunpack.c.l.b16 %v6462
        %v8614 = vunpack.c.h.b16 %v6462
        %v8615 = vunpack.c.l.b16 %v6463
        %v8616 = vunpack.c.h.b16 %v6463
        %v8617 = vunpack.c.l.b16 %v6464
        %v8618 = vunpack.c.h.b16 %v6464
        %v8619 = vunpack.c.l.b16 %v6465
        %v8620 = vunpack.c.h.b16 %v6465
        %v8621 = vunpack.c.l.b16 %v6466
        %v8622 = vunpack.c.h.b16 %v6466
        %v8623 = vunpack.c.l.b16 %v6467
        %v8624 = vunpack.c.h.b16 %v6467
        %v8625 = vunpack.c.l.b16 %v6468
        %v8626 = vunpack.c.h.b16 %v6468
        %v8627 = vunpack.c.l.b16 %v6469
        %v8628 = vunpack.c.h.b16 %v6469
        %v8629 = vunpack.c.l.b16 %v6470
        %v8630 = vunpack.c.h.b16 %v6470
        %v8631 = vunpack.c.l.b16 %v6471
        %v8632 = vunpack.c.h.b16 %v6471
        %v8633 = vunpack.c.l.b16 %v6472
        %v8634 = vunpack.c.h.b16 %v6472
        %v8635 = vunpack.c.l.b16 %v6473
        %v8636 = vunpack.c.h.b16 %v6473
        %v8637 = vunpack.c.l.b16 %v6474
        %v8638 = vunpack.c.h.b16 %v6474
        %v8639 = vunpack.c.l.b16 %v6475
        %v8640 = vunpack.c.h.b16 %v6475
        %v8641 = vunpack.c.l.b16 %v6476
        %v8642 = vunpack.c.h.b16 %v6476
        %v8643 = vunpack.c.l.b16 %v6477
        %v8644 = vunpack.c.h.b16 %v6477
        %v8645 = vunpack.c.l.b16 %v6478
        %v8646 = vunpack.c.h.b16 %v6478
        %v8647 = vunpack.c.l.b16 %v6479
        %v8648 = vunpack.c.h.b16 %v6479
        %v8649 = vunpack.c.l.b16 %v6480
        %v8650 = vunpack.c.h.b16 %v6480
        %v8651 = vunpack.c.l.b16 %v6481
        %v8652 = vunpack.c.h.b16 %v6481
        %v8653 = vunpack.c.l.b16 %v6482
        %v8654 = vunpack.c.h.b16 %v6482
        %v8655 = vunpack.c.l.b16 %v6483
        %v8656 = vunpack.c.h.b16 %v6483
        %v8657 = vunpack.c.l.b16 %v6484
        %v8658 = vunpack.c.h.b16 %v6484
        %v8659 = vunpack.c.l.b16 %v6485
        %v8660 = vunpack.c.h.b16 %v6485
        %v8661 = vunpack.c.l.b16 %v6486
        %v8662 = vunpack.c.h.b16 %v6486
        %v8663 = vunpack.c.l.b16 %v6487
        %v8664 = vunpack.c.h.b16 %v6487
        %v8665 = vunpack.c.l.b16 %v6488
        %v8666 = vunpack.c.h.b16 %v6488
        %v8667 = vunpack.c.l.b16 %v6489
        %v8668 = vunpack.c.h.b16 %v6489
        %v8669 = vunpack.c.l.b16 %v6490
        %v8670 = vunpack.c.h.b16 %v6490
        %v8671 = vunpack.c.l.b16 %v6491
        %v8672 = vunpack.c.h.b16 %v6491
        %v8673 = vunpack.c.l.b16 %v6492
        %v8674 = vunpack.c.h.b16 %v6492
        %v8675 = vunpack.c.l.b16 %v6493
        %v8676 = vunpack.c.h.b16 %v6493
        %v8677 = vunpack.c.l.b16 %v6494
        %v8678 = vunpack.c.h.b16 %v6494
        %v8679 = vunpack.c.l.b16 %v6495
        %v8680 = vunpack.c.h.b16 %v6495
        %v8681 = vunpack.c.l.b16 %v6496
        %v8682 = vunpack.c.h.b16 %v6496
        %v8683 = vunpack.c.l.b16 %v6497
        %v8684 = vunpack.c.h.b16 %v6497
        %v8685 = vunpack.c.l.b16 %v6498
        %v8686 = vunpack.c.h.b16 %v6498
        %v8687 = vunpack.c.l.b16 %v6499
        %v8688 = vunpack.c.h.b16 %v6499
        %v8689 = vunpack.c.l.b16 %v6500
        %v8690 = vunpack.c.h.b16 %v6500
        %v8691 = vunpack.c.l.b16 %v6501
        %v8692 = vunpack.c.h.b16 %v6501
        %v8693 = vunpack.c.l.b16 %v6502
        %v8694 = vunpack.c.h.b16 %v6502
        %v8695 = vunpack.c.l.b16 %v6503
        %v8696 = vunpack.c.h.b16 %v6503
        %v8697 = vunpack.c.l.b16 %v6504
        %v8698 = vunpack.c.h.b16 %v6504
        %v8699 = vunpack.c.l.b16 %v6505
        %v8700 = vunpack.c.h.b16 %v6505
        %v8701 = vunpack.c.l.b16 %v6506
        %v8702 = vunpack.c.h.b16 %v6506
        %v8703 = vunpack.c.l.b16 %v6507
        %v8704 = vunpack.c.h.b16 %v6507
        %v8705 = vunpack.c.l.b16 %v6508
        %v8706 = vunpack.c.h.b16 %v6508
        %v8707 = vunpack.c.l.b16 %v6509
        %v8708 = vunpack.c.h.b16 %v6509
        %v8709 = vunpack.c.l.b16 %v6510
        %v8710 = vunpack.c.h.b16 %v6510
        %v8711 = vunpack.c.l.b16 %v6511
        %v8712 = vunpack.c.h.b16 %v6511
        %v8713 = vunpack.c.l.b16 %v6512
        %v8714 = vunpack.c.h.b16 %v6512
        %v8715 = vunpack.c.l.b16 %v6513
        %v8716 = vunpack.c.h.b16 %v6513
        %v8717 = vunpack.c.l.b16 %v6514
        %v8718 = vunpack.c.h.b16 %v6514
        %v8719 = vunpack.c.l.b16 %v6515
        %v8720 = vunpack.c.h.b16 %v6515
        %v8721 = vunpack.c.l.b16 %v6516
        %v8722 = vunpack.c.h.b16 %v6516
        %v8723 = vunpack.c.l.b16 %v6517
        %v8724 = vunpack.c.h.b16 %v6517
        %v8725 = vunpack.c.l.b16 %v6518
        %v8726 = vunpack.c.h.b16 %v6518
        %v8727 = vunpack.c.l.b16 %v6519
        %v8728 = vunpack.c.h.b16 %v6519
        %v8729 = vunpack.c.l.b16 %v6520
        %v8730 = vunpack.c.h.b16 %v6520
        %v8731 = vunpack.c.l.b16 %v6521
        %v8732 = vunpack.c.h.b16 %v6521
        %v8733 = vunpack.c.l.b16 %v6522
        %v8734 = vunpack.c.h.b16 %v6522
        %v8735 = vunpack.c.l.b16 %v6523
        %v8736 = vunpack.c.h.b16 %v6523
        %v8737 = vunpack.c.l.b16 %v6524
        %v8738 = vunpack.c.h.b16 %v6524
        %v8739 = vunpack.c.l.b16 %v6525
        %v8740 = vunpack.c.h.b16 %v6525
        %v8741 = vunpack.c.l.b16 %v6526
        %v8742 = vunpack.c.h.b16 %v6526
        %v8743 = vunpack.c.l.b16 %v6527
        %v8744 = vunpack.c.h.b16 %v6527
        %v8745 = vunpack.c.l.b16 %v6528
        %v8746 = vunpack.c.h.b16 %v6528
        %v8747 = vunpack.c.l.b16 %v6529
        %v8748 = vunpack.c.h.b16 %v6529
        %v8749 = vunpack.c.l.b16 %v6530
        %v8750 = vunpack.c.h.b16 %v6530
        %v8751 = vunpack.c.l.b16 %v6531
        %v8752 = vunpack.c.h.b16 %v6531
        %v8753 = vunpack.c.l.b16 %v6532
        %v8754 = vunpack.c.h.b16 %v6532
        %v8755 = vunpack.c.l.b16 %v6533
        %v8756 = vunpack.c.h.b16 %v6533
        %v8757 = vunpack.c.l.b16 %v6534
        %v8758 = vunpack.c.h.b16 %v6534
        %v8759 = vunpack.c.l.b16 %v6535
        %v8760 = vunpack.c.h.b16 %v6535
        %v8761 = vunpack.c.l.b16 %v6536
        %v8762 = vunpack.c.h.b16 %v6536
        %v8763 = vunpack.c.l.b16 %v6537
        %v8764 = vunpack.c.h.b16 %v6537
        %v8765 = vunpack.c.l.b16 %v6538
        %v8766 = vunpack.c.h.b16 %v6538
        %v8767 = vunpack.c.l.b16 %v6539
        %v8768 = vunpack.c.h.b16 %v6539
        %v8769 = vunpack.c.l.b16 %v6540
        %v8770 = vunpack.c.h.b16 %v6540
        %v8771 = vunpack.c.l.b16 %v6541
        %v8772 = vunpack.c.h.b16 %v6541
        %v8773 = vunpack.c.l.b16 %v6542
        %v8774 = vunpack.c.h.b16 %v6542
        %v8775 = vunpack.c.l.b16 %v6543
        %v8776 = vunpack.c.h.b16 %v6543
        %v8777 = vunpack.c.l.b16 %v6544
        %v8778 = vunpack.c.h.b16 %v6544
        %v8779 = vunpack.c.l.b16 %v6545
        %v8780 = vunpack.c.h.b16 %v6545
        %v8781 = vunpack.c.l.b16 %v6546
        %v8782 = vunpack.c.h.b16 %v6546
        %v8783 = vunpack.c.l.b16 %v6547
        %v8784 = vunpack.c.h.b16 %v6547
        %v8785 = vunpack.c.l.b16 %v6548
        %v8786 = vunpack.c.h.b16 %v6548
        %v8787 = vunpack.c.l.b16 %v6549
        %v8788 = vunpack.c.h.b16 %v6549
        %v8789 = vunpack.c.l.b16 %v6550
        %v8790 = vunpack.c.h.b16 %v6550
        %v8791 = vunpack.c.l.b16 %v6551
        %v8792 = vunpack.c.h.b16 %v6551
        %v8793 = vunpack.c.l.b16 %v6552
        %v8794 = vunpack.c.h.b16 %v6552
        %v8795 = vunpack.c.l.b16 %v6553
        %v8796 = vunpack.c.h.b16 %v6553
        %v8797 = vunpack.c.l.b16 %v6554
        %v8798 = vunpack.c.h.b16 %v6554
        %v8799 = vunpack.c.l.b16 %v6555
        %v8800 = vunpack.c.h.b16 %v6555
        %v8801 = vunpack.c.l.b16 %v6556
        %v8802 = vunpack.c.h.b16 %v6556
        %v8803 = vunpack.c.l.b16 %v6557
        %v8804 = vunpack.c.h.b16 %v6557
        %v8805 = vunpack.c.l.b16 %v6558
        %v8806 = vunpack.c.h.b16 %v6558
        %v8807 = vunpack.c.l.b16 %v6559
        %v8808 = vunpack.c.h.b16 %v6559
        %v8809 = vunpack.c.l.b16 %v6560
        %v8810 = vunpack.c.h.b16 %v6560
        %v8811 = vunpack.c.l.b16 %v6561
        %v8812 = vunpack.c.h.b16 %v6561
        %v8813 = vunpack.c.l.b16 %v6562
        %v8814 = vunpack.c.h.b16 %v6562
        %v8815 = vunpack.c.l.b16 %v6563
        %v8816 = vunpack.c.h.b16 %v6563
        %v8817 = vunpack.c.l.b16 %v6564
        %v8818 = vunpack.c.h.b16 %v6564
        %v8819 = vunpack.c.l.b16 %v6565
        %v8820 = vunpack.c.h.b16 %v6565
        %v8821 = vunpack.c.l.b16 %v6566
        %v8822 = vunpack.c.h.b16 %v6566
        %v8823 = vunpack.c.l.b16 %v6567
        %v8824 = vunpack.c.h.b16 %v6567
        %v8825 = vunpack.c.l.b16 %v6568
        %v8826 = vunpack.c.h.b16 %v6568
        %v8827 = vunpack.c.l.b16 %v6569
        %v8828 = vunpack.c.h.b16 %v6569
        %v8829 = vunpack.c.l.b16 %v6570
        %v8830 = vunpack.c.h.b16 %v6570
        %v8831 = vunpack.c.l.b16 %v6571
        %v8832 = vunpack.c.h.b16 %v6571
        %v8833 = vunpack.c.l.b16 %v6572
        %v8834 = vunpack.c.h.b16 %v6572
        %v8835 = vunpack.c.l.b16 %v6573
        %v8836 = vunpack.c.h.b16 %v6573
        %v8837 = vunpack.c.l.b16 %v6574
        %v8838 = vunpack.c.h.b16 %v6574
        %v8839 = vunpack.c.l.b16 %v6575
        %v8840 = vunpack.c.h.b16 %v6575
        %v8841 = vunpack.c.l.b16 %v6576
        %v8842 = vunpack.c.h.b16 %v6576
        %v8843 = vunpack.c.l.b16 %v6577
        %v8844 = vunpack.c.h.b16 %v6577
        %v8845 = vunpack.c.l.b16 %v6578
        %v8846 = vunpack.c.h.b16 %v6578
        %v8847 = vunpack.c.l.b16 %v6579
        %v8848 = vunpack.c.h.b16 %v6579
        %v8849 = vunpack.c.l.b16 %v6580
        %v8850 = vunpack.c.h.b16 %v6580
        %v8851 = vunpack.c.l.b16 %v6581
        %v8852 = vunpack.c.h.b16 %v6581
        %v8853 = vunpack.c.l.b16 %v6582
        %v8854 = vunpack.c.h.b16 %v6582
        %v8855 = vunpack.c.l.b16 %v6583
        %v8856 = vunpack.c.h.b16 %v6583
        %v8857 = vunpack.c.l.b16 %v6584
        %v8858 = vunpack.c.h.b16 %v6584
        %v8859 = vunpack.c.l.b16 %v6585
        %v8860 = vunpack.c.h.b16 %v6585
        %v8861 = vunpack.c.l.b16 %v6586
        %v8862 = vunpack.c.h.b16 %v6586
        %v8863 = vunpack.c.l.b16 %v6587
        %v8864 = vunpack.c.h.b16 %v6587
        %v8865 = vunpack.c.l.b16 %v6588
        %v8866 = vunpack.c.h.b16 %v6588
        %v8867 = vunpack.c.l.b16 %v6589
        %v8868 = vunpack.c.h.b16 %v6589
        %v8869 = vunpack.c.l.b16 %v6590
        %v8870 = vunpack.c.h.b16 %v6590
        %v8871 = vunpack.c.l.b16 %v6591
        %v8872 = vunpack.c.h.b16 %v6591
        %v8873 = vunpack.c.l.b16 %v6592
        %v8874 = vunpack.c.h.b16 %v6592
        %v8875 = vunpack.c.l.b16 %v6593
        %v8876 = vunpack.c.h.b16 %v6593
        %v8877 = vunpack.c.l.b16 %v6594
        %v8878 = vunpack.c.h.b16 %v6594
        %v8879 = vunpack.c.l.b16 %v6595
        %v8880 = vunpack.c.h.b16 %v6595
        %v8881 = vunpack.c.l.b16 %v6596
        %v8882 = vunpack.c.h.b16 %v6596
        %v8883 = vunpack.c.l.b16 %v6597
        %v8884 = vunpack.c.h.b16 %v6597
        %v8885 = vunpack.c.l.b16 %v6598
        %v8886 = vunpack.c.h.b16 %v6598
        %v8887 = vunpack.c.l.b16 %v6599
        %v8888 = vunpack.c.h.b16 %v6599
        %v8889 = vunpack.c.l.b16 %v6600
        %v8890 = vunpack.c.h.b16 %v6600
        %v8891 = vunpack.c.l.b16 %v6601
        %v8892 = vunpack.c.h.b16 %v6601
        %v8893 = vunpack.c.l.b16 %v6602
        %v8894 = vunpack.c.h.b16 %v6602
        %v8895 = vunpack.c.l.b16 %v6603
        %v8896 = vunpack.c.h.b16 %v6603
        %v8897 = vunpack.c.l.b16 %v6604
        %v8898 = vunpack.c.h.b16 %v6604
        %v8899 = vunpack.c.l.b16 %v6605
        %v8900 = vunpack.c.h.b16 %v6605
        %v8901 = vunpack.c.l.b16 %v6606
        %v8902 = vunpack.c.h.b16 %v6606
        %v8903 = vunpack.c.l.b16 %v6607
        %v8904 = vunpack.c.h.b16 %v6607
        %v8905 = vunpack.c.l.b16 %v6608
        %v8906 = vunpack.c.h.b16 %v6608
        %v8907 = vunpack.c.l.b16 %v6609
        %v8908 = vunpack.c.h.b16 %v6609
        %v8909 = vunpack.c.l.b16 %v6610
        %v8910 = vunpack.c.h.b16 %v6610
        %v8911 = vunpack.c.l.b16 %v6611
        %v8912 = vunpack.c.h.b16 %v6611
        %v8913 = vunpack.c.l.b16 %v6612
        %v8914 = vunpack.c.h.b16 %v6612
        %v8915 = vunpack.c.l.b16 %v6613
        %v8916 = vunpack.c.h.b16 %v6613
        %v8917 = vunpack.c.l.b16 %v6614
        %v8918 = vunpack.c.h.b16 %v6614
        %v8919 = vpack.c.b16 %v7389, %v7383
        %v8920 = vpack.c.b16 %v7390, %v7384
        %v8921 = vpack.c.b16 %v7391, %v7385
        %v8922 = vpack.c.b16 %v7392, %v7386
        %v8923 = vpack.c.b16 %v7393, %v7387
        %v8924 = vpack.c.b16 %v7394, %v7388
        %v8925 = vpack.c.b16 %v7401, %v7395
        %v8926 = vpack.c.b16 %v7402, %v7396
        %v8927 = vpack.c.b16 %v7403, %v7397
        %v8928 = vpack.c.b16 %v7404, %v7398
        %v8929 = vpack.c.b16 %v7405, %v7399
        %v8930 = vpack.c.b16 %v7406, %v7400
        %v8931 = vpack.c.b16 %v7413, %v7407
        %v8932 = vpack.c.b16 %v7414, %v7408
        %v8933 = vpack.c.b16 %v7415, %v7409
        %v8934 = vpack.c.b16 %v7416, %v7410
        %v8935 = vpack.c.b16 %v7417, %v7411
        %v8936 = vpack.c.b16 %v7418, %v7412
        %v8937 = vpack.c.b16 %v7425, %v7419
        %v8938 = vpack.c.b16 %v7426, %v7420
        %v8939 = vpack.c.b16 %v7427, %v7421
        %v8940 = vpack.c.b16 %v7428, %v7422
        %v8941 = vpack.c.b16 %v7429, %v7423
        %v8942 = vpack.c.b16 %v7430, %v7424
        %v8943 = vpack.c.b16 %v7437, %v7431
        %v8944 = vpack.c.b16 %v7438, %v7432
        %v8945 = vpack.c.b16 %v7439, %v7433
        %v8946 = vpack.c.b16 %v7440, %v7434
        %v8947 = vpack.c.b16 %v7441, %v7435
        %v8948 = vpack.c.b16 %v7442, %v7436
        %v8949 = vpack.c.b16 %v7449, %v7443
        %v8950 = vpack.c.b16 %v7450, %v7444
        %v8951 = vpack.c.b16 %v7451, %v7445
        %v8952 = vpack.c.b16 %v7452, %v7446
        %v8953 = vpack.c.b16 %v7453, %v7447
        %v8954 = vpack.c.b16 %v7454, %v7448
        %v8955 = vpack.c.b16 %v7461, %v7455
        %v8956 = vpack.c.b16 %v7462, %v7456
        %v8957 = vpack.c.b16 %v7463, %v7457
        %v8958 = vpack.c.b16 %v7464, %v7458
        %v8959 = vpack.c.b16 %v7465, %v7459
        %v8960 = vpack.c.b16 %v7466, %v7460
        %v8961 = vpack.c.b16 %v7473, %v7467
        %v8962 = vpack.c.b16 %v7474, %v7468
        %v8963 = vpack.c.b16 %v7475, %v7469
        %v8964 = vpack.c.b16 %v7476, %v7470
        %v8965 = vpack.c.b16 %v7477, %v7471
        %v8966 = vpack.c.b16 %v7478, %v7472
        %v8967 = vpack.c.b16 %v7485, %v7479
        %v8968 = vpack.c.b16 %v7486, %v7480
        %v8969 = vpack.c.b16 %v7487, %v7481
        %v8970 = vpack.c.b16 %v7488, %v7482
        %v8971 = vpack.c.b16 %v7489, %v7483
        %v8972 = vpack.c.b16 %v7490, %v7484
        %v8973 = vpack.c.b16 %v7497, %v7491
        %v8974 = vpack.c.b16 %v7498, %v7492
        %v8975 = vpack.c.b16 %v7499, %v7493
        %v8976 = vpack.c.b16 %v7500, %v7494
        %v8977 = vpack.c.b16 %v7501, %v7495
        %v8978 = vpack.c.b16 %v7502, %v7496
        %v8979 = vpack.c.b16 %v7509, %v7503
        %v8980 = vpack.c.b16 %v7510, %v7504
        %v8981 = vpack.c.b16 %v7511, %v7505
        %v8982 = vpack.c.b16 %v7512, %v7506
        %v8983 = vpack.c.b16 %v7513, %v7507
        %v8984 = vpack.c.b16 %v7514, %v7508
        %v8985 = vpack.c.b16 %v7521, %v7515
        %v8986 = vpack.c.b16 %v7522, %v7516
        %v8987 = vpack.c.b16 %v7523, %v7517
        %v8988 = vpack.c.b16 %v7524, %v7518
        %v8989 = vpack.c.b16 %v7525, %v7519
        %v8990 = vpack.c.b16 %v7526, %v7520
        %v8991 = vpack.c.b16 %v7533, %v7527
        %v8992 = vpack.c.b16 %v7534, %v7528
        %v8993 = vpack.c.b16 %v7535, %v7529
        %v8994 = vpack.c.b16 %v7536, %v7530
        %v8995 = vpack.c.b16 %v7537, %v7531
        %v8996 = vpack.c.b16 %v7538, %v7532
        %v8997 = vpack.c.b16 %v7545, %v7539
        %v8998 = vpack.c.b16 %v7546, %v7540
        %v8999 = vpack.c.b16 %v7547, %v7541
        %v9000 = vpack.c.b16 %v7548, %v7542
        %v9001 = vpack.c.b16 %v7549, %v7543
        %v9002 = vpack.c.b16 %v7550, %v7544
        %v9003 = vpack.c.b16 %v7557, %v7551
        %v9004 = vpack.c.b16 %v7558, %v7552
        %v9005 = vpack.c.b16 %v7559, %v7553
        %v9006 = vpack.c.b16 %v7560, %v7554
        %v9007 = vpack.c.b16 %v7561, %v7555
        %v9008 = vpack.c.b16 %v7562, %v7556
        %v9009 = vpack.c.b16 %v7569, %v7563
        %v9010 = vpack.c.b16 %v7570, %v7564
        %v9011 = vpack.c.b16 %v7571, %v7565
        %v9012 = vpack.c.b16 %v7572, %v7566
        %v9013 = vpack.c.b16 %v7573, %v7567
        %v9014 = vpack.c.b16 %v7574, %v7568
        %v9015 = vpack.c.b16 %v7581, %v7575
        %v9016 = vpack.c.b16 %v7582, %v7576
        %v9017 = vpack.c.b16 %v7583, %v7577
        %v9018 = vpack.c.b16 %v7584, %v7578
        %v9019 = vpack.c.b16 %v7585, %v7579
        %v9020 = vpack.c.b16 %v7586, %v7580
        %v9021 = vpack.c.b16 %v7593, %v7587
        %v9022 = vpack.c.b16 %v7594, %v7588
        %v9023 = vpack.c.b16 %v7595, %v7589
        %v9024 = vpack.c.b16 %v7596, %v7590
        %v9025 = vpack.c.b16 %v7597, %v7591
        %v9026 = vpack.c.b16 %v7598, %v7592
        %v9027 = vpack.c.b16 %v7605, %v7599
        %v9028 = vpack.c.b16 %v7606, %v7600
        %v9029 = vpack.c.b16 %v7607, %v7601
        %v9030 = vpack.c.b16 %v7608, %v7602
        %v9031 = vpack.c.b16 %v7609, %v7603
        %v9032 = vpack.c.b16 %v7610, %v7604
        %v9033 = vpack.c.b16 %v7617, %v7611
        %v9034 = vpack.c.b16 %v7618, %v7612
        %v9035 = vpack.c.b16 %v7619, %v7613
        %v9036 = vpack.c.b16 %v7620, %v7614
        %v9037 = vpack.c.b16 %v7621, %v7615
        %v9038 = vpack.c.b16 %v7622, %v7616
        %v9039 = vpack.c.b16 %v7629, %v7623
        %v9040 = vpack.c.b16 %v7630, %v7624
        %v9041 = vpack.c.b16 %v7631, %v7625
        %v9042 = vpack.c.b16 %v7632, %v7626
        %v9043 = vpack.c.b16 %v7633, %v7627
        %v9044 = vpack.c.b16 %v7634, %v7628
        %v9045 = vpack.c.b16 %v7641, %v7635
        %v9046 = vpack.c.b16 %v7642, %v7636
        %v9047 = vpack.c.b16 %v7643, %v7637
        %v9048 = vpack.c.b16 %v7644, %v7638
        %v9049 = vpack.c.b16 %v7645, %v7639
        %v9050 = vpack.c.b16 %v7646, %v7640
        %v9051 = vpack.c.b16 %v7653, %v7647
        %v9052 = vpack.c.b16 %v7654, %v7648
        %v9053 = vpack.c.b16 %v7655, %v7649
        %v9054 = vpack.c.b16 %v7656, %v7650
        %v9055 = vpack.c.b16 %v7657, %v7651
        %v9056 = vpack.c.b16 %v7658, %v7652
        %v9057 = vpack.c.b16 %v7665, %v7659
        %v9058 = vpack.c.b16 %v7666, %v7660
        %v9059 = vpack.c.b16 %v7667, %v7661
        %v9060 = vpack.c.b16 %v7668, %v7662
        %v9061 = vpack.c.b16 %v7669, %v7663
        %v9062 = vpack.c.b16 %v7670, %v7664
        %v9063 = vpack.c.b16 %v7677, %v7671
        %v9064 = vpack.c.b16 %v7678, %v7672
        %v9065 = vpack.c.b16 %v7679, %v7673
        %v9066 = vpack.c.b16 %v7680, %v7674
        %v9067 = vpack.c.b16 %v7681, %v7675
        %v9068 = vpack.c.b16 %v7682, %v7676
        %v9069 = vpack.c.b16 %v7689, %v7683
        %v9070 = vpack.c.b16 %v7690, %v7684
        %v9071 = vpack.c.b16 %v7691, %v7685
        %v9072 = vpack.c.b16 %v7692, %v7686
        %v9073 = vpack.c.b16 %v7693, %v7687
        %v9074 = vpack.c.b16 %v7694, %v7688
        %v9075 = vpack.c.b16 %v7701, %v7695
        %v9076 = vpack.c.b16 %v7702, %v7696
        %v9077 = vpack.c.b16 %v7703, %v7697
        %v9078 = vpack.c.b16 %v7704, %v7698
        %v9079 = vpack.c.b16 %v7705, %v7699
        %v9080 = vpack.c.b16 %v7706, %v7700
        %v9081 = vpack.c.b16 %v7713, %v7707
        %v9082 = vpack.c.b16 %v7714, %v7708
        %v9083 = vpack.c.b16 %v7715, %v7709
        %v9084 = vpack.c.b16 %v7716, %v7710
        %v9085 = vpack.c.b16 %v7717, %v7711
        %v9086 = vpack.c.b16 %v7718, %v7712
        %v9087 = vpack.c.b16 %v7725, %v7719
        %v9088 = vpack.c.b16 %v7726, %v7720
        %v9089 = vpack.c.b16 %v7727, %v7721
        %v9090 = vpack.c.b16 %v7728, %v7722
        %v9091 = vpack.c.b16 %v7729, %v7723
        %v9092 = vpack.c.b16 %v7730, %v7724
        %v9093 = vpack.c.b16 %v7737, %v7731
        %v9094 = vpack.c.b16 %v7738, %v7732
        %v9095 = vpack.c.b16 %v7739, %v7733
        %v9096 = vpack.c.b16 %v7740, %v7734
        %v9097 = vpack.c.b16 %v7741, %v7735
        %v9098 = vpack.c.b16 %v7742, %v7736
        %v9099 = vpack.c.b16 %v7749, %v7743
        %v9100 = vpack.c.b16 %v7750, %v7744
        %v9101 = vpack.c.b16 %v7751, %v7745
        %v9102 = vpack.c.b16 %v7752, %v7746
        %v9103 = vpack.c.b16 %v7753, %v7747
        %v9104 = vpack.c.b16 %v7754, %v7748
        %v9105 = vpack.c.b16 %v7761, %v7755
        %v9106 = vpack.c.b16 %v7762, %v7756
        %v9107 = vpack.c.b16 %v7763, %v7757
        %v9108 = vpack.c.b16 %v7764, %v7758
        %v9109 = vpack.c.b16 %v7765, %v7759
        %v9110 = vpack.c.b16 %v7766, %v7760
        %v9111 = vpack.c.b16 %v7773, %v7767
        %v9112 = vpack.c.b16 %v7774, %v7768
        %v9113 = vpack.c.b16 %v7775, %v7769
        %v9114 = vpack.c.b16 %v7776, %v7770
        %v9115 = vpack.c.b16 %v7777, %v7771
        %v9116 = vpack.c.b16 %v7778, %v7772
        %v9117 = vpack.c.b16 %v7785, %v7779
        %v9118 = vpack.c.b16 %v7786, %v7780
        %v9119 = vpack.c.b16 %v7787, %v7781
        %v9120 = vpack.c.b16 %v7788, %v7782
        %v9121 = vpack.c.b16 %v7789, %v7783
        %v9122 = vpack.c.b16 %v7790, %v7784
        %v9123 = vpack.c.b16 %v7797, %v7791
        %v9124 = vpack.c.b16 %v7798, %v7792
        %v9125 = vpack.c.b16 %v7799, %v7793
        %v9126 = vpack.c.b16 %v7800, %v7794
        %v9127 = vpack.c.b16 %v7801, %v7795
        %v9128 = vpack.c.b16 %v7802, %v7796
        %v9129 = vpack.c.b16 %v7809, %v7803
        %v9130 = vpack.c.b16 %v7810, %v7804
        %v9131 = vpack.c.b16 %v7811, %v7805
        %v9132 = vpack.c.b16 %v7812, %v7806
        %v9133 = vpack.c.b16 %v7813, %v7807
        %v9134 = vpack.c.b16 %v7814, %v7808
        %v9135 = vpack.c.b16 %v7821, %v7815
        %v9136 = vpack.c.b16 %v7822, %v7816
        %v9137 = vpack.c.b16 %v7823, %v7817
        %v9138 = vpack.c.b16 %v7824, %v7818
        %v9139 = vpack.c.b16 %v7825, %v7819
        %v9140 = vpack.c.b16 %v7826, %v7820
        %v9141 = vpack.c.b16 %v7833, %v7827
        %v9142 = vpack.c.b16 %v7834, %v7828
        %v9143 = vpack.c.b16 %v7835, %v7829
        %v9144 = vpack.c.b16 %v7836, %v7830
        %v9145 = vpack.c.b16 %v7837, %v7831
        %v9146 = vpack.c.b16 %v7838, %v7832
        %v9147 = vpack.c.b16 %v7845, %v7839
        %v9148 = vpack.c.b16 %v7846, %v7840
        %v9149 = vpack.c.b16 %v7847, %v7841
        %v9150 = vpack.c.b16 %v7848, %v7842
        %v9151 = vpack.c.b16 %v7849, %v7843
        %v9152 = vpack.c.b16 %v7850, %v7844
        %v9153 = vpack.c.b16 %v7857, %v7851
        %v9154 = vpack.c.b16 %v7858, %v7852
        %v9155 = vpack.c.b16 %v7859, %v7853
        %v9156 = vpack.c.b16 %v7860, %v7854
        %v9157 = vpack.c.b16 %v7861, %v7855
        %v9158 = vpack.c.b16 %v7862, %v7856
        %v9159 = vpack.c.b16 %v7869, %v7863
        %v9160 = vpack.c.b16 %v7870, %v7864
        %v9161 = vpack.c.b16 %v7871, %v7865
        %v9162 = vpack.c.b16 %v7872, %v7866
        %v9163 = vpack.c.b16 %v7873, %v7867
        %v9164 = vpack.c.b16 %v7874, %v7868
        %v9165 = vpack.c.b16 %v7881, %v7875
        %v9166 = vpack.c.b16 %v7882, %v7876
        %v9167 = vpack.c.b16 %v7883, %v7877
        %v9168 = vpack.c.b16 %v7884, %v7878
        %v9169 = vpack.c.b16 %v7885, %v7879
        %v9170 = vpack.c.b16 %v7886, %v7880
        %v9171 = vpack.c.b16 %v7893, %v7887
        %v9172 = vpack.c.b16 %v7894, %v7888
        %v9173 = vpack.c.b16 %v7895, %v7889
        %v9174 = vpack.c.b16 %v7896, %v7890
        %v9175 = vpack.c.b16 %v7897, %v7891
        %v9176 = vpack.c.b16 %v7898, %v7892
        %v9177 = vpack.c.b16 %v7905, %v7899
        %v9178 = vpack.c.b16 %v7906, %v7900
        %v9179 = vpack.c.b16 %v7907, %v7901
        %v9180 = vpack.c.b16 %v7908, %v7902
        %v9181 = vpack.c.b16 %v7909, %v7903
        %v9182 = vpack.c.b16 %v7910, %v7904
        %v9183 = vpack.c.b16 %v7917, %v7911
        %v9184 = vpack.c.b16 %v7918, %v7912
        %v9185 = vpack.c.b16 %v7919, %v7913
        %v9186 = vpack.c.b16 %v7920, %v7914
        %v9187 = vpack.c.b16 %v7921, %v7915
        %v9188 = vpack.c.b16 %v7922, %v7916
        %v9189 = vpack.c.b16 %v7929, %v7923
        %v9190 = vpack.c.b16 %v7930, %v7924
        %v9191 = vpack.c.b16 %v7931, %v7925
        %v9192 = vpack.c.b16 %v7932, %v7926
        %v9193 = vpack.c.b16 %v7933, %v7927
        %v9194 = vpack.c.b16 %v7934, %v7928
        %v9195 = vpack.c.b16 %v7941, %v7935
        %v9196 = vpack.c.b16 %v7942, %v7936
        %v9197 = vpack.c.b16 %v7943, %v7937
        %v9198 = vpack.c.b16 %v7944, %v7938
        %v9199 = vpack.c.b16 %v7945, %v7939
        %v9200 = vpack.c.b16 %v7946, %v7940
        %v9201 = vpack.c.b16 %v7953, %v7947
        %v9202 = vpack.c.b16 %v7954, %v7948
        %v9203 = vpack.c.b16 %v7955, %v7949
        %v9204 = vpack.c.b16 %v7956, %v7950
        %v9205 = vpack.c.b16 %v7957, %v7951
        %v9206 = vpack.c.b16 %v7958, %v7952
        %v9207 = vpack.c.b16 %v7965, %v7959
        %v9208 = vpack.c.b16 %v7966, %v7960
        %v9209 = vpack.c.b16 %v7967, %v7961
        %v9210 = vpack.c.b16 %v7968, %v7962
        %v9211 = vpack.c.b16 %v7969, %v7963
        %v9212 = vpack.c.b16 %v7970, %v7964
        %v9213 = vpack.c.b16 %v7977, %v7971
        %v9214 = vpack.c.b16 %v7978, %v7972
        %v9215 = vpack.c.b16 %v7979, %v7973
        %v9216 = vpack.c.b16 %v7980, %v7974
        %v9217 = vpack.c.b16 %v7981, %v7975
        %v9218 = vpack.c.b16 %v7982, %v7976
        %v9219 = vpack.c.b16 %v7989, %v7983
        %v9220 = vpack.c.b16 %v7990, %v7984
        %v9221 = vpack.c.b16 %v7991, %v7985
        %v9222 = vpack.c.b16 %v7992, %v7986
        %v9223 = vpack.c.b16 %v7993, %v7987
        %v9224 = vpack.c.b16 %v7994, %v7988
        %v9225 = vpack.c.b16 %v8001, %v7995
        %v9226 = vpack.c.b16 %v8002, %v7996
        %v9227 = vpack.c.b16 %v8003, %v7997
        %v9228 = vpack.c.b16 %v8004, %v7998
        %v9229 = vpack.c.b16 %v8005, %v7999
        %v9230 = vpack.c.b16 %v8006, %v8000
        %v9231 = vpack.c.b16 %v8013, %v8007
        %v9232 = vpack.c.b16 %v8014, %v8008
        %v9233 = vpack.c.b16 %v8015, %v8009
        %v9234 = vpack.c.b16 %v8016, %v8010
        %v9235 = vpack.c.b16 %v8017, %v8011
        %v9236 = vpack.c.b16 %v8018, %v8012
        %v9237 = vpack.c.b16 %v8025, %v8019
        %v9238 = vpack.c.b16 %v8026, %v8020
        %v9239 = vpack.c.b16 %v8027, %v8021
        %v9240 = vpack.c.b16 %v8028, %v8022
        %v9241 = vpack.c.b16 %v8029, %v8023
        %v9242 = vpack.c.b16 %v8030, %v8024
        %v9243 = vpack.c.b16 %v8037, %v8031
        %v9244 = vpack.c.b16 %v8038, %v8032
        %v9245 = vpack.c.b16 %v8039, %v8033
        %v9246 = vpack.c.b16 %v8040, %v8034
        %v9247 = vpack.c.b16 %v8041, %v8035
        %v9248 = vpack.c.b16 %v8042, %v8036
        %v9249 = vpack.c.b16 %v8049, %v8043
        %v9250 = vpack.c.b16 %v8050, %v8044
        %v9251 = vpack.c.b16 %v8051, %v8045
        %v9252 = vpack.c.b16 %v8052, %v8046
        %v9253 = vpack.c.b16 %v8053, %v8047
        %v9254 = vpack.c.b16 %v8054, %v8048
        %v9255 = vpack.c.b16 %v8061, %v8055
        %v9256 = vpack.c.b16 %v8062, %v8056
        %v9257 = vpack.c.b16 %v8063, %v8057
        %v9258 = vpack.c.b16 %v8064, %v8058
        %v9259 = vpack.c.b16 %v8065, %v8059
        %v9260 = vpack.c.b16 %v8066, %v8060
        %v9261 = vpack.c.b16 %v8073, %v8067
        %v9262 = vpack.c.b16 %v8074, %v8068
        %v9263 = vpack.c.b16 %v8075, %v8069
        %v9264 = vpack.c.b16 %v8076, %v8070
        %v9265 = vpack.c.b16 %v8077, %v8071
        %v9266 = vpack.c.b16 %v8078, %v8072
        %v9267 = vpack.c.b16 %v8085, %v8079
        %v9268 = vpack.c.b16 %v8086, %v8080
        %v9269 = vpack.c.b16 %v8087, %v8081
        %v9270 = vpack.c.b16 %v8088, %v8082
        %v9271 = vpack.c.b16 %v8089, %v8083
        %v9272 = vpack.c.b16 %v8090, %v8084
        %v9273 = vpack.c.b16 %v8097, %v8091
        %v9274 = vpack.c.b16 %v8098, %v8092
        %v9275 = vpack.c.b16 %v8099, %v8093
        %v9276 = vpack.c.b16 %v8100, %v8094
        %v9277 = vpack.c.b16 %v8101, %v8095
        %v9278 = vpack.c.b16 %v8102, %v8096
        %v9279 = vpack.c.b16 %v8109, %v8103
        %v9280 = vpack.c.b16 %v8110, %v8104
        %v9281 = vpack.c.b16 %v8111, %v8105
        %v9282 = vpack.c.b16 %v8112, %v8106
        %v9283 = vpack.c.b16 %v8113, %v8107
        %v9284 = vpack.c.b16 %v8114, %v8108
        %v9285 = vpack.c.b16 %v8121, %v8115
        %v9286 = vpack.c.b16 %v8122, %v8116
        %v9287 = vpack.c.b16 %v8123, %v8117
        %v9288 = vpack.c.b16 %v8124, %v8118
        %v9289 = vpack.c.b16 %v8125, %v8119
        %v9290 = vpack.c.b16 %v8126, %v8120
        %v9291 = vpack.c.b16 %v8133, %v8127
        %v9292 = vpack.c.b16 %v8134, %v8128
        %v9293 = vpack.c.b16 %v8135, %v8129
        %v9294 = vpack.c.b16 %v8136, %v8130
        %v9295 = vpack.c.b16 %v8137, %v8131
        %v9296 = vpack.c.b16 %v8138, %v8132
        %v9297 = vpack.c.b16 %v8145, %v8139
        %v9298 = vpack.c.b16 %v8146, %v8140
        %v9299 = vpack.c.b16 %v8147, %v8141
        %v9300 = vpack.c.b16 %v8148, %v8142
        %v9301 = vpack.c.b16 %v8149, %v8143
        %v9302 = vpack.c.b16 %v8150, %v8144
        %v9303 = vpack.c.b16 %v8157, %v8151
        %v9304 = vpack.c.b16 %v8158, %v8152
        %v9305 = vpack.c.b16 %v8159, %v8153
        %v9306 = vpack.c.b16 %v8160, %v8154
        %v9307 = vpack.c.b16 %v8161, %v8155
        %v9308 = vpack.c.b16 %v8162, %v8156
        %v9309 = vpack.c.b16 %v8169, %v8163
        %v9310 = vpack.c.b16 %v8170, %v8164
        %v9311 = vpack.c.b16 %v8171, %v8165
        %v9312 = vpack.c.b16 %v8172, %v8166
        %v9313 = vpack.c.b16 %v8173, %v8167
        %v9314 = vpack.c.b16 %v8174, %v8168
        %v9315 = vpack.c.b16 %v8181, %v8175
        %v9316 = vpack.c.b16 %v8182, %v8176
        %v9317 = vpack.c.b16 %v8183, %v8177
        %v9318 = vpack.c.b16 %v8184, %v8178
        %v9319 = vpack.c.b16 %v8185, %v8179
        %v9320 = vpack.c.b16 %v8186, %v8180
        %v9321 = vpack.c.b16 %v8193, %v8187
        %v9322 = vpack.c.b16 %v8194, %v8188
        %v9323 = vpack.c.b16 %v8195, %v8189
        %v9324 = vpack.c.b16 %v8196, %v8190
        %v9325 = vpack.c.b16 %v8197, %v8191
        %v9326 = vpack.c.b16 %v8198, %v8192
        %v9327 = vpack.c.b16 %v8205, %v8199
        %v9328 = vpack.c.b16 %v8206, %v8200
        %v9329 = vpack.c.b16 %v8207, %v8201
        %v9330 = vpack.c.b16 %v8208, %v8202
        %v9331 = vpack.c.b16 %v8209, %v8203
        %v9332 = vpack.c.b16 %v8210, %v8204
        %v9333 = vpack.c.b16 %v8217, %v8211
        %v9334 = vpack.c.b16 %v8218, %v8212
        %v9335 = vpack.c.b16 %v8219, %v8213
        %v9336 = vpack.c.b16 %v8220, %v8214
        %v9337 = vpack.c.b16 %v8221, %v8215
        %v9338 = vpack.c.b16 %v8222, %v8216
        %v9339 = vpack.c.b16 %v8229, %v8223
        %v9340 = vpack.c.b16 %v8230, %v8224
        %v9341 = vpack.c.b16 %v8231, %v8225
        %v9342 = vpack.c.b16 %v8232, %v8226
        %v9343 = vpack.c.b16 %v8233, %v8227
        %v9344 = vpack.c.b16 %v8234, %v8228
        %v9345 = vpack.c.b16 %v8241, %v8235
        %v9346 = vpack.c.b16 %v8242, %v8236
        %v9347 = vpack.c.b16 %v8243, %v8237
        %v9348 = vpack.c.b16 %v8244, %v8238
        %v9349 = vpack.c.b16 %v8245, %v8239
        %v9350 = vpack.c.b16 %v8246, %v8240
        %v9351 = vpack.c.b16 %v8253, %v8247
        %v9352 = vpack.c.b16 %v8254, %v8248
        %v9353 = vpack.c.b16 %v8255, %v8249
        %v9354 = vpack.c.b16 %v8256, %v8250
        %v9355 = vpack.c.b16 %v8257, %v8251
        %v9356 = vpack.c.b16 %v8258, %v8252
        %v9357 = vpack.c.b16 %v8265, %v8259
        %v9358 = vpack.c.b16 %v8266, %v8260
        %v9359 = vpack.c.b16 %v8267, %v8261
        %v9360 = vpack.c.b16 %v8268, %v8262
        %v9361 = vpack.c.b16 %v8269, %v8263
        %v9362 = vpack.c.b16 %v8270, %v8264
        %v9363 = vpack.c.b16 %v8277, %v8271
        %v9364 = vpack.c.b16 %v8278, %v8272
        %v9365 = vpack.c.b16 %v8279, %v8273
        %v9366 = vpack.c.b16 %v8280, %v8274
        %v9367 = vpack.c.b16 %v8281, %v8275
        %v9368 = vpack.c.b16 %v8282, %v8276
        %v9369 = vpack.c.b16 %v8289, %v8283
        %v9370 = vpack.c.b16 %v8290, %v8284
        %v9371 = vpack.c.b16 %v8291, %v8285
        %v9372 = vpack.c.b16 %v8292, %v8286
        %v9373 = vpack.c.b16 %v8293, %v8287
        %v9374 = vpack.c.b16 %v8294, %v8288
        %v9375 = vpack.c.b16 %v8301, %v8295
        %v9376 = vpack.c.b16 %v8302, %v8296
        %v9377 = vpack.c.b16 %v8303, %v8297
        %v9378 = vpack.c.b16 %v8304, %v8298
        %v9379 = vpack.c.b16 %v8305, %v8299
        %v9380 = vpack.c.b16 %v8306, %v8300
        %v9381 = vpack.c.b16 %v8313, %v8307
        %v9382 = vpack.c.b16 %v8314, %v8308
        %v9383 = vpack.c.b16 %v8315, %v8309
        %v9384 = vpack.c.b16 %v8316, %v8310
        %v9385 = vpack.c.b16 %v8317, %v8311
        %v9386 = vpack.c.b16 %v8318, %v8312
        %v9387 = vpack.c.b16 %v8325, %v8319
        %v9388 = vpack.c.b16 %v8326, %v8320
        %v9389 = vpack.c.b16 %v8327, %v8321
        %v9390 = vpack.c.b16 %v8328, %v8322
        %v9391 = vpack.c.b16 %v8329, %v8323
        %v9392 = vpack.c.b16 %v8330, %v8324
        %v9393 = vpack.c.b16 %v8337, %v8331
        %v9394 = vpack.c.b16 %v8338, %v8332
        %v9395 = vpack.c.b16 %v8339, %v8333
        %v9396 = vpack.c.b16 %v8340, %v8334
        %v9397 = vpack.c.b16 %v8341, %v8335
        %v9398 = vpack.c.b16 %v8342, %v8336
        %v9399 = vpack.c.b16 %v8349, %v8343
        %v9400 = vpack.c.b16 %v8350, %v8344
        %v9401 = vpack.c.b16 %v8351, %v8345
        %v9402 = vpack.c.b16 %v8352, %v8346
        %v9403 = vpack.c.b16 %v8353, %v8347
        %v9404 = vpack.c.b16 %v8354, %v8348
        %v9405 = vpack.c.b16 %v8361, %v8355
        %v9406 = vpack.c.b16 %v8362, %v8356
        %v9407 = vpack.c.b16 %v8363, %v8357
        %v9408 = vpack.c.b16 %v8364, %v8358
        %v9409 = vpack.c.b16 %v8365, %v8359
        %v9410 = vpack.c.b16 %v8366, %v8360
        %v9411 = vpack.c.b16 %v8373, %v8367
        %v9412 = vpack.c.b16 %v8374, %v8368
        %v9413 = vpack.c.b16 %v8375, %v8369
        %v9414 = vpack.c.b16 %v8376, %v8370
        %v9415 = vpack.c.b16 %v8377, %v8371
        %v9416 = vpack.c.b16 %v8378, %v8372
        %v9417 = vpack.c.b16 %v8385, %v8379
        %v9418 = vpack.c.b16 %v8386, %v8380
        %v9419 = vpack.c.b16 %v8387, %v8381
        %v9420 = vpack.c.b16 %v8388, %v8382
        %v9421 = vpack.c.b16 %v8389, %v8383
        %v9422 = vpack.c.b16 %v8390, %v8384
        %v9423 = vpack.c.b16 %v8397, %v8391
        %v9424 = vpack.c.b16 %v8398, %v8392
        %v9425 = vpack.c.b16 %v8399, %v8393
        %v9426 = vpack.c.b16 %v8400, %v8394
        %v9427 = vpack.c.b16 %v8401, %v8395
        %v9428 = vpack.c.b16 %v8402, %v8396
        %v9429 = vpack.c.b16 %v8409, %v8403
        %v9430 = vpack.c.b16 %v8410, %v8404
        %v9431 = vpack.c.b16 %v8411, %v8405
        %v9432 = vpack.c.b16 %v8412, %v8406
        %v9433 = vpack.c.b16 %v8413, %v8407
        %v9434 = vpack.c.b16 %v8414, %v8408
        %v9435 = vpack.c.b16 %v8421, %v8415
        %v9436 = vpack.c.b16 %v8422, %v8416
        %v9437 = vpack.c.b16 %v8423, %v8417
        %v9438 = vpack.c.b16 %v8424, %v8418
        %v9439 = vpack.c.b16 %v8425, %v8419
        %v9440 = vpack.c.b16 %v8426, %v8420
        %v9441 = vpack.c.b16 %v8433, %v8427
        %v9442 = vpack.c.b16 %v8434, %v8428
        %v9443 = vpack.c.b16 %v8435, %v8429
        %v9444 = vpack.c.b16 %v8436, %v8430
        %v9445 = vpack.c.b16 %v8437, %v8431
        %v9446 = vpack.c.b16 %v8438, %v8432
        %v9447 = vpack.c.b16 %v8445, %v8439
        %v9448 = vpack.c.b16 %v8446, %v8440
        %v9449 = vpack.c.b16 %v8447, %v8441
        %v9450 = vpack.c.b16 %v8448, %v8442
        %v9451 = vpack.c.b16 %v8449, %v8443
        %v9452 = vpack.c.b16 %v8450, %v8444
        %v9453 = vpack.c.b16 %v8457, %v8451
        %v9454 = vpack.c.b16 %v8458, %v8452
        %v9455 = vpack.c.b16 %v8459, %v8453
        %v9456 = vpack.c.b16 %v8460, %v8454
        %v9457 = vpack.c.b16 %v8461, %v8455
        %v9458 = vpack.c.b16 %v8462, %v8456
        %v9459 = vpack.c.b16 %v8469, %v8463
        %v9460 = vpack.c.b16 %v8470, %v8464
        %v9461 = vpack.c.b16 %v8471, %v8465
        %v9462 = vpack.c.b16 %v8472, %v8466
        %v9463 = vpack.c.b16 %v8473, %v8467
        %v9464 = vpack.c.b16 %v8474, %v8468
        %v9465 = vpack.c.b16 %v8481, %v8475
        %v9466 = vpack.c.b16 %v8482, %v8476
        %v9467 = vpack.c.b16 %v8483, %v8477
        %v9468 = vpack.c.b16 %v8484, %v8478
        %v9469 = vpack.c.b16 %v8485, %v8479
        %v9470 = vpack.c.b16 %v8486, %v8480
        %v9471 = vpack.c.b16 %v8493, %v8487
        %v9472 = vpack.c.b16 %v8494, %v8488
        %v9473 = vpack.c.b16 %v8495, %v8489
        %v9474 = vpack.c.b16 %v8496, %v8490
        %v9475 = vpack.c.b16 %v8497, %v8491
        %v9476 = vpack.c.b16 %v8498, %v8492
        %v9477 = vpack.c.b16 %v8505, %v8499
        %v9478 = vpack.c.b16 %v8506, %v8500
        %v9479 = vpack.c.b16 %v8507, %v8501
        %v9480 = vpack.c.b16 %v8508, %v8502
        %v9481 = vpack.c.b16 %v8509, %v8503
        %v9482 = vpack.c.b16 %v8510, %v8504
        %v9483 = vpack.c.b16 %v8517, %v8511
        %v9484 = vpack.c.b16 %v8518, %v8512
        %v9485 = vpack.c.b16 %v8519, %v8513
        %v9486 = vpack.c.b16 %v8520, %v8514
        %v9487 = vpack.c.b16 %v8521, %v8515
        %v9488 = vpack.c.b16 %v8522, %v8516
        %v9489 = vpack.c.b16 %v8529, %v8523
        %v9490 = vpack.c.b16 %v8530, %v8524
        %v9491 = vpack.c.b16 %v8531, %v8525
        %v9492 = vpack.c.b16 %v8532, %v8526
        %v9493 = vpack.c.b16 %v8533, %v8527
        %v9494 = vpack.c.b16 %v8534, %v8528
        %v9495 = vpack.c.b16 %v8541, %v8535
        %v9496 = vpack.c.b16 %v8542, %v8536
        %v9497 = vpack.c.b16 %v8543, %v8537
        %v9498 = vpack.c.b16 %v8544, %v8538
        %v9499 = vpack.c.b16 %v8545, %v8539
        %v9500 = vpack.c.b16 %v8546, %v8540
        %v9501 = vpack.c.b16 %v8553, %v8547
        %v9502 = vpack.c.b16 %v8554, %v8548
        %v9503 = vpack.c.b16 %v8555, %v8549
        %v9504 = vpack.c.b16 %v8556, %v8550
        %v9505 = vpack.c.b16 %v8557, %v8551
        %v9506 = vpack.c.b16 %v8558, %v8552
        %v9507 = vpack.c.b16 %v8565, %v8559
        %v9508 = vpack.c.b16 %v8566, %v8560
        %v9509 = vpack.c.b16 %v8567, %v8561
        %v9510 = vpack.c.b16 %v8568, %v8562
        %v9511 = vpack.c.b16 %v8569, %v8563
        %v9512 = vpack.c.b16 %v8570, %v8564
        %v9513 = vpack.c.b16 %v8577, %v8571
        %v9514 = vpack.c.b16 %v8578, %v8572
        %v9515 = vpack.c.b16 %v8579, %v8573
        %v9516 = vpack.c.b16 %v8580, %v8574
        %v9517 = vpack.c.b16 %v8581, %v8575
        %v9518 = vpack.c.b16 %v8582, %v8576
        %v9519 = vpack.c.b16 %v8589, %v8583
        %v9520 = vpack.c.b16 %v8590, %v8584
        %v9521 = vpack.c.b16 %v8591, %v8585
        %v9522 = vpack.c.b16 %v8592, %v8586
        %v9523 = vpack.c.b16 %v8593, %v8587
        %v9524 = vpack.c.b16 %v8594, %v8588
        %v9525 = vpack.c.b16 %v8601, %v8595
        %v9526 = vpack.c.b16 %v8602, %v8596
        %v9527 = vpack.c.b16 %v8603, %v8597
        %v9528 = vpack.c.b16 %v8604, %v8598
        %v9529 = vpack.c.b16 %v8605, %v8599
        %v9530 = vpack.c.b16 %v8606, %v8600
        %v9531 = vpack.c.b16 %v8613, %v8607
        %v9532 = vpack.c.b16 %v8614, %v8608
        %v9533 = vpack.c.b16 %v8615, %v8609
        %v9534 = vpack.c.b16 %v8616, %v8610
        %v9535 = vpack.c.b16 %v8617, %v8611
        %v9536 = vpack.c.b16 %v8618, %v8612
        %v9537 = vpack.c.b16 %v8625, %v8619
        %v9538 = vpack.c.b16 %v8626, %v8620
        %v9539 = vpack.c.b16 %v8627, %v8621
        %v9540 = vpack.c.b16 %v8628, %v8622
        %v9541 = vpack.c.b16 %v8629, %v8623
        %v9542 = vpack.c.b16 %v8630, %v8624
        %v9543 = vpack.c.b16 %v8637, %v8631
        %v9544 = vpack.c.b16 %v8638, %v8632
        %v9545 = vpack.c.b16 %v8639, %v8633
        %v9546 = vpack.c.b16 %v8640, %v8634
        %v9547 = vpack.c.b16 %v8641, %v8635
        %v9548 = vpack.c.b16 %v8642, %v8636
        %v9549 = vpack.c.b16 %v8649, %v8643
        %v9550 = vpack.c.b16 %v8650, %v8644
        %v9551 = vpack.c.b16 %v8651, %v8645
        %v9552 = vpack.c.b16 %v8652, %v8646
        %v9553 = vpack.c.b16 %v8653, %v8647
        %v9554 = vpack.c.b16 %v8654, %v8648
        %v9555 = vpack.c.b16 %v8661, %v8655
        %v9556 = vpack.c.b16 %v8662, %v8656
        %v9557 = vpack.c.b16 %v8663, %v8657
        %v9558 = vpack.c.b16 %v8664, %v8658
        %v9559 = vpack.c.b16 %v8665, %v8659
        %v9560 = vpack.c.b16 %v8666, %v8660
        %v9561 = vpack.c.b16 %v8673, %v8667
        %v9562 = vpack.c.b16 %v8674, %v8668
        %v9563 = vpack.c.b16 %v8675, %v8669
        %v9564 = vpack.c.b16 %v8676, %v8670
        %v9565 = vpack.c.b16 %v8677, %v8671
        %v9566 = vpack.c.b16 %v8678, %v8672
        %v9567 = vpack.c.b16 %v8685, %v8679
        %v9568 = vpack.c.b16 %v8686, %v8680
        %v9569 = vpack.c.b16 %v8687, %v8681
        %v9570 = vpack.c.b16 %v8688, %v8682
        %v9571 = vpack.c.b16 %v8689, %v8683
        %v9572 = vpack.c.b16 %v8690, %v8684
        %v9573 = vpack.c.b16 %v8697, %v8691
        %v9574 = vpack.c.b16 %v8698, %v8692
        %v9575 = vpack.c.b16 %v8699, %v8693
        %v9576 = vpack.c.b16 %v8700, %v8694
        %v9577 = vpack.c.b16 %v8701, %v8695
        %v9578 = vpack.c.b16 %v8702, %v8696
        %v9579 = vpack.c.b16 %v8709, %v8703
        %v9580 = vpack.c.b16 %v8710, %v8704
        %v9581 = vpack.c.b16 %v8711, %v8705
        %v9582 = vpack.c.b16 %v8712, %v8706
        %v9583 = vpack.c.b16 %v8713, %v8707
        %v9584 = vpack.c.b16 %v8714, %v8708
        %v9585 = vpack.c.b16 %v8721, %v8715
        %v9586 = vpack.c.b16 %v8722, %v8716
        %v9587 = vpack.c.b16 %v8723, %v8717
        %v9588 = vpack.c.b16 %v8724, %v8718
        %v9589 = vpack.c.b16 %v8725, %v8719
        %v9590 = vpack.c.b16 %v8726, %v8720
        %v9591 = vpack.c.b16 %v8733, %v8727
        %v9592 = vpack.c.b16 %v8734, %v8728
        %v9593 = vpack.c.b16 %v8735, %v8729
        %v9594 = vpack.c.b16 %v8736, %v8730
        %v9595 = vpack.c.b16 %v8737, %v8731
        %v9596 = vpack.c.b16 %v8738, %v8732
        %v9597 = vpack.c.b16 %v8745, %v8739
        %v9598 = vpack.c.b16 %v8746, %v8740
        %v9599 = vpack.c.b16 %v8747, %v8741
        %v9600 = vpack.c.b16 %v8748, %v8742
        %v9601 = vpack.c.b16 %v8749, %v8743
        %v9602 = vpack.c.b16 %v8750, %v8744
        %v9603 = vpack.c.b16 %v8757, %v8751
        %v9604 = vpack.c.b16 %v8758, %v8752
        %v9605 = vpack.c.b16 %v8759, %v8753
        %v9606 = vpack.c.b16 %v8760, %v8754
        %v9607 = vpack.c.b16 %v8761, %v8755
        %v9608 = vpack.c.b16 %v8762, %v8756
        %v9609 = vpack.c.b16 %v8769, %v8763
        %v9610 = vpack.c.b16 %v8770, %v8764
        %v9611 = vpack.c.b16 %v8771, %v8765
        %v9612 = vpack.c.b16 %v8772, %v8766
        %v9613 = vpack.c.b16 %v8773, %v8767
        %v9614 = vpack.c.b16 %v8774, %v8768
        %v9615 = vpack.c.b16 %v8781, %v8775
        %v9616 = vpack.c.b16 %v8782, %v8776
        %v9617 = vpack.c.b16 %v8783, %v8777
        %v9618 = vpack.c.b16 %v8784, %v8778
        %v9619 = vpack.c.b16 %v8785, %v8779
        %v9620 = vpack.c.b16 %v8786, %v8780
        %v9621 = vpack.c.b16 %v8793, %v8787
        %v9622 = vpack.c.b16 %v8794, %v8788
        %v9623 = vpack.c.b16 %v8795, %v8789
        %v9624 = vpack.c.b16 %v8796, %v8790
        %v9625 = vpack.c.b16 %v8797, %v8791
        %v9626 = vpack.c.b16 %v8798, %v8792
        %v9627 = vpack.c.b16 %v8805, %v8799
        %v9628 = vpack.c.b16 %v8806, %v8800
        %v9629 = vpack.c.b16 %v8807, %v8801
        %v9630 = vpack.c.b16 %v8808, %v8802
        %v9631 = vpack.c.b16 %v8809, %v8803
        %v9632 = vpack.c.b16 %v8810, %v8804
        %v9633 = vpack.c.b16 %v8817, %v8811
        %v9634 = vpack.c.b16 %v8818, %v8812
        %v9635 = vpack.c.b16 %v8819, %v8813
        %v9636 = vpack.c.b16 %v8820, %v8814
        %v9637 = vpack.c.b16 %v8821, %v8815
        %v9638 = vpack.c.b16 %v8822, %v8816
        %v9639 = vpack.c.b16 %v8829, %v8823
        %v9640 = vpack.c.b16 %v8830, %v8824
        %v9641 = vpack.c.b16 %v8831, %v8825
        %v9642 = vpack.c.b16 %v8832, %v8826
        %v9643 = vpack.c.b16 %v8833, %v8827
        %v9644 = vpack.c.b16 %v8834, %v8828
        %v9645 = vpack.c.b16 %v8841, %v8835
        %v9646 = vpack.c.b16 %v8842, %v8836
        %v9647 = vpack.c.b16 %v8843, %v8837
        %v9648 = vpack.c.b16 %v8844, %v8838
        %v9649 = vpack.c.b16 %v8845, %v8839
        %v9650 = vpack.c.b16 %v8846, %v8840
        %v9651 = vpack.c.b16 %v8853, %v8847
        %v9652 = vpack.c.b16 %v8854, %v8848
        %v9653 = vpack.c.b16 %v8855, %v8849
        %v9654 = vpack.c.b16 %v8856, %v8850
        %v9655 = vpack.c.b16 %v8857, %v8851
        %v9656 = vpack.c.b16 %v8858, %v8852
        %v9657 = vpack.c.b16 %v8865, %v8859
        %v9658 = vpack.c.b16 %v8866, %v8860
        %v9659 = vpack.c.b16 %v8867, %v8861
        %v9660 = vpack.c.b16 %v8868, %v8862
        %v9661 = vpack.c.b16 %v8869, %v8863
        %v9662 = vpack.c.b16 %v8870, %v8864
        %v9663 = vpack.c.b16 %v8877, %v8871
        %v9664 = vpack.c.b16 %v8878, %v8872
        %v9665 = vpack.c.b16 %v8879, %v8873
        %v9666 = vpack.c.b16 %v8880, %v8874
        %v9667 = vpack.c.b16 %v8881, %v8875
        %v9668 = vpack.c.b16 %v8882, %v8876
        %v9669 = vpack.c.b16 %v8889, %v8883
        %v9670 = vpack.c.b16 %v8890, %v8884
        %v9671 = vpack.c.b16 %v8891, %v8885
        %v9672 = vpack.c.b16 %v8892, %v8886
        %v9673 = vpack.c.b16 %v8893, %v8887
        %v9674 = vpack.c.b16 %v8894, %v8888
        %v9675 = vpack.c.b16 %v8901, %v8895
        %v9676 = vpack.c.b16 %v8902, %v8896
        %v9677 = vpack.c.b16 %v8903, %v8897
        %v9678 = vpack.c.b16 %v8904, %v8898
        %v9679 = vpack.c.b16 %v8905, %v8899
        %v9680 = vpack.c.b16 %v8906, %v8900
        %v9681 = vpack.c.b16 %v8913, %v8907
        %v9682 = vpack.c.b16 %v8914, %v8908
        %v9683 = vpack.c.b16 %v8915, %v8909
        %v9684 = vpack.c.b16 %v8916, %v8910
        %v9685 = vpack.c.b16 %v8917, %v8911
        %v9686 = vpack.c.b16 %v8918, %v8912
        %10455 = vmatprep.subr.bf16.mxu0 %v8962
        %10456 = vmatpush1.bf16.msra.mxu0 %v8961
        %10457 = vmatprep.subr.bf16.mxu0 %v8956
        %10458 = vmatpush1.bf16.msra.mxu0 %v8955
        %10459 = vmatprep.subr.bf16.mxu0 %v8950
        %10460 = vmatpush1.bf16.msra.mxu0 %v8949
        %10461 = vmatprep.subr.bf16.mxu0 %v8944
        %10462 = vmatpush1.bf16.msra.mxu0 %v8943
        %10463 = vmatprep.subr.bf16.mxu0 %v8938
        %10464 = vmatpush1.bf16.msra.mxu0 %v8937
        %10465 = vmatprep.subr.bf16.mxu0 %v8932
        %10466 = vmatpush1.bf16.msra.mxu0 %v8931
        %10467 = vmatprep.subr.bf16.mxu0 %v8926
        %10468 = vmatpush1.bf16.msra.mxu0 %v8925
        %10469 = vmatprep.subr.bf16.mxu0 %v8920
        %10470 = vmatpush1.bf16.msra.mxu0 %v8919
        %10471 = vmatprep.subr.bf16.mxu0 %v9010
        %10472 = vmatpush2.bf16.msra.mxu0 %v9009
        %10473 = vmatprep.subr.bf16.mxu0 %v9004
        %10474 = vmatpush2.bf16.msra.mxu0 %v9003
        %10475 = vmatprep.subr.bf16.mxu0 %v8998
        %10476 = vmatpush2.bf16.msra.mxu0 %v8997
        %10477 = vmatprep.subr.bf16.mxu0 %v8992
        %10478 = vmatpush2.bf16.msra.mxu0 %v8991
        %10479 = vmatprep.subr.bf16.mxu0 %v8986
        %10480 = vmatpush2.bf16.msra.mxu0 %v8985
        %10481 = vmatprep.subr.bf16.mxu0 %v8980
        %10482 = vmatpush2.bf16.msra.mxu0 %v8979
        %10483 = vmatprep.subr.bf16.mxu0 %v8974
        %10484 = vmatpush2.bf16.msra.mxu0 %v8973
        %10485 = vmatprep.subr.bf16.mxu0 %v8968
        %10486 = vmatpush2.bf16.msra.mxu0 %v8967
        %10487 = vmatprep.mubr.bf16.mxu0 %v5832
        %10488 = vmatmul.mubr.bf16.gmra.mxu0 %v5831
        %v10489 = vpop.f32.mrf.mxu0
        %v10490 = vadd.f32 0.0, %v10489
        %v10491 = vpop.f32.mrf.mxu0
        %v10492 = vadd.f32 0.0, %v10491
        %v10493 = vpop.f32.mrf.mxu0
        %v10494 = vpop.f32.mrf.mxu0
        %10495 = vdwg.mxu0
        %10496 = vmatprep.subr.bf16.mxu0 %v9058
        %10497 = vmatpush1.bf16.msra.mxu0 %v9057
        %10498 = vmatprep.subr.bf16.mxu0 %v9052
        %10499 = vmatpush1.bf16.msra.mxu0 %v9051
        %10500 = vmatprep.subr.bf16.mxu0 %v9046
        %10501 = vmatpush1.bf16.msra.mxu0 %v9045
        %10502 = vmatprep.subr.bf16.mxu0 %v9040
        %10503 = vmatpush1.bf16.msra.mxu0 %v9039
        %10504 = vmatprep.subr.bf16.mxu0 %v9034
        %10505 = vmatpush1.bf16.msra.mxu0 %v9033
        %10506 = vmatprep.subr.bf16.mxu0 %v9028
        %10507 = vmatpush1.bf16.msra.mxu0 %v9027
        %10508 = vmatprep.subr.bf16.mxu0 %v9022
        %10509 = vmatpush1.bf16.msra.mxu0 %v9021
        %10510 = vmatprep.subr.bf16.mxu0 %v9016
        %10511 = vmatpush1.bf16.msra.mxu0 %v9015
        %10512 = vmatprep.subr.bf16.mxu0 %v9106
        %10513 = vmatpush2.bf16.msra.mxu0 %v9105
        %10514 = vmatprep.subr.bf16.mxu0 %v9100
        %10515 = vmatpush2.bf16.msra.mxu0 %v9099
        %10516 = vmatprep.subr.bf16.mxu0 %v9094
        %10517 = vmatpush2.bf16.msra.mxu0 %v9093
        %10518 = vmatprep.subr.bf16.mxu0 %v9088
        %10519 = vmatpush2.bf16.msra.mxu0 %v9087
        %10520 = vmatprep.subr.bf16.mxu0 %v9082
        %10521 = vmatpush2.bf16.msra.mxu0 %v9081
        %10522 = vmatprep.subr.bf16.mxu0 %v9076
        %10523 = vmatpush2.bf16.msra.mxu0 %v9075
        %10524 = vmatprep.subr.bf16.mxu0 %v9070
        %10525 = vmatpush2.bf16.msra.mxu0 %v9069
        %10526 = vmatprep.subr.bf16.mxu0 %v9064
        %10527 = vmatpush2.bf16.msra.mxu0 %v9063
        %10528 = vmatprep.mubr.bf16.mxu0 %v5834
        %10529 = vmatmul.mubr.bf16.gmra.mxu0 %v5833
        %v10530 = vpop.f32.mrf.mxu0
        %v10531 = vadd.f32 %v10490, %v10530
        %v10532 = vpop.f32.mrf.mxu0
        %v10533 = vadd.f32 %v10492, %v10532
        %v10534 = vpop.f32.mrf.mxu0
        %v10535 = vpop.f32.mrf.mxu0
        %10536 = vdwg.mxu0
        %10537 = vmatprep.subr.bf16.mxu0 %v9154
        %10538 = vmatpush1.bf16.msra.mxu0 %v9153
        %10539 = vmatprep.subr.bf16.mxu0 %v9148
        %10540 = vmatpush1.bf16.msra.mxu0 %v9147
        %10541 = vmatprep.subr.bf16.mxu0 %v9142
        %10542 = vmatpush1.bf16.msra.mxu0 %v9141
        %10543 = vmatprep.subr.bf16.mxu0 %v9136
        %10544 = vmatpush1.bf16.msra.mxu0 %v9135
        %10545 = vmatprep.subr.bf16.mxu0 %v9130
        %10546 = vmatpush1.bf16.msra.mxu0 %v9129
        %10547 = vmatprep.subr.bf16.mxu0 %v9124
        %10548 = vmatpush1.bf16.msra.mxu0 %v9123
        %10549 = vmatprep.subr.bf16.mxu0 %v9118
        %10550 = vmatpush1.bf16.msra.mxu0 %v9117
        %10551 = vmatprep.subr.bf16.mxu0 %v9112
        %10552 = vmatpush1.bf16.msra.mxu0 %v9111
        %10553 = vmatprep.subr.bf16.mxu0 %v9202
        %10554 = vmatpush2.bf16.msra.mxu0 %v9201
        %10555 = vmatprep.subr.bf16.mxu0 %v9196
        %10556 = vmatpush2.bf16.msra.mxu0 %v9195
        %10557 = vmatprep.subr.bf16.mxu0 %v9190
        %10558 = vmatpush2.bf16.msra.mxu0 %v9189
        %10559 = vmatprep.subr.bf16.mxu0 %v9184
        %10560 = vmatpush2.bf16.msra.mxu0 %v9183
        %10561 = vmatprep.subr.bf16.mxu0 %v9178
        %10562 = vmatpush2.bf16.msra.mxu0 %v9177
        %10563 = vmatprep.subr.bf16.mxu0 %v9172
        %10564 = vmatpush2.bf16.msra.mxu0 %v9171
        %10565 = vmatprep.subr.bf16.mxu0 %v9166
        %10566 = vmatpush2.bf16.msra.mxu0 %v9165
        %10567 = vmatprep.subr.bf16.mxu0 %v9160
        %10568 = vmatpush2.bf16.msra.mxu0 %v9159
        %10569 = vmatprep.mubr.bf16.mxu0 %v5836
        %10570 = vmatmul.mubr.bf16.gmra.mxu0 %v5835
        %v10571 = vpop.f32.mrf.mxu0
        %v10572 = vadd.f32 %v10531, %v10571
        %v10573 = vpop.f32.mrf.mxu0
        %v10574 = vadd.f32 %v10533, %v10573
        %v10575 = vpop.f32.mrf.mxu0
        %v10576 = vpop.f32.mrf.mxu0
        %10577 = vdwg.mxu0
        %10578 = vmatprep.subr.bf16.mxu0 %v9250
        %10579 = vmatpush1.bf16.msra.mxu0 %v9249
        %10580 = vmatprep.subr.bf16.mxu0 %v9244
        %10581 = vmatpush1.bf16.msra.mxu0 %v9243
        %10582 = vmatprep.subr.bf16.mxu0 %v9238
        %10583 = vmatpush1.bf16.msra.mxu0 %v9237
        %10584 = vmatprep.subr.bf16.mxu0 %v9232
        %10585 = vmatpush1.bf16.msra.mxu0 %v9231
        %10586 = vmatprep.subr.bf16.mxu0 %v9226
        %10587 = vmatpush1.bf16.msra.mxu0 %v9225
        %10588 = vmatprep.subr.bf16.mxu0 %v9220
        %10589 = vmatpush1.bf16.msra.mxu0 %v9219
        %10590 = vmatprep.subr.bf16.mxu0 %v9214
        %10591 = vmatpush1.bf16.msra.mxu0 %v9213
        %10592 = vmatprep.subr.bf16.mxu0 %v9208
        %10593 = vmatpush1.bf16.msra.mxu0 %v9207
        %10594 = vmatprep.subr.bf16.mxu0 %v9298
        %10595 = vmatpush2.bf16.msra.mxu0 %v9297
        %10596 = vmatprep.subr.bf16.mxu0 %v9292
        %10597 = vmatpush2.bf16.msra.mxu0 %v9291
        %10598 = vmatprep.subr.bf16.mxu0 %v9286
        %10599 = vmatpush2.bf16.msra.mxu0 %v9285
        %10600 = vmatprep.subr.bf16.mxu0 %v9280
        %10601 = vmatpush2.bf16.msra.mxu0 %v9279
        %10602 = vmatprep.subr.bf16.mxu0 %v9274
        %10603 = vmatpush2.bf16.msra.mxu0 %v9273
        %10604 = vmatprep.subr.bf16.mxu0 %v9268
        %10605 = vmatpush2.bf16.msra.mxu0 %v9267
        %10606 = vmatprep.subr.bf16.mxu0 %v9262
        %10607 = vmatpush2.bf16.msra.mxu0 %v9261
        %10608 = vmatprep.subr.bf16.mxu0 %v9256
        %10609 = vmatpush2.bf16.msra.mxu0 %v9255
        %10610 = vmatprep.mubr.bf16.mxu0 %v5838
        %10611 = vmatmul.mubr.bf16.gmra.mxu0 %v5837
        %v10612 = vpop.f32.mrf.mxu0
        %v10613 = vadd.f32 %v10572, %v10612
        %v10614 = vpop.f32.mrf.mxu0
        %v10615 = vadd.f32 %v10574, %v10614
        %v10616 = vpop.f32.mrf.mxu0
        %v10617 = vpop.f32.mrf.mxu0
        %10618 = vdwg.mxu0
        %10619 = vmatprep.subr.bf16.mxu0 %v9346
        %10620 = vmatpush1.bf16.msra.mxu0 %v9345
        %10621 = vmatprep.subr.bf16.mxu0 %v9340
        %10622 = vmatpush1.bf16.msra.mxu0 %v9339
        %10623 = vmatprep.subr.bf16.mxu0 %v9334
        %10624 = vmatpush1.bf16.msra.mxu0 %v9333
        %10625 = vmatprep.subr.bf16.mxu0 %v9328
        %10626 = vmatpush1.bf16.msra.mxu0 %v9327
        %10627 = vmatprep.subr.bf16.mxu0 %v9322
        %10628 = vmatpush1.bf16.msra.mxu0 %v9321
        %10629 = vmatprep.subr.bf16.mxu0 %v9316
        %10630 = vmatpush1.bf16.msra.mxu0 %v9315
        %10631 = vmatprep.subr.bf16.mxu0 %v9310
        %10632 = vmatpush1.bf16.msra.mxu0 %v9309
        %10633 = vmatprep.subr.bf16.mxu0 %v9304
        %10634 = vmatpush1.bf16.msra.mxu0 %v9303
        %10635 = vmatprep.subr.bf16.mxu0 %v9394
        %10636 = vmatpush2.bf16.msra.mxu0 %v9393
        %10637 = vmatprep.subr.bf16.mxu0 %v9388
        %10638 = vmatpush2.bf16.msra.mxu0 %v9387
        %10639 = vmatprep.subr.bf16.mxu0 %v9382
        %10640 = vmatpush2.bf16.msra.mxu0 %v9381
        %10641 = vmatprep.subr.bf16.mxu0 %v9376
        %10642 = vmatpush2.bf16.msra.mxu0 %v9375
        %10643 = vmatprep.subr.bf16.mxu0 %v9370
        %10644 = vmatpush2.bf16.msra.mxu0 %v9369
        %10645 = vmatprep.subr.bf16.mxu0 %v9364
        %10646 = vmatpush2.bf16.msra.mxu0 %v9363
        %10647 = vmatprep.subr.bf16.mxu0 %v9358
        %10648 = vmatpush2.bf16.msra.mxu0 %v9357
        %10649 = vmatprep.subr.bf16.mxu0 %v9352
        %10650 = vmatpush2.bf16.msra.mxu0 %v9351
        %10651 = vmatprep.mubr.bf16.mxu0 %v5840
        %10652 = vmatmul.mubr.bf16.gmra.mxu0 %v5839
        %v10653 = vpop.f32.mrf.mxu0
        %v10654 = vadd.f32 %v10613, %v10653
        %v10655 = vpop.f32.mrf.mxu0
        %v10656 = vadd.f32 %v10615, %v10655
        %v10657 = vpop.f32.mrf.mxu0
        %v10658 = vpop.f32.mrf.mxu0
        %10659 = vdwg.mxu0
        %10660 = vmatprep.subr.bf16.mxu0 %v9442
        %10661 = vmatpush1.bf16.msra.mxu0 %v9441
        %10662 = vmatprep.subr.bf16.mxu0 %v9436
        %10663 = vmatpush1.bf16.msra.mxu0 %v9435
        %10664 = vmatprep.subr.bf16.mxu0 %v9430
        %10665 = vmatpush1.bf16.msra.mxu0 %v9429
        %10666 = vmatprep.subr.bf16.mxu0 %v9424
        %10667 = vmatpush1.bf16.msra.mxu0 %v9423
        %10668 = vmatprep.subr.bf16.mxu0 %v9418
        %10669 = vmatpush1.bf16.msra.mxu0 %v9417
        %10670 = vmatprep.subr.bf16.mxu0 %v9412
        %10671 = vmatpush1.bf16.msra.mxu0 %v9411
        %10672 = vmatprep.subr.bf16.mxu0 %v9406
        %10673 = vmatpush1.bf16.msra.mxu0 %v9405
        %10674 = vmatprep.subr.bf16.mxu0 %v9400
        %10675 = vmatpush1.bf16.msra.mxu0 %v9399
        %10676 = vmatprep.subr.bf16.mxu0 %v9490
        %10677 = vmatpush2.bf16.msra.mxu0 %v9489
        %10678 = vmatprep.subr.bf16.mxu0 %v9484
        %10679 = vmatpush2.bf16.msra.mxu0 %v9483
        %10680 = vmatprep.subr.bf16.mxu0 %v9478
        %10681 = vmatpush2.bf16.msra.mxu0 %v9477
        %10682 = vmatprep.subr.bf16.mxu0 %v9472
        %10683 = vmatpush2.bf16.msra.mxu0 %v9471
        %10684 = vmatprep.subr.bf16.mxu0 %v9466
        %10685 = vmatpush2.bf16.msra.mxu0 %v9465
        %10686 = vmatprep.subr.bf16.mxu0 %v9460
        %10687 = vmatpush2.bf16.msra.mxu0 %v9459
        %10688 = vmatprep.subr.bf16.mxu0 %v9454
        %10689 = vmatpush2.bf16.msra.mxu0 %v9453
        %10690 = vmatprep.subr.bf16.mxu0 %v9448
        %10691 = vmatpush2.bf16.msra.mxu0 %v9447
        %10692 = vmatprep.mubr.bf16.mxu0 %v5842
        %10693 = vmatmul.mubr.bf16.gmra.mxu0 %v5841
        %v10694 = vpop.f32.mrf.mxu0
        %v10695 = vadd.f32 %v10654, %v10694
        %v10696 = vpop.f32.mrf.mxu0
        %v10697 = vadd.f32 %v10656, %v10696
        %v10698 = vpop.f32.mrf.mxu0
        %v10699 = vpop.f32.mrf.mxu0
        %10700 = vdwg.mxu0
        %10701 = vmatprep.subr.bf16.mxu0 %v9538
        %10702 = vmatpush1.bf16.msra.mxu0 %v9537
        %10703 = vmatprep.subr.bf16.mxu0 %v9532
        %10704 = vmatpush1.bf16.msra.mxu0 %v9531
        %10705 = vmatprep.subr.bf16.mxu0 %v9526
        %10706 = vmatpush1.bf16.msra.mxu0 %v9525
        %10707 = vmatprep.subr.bf16.mxu0 %v9520
        %10708 = vmatpush1.bf16.msra.mxu0 %v9519
        %10709 = vmatprep.subr.bf16.mxu0 %v9514
        %10710 = vmatpush1.bf16.msra.mxu0 %v9513
        %10711 = vmatprep.subr.bf16.mxu0 %v9508
        %10712 = vmatpush1.bf16.msra.mxu0 %v9507
        %10713 = vmatprep.subr.bf16.mxu0 %v9502
        %10714 = vmatpush1.bf16.msra.mxu0 %v9501
        %10715 = vmatprep.subr.bf16.mxu0 %v9496
        %10716 = vmatpush1.bf16.msra.mxu0 %v9495
        %10717 = vmatprep.subr.bf16.mxu0 %v9586
        %10718 = vmatpush2.bf16.msra.mxu0 %v9585
        %10719 = vmatprep.subr.bf16.mxu0 %v9580
        %10720 = vmatpush2.bf16.msra.mxu0 %v9579
        %10721 = vmatprep.subr.bf16.mxu0 %v9574
        %10722 = vmatpush2.bf16.msra.mxu0 %v9573
        %10723 = vmatprep.subr.bf16.mxu0 %v9568
        %10724 = vmatpush2.bf16.msra.mxu0 %v9567
        %10725 = vmatprep.subr.bf16.mxu0 %v9562
        %10726 = vmatpush2.bf16.msra.mxu0 %v9561
        %10727 = vmatprep.subr.bf16.mxu0 %v9556
        %10728 = vmatpush2.bf16.msra.mxu0 %v9555
        %10729 = vmatprep.subr.bf16.mxu0 %v9550
        %10730 = vmatpush2.bf16.msra.mxu0 %v9549
        %10731 = vmatprep.subr.bf16.mxu0 %v9544
        %10732 = vmatpush2.bf16.msra.mxu0 %v9543
        %10733 = vmatprep.mubr.bf16.mxu0 %v5844
        %10734 = vmatmul.mubr.bf16.gmra.mxu0 %v5843
        %v10735 = vpop.f32.mrf.mxu0
        %v10736 = vadd.f32 %v10695, %v10735
        %v10737 = vpop.f32.mrf.mxu0
        %v10738 = vadd.f32 %v10697, %v10737
        %v10739 = vpop.f32.mrf.mxu0
        %v10740 = vpop.f32.mrf.mxu0
        %10741 = vdwg.mxu0
        %10742 = vmatprep.subr.bf16.mxu0 %v9634
        %10743 = vmatpush1.bf16.msra.mxu0 %v9633
        %10744 = vmatprep.subr.bf16.mxu0 %v9628
        %10745 = vmatpush1.bf16.msra.mxu0 %v9627
        %10746 = vmatprep.subr.bf16.mxu0 %v9622
        %10747 = vmatpush1.bf16.msra.mxu0 %v9621
        %10748 = vmatprep.subr.bf16.mxu0 %v9616
        %10749 = vmatpush1.bf16.msra.mxu0 %v9615
        %10750 = vmatprep.subr.bf16.mxu0 %v9610
        %10751 = vmatpush1.bf16.msra.mxu0 %v9609
        %10752 = vmatprep.subr.bf16.mxu0 %v9604
        %10753 = vmatpush1.bf16.msra.mxu0 %v9603
        %10754 = vmatprep.subr.bf16.mxu0 %v9598
        %10755 = vmatpush1.bf16.msra.mxu0 %v9597
        %10756 = vmatprep.subr.bf16.mxu0 %v9592
        %10757 = vmatpush1.bf16.msra.mxu0 %v9591
        %10758 = vmatprep.subr.bf16.mxu0 %v9682
        %10759 = vmatpush2.bf16.msra.mxu0 %v9681
        %10760 = vmatprep.subr.bf16.mxu0 %v9676
        %10761 = vmatpush2.bf16.msra.mxu0 %v9675
        %10762 = vmatprep.subr.bf16.mxu0 %v9670
        %10763 = vmatpush2.bf16.msra.mxu0 %v9669
        %10764 = vmatprep.subr.bf16.mxu0 %v9664
        %10765 = vmatpush2.bf16.msra.mxu0 %v9663
        %10766 = vmatprep.subr.bf16.mxu0 %v9658
        %10767 = vmatpush2.bf16.msra.mxu0 %v9657
        %10768 = vmatprep.subr.bf16.mxu0 %v9652
        %10769 = vmatpush2.bf16.msra.mxu0 %v9651
        %10770 = vmatprep.subr.bf16.mxu0 %v9646
        %10771 = vmatpush2.bf16.msra.mxu0 %v9645
        %10772 = vmatprep.subr.bf16.mxu0 %v9640
        %10773 = vmatpush2.bf16.msra.mxu0 %v9639
        %10774 = vmatprep.mubr.bf16.mxu0 %v5846
        %10775 = vmatmul.mubr.bf16.gmra.mxu0 %v5845
        %v10776 = vpop.f32.mrf.mxu0
        %v10777 = vadd.f32 %v10736, %v10776
        %v10778 = vpop.f32.mrf.mxu0
        %v10779 = vadd.f32 %v10738, %v10778
        %v10780 = vpop.f32.mrf.mxu0
        %v10781 = vpop.f32.mrf.mxu0
        %10782 = vdwg.mxu0
        %10783 = vmatprep.subr.bf16.mxu0 %v8964
        %10784 = vmatpush1.bf16.msra.mxu0 %v8963
        %10785 = vmatprep.subr.bf16.mxu0 %v8958
        %10786 = vmatpush1.bf16.msra.mxu0 %v8957
        %10787 = vmatprep.subr.bf16.mxu0 %v8952
        %10788 = vmatpush1.bf16.msra.mxu0 %v8951
        %10789 = vmatprep.subr.bf16.mxu0 %v8946
        %10790 = vmatpush1.bf16.msra.mxu0 %v8945
        %10791 = vmatprep.subr.bf16.mxu0 %v8940
        %10792 = vmatpush1.bf16.msra.mxu0 %v8939
        %10793 = vmatprep.subr.bf16.mxu0 %v8934
        %10794 = vmatpush1.bf16.msra.mxu0 %v8933
        %10795 = vmatprep.subr.bf16.mxu0 %v8928
        %10796 = vmatpush1.bf16.msra.mxu0 %v8927
        %10797 = vmatprep.subr.bf16.mxu0 %v8922
        %10798 = vmatpush1.bf16.msra.mxu0 %v8921
        %10799 = vmatprep.subr.bf16.mxu0 %v9012
        %10800 = vmatpush2.bf16.msra.mxu0 %v9011
        %10801 = vmatprep.subr.bf16.mxu0 %v9006
        %10802 = vmatpush2.bf16.msra.mxu0 %v9005
        %10803 = vmatprep.subr.bf16.mxu0 %v9000
        %10804 = vmatpush2.bf16.msra.mxu0 %v8999
        %10805 = vmatprep.subr.bf16.mxu0 %v8994
        %10806 = vmatpush2.bf16.msra.mxu0 %v8993
        %10807 = vmatprep.subr.bf16.mxu0 %v8988
        %10808 = vmatpush2.bf16.msra.mxu0 %v8987
        %10809 = vmatprep.subr.bf16.mxu0 %v8982
        %10810 = vmatpush2.bf16.msra.mxu0 %v8981
        %10811 = vmatprep.subr.bf16.mxu0 %v8976
        %10812 = vmatpush2.bf16.msra.mxu0 %v8975
        %10813 = vmatprep.subr.bf16.mxu0 %v8970
        %10814 = vmatpush2.bf16.msra.mxu0 %v8969
        %10815 = vmatprep.mubr.bf16.mxu0 %v5832
        %10816 = vmatmul.mubr.bf16.gmra.mxu0 %v5831
        %v10817 = vpop.f32.mrf.mxu0
        %v10818 = vadd.f32 0.0, %v10817
        %v10819 = vpop.f32.mrf.mxu0
        %v10820 = vadd.f32 0.0, %v10819
        %v10821 = vpop.f32.mrf.mxu0
        %v10822 = vpop.f32.mrf.mxu0
        %10823 = vdwg.mxu0
        %10824 = vmatprep.subr.bf16.mxu0 %v9060
        %10825 = vmatpush1.bf16.msra.mxu0 %v9059
        %10826 = vmatprep.subr.bf16.mxu0 %v9054
        %10827 = vmatpush1.bf16.msra.mxu0 %v9053
        %10828 = vmatprep.subr.bf16.mxu0 %v9048
        %10829 = vmatpush1.bf16.msra.mxu0 %v9047
        %10830 = vmatprep.subr.bf16.mxu0 %v9042
        %10831 = vmatpush1.bf16.msra.mxu0 %v9041
        %10832 = vmatprep.subr.bf16.mxu0 %v9036
        %10833 = vmatpush1.bf16.msra.mxu0 %v9035
        %10834 = vmatprep.subr.bf16.mxu0 %v9030
        %10835 = vmatpush1.bf16.msra.mxu0 %v9029
        %10836 = vmatprep.subr.bf16.mxu0 %v9024
        %10837 = vmatpush1.bf16.msra.mxu0 %v9023
        %10838 = vmatprep.subr.bf16.mxu0 %v9018
        %10839 = vmatpush1.bf16.msra.mxu0 %v9017
        %10840 = vmatprep.subr.bf16.mxu0 %v9108
        %10841 = vmatpush2.bf16.msra.mxu0 %v9107
        %10842 = vmatprep.subr.bf16.mxu0 %v9102
        %10843 = vmatpush2.bf16.msra.mxu0 %v9101
        %10844 = vmatprep.subr.bf16.mxu0 %v9096
        %10845 = vmatpush2.bf16.msra.mxu0 %v9095
        %10846 = vmatprep.subr.bf16.mxu0 %v9090
        %10847 = vmatpush2.bf16.msra.mxu0 %v9089
        %10848 = vmatprep.subr.bf16.mxu0 %v9084
        %10849 = vmatpush2.bf16.msra.mxu0 %v9083
        %10850 = vmatprep.subr.bf16.mxu0 %v9078
        %10851 = vmatpush2.bf16.msra.mxu0 %v9077
        %10852 = vmatprep.subr.bf16.mxu0 %v9072
        %10853 = vmatpush2.bf16.msra.mxu0 %v9071
        %10854 = vmatprep.subr.bf16.mxu0 %v9066
        %10855 = vmatpush2.bf16.msra.mxu0 %v9065
        %10856 = vmatprep.mubr.bf16.mxu0 %v5834
        %10857 = vmatmul.mubr.bf16.gmra.mxu0 %v5833
        %v10858 = vpop.f32.mrf.mxu0
        %v10859 = vadd.f32 %v10818, %v10858
        %v10860 = vpop.f32.mrf.mxu0
        %v10861 = vadd.f32 %v10820, %v10860
        %v10862 = vpop.f32.mrf.mxu0
        %v10863 = vpop.f32.mrf.mxu0
        %10864 = vdwg.mxu0
        %10865 = vmatprep.subr.bf16.mxu0 %v9156
        %10866 = vmatpush1.bf16.msra.mxu0 %v9155
        %10867 = vmatprep.subr.bf16.mxu0 %v9150
        %10868 = vmatpush1.bf16.msra.mxu0 %v9149
        %10869 = vmatprep.subr.bf16.mxu0 %v9144
        %10870 = vmatpush1.bf16.msra.mxu0 %v9143
        %10871 = vmatprep.subr.bf16.mxu0 %v9138
        %10872 = vmatpush1.bf16.msra.mxu0 %v9137
        %10873 = vmatprep.subr.bf16.mxu0 %v9132
        %10874 = vmatpush1.bf16.msra.mxu0 %v9131
        %10875 = vmatprep.subr.bf16.mxu0 %v9126
        %10876 = vmatpush1.bf16.msra.mxu0 %v9125
        %10877 = vmatprep.subr.bf16.mxu0 %v9120
        %10878 = vmatpush1.bf16.msra.mxu0 %v9119
        %10879 = vmatprep.subr.bf16.mxu0 %v9114
        %10880 = vmatpush1.bf16.msra.mxu0 %v9113
        %10881 = vmatprep.subr.bf16.mxu0 %v9204
        %10882 = vmatpush2.bf16.msra.mxu0 %v9203
        %10883 = vmatprep.subr.bf16.mxu0 %v9198
        %10884 = vmatpush2.bf16.msra.mxu0 %v9197
        %10885 = vmatprep.subr.bf16.mxu0 %v9192
        %10886 = vmatpush2.bf16.msra.mxu0 %v9191
        %10887 = vmatprep.subr.bf16.mxu0 %v9186
        %10888 = vmatpush2.bf16.msra.mxu0 %v9185
        %10889 = vmatprep.subr.bf16.mxu0 %v9180
        %10890 = vmatpush2.bf16.msra.mxu0 %v9179
        %10891 = vmatprep.subr.bf16.mxu0 %v9174
        %10892 = vmatpush2.bf16.msra.mxu0 %v9173
        %10893 = vmatprep.subr.bf16.mxu0 %v9168
        %10894 = vmatpush2.bf16.msra.mxu0 %v9167
        %10895 = vmatprep.subr.bf16.mxu0 %v9162
        %10896 = vmatpush2.bf16.msra.mxu0 %v9161
        %10897 = vmatprep.mubr.bf16.mxu0 %v5836
        %10898 = vmatmul.mubr.bf16.gmra.mxu0 %v5835
        %v10899 = vpop.f32.mrf.mxu0
        %v10900 = vadd.f32 %v10859, %v10899
        %v10901 = vpop.f32.mrf.mxu0
        %v10902 = vadd.f32 %v10861, %v10901
        %v10903 = vpop.f32.mrf.mxu0
        %v10904 = vpop.f32.mrf.mxu0
        %10905 = vdwg.mxu0
        %10906 = vmatprep.subr.bf16.mxu0 %v9252
        %10907 = vmatpush1.bf16.msra.mxu0 %v9251
        %10908 = vmatprep.subr.bf16.mxu0 %v9246
        %10909 = vmatpush1.bf16.msra.mxu0 %v9245
        %10910 = vmatprep.subr.bf16.mxu0 %v9240
        %10911 = vmatpush1.bf16.msra.mxu0 %v9239
        %10912 = vmatprep.subr.bf16.mxu0 %v9234
        %10913 = vmatpush1.bf16.msra.mxu0 %v9233
        %10914 = vmatprep.subr.bf16.mxu0 %v9228
        %10915 = vmatpush1.bf16.msra.mxu0 %v9227
        %10916 = vmatprep.subr.bf16.mxu0 %v9222
        %10917 = vmatpush1.bf16.msra.mxu0 %v9221
        %10918 = vmatprep.subr.bf16.mxu0 %v9216
        %10919 = vmatpush1.bf16.msra.mxu0 %v9215
        %10920 = vmatprep.subr.bf16.mxu0 %v9210
        %10921 = vmatpush1.bf16.msra.mxu0 %v9209
        %10922 = vmatprep.subr.bf16.mxu0 %v9300
        %10923 = vmatpush2.bf16.msra.mxu0 %v9299
        %10924 = vmatprep.subr.bf16.mxu0 %v9294
        %10925 = vmatpush2.bf16.msra.mxu0 %v9293
        %10926 = vmatprep.subr.bf16.mxu0 %v9288
        %10927 = vmatpush2.bf16.msra.mxu0 %v9287
        %10928 = vmatprep.subr.bf16.mxu0 %v9282
        %10929 = vmatpush2.bf16.msra.mxu0 %v9281
        %10930 = vmatprep.subr.bf16.mxu0 %v9276
        %10931 = vmatpush2.bf16.msra.mxu0 %v9275
        %10932 = vmatprep.subr.bf16.mxu0 %v9270
        %10933 = vmatpush2.bf16.msra.mxu0 %v9269
        %10934 = vmatprep.subr.bf16.mxu0 %v9264
        %10935 = vmatpush2.bf16.msra.mxu0 %v9263
        %10936 = vmatprep.subr.bf16.mxu0 %v9258
        %10937 = vmatpush2.bf16.msra.mxu0 %v9257
        %10938 = vmatprep.mubr.bf16.mxu0 %v5838
        %10939 = vmatmul.mubr.bf16.gmra.mxu0 %v5837
        %v10940 = vpop.f32.mrf.mxu0
        %v10941 = vadd.f32 %v10900, %v10940
        %v10942 = vpop.f32.mrf.mxu0
        %v10943 = vadd.f32 %v10902, %v10942
        %v10944 = vpop.f32.mrf.mxu0
        %v10945 = vpop.f32.mrf.mxu0
        %10946 = vdwg.mxu0
        %10947 = vmatprep.subr.bf16.mxu0 %v9348
        %10948 = vmatpush1.bf16.msra.mxu0 %v9347
        %10949 = vmatprep.subr.bf16.mxu0 %v9342
        %10950 = vmatpush1.bf16.msra.mxu0 %v9341
        %10951 = vmatprep.subr.bf16.mxu0 %v9336
        %10952 = vmatpush1.bf16.msra.mxu0 %v9335
        %10953 = vmatprep.subr.bf16.mxu0 %v9330
        %10954 = vmatpush1.bf16.msra.mxu0 %v9329
        %10955 = vmatprep.subr.bf16.mxu0 %v9324
        %10956 = vmatpush1.bf16.msra.mxu0 %v9323
        %10957 = vmatprep.subr.bf16.mxu0 %v9318
        %10958 = vmatpush1.bf16.msra.mxu0 %v9317
        %10959 = vmatprep.subr.bf16.mxu0 %v9312
        %10960 = vmatpush1.bf16.msra.mxu0 %v9311
        %10961 = vmatprep.subr.bf16.mxu0 %v9306
        %10962 = vmatpush1.bf16.msra.mxu0 %v9305
        %10963 = vmatprep.subr.bf16.mxu0 %v9396
        %10964 = vmatpush2.bf16.msra.mxu0 %v9395
        %10965 = vmatprep.subr.bf16.mxu0 %v9390
        %10966 = vmatpush2.bf16.msra.mxu0 %v9389
        %10967 = vmatprep.subr.bf16.mxu0 %v9384
        %10968 = vmatpush2.bf16.msra.mxu0 %v9383
        %10969 = vmatprep.subr.bf16.mxu0 %v9378
        %10970 = vmatpush2.bf16.msra.mxu0 %v9377
        %10971 = vmatprep.subr.bf16.mxu0 %v9372
        %10972 = vmatpush2.bf16.msra.mxu0 %v9371
        %10973 = vmatprep.subr.bf16.mxu0 %v9366
        %10974 = vmatpush2.bf16.msra.mxu0 %v9365
        %10975 = vmatprep.subr.bf16.mxu0 %v9360
        %10976 = vmatpush2.bf16.msra.mxu0 %v9359
        %10977 = vmatprep.subr.bf16.mxu0 %v9354
        %10978 = vmatpush2.bf16.msra.mxu0 %v9353
        %10979 = vmatprep.mubr.bf16.mxu0 %v5840
        %10980 = vmatmul.mubr.bf16.gmra.mxu0 %v5839
        %v10981 = vpop.f32.mrf.mxu0
        %v10982 = vadd.f32 %v10941, %v10981
        %v10983 = vpop.f32.mrf.mxu0
        %v10984 = vadd.f32 %v10943, %v10983
        %v10985 = vpop.f32.mrf.mxu0
        %v10986 = vpop.f32.mrf.mxu0
        %10987 = vdwg.mxu0
        %10988 = vmatprep.subr.bf16.mxu0 %v9444
        %10989 = vmatpush1.bf16.msra.mxu0 %v9443
        %10990 = vmatprep.subr.bf16.mxu0 %v9438
        %10991 = vmatpush1.bf16.msra.mxu0 %v9437
        %10992 = vmatprep.subr.bf16.mxu0 %v9432
        %10993 = vmatpush1.bf16.msra.mxu0 %v9431
        %10994 = vmatprep.subr.bf16.mxu0 %v9426
        %10995 = vmatpush1.bf16.msra.mxu0 %v9425
        %10996 = vmatprep.subr.bf16.mxu0 %v9420
        %10997 = vmatpush1.bf16.msra.mxu0 %v9419
        %10998 = vmatprep.subr.bf16.mxu0 %v9414
        %10999 = vmatpush1.bf16.msra.mxu0 %v9413
        %11000 = vmatprep.subr.bf16.mxu0 %v9408
        %11001 = vmatpush1.bf16.msra.mxu0 %v9407
        %11002 = vmatprep.subr.bf16.mxu0 %v9402
        %11003 = vmatpush1.bf16.msra.mxu0 %v9401
        %11004 = vmatprep.subr.bf16.mxu0 %v9492
        %11005 = vmatpush2.bf16.msra.mxu0 %v9491
        %11006 = vmatprep.subr.bf16.mxu0 %v9486
        %11007 = vmatpush2.bf16.msra.mxu0 %v9485
        %11008 = vmatprep.subr.bf16.mxu0 %v9480
        %11009 = vmatpush2.bf16.msra.mxu0 %v9479
        %11010 = vmatprep.subr.bf16.mxu0 %v9474
        %11011 = vmatpush2.bf16.msra.mxu0 %v9473
        %11012 = vmatprep.subr.bf16.mxu0 %v9468
        %11013 = vmatpush2.bf16.msra.mxu0 %v9467
        %11014 = vmatprep.subr.bf16.mxu0 %v9462
        %11015 = vmatpush2.bf16.msra.mxu0 %v9461
        %11016 = vmatprep.subr.bf16.mxu0 %v9456
        %11017 = vmatpush2.bf16.msra.mxu0 %v9455
        %11018 = vmatprep.subr.bf16.mxu0 %v9450
        %11019 = vmatpush2.bf16.msra.mxu0 %v9449
        %11020 = vmatprep.mubr.bf16.mxu0 %v5842
        %11021 = vmatmul.mubr.bf16.gmra.mxu0 %v5841
        %v11022 = vpop.f32.mrf.mxu0
        %v11023 = vadd.f32 %v10982, %v11022
        %v11024 = vpop.f32.mrf.mxu0
        %v11025 = vadd.f32 %v10984, %v11024
        %v11026 = vpop.f32.mrf.mxu0
        %v11027 = vpop.f32.mrf.mxu0
        %11028 = vdwg.mxu0
        %11029 = vmatprep.subr.bf16.mxu0 %v9540
        %11030 = vmatpush1.bf16.msra.mxu0 %v9539
        %11031 = vmatprep.subr.bf16.mxu0 %v9534
        %11032 = vmatpush1.bf16.msra.mxu0 %v9533
        %11033 = vmatprep.subr.bf16.mxu0 %v9528
        %11034 = vmatpush1.bf16.msra.mxu0 %v9527
        %11035 = vmatprep.subr.bf16.mxu0 %v9522
        %11036 = vmatpush1.bf16.msra.mxu0 %v9521
        %11037 = vmatprep.subr.bf16.mxu0 %v9516
        %11038 = vmatpush1.bf16.msra.mxu0 %v9515
        %11039 = vmatprep.subr.bf16.mxu0 %v9510
        %11040 = vmatpush1.bf16.msra.mxu0 %v9509
        %11041 = vmatprep.subr.bf16.mxu0 %v9504
        %11042 = vmatpush1.bf16.msra.mxu0 %v9503
        %11043 = vmatprep.subr.bf16.mxu0 %v9498
        %11044 = vmatpush1.bf16.msra.mxu0 %v9497
        %11045 = vmatprep.subr.bf16.mxu0 %v9588
        %11046 = vmatpush2.bf16.msra.mxu0 %v9587
        %11047 = vmatprep.subr.bf16.mxu0 %v9582
        %11048 = vmatpush2.bf16.msra.mxu0 %v9581
        %11049 = vmatprep.subr.bf16.mxu0 %v9576
        %11050 = vmatpush2.bf16.msra.mxu0 %v9575
        %11051 = vmatprep.subr.bf16.mxu0 %v9570
        %11052 = vmatpush2.bf16.msra.mxu0 %v9569
        %11053 = vmatprep.subr.bf16.mxu0 %v9564
        %11054 = vmatpush2.bf16.msra.mxu0 %v9563
        %11055 = vmatprep.subr.bf16.mxu0 %v9558
        %11056 = vmatpush2.bf16.msra.mxu0 %v9557
        %11057 = vmatprep.subr.bf16.mxu0 %v9552
        %11058 = vmatpush2.bf16.msra.mxu0 %v9551
        %11059 = vmatprep.subr.bf16.mxu0 %v9546
        %11060 = vmatpush2.bf16.msra.mxu0 %v9545
        %11061 = vmatprep.mubr.bf16.mxu0 %v5844
        %11062 = vmatmul.mubr.bf16.gmra.mxu0 %v5843
        %v11063 = vpop.f32.mrf.mxu0
        %v11064 = vadd.f32 %v11023, %v11063
        %v11065 = vpop.f32.mrf.mxu0
        %v11066 = vadd.f32 %v11025, %v11065
        %v11067 = vpop.f32.mrf.mxu0
        %v11068 = vpop.f32.mrf.mxu0
        %11069 = vdwg.mxu0
        %11070 = vmatprep.subr.bf16.mxu0 %v9636
        %11071 = vmatpush1.bf16.msra.mxu0 %v9635
        %11072 = vmatprep.subr.bf16.mxu0 %v9630
        %11073 = vmatpush1.bf16.msra.mxu0 %v9629
        %11074 = vmatprep.subr.bf16.mxu0 %v9624
        %11075 = vmatpush1.bf16.msra.mxu0 %v9623
        %11076 = vmatprep.subr.bf16.mxu0 %v9618
        %11077 = vmatpush1.bf16.msra.mxu0 %v9617
        %11078 = vmatprep.subr.bf16.mxu0 %v9612
        %11079 = vmatpush1.bf16.msra.mxu0 %v9611
        %11080 = vmatprep.subr.bf16.mxu0 %v9606
        %11081 = vmatpush1.bf16.msra.mxu0 %v9605
        %11082 = vmatprep.subr.bf16.mxu0 %v9600
        %11083 = vmatpush1.bf16.msra.mxu0 %v9599
        %11084 = vmatprep.subr.bf16.mxu0 %v9594
        %11085 = vmatpush1.bf16.msra.mxu0 %v9593
        %11086 = vmatprep.subr.bf16.mxu0 %v9684
        %11087 = vmatpush2.bf16.msra.mxu0 %v9683
        %11088 = vmatprep.subr.bf16.mxu0 %v9678
        %11089 = vmatpush2.bf16.msra.mxu0 %v9677
        %11090 = vmatprep.subr.bf16.mxu0 %v9672
        %11091 = vmatpush2.bf16.msra.mxu0 %v9671
        %11092 = vmatprep.subr.bf16.mxu0 %v9666
        %11093 = vmatpush2.bf16.msra.mxu0 %v9665
        %11094 = vmatprep.subr.bf16.mxu0 %v9660
        %11095 = vmatpush2.bf16.msra.mxu0 %v9659
        %11096 = vmatprep.subr.bf16.mxu0 %v9654
        %11097 = vmatpush2.bf16.msra.mxu0 %v9653
        %11098 = vmatprep.subr.bf16.mxu0 %v9648
        %11099 = vmatpush2.bf16.msra.mxu0 %v9647
        %11100 = vmatprep.subr.bf16.mxu0 %v9642
        %11101 = vmatpush2.bf16.msra.mxu0 %v9641
        %11102 = vmatprep.mubr.bf16.mxu0 %v5846
        %11103 = vmatmul.mubr.bf16.gmra.mxu0 %v5845
        %v11104 = vpop.f32.mrf.mxu0
        %v11105 = vadd.f32 %v11064, %v11104
        %v11106 = vpop.f32.mrf.mxu0
        %v11107 = vadd.f32 %v11066, %v11106
        %v11108 = vpop.f32.mrf.mxu0
        %v11109 = vpop.f32.mrf.mxu0
        %11110 = vdwg.mxu0
        %11111 = vmatprep.subr.bf16.mxu0 %v8966
        %11112 = vmatpush1.bf16.msra.mxu0 %v8965
        %11113 = vmatprep.subr.bf16.mxu0 %v8960
        %11114 = vmatpush1.bf16.msra.mxu0 %v8959
        %11115 = vmatprep.subr.bf16.mxu0 %v8954
        %11116 = vmatpush1.bf16.msra.mxu0 %v8953
        %11117 = vmatprep.subr.bf16.mxu0 %v8948
        %11118 = vmatpush1.bf16.msra.mxu0 %v8947
        %11119 = vmatprep.subr.bf16.mxu0 %v8942
        %11120 = vmatpush1.bf16.msra.mxu0 %v8941
        %11121 = vmatprep.subr.bf16.mxu0 %v8936
        %11122 = vmatpush1.bf16.msra.mxu0 %v8935
        %11123 = vmatprep.subr.bf16.mxu0 %v8930
        %11124 = vmatpush1.bf16.msra.mxu0 %v8929
        %11125 = vmatprep.subr.bf16.mxu0 %v8924
        %11126 = vmatpush1.bf16.msra.mxu0 %v8923
        %11127 = vmatprep.subr.bf16.mxu0 %v9014
        %11128 = vmatpush2.bf16.msra.mxu0 %v9013
        %11129 = vmatprep.subr.bf16.mxu0 %v9008
        %11130 = vmatpush2.bf16.msra.mxu0 %v9007
        %11131 = vmatprep.subr.bf16.mxu0 %v9002
        %11132 = vmatpush2.bf16.msra.mxu0 %v9001
        %11133 = vmatprep.subr.bf16.mxu0 %v8996
        %11134 = vmatpush2.bf16.msra.mxu0 %v8995
        %11135 = vmatprep.subr.bf16.mxu0 %v8990
        %11136 = vmatpush2.bf16.msra.mxu0 %v8989
        %11137 = vmatprep.subr.bf16.mxu0 %v8984
        %11138 = vmatpush2.bf16.msra.mxu0 %v8983
        %11139 = vmatprep.subr.bf16.mxu0 %v8978
        %11140 = vmatpush2.bf16.msra.mxu0 %v8977
        %11141 = vmatprep.subr.bf16.mxu0 %v8972
        %11142 = vmatpush2.bf16.msra.mxu0 %v8971
        %11143 = vmatprep.mubr.bf16.mxu0 %v5832
        %11144 = vmatmul.mubr.bf16.gmra.mxu0 %v5831
        %v11145 = vpop.f32.mrf.mxu0
        %v11146 = vadd.f32 0.0, %v11145
        %v11147 = vpop.f32.mrf.mxu0
        %v11148 = vadd.f32 0.0, %v11147
        %v11149 = vpop.f32.mrf.mxu0
        %v11150 = vpop.f32.mrf.mxu0
        %11151 = vdwg.mxu0
        %11152 = vmatprep.subr.bf16.mxu0 %v9062
        %11153 = vmatpush1.bf16.msra.mxu0 %v9061
        %11154 = vmatprep.subr.bf16.mxu0 %v9056
        %11155 = vmatpush1.bf16.msra.mxu0 %v9055
        %11156 = vmatprep.subr.bf16.mxu0 %v9050
        %11157 = vmatpush1.bf16.msra.mxu0 %v9049
        %11158 = vmatprep.subr.bf16.mxu0 %v9044
        %11159 = vmatpush1.bf16.msra.mxu0 %v9043
        %11160 = vmatprep.subr.bf16.mxu0 %v9038
        %11161 = vmatpush1.bf16.msra.mxu0 %v9037
        %11162 = vmatprep.subr.bf16.mxu0 %v9032
        %11163 = vmatpush1.bf16.msra.mxu0 %v9031
        %11164 = vmatprep.subr.bf16.mxu0 %v9026
        %11165 = vmatpush1.bf16.msra.mxu0 %v9025
        %11166 = vmatprep.subr.bf16.mxu0 %v9020
        %11167 = vmatpush1.bf16.msra.mxu0 %v9019
        %11168 = vmatprep.subr.bf16.mxu0 %v9110
        %11169 = vmatpush2.bf16.msra.mxu0 %v9109
        %11170 = vmatprep.subr.bf16.mxu0 %v9104
        %11171 = vmatpush2.bf16.msra.mxu0 %v9103
        %11172 = vmatprep.subr.bf16.mxu0 %v9098
        %11173 = vmatpush2.bf16.msra.mxu0 %v9097
        %11174 = vmatprep.subr.bf16.mxu0 %v9092
        %11175 = vmatpush2.bf16.msra.mxu0 %v9091
        %11176 = vmatprep.subr.bf16.mxu0 %v9086
        %11177 = vmatpush2.bf16.msra.mxu0 %v9085
        %11178 = vmatprep.subr.bf16.mxu0 %v9080
        %11179 = vmatpush2.bf16.msra.mxu0 %v9079
        %11180 = vmatprep.subr.bf16.mxu0 %v9074
        %11181 = vmatpush2.bf16.msra.mxu0 %v9073
        %11182 = vmatprep.subr.bf16.mxu0 %v9068
        %11183 = vmatpush2.bf16.msra.mxu0 %v9067
        %11184 = vmatprep.mubr.bf16.mxu0 %v5834
        %11185 = vmatmul.mubr.bf16.gmra.mxu0 %v5833
        %v11186 = vpop.f32.mrf.mxu0
        %v11187 = vadd.f32 %v11146, %v11186
        %v11188 = vpop.f32.mrf.mxu0
        %v11189 = vadd.f32 %v11148, %v11188
        %v11190 = vpop.f32.mrf.mxu0
        %v11191 = vpop.f32.mrf.mxu0
        %11192 = vdwg.mxu0
        %11193 = vmatprep.subr.bf16.mxu0 %v9158
        %11194 = vmatpush1.bf16.msra.mxu0 %v9157
        %11195 = vmatprep.subr.bf16.mxu0 %v9152
        %11196 = vmatpush1.bf16.msra.mxu0 %v9151
        %11197 = vmatprep.subr.bf16.mxu0 %v9146
        %11198 = vmatpush1.bf16.msra.mxu0 %v9145
        %11199 = vmatprep.subr.bf16.mxu0 %v9140
        %11200 = vmatpush1.bf16.msra.mxu0 %v9139
        %11201 = vmatprep.subr.bf16.mxu0 %v9134
        %11202 = vmatpush1.bf16.msra.mxu0 %v9133
        %11203 = vmatprep.subr.bf16.mxu0 %v9128
        %11204 = vmatpush1.bf16.msra.mxu0 %v9127
        %11205 = vmatprep.subr.bf16.mxu0 %v9122
        %11206 = vmatpush1.bf16.msra.mxu0 %v9121
        %11207 = vmatprep.subr.bf16.mxu0 %v9116
        %11208 = vmatpush1.bf16.msra.mxu0 %v9115
        %11209 = vmatprep.subr.bf16.mxu0 %v9206
        %11210 = vmatpush2.bf16.msra.mxu0 %v9205
        %11211 = vmatprep.subr.bf16.mxu0 %v9200
        %11212 = vmatpush2.bf16.msra.mxu0 %v9199
        %11213 = vmatprep.subr.bf16.mxu0 %v9194
        %11214 = vmatpush2.bf16.msra.mxu0 %v9193
        %11215 = vmatprep.subr.bf16.mxu0 %v9188
        %11216 = vmatpush2.bf16.msra.mxu0 %v9187
        %11217 = vmatprep.subr.bf16.mxu0 %v9182
        %11218 = vmatpush2.bf16.msra.mxu0 %v9181
        %11219 = vmatprep.subr.bf16.mxu0 %v9176
        %11220 = vmatpush2.bf16.msra.mxu0 %v9175
        %11221 = vmatprep.subr.bf16.mxu0 %v9170
        %11222 = vmatpush2.bf16.msra.mxu0 %v9169
        %11223 = vmatprep.subr.bf16.mxu0 %v9164
        %11224 = vmatpush2.bf16.msra.mxu0 %v9163
        %11225 = vmatprep.mubr.bf16.mxu0 %v5836
        %11226 = vmatmul.mubr.bf16.gmra.mxu0 %v5835
        %v11227 = vpop.f32.mrf.mxu0
        %v11228 = vadd.f32 %v11187, %v11227
        %v11229 = vpop.f32.mrf.mxu0
        %v11230 = vadd.f32 %v11189, %v11229
        %v11231 = vpop.f32.mrf.mxu0
        %v11232 = vpop.f32.mrf.mxu0
        %11233 = vdwg.mxu0
        %11234 = vmatprep.subr.bf16.mxu0 %v9254
        %11235 = vmatpush1.bf16.msra.mxu0 %v9253
        %11236 = vmatprep.subr.bf16.mxu0 %v9248
        %11237 = vmatpush1.bf16.msra.mxu0 %v9247
        %11238 = vmatprep.subr.bf16.mxu0 %v9242
        %11239 = vmatpush1.bf16.msra.mxu0 %v9241
        %11240 = vmatprep.subr.bf16.mxu0 %v9236
        %11241 = vmatpush1.bf16.msra.mxu0 %v9235
        %11242 = vmatprep.subr.bf16.mxu0 %v9230
        %11243 = vmatpush1.bf16.msra.mxu0 %v9229
        %11244 = vmatprep.subr.bf16.mxu0 %v9224
        %11245 = vmatpush1.bf16.msra.mxu0 %v9223
        %11246 = vmatprep.subr.bf16.mxu0 %v9218
        %11247 = vmatpush1.bf16.msra.mxu0 %v9217
        %11248 = vmatprep.subr.bf16.mxu0 %v9212
        %11249 = vmatpush1.bf16.msra.mxu0 %v9211
        %11250 = vmatprep.subr.bf16.mxu0 %v9302
        %11251 = vmatpush2.bf16.msra.mxu0 %v9301
        %11252 = vmatprep.subr.bf16.mxu0 %v9296
        %11253 = vmatpush2.bf16.msra.mxu0 %v9295
        %11254 = vmatprep.subr.bf16.mxu0 %v9290
        %11255 = vmatpush2.bf16.msra.mxu0 %v9289
        %11256 = vmatprep.subr.bf16.mxu0 %v9284
        %11257 = vmatpush2.bf16.msra.mxu0 %v9283
        %11258 = vmatprep.subr.bf16.mxu0 %v9278
        %11259 = vmatpush2.bf16.msra.mxu0 %v9277
        %11260 = vmatprep.subr.bf16.mxu0 %v9272
        %11261 = vmatpush2.bf16.msra.mxu0 %v9271
        %11262 = vmatprep.subr.bf16.mxu0 %v9266
        %11263 = vmatpush2.bf16.msra.mxu0 %v9265
        %11264 = vmatprep.subr.bf16.mxu0 %v9260
        %11265 = vmatpush2.bf16.msra.mxu0 %v9259
        %11266 = vmatprep.mubr.bf16.mxu0 %v5838
        %11267 = vmatmul.mubr.bf16.gmra.mxu0 %v5837
        %v11268 = vpop.f32.mrf.mxu0
        %v11269 = vadd.f32 %v11228, %v11268
        %v11270 = vpop.f32.mrf.mxu0
        %v11271 = vadd.f32 %v11230, %v11270
        %v11272 = vpop.f32.mrf.mxu0
        %v11273 = vpop.f32.mrf.mxu0
        %11274 = vdwg.mxu0
        %11275 = vmatprep.subr.bf16.mxu0 %v9350
        %11276 = vmatpush1.bf16.msra.mxu0 %v9349
        %11277 = vmatprep.subr.bf16.mxu0 %v9344
        %11278 = vmatpush1.bf16.msra.mxu0 %v9343
        %11279 = vmatprep.subr.bf16.mxu0 %v9338
        %11280 = vmatpush1.bf16.msra.mxu0 %v9337
        %11281 = vmatprep.subr.bf16.mxu0 %v9332
        %11282 = vmatpush1.bf16.msra.mxu0 %v9331
        %11283 = vmatprep.subr.bf16.mxu0 %v9326
        %11284 = vmatpush1.bf16.msra.mxu0 %v9325
        %11285 = vmatprep.subr.bf16.mxu0 %v9320
        %11286 = vmatpush1.bf16.msra.mxu0 %v9319
        %11287 = vmatprep.subr.bf16.mxu0 %v9314
        %11288 = vmatpush1.bf16.msra.mxu0 %v9313
        %11289 = vmatprep.subr.bf16.mxu0 %v9308
        %11290 = vmatpush1.bf16.msra.mxu0 %v9307
        %11291 = vmatprep.subr.bf16.mxu0 %v9398
        %11292 = vmatpush2.bf16.msra.mxu0 %v9397
        %11293 = vmatprep.subr.bf16.mxu0 %v9392
        %11294 = vmatpush2.bf16.msra.mxu0 %v9391
        %11295 = vmatprep.subr.bf16.mxu0 %v9386
        %11296 = vmatpush2.bf16.msra.mxu0 %v9385
        %11297 = vmatprep.subr.bf16.mxu0 %v9380
        %11298 = vmatpush2.bf16.msra.mxu0 %v9379
        %11299 = vmatprep.subr.bf16.mxu0 %v9374
        %11300 = vmatpush2.bf16.msra.mxu0 %v9373
        %11301 = vmatprep.subr.bf16.mxu0 %v9368
        %11302 = vmatpush2.bf16.msra.mxu0 %v9367
        %11303 = vmatprep.subr.bf16.mxu0 %v9362
        %11304 = vmatpush2.bf16.msra.mxu0 %v9361
        %11305 = vmatprep.subr.bf16.mxu0 %v9356
        %11306 = vmatpush2.bf16.msra.mxu0 %v9355
        %11307 = vmatprep.mubr.bf16.mxu0 %v5840
        %11308 = vmatmul.mubr.bf16.gmra.mxu0 %v5839
        %v11309 = vpop.f32.mrf.mxu0
        %v11310 = vadd.f32 %v11269, %v11309
        %v11311 = vpop.f32.mrf.mxu0
        %v11312 = vadd.f32 %v11271, %v11311
        %v11313 = vpop.f32.mrf.mxu0
        %v11314 = vpop.f32.mrf.mxu0
        %11315 = vdwg.mxu0
        %11316 = vmatprep.subr.bf16.mxu0 %v9446
        %11317 = vmatpush1.bf16.msra.mxu0 %v9445
        %11318 = vmatprep.subr.bf16.mxu0 %v9440
        %11319 = vmatpush1.bf16.msra.mxu0 %v9439
        %11320 = vmatprep.subr.bf16.mxu0 %v9434
        %11321 = vmatpush1.bf16.msra.mxu0 %v9433
        %11322 = vmatprep.subr.bf16.mxu0 %v9428
        %11323 = vmatpush1.bf16.msra.mxu0 %v9427
        %11324 = vmatprep.subr.bf16.mxu0 %v9422
        %11325 = vmatpush1.bf16.msra.mxu0 %v9421
        %11326 = vmatprep.subr.bf16.mxu0 %v9416
        %11327 = vmatpush1.bf16.msra.mxu0 %v9415
        %11328 = vmatprep.subr.bf16.mxu0 %v9410
        %11329 = vmatpush1.bf16.msra.mxu0 %v9409
        %11330 = vmatprep.subr.bf16.mxu0 %v9404
        %11331 = vmatpush1.bf16.msra.mxu0 %v9403
        %11332 = vmatprep.subr.bf16.mxu0 %v9494
        %11333 = vmatpush2.bf16.msra.mxu0 %v9493
        %11334 = vmatprep.subr.bf16.mxu0 %v9488
        %11335 = vmatpush2.bf16.msra.mxu0 %v9487
        %11336 = vmatprep.subr.bf16.mxu0 %v9482
        %11337 = vmatpush2.bf16.msra.mxu0 %v9481
        %11338 = vmatprep.subr.bf16.mxu0 %v9476
        %11339 = vmatpush2.bf16.msra.mxu0 %v9475
        %11340 = vmatprep.subr.bf16.mxu0 %v9470
        %11341 = vmatpush2.bf16.msra.mxu0 %v9469
        %11342 = vmatprep.subr.bf16.mxu0 %v9464
        %11343 = vmatpush2.bf16.msra.mxu0 %v9463
        %11344 = vmatprep.subr.bf16.mxu0 %v9458
        %11345 = vmatpush2.bf16.msra.mxu0 %v9457
        %11346 = vmatprep.subr.bf16.mxu0 %v9452
        %11347 = vmatpush2.bf16.msra.mxu0 %v9451
        %11348 = vmatprep.mubr.bf16.mxu0 %v5842
        %11349 = vmatmul.mubr.bf16.gmra.mxu0 %v5841
        %v11350 = vpop.f32.mrf.mxu0
        %v11351 = vadd.f32 %v11310, %v11350
        %v11352 = vpop.f32.mrf.mxu0
        %v11353 = vadd.f32 %v11312, %v11352
        %v11354 = vpop.f32.mrf.mxu0
        %v11355 = vpop.f32.mrf.mxu0
        %11356 = vdwg.mxu0
        %11357 = vmatprep.subr.bf16.mxu0 %v9542
        %11358 = vmatpush1.bf16.msra.mxu0 %v9541
        %11359 = vmatprep.subr.bf16.mxu0 %v9536
        %11360 = vmatpush1.bf16.msra.mxu0 %v9535
        %11361 = vmatprep.subr.bf16.mxu0 %v9530
        %11362 = vmatpush1.bf16.msra.mxu0 %v9529
        %11363 = vmatprep.subr.bf16.mxu0 %v9524
        %11364 = vmatpush1.bf16.msra.mxu0 %v9523
        %11365 = vmatprep.subr.bf16.mxu0 %v9518
        %11366 = vmatpush1.bf16.msra.mxu0 %v9517
        %11367 = vmatprep.subr.bf16.mxu0 %v9512
        %11368 = vmatpush1.bf16.msra.mxu0 %v9511
        %11369 = vmatprep.subr.bf16.mxu0 %v9506
        %11370 = vmatpush1.bf16.msra.mxu0 %v9505
        %11371 = vmatprep.subr.bf16.mxu0 %v9500
        %11372 = vmatpush1.bf16.msra.mxu0 %v9499
        %11373 = vmatprep.subr.bf16.mxu0 %v9590
        %11374 = vmatpush2.bf16.msra.mxu0 %v9589
        %11375 = vmatprep.subr.bf16.mxu0 %v9584
        %11376 = vmatpush2.bf16.msra.mxu0 %v9583
        %11377 = vmatprep.subr.bf16.mxu0 %v9578
        %11378 = vmatpush2.bf16.msra.mxu0 %v9577
        %11379 = vmatprep.subr.bf16.mxu0 %v9572
        %11380 = vmatpush2.bf16.msra.mxu0 %v9571
        %11381 = vmatprep.subr.bf16.mxu0 %v9566
        %11382 = vmatpush2.bf16.msra.mxu0 %v9565
        %11383 = vmatprep.subr.bf16.mxu0 %v9560
        %11384 = vmatpush2.bf16.msra.mxu0 %v9559
        %11385 = vmatprep.subr.bf16.mxu0 %v9554
        %11386 = vmatpush2.bf16.msra.mxu0 %v9553
        %11387 = vmatprep.subr.bf16.mxu0 %v9548
        %11388 = vmatpush2.bf16.msra.mxu0 %v9547
        %11389 = vmatprep.mubr.bf16.mxu0 %v5844
        %11390 = vmatmul.mubr.bf16.gmra.mxu0 %v5843
        %v11391 = vpop.f32.mrf.mxu0
        %v11392 = vadd.f32 %v11351, %v11391
        %v11393 = vpop.f32.mrf.mxu0
        %v11394 = vadd.f32 %v11353, %v11393
        %v11395 = vpop.f32.mrf.mxu0
        %v11396 = vpop.f32.mrf.mxu0
        %11397 = vdwg.mxu0
        %11398 = vmatprep.subr.bf16.mxu0 %v9638
        %11399 = vmatpush1.bf16.msra.mxu0 %v9637
        %11400 = vmatprep.subr.bf16.mxu0 %v9632
        %11401 = vmatpush1.bf16.msra.mxu0 %v9631
        %11402 = vmatprep.subr.bf16.mxu0 %v9626
        %11403 = vmatpush1.bf16.msra.mxu0 %v9625
        %11404 = vmatprep.subr.bf16.mxu0 %v9620
        %11405 = vmatpush1.bf16.msra.mxu0 %v9619
        %11406 = vmatprep.subr.bf16.mxu0 %v9614
        %11407 = vmatpush1.bf16.msra.mxu0 %v9613
        %11408 = vmatprep.subr.bf16.mxu0 %v9608
        %11409 = vmatpush1.bf16.msra.mxu0 %v9607
        %11410 = vmatprep.subr.bf16.mxu0 %v9602
        %11411 = vmatpush1.bf16.msra.mxu0 %v9601
        %11412 = vmatprep.subr.bf16.mxu0 %v9596
        %11413 = vmatpush1.bf16.msra.mxu0 %v9595
        %11414 = vmatprep.subr.bf16.mxu0 %v9686
        %11415 = vmatpush2.bf16.msra.mxu0 %v9685
        %11416 = vmatprep.subr.bf16.mxu0 %v9680
        %11417 = vmatpush2.bf16.msra.mxu0 %v9679
        %11418 = vmatprep.subr.bf16.mxu0 %v9674
        %11419 = vmatpush2.bf16.msra.mxu0 %v9673
        %11420 = vmatprep.subr.bf16.mxu0 %v9668
        %11421 = vmatpush2.bf16.msra.mxu0 %v9667
        %11422 = vmatprep.subr.bf16.mxu0 %v9662
        %11423 = vmatpush2.bf16.msra.mxu0 %v9661
        %11424 = vmatprep.subr.bf16.mxu0 %v9656
        %11425 = vmatpush2.bf16.msra.mxu0 %v9655
        %11426 = vmatprep.subr.bf16.mxu0 %v9650
        %11427 = vmatpush2.bf16.msra.mxu0 %v9649
        %11428 = vmatprep.subr.bf16.mxu0 %v9644
        %11429 = vmatpush2.bf16.msra.mxu0 %v9643
        %11430 = vmatprep.mubr.bf16.mxu0 %v5846
        %11431 = vmatmul.mubr.bf16.gmra.mxu0 %v5845
        %v11432 = vpop.f32.mrf.mxu0
        %v11433 = vadd.f32 %v11392, %v11432
        %v11434 = vpop.f32.mrf.mxu0
        %v11435 = vadd.f32 %v11394, %v11434
        %v11436 = vpop.f32.mrf.mxu0
        %v11437 = vpop.f32.mrf.mxu0
        %11438 = vdwg.mxu0
        %11439 = vst [vmem:[%s193] sm:$0xff] %v10777
        %11440 = vst [vmem:[%s193 + $0x8] sm:$0xff] %v10779
        %11441 = vst [vmem:[%s193 + $0x10] sm:$0xff] %v11105
        %11442 = vst [vmem:[%s193 + $0x18] sm:$0xff] %v11107
        %11443 = vst [vmem:[%s193 + $0x20] sm:$0xff] %v11433
        %11444 = vst [vmem:[%s193 + $0x28] sm:$0xff] %v11435
        %s11445 = sand.u32 %s95, 1
        %s11446 = scalar_lea.sflag [#allocation4], %s11445
        %s11447 = sand.u32 %s95, 1
        %s11448 = smul.addr %s11447, 48
        %s11449 = scalar_lea.vmem [#allocation7], %s11448
        // Predicated region
        $region41: #{position_forward_prepared.1} parent=31 // pred_check
          %p11450 = pneg %p105
        $region42: #{position_forward_prepared.1} parent=31 // pred_check_branch
          %11452 = sbr.rel (%p11450) target = $region44
        $region43: #{position_forward_prepared.1} parent=31 // pred_region
          %s11454 = ssub.s32 768, 768
          %11455 = vsyncadd %s11446, %s11454
          %s11456 = smul.addr %s19, 6
          %s11457 = smul.addr %s11456, 128
          %s11458 = scalar_lea.hbm %s3, %s11457
          %s11460 = sshll.u32 %s11449, 4
          %s11461 = int_to_ptr.vmem [resolvable:$true] %s11460
          %11463 = dma.vmem_to_hbm [thread:$0]  %s11461, 768, %s11458, %s11446
        $region44: #{position_forward_prepared.1} parent=31 // pred_fallthru
          _
      $region32: #{position_forward_prepared.1} parent=5 // pred_fallthru
        _
      %p11464 = scmp.le.s32.totalorder 2, %s14
      // Predicated region
      $region45: #{position_forward_prepared.1} parent=5 // pred_check
        %p11465 = pneg %p11464
      $region46: #{position_forward_prepared.1} parent=5 // pred_check_branch
        %11467 = sbr.rel (%p11465) target = $region48
      $region47: #{position_forward_prepared.1} parent=5 // pred_region
        %s11468 = ssub.s32 %s14, 2
        // Predicated region
        $region49: #{position_forward_prepared.1} parent=47 // pred_check
          %p11469 = pneg %p111
        $region50: #{position_forward_prepared.1} parent=47 // pred_check_branch
          %11471 = sbr.rel (%p11469) target = $region52
        $region51: #{position_forward_prepared.1} parent=47 // pred_region
          %s11472 = sand.u32 %s96, 1
          %s11473 = scalar_lea.sflag [#allocation4], %s11472
          %s11474 = sand.u32 %s96, 1
          %s11475 = smul.addr %s11474, 48
          %s11476 = scalar_lea.vmem [#allocation7], %s11475
          %11477 = dma.done %s11473, 768
        $region52: #{position_forward_prepared.1} parent=47 // pred_fallthru
          _
      $region48: #{position_forward_prepared.1} parent=5 // pred_fallthru
        _
    $region6: #{position_forward_prepared.1} parent=1 // loop_footer
      %s18 = sadd.s32 1, %s14
    $region7: #{position_forward_prepared.1} parent=1 // loop_footer_branch
      %13 = sbr.rel target = $region3
    $region8: #{position_forward_prepared.1} parent=1 // loop_exit
      _
    %11478 = vsyncpa [#allocation3], 1
    %s11479 = scalar_lea.sflag [#allocation3], 1
    %11480 = vsyncpa %s11479, 1
    %11481 = vsyncpa [#allocation6], 1
    %11482 = vsyncpa [#allocation4], 1
    %s11483 = scalar_lea.sflag [#allocation4], 1
    %11484 = vsyncpa %s11483, 1

</llo_original>
